<compile_context>
chip_gen: v7x
topology: tpu7x:2x2x1
jax: 0.10.0
libtpu: 0.0.40
codegen_flags: <defaults>
</compile_context>

<pallas_src>
import functools
import math

import jax
import jax.numpy as jnp
from jax.experimental import pallas as pl
from jax.experimental.pallas import tpu as pltpu


# ---------------------------------------------------------------------------
# Fused whole-stack kernel
# ---------------------------------------------------------------------------

def _co_encode_stack_kernel(
    # data (full (B*T, C) slabs) and constant head-block masks
    img_ref, bh_ref, rep_img_ref, rep_bh_ref,
    # co_attentional weights (stacked over layers)
    co_iqkv_w_ref, co_iqkv_b_ref, co_bqkv_w_ref, co_bqkv_b_ref,
    co_pi_w_ref, co_pi_b_ref, co_pb_w_ref, co_pb_b_ref,
    # img / bh self-attention
    ia_qkv_w_ref, ia_qkv_b_ref, ia_p_w_ref, ia_p_b_ref,
    ba_qkv_w_ref, ba_qkv_b_ref, ba_p_w_ref, ba_p_b_ref,
    # MLPs
    mi_fc1_w_ref, mi_fc1_b_ref, mi_fc2_w_ref, mi_fc2_b_ref,
    mb_fc1_w_ref, mb_fc1_b_ref, mb_fc2_w_ref, mb_fc2_b_ref,
    # LayerNorms stacked per layer: rows = [ln_img, ln_img2, ln_img3, ln_bh, ln_bh2, ln_bh3]
    ln_g_ref, ln_b_ref,
    # outputs
    img_out_ref, bh_out_ref,
    *, n_layers, n_embd, n_head, n_batch, t_img, t_bh):
    c = n_embd

    # Block-diagonal head masks: rep[h*T_kv + s, hd*dh + d] = 1 iff h == hd.
    rep_img = rep_img_ref[...]   # (n_head * t_img, C)
    rep_bh = rep_bh_ref[...]     # (n_head * t_bh,  C)

    def linear(x, w, b):
        return jnp.dot(x, w, preferred_element_type=jnp.float32) + b

    def attention(qkv_q, qkv_kv, t_q, t_kv, rep_mask, w_p, b_p):
        # qkv_q : (B*t_q , 3C)  queries in cols [0:C]  (score scale already folded into W_q)
        # qkv_kv: (B*t_kv, 3C)  keys in [C:2C], values in [2C:3C]
        outs = []
        for b in range(n_batch):
            q = qkv_q[b * t_q:(b + 1) * t_q, 0:c]                 # (t_q, C)
            k = qkv_kv[b * t_kv:(b + 1) * t_kv, c:2 * c]          # (t_kv, C)
            v = qkv_kv[b * t_kv:(b + 1) * t_kv, 2 * c:3 * c]      # (t_kv, C)
            # Tile K/V along sublanes and mask to a block-diagonal-per-head layout so ALL
            # heads' scores / outputs come from a single matmul each.
            k_rep = jnp.concatenate([k] * n_head, axis=0) * rep_mask   # (n_head*t_kv, C)
            v_rep = jnp.concatenate([v] * n_head, axis=0) * rep_mask   # (n_head*t_kv, C)
            # Stacked scores: s[t, h*t_kv + s'] = sum_{d in head h} q[t,d] * k[s',d]
            s = jax.lax.dot_general(q, k_rep, (((1,), (1,)), ((), ())),
                                    preferred_element_type=jnp.float32)  # (t_q, n_head*t_kv)
            # One shared per-row max is valid for every head (softmax is shift-invariant).
            p = jnp.exp(s - jnp.max(s, axis=-1, keepdims=True))
            o_un = jnp.dot(p, v_rep, preferred_element_type=jnp.float32)     # (t_q, C)
            den = jnp.dot(p, rep_mask, preferred_element_type=jnp.float32)   # per-head sums, bcast to lanes
            outs.append(o_un * pl.reciprocal(den, approx=True))
        merged = jnp.concatenate(outs, axis=0)                    # (B*t_q, C)
        return jnp.dot(merged, w_p, preferred_element_type=jnp.float32) + b_p

    img = img_ref[...].astype(jnp.float32)   # (B*T_img, C)
    bh = bh_ref[...].astype(jnp.float32)     # (B*T_bh,  C)

    for l in range(n_layers):                # static unroll; weights indexed at static l
        ln_g = ln_g_ref[l]                   # (6, C)
        ln_b = ln_b_ref[l]                   # (6, C)

        def layer_norm(x, idx, _g=ln_g, _b=ln_b):
            mean = jnp.mean(x, axis=-1, keepdims=True)
            var = jnp.mean((x - mean) ** 2, axis=-1, keepdims=True)
            return (x - mean) * jax.lax.rsqrt(var + 1e-12) * _g[idx:idx + 1, :] + _b[idx:idx + 1, :]

        # ---- co_attentional (cross attention between the two streams) ----
        qkv_img = linear(img, co_iqkv_w_ref[l], co_iqkv_b_ref[l])   # [q_img | k_img2bh | v_img2bh]
        qkv_bh = linear(bh, co_bqkv_w_ref[l], co_bqkv_b_ref[l])     # [q_bh  | k_bh2img | v_bh2img]
        x = attention(qkv_img, qkv_bh, t_img, t_bh, rep_bh,
                      co_pi_w_ref[l], co_pi_b_ref[l])               # img queries, bh keys/values
        y = attention(qkv_bh, qkv_img, t_bh, t_img, rep_img,
                      co_pb_w_ref[l], co_pb_b_ref[l])               # bh queries, img keys/values

        # ---- img stream: residual + LN, self-attention, MLP ----
        x = layer_norm(x + img, 0)
        x1 = x
        qkv = linear(x, ia_qkv_w_ref[l], ia_qkv_b_ref[l])
        x = attention(qkv, qkv, t_img, t_img, rep_img, ia_p_w_ref[l], ia_p_b_ref[l])
        x = layer_norm(x + x1, 1)
        x2 = x
        hid = jax.nn.gelu(linear(x, mi_fc1_w_ref[l], mi_fc1_b_ref[l]), approximate=True)
        x = layer_norm(linear(hid, mi_fc2_w_ref[l], mi_fc2_b_ref[l]) + x2, 2)

        # ---- bh stream: residual + LN, self-attention, MLP ----
        y = layer_norm(y + bh, 3)
        y1 = y
        qkv = linear(y, ba_qkv_w_ref[l], ba_qkv_b_ref[l])
        y = attention(qkv, qkv, t_bh, t_bh, rep_bh, ba_p_w_ref[l], ba_p_b_ref[l])
        y = layer_norm(y + y1, 4)
        y2 = y
        hid = jax.nn.gelu(linear(y, mb_fc1_w_ref[l], mb_fc1_b_ref[l]), approximate=True)
        y = layer_norm(linear(hid, mb_fc2_w_ref[l], mb_fc2_b_ref[l]) + y2, 5)

        img, bh = x, y

    img_out_ref[...] = img.astype(img_out_ref.dtype)
    bh_out_ref[...] = bh.astype(bh_out_ref.dtype)


# ---------------------------------------------------------------------------
# Wrapper: a single pallas_call for the whole module
# ---------------------------------------------------------------------------

def _rep_mask(t, c, n_head):
    """(n_head*t, c) float32 block-diagonal head mask: 1 where row//t == col//(c//n_head)."""
    dh = c // n_head
    rows = jax.lax.broadcasted_iota(jnp.int32, (n_head * t, c), 0)
    cols = jax.lax.broadcasted_iota(jnp.int32, (n_head * t, c), 1)
    return ((rows // t) == (cols // dh)).astype(jnp.float32)


def co_encode_modle_fused(img, bh, stacked, n_head):
    bsz, t_img, c = img.shape
    _, t_bh, _ = bh.shape
    n_layers = stacked[0].shape[0]

    img2 = img.reshape(bsz * t_img, c)
    bh2 = bh.reshape(bsz * t_bh, c)
    rep_img = _rep_mask(t_img, c, n_head)
    rep_bh = _rep_mask(t_bh, c, n_head)

    def full_spec(shape):
        nd = len(shape)
        return pl.BlockSpec(shape, lambda *_: (0,) * nd)

    in_arrays = [img2, bh2, rep_img, rep_bh] + list(stacked)
    in_specs = [full_spec(a.shape) for a in in_arrays]

    kernel = functools.partial(
        _co_encode_stack_kernel,
        n_layers=n_layers, n_embd=c, n_head=n_head,
        n_batch=bsz, t_img=t_img, t_bh=t_bh)

    out_img, out_bh = pl.pallas_call(
        kernel,
        out_shape=(jax.ShapeDtypeStruct((bsz * t_img, c), img.dtype),
                   jax.ShapeDtypeStruct((bsz * t_bh, c), bh.dtype)),
        grid=(1,),
        in_specs=in_specs,
        out_specs=(full_spec((bsz * t_img, c)), full_spec((bsz * t_bh, c))),
        compiler_params=pltpu.CompilerParams(dimension_semantics=("arbitrary",)),
    )(*in_arrays)
    return out_img.reshape(bsz, t_img, c), out_bh.reshape(bsz, t_bh, c)


# ---------------------------------------------------------------------------
# Parameter init (shapes follow the PyTorch __init__) and packing for the kernel
# ---------------------------------------------------------------------------

def _init_linear(key, cin, cout, scale=0.02):
    kw, kb = jax.random.split(key)
    return {"w": jax.random.normal(kw, (cin, cout), jnp.float32) * scale,
            "b": jax.random.normal(kb, (cout,), jnp.float32) * scale}


def _init_layernorm(c):
    return {"g": jnp.ones((c,), jnp.float32), "b": jnp.zeros((c,), jnp.float32)}


def _init_layer(key, n_embd):
    keys = iter(jax.random.split(key, 32))
    c = n_embd
    co_att = {name: _init_linear(next(keys), c, c) for name in
              ["value_img_to_bh", "key_img_to_bh", "query_img",
               "value_bh_to_img", "key_bh_to_img", "query_bh",
               "proj_img", "proj_bh"]}
    img_att = {name: _init_linear(next(keys), c, c) for name in ["key", "query", "value", "proj"]}
    bh_att = {name: _init_linear(next(keys), c, c) for name in ["key", "query", "value", "proj"]}
    mlp_img = {"fc1": _init_linear(next(keys), c, 4 * c), "fc2": _init_linear(next(keys), 4 * c, c)}
    mlp_bh = {"fc1": _init_linear(next(keys), c, 4 * c), "fc2": _init_linear(next(keys), 4 * c, c)}
    return {
        "co_att": co_att, "img_att": img_att, "bh_att": bh_att,
        "mlp_img": mlp_img, "mlp_bh": mlp_bh,
        "ln_img": _init_layernorm(c), "ln_img2": _init_layernorm(c), "ln_img3": _init_layernorm(c),
        "ln_bh": _init_layernorm(c), "ln_bh2": _init_layernorm(c), "ln_bh3": _init_layernorm(c),
    }


def init_co_encode_modle(key, n_embd, layers):
    return {"blocks": [_init_layer(k, n_embd) for k in jax.random.split(key, layers)]}


def _pack_layer_params(p, n_head):
    """Concatenate QKV weights, fold 1/sqrt(head_dim) into the query weights, stack LN params."""
    c = p["co_att"]["query_img"]["w"].shape[0]
    dh = c // n_head
    scale = 1.0 / math.sqrt(dh)

    def qkv(q, k, v):
        w = jnp.concatenate([q["w"] * scale, k["w"], v["w"]], axis=1)            # (C, 3C)
        b = jnp.concatenate([q["b"] * scale, k["b"], v["b"]], axis=0)[None, :]   # (1, 3C)
        return w, b

    def lin(l):
        return l["w"], l["b"][None, :]

    co, ia, ba = p["co_att"], p["img_att"], p["bh_att"]
    mi, mb = p["mlp_img"], p["mlp_bh"]

    co_iqkv_w, co_iqkv_b = qkv(co["query_img"], co["key_img_to_bh"], co["value_img_to_bh"])
    co_bqkv_w, co_bqkv_b = qkv(co["query_bh"], co["key_bh_to_img"], co["value_bh_to_img"])
    co_pi_w, co_pi_b = lin(co["proj_img"])
    co_pb_w, co_pb_b = lin(co["proj_bh"])
    ia_qkv_w, ia_qkv_b = qkv(ia["query"], ia["key"], ia["value"])
    ia_p_w, ia_p_b = lin(ia["proj"])
    ba_qkv_w, ba_qkv_b = qkv(ba["query"], ba["key"], ba["value"])
    ba_p_w, ba_p_b = lin(ba["proj"])
    mi_fc1_w, mi_fc1_b = lin(mi["fc1"])
    mi_fc2_w, mi_fc2_b = lin(mi["fc2"])
    mb_fc1_w, mb_fc1_b = lin(mb["fc1"])
    mb_fc2_w, mb_fc2_b = lin(mb["fc2"])
    ln_order = ["ln_img", "ln_img2", "ln_img3", "ln_bh", "ln_bh2", "ln_bh3"]
    ln_g = jnp.stack([p[k]["g"] for k in ln_order], axis=0)                      # (6, C)
    ln_b = jnp.stack([p[k]["b"] for k in ln_order], axis=0)                      # (6, C)

    return (co_iqkv_w, co_iqkv_b, co_bqkv_w, co_bqkv_b,
            co_pi_w, co_pi_b, co_pb_w, co_pb_b,
            ia_qkv_w, ia_qkv_b, ia_p_w, ia_p_b,
            ba_qkv_w, ba_qkv_b, ba_p_w, ba_p_b,
            mi_fc1_w, mi_fc1_b, mi_fc2_w, mi_fc2_b,
            mb_fc1_w, mb_fc1_b, mb_fc2_w, mb_fc2_b,
            ln_g, ln_b)


def stack_co_encode_params(params, n_head):
    """Pack per layer, then stack each field along a leading n_layers axis."""
    per_layer = [_pack_layer_params(lp, n_head) for lp in params["blocks"]]
    return tuple(jnp.stack(list(field), axis=0) for field in zip(*per_layer))


# ---------------------------------------------------------------------------
# Pure-JAX reference (direct port of the PyTorch forward) — used for validation
# ---------------------------------------------------------------------------

def _ref_linear(x, l):
    return x @ l["w"] + l["b"]


def _ref_ln(x, l):
    mean = x.mean(-1, keepdims=True)
    var = ((x - mean) ** 2).mean(-1, keepdims=True)
    return (x - mean) * jax.lax.rsqrt(var + 1e-12) * l["g"] + l["b"]


def _ref_split(x, h):
    b, t, c = x.shape
    return x.reshape(b, t, h, c // h).transpose(0, 2, 1, 3)


def _ref_attn(q, k, v):
    dh = q.shape[-1]
    s = jnp.einsum("bhqd,bhkd->bhqk", q, k) * (1.0 / math.sqrt(dh))
    p = jax.nn.softmax(s, axis=-1)
    o = jnp.einsum("bhqk,bhkd->bhqd", p, v)
    b, h, t, d = o.shape
    return o.transpose(0, 2, 1, 3).reshape(b, t, h * d)


def _ref_mhsa(x, p, h):
    q = _ref_split(_ref_linear(x, p["query"]), h)
    k = _ref_split(_ref_linear(x, p["key"]), h)
    v = _ref_split(_ref_linear(x, p["value"]), h)
    return _ref_linear(_ref_attn(q, k, v), p["proj"])


def _ref_layer(img, bh, p, h):
    co = p["co_att"]
    q_img = _ref_split(_ref_linear(img, co["query_img"]), h)
    k_fi = _ref_split(_ref_linear(img, co["key_img_to_bh"]), h)
    v_fi = _ref_split(_ref_linear(img, co["value_img_to_bh"]), h)
    q_bh = _ref_split(_ref_linear(bh, co["query_bh"]), h)
    k_fb = _ref_split(_ref_linear(bh, co["key_bh_to_img"]), h)
    v_fb = _ref_split(_ref_linear(bh, co["value_bh_to_img"]), h)
    x_img = _ref_linear(_ref_attn(q_img, k_fb, v_fb), co["proj_img"])
    y_bh = _ref_linear(_ref_attn(q_bh, k_fi, v_fi), co["proj_bh"])

    x_img = _ref_ln(x_img + img, p["ln_img"])
    x1 = x_img
    x_img = _ref_ln(_ref_mhsa(x_img, p["img_att"], h) + x1, p["ln_img2"])
    x2 = x_img
    hid = jax.nn.gelu(_ref_linear(x_img, p["mlp_img"]["fc1"]), approximate=False)
    x_img = _ref_ln(_ref_linear(hid, p["mlp_img"]["fc2"]) + x2, p["ln_img3"])

    y_bh = _ref_ln(y_bh + bh, p["ln_bh"])
    y1 = y_bh
    y_bh = _ref_ln(_ref_mhsa(y_bh, p["bh_att"], h) + y1, p["ln_bh2"])
    y2 = y_bh
    hid = jax.nn.gelu(_ref_linear(y_bh, p["mlp_bh"]["fc1"]), approximate=False)
    y_bh = _ref_ln(_ref_linear(hid, p["mlp_bh"]["fc2"]) + y2, p["ln_bh3"])
    return x_img, y_bh


def _ref_model(x, y, params, h):
    for lp in params["blocks"]:
        x, y = _ref_layer(x, y, lp, h)
    return x, y


# ---------------------------------------------------------------------------
# Main
# ---------------------------------------------------------------------------

if __name__ == "__main__":
    # config: n_embd = n_img_embd = n_bh_embd = 32, n_head = 4, layers = 2
    n_embd, n_head, layers = 32, 4, 2
    B, T_img, T_bh = 2, 8, 8

    key = jax.random.PRNGKey(0)
    k_params, k_img, k_bh = jax.random.split(key, 3)

    params = init_co_encode_modle(k_params, n_embd, layers)
    stacked = stack_co_encode_params(params, n_head)   # done once, outside the jitted forward

    x_img = jax.random.normal(k_img, (B, T_img, n_embd), jnp.float32)
    y_bh = jax.random.normal(k_bh, (B, T_bh, n_embd), jnp.float32)

    fwd = jax.jit(lambda x, y, w: co_encode_modle_fused(x, y, w, n_head))
    out_img, out_bh = fwd(x_img, y_bh, stacked)
    jax.block_until_ready((out_img, out_bh))

    assert out_img.shape == (B, T_img, n_embd)
    assert out_bh.shape == (B, T_bh, n_embd)
    assert bool(jnp.all(jnp.isfinite(out_img))) and bool(jnp.all(jnp.isfinite(out_bh)))

    # Validate against the pure-JAX port of the PyTorch forward (exact erf GELU / exact
    # softmax). Tolerance covers the kernel's tanh-GELU + approx-reciprocal EUP offload.
    ref_img, ref_bh = _ref_model(x_img, y_bh, params, n_head)
    assert bool(jnp.allclose(out_img, ref_img, atol=5e-3, rtol=5e-3))
    assert bool(jnp.allclose(out_bh, ref_bh, atol=5e-3, rtol=5e-3))

    print("KERNEL_OK")
</pallas_src>

<mosaic_0001>
module attributes {stable_mosaic.version = 11 : i64} {
  func.func @_co_encode_stack_kernel(%arg0: i32, %arg1: memref<16x32xf32, #tpu.memory_space<vmem>>, %arg2: memref<16x32xf32, #tpu.memory_space<vmem>>, %arg3: memref<32x32xf32, #tpu.memory_space<vmem>>, %arg4: memref<32x32xf32, #tpu.memory_space<vmem>>, %arg5: memref<2x32x96xf32, #tpu.memory_space<vmem>>, %arg6: memref<2x1x96xf32, #tpu.memory_space<vmem>>, %arg7: memref<2x32x96xf32, #tpu.memory_space<vmem>>, %arg8: memref<2x1x96xf32, #tpu.memory_space<vmem>>, %arg9: memref<2x32x32xf32, #tpu.memory_space<vmem>>, %arg10: memref<2x1x32xf32, #tpu.memory_space<vmem>>, %arg11: memref<2x32x32xf32, #tpu.memory_space<vmem>>, %arg12: memref<2x1x32xf32, #tpu.memory_space<vmem>>, %arg13: memref<2x32x96xf32, #tpu.memory_space<vmem>>, %arg14: memref<2x1x96xf32, #tpu.memory_space<vmem>>, %arg15: memref<2x32x32xf32, #tpu.memory_space<vmem>>, %arg16: memref<2x1x32xf32, #tpu.memory_space<vmem>>, %arg17: memref<2x32x96xf32, #tpu.memory_space<vmem>>, %arg18: memref<2x1x96xf32, #tpu.memory_space<vmem>>, %arg19: memref<2x32x32xf32, #tpu.memory_space<vmem>>, %arg20: memref<2x1x32xf32, #tpu.memory_space<vmem>>, %arg21: memref<2x32x128xf32, #tpu.memory_space<vmem>>, %arg22: memref<2x1x128xf32, #tpu.memory_space<vmem>>, %arg23: memref<2x128x32xf32, #tpu.memory_space<vmem>>, %arg24: memref<2x1x32xf32, #tpu.memory_space<vmem>>, %arg25: memref<2x32x128xf32, #tpu.memory_space<vmem>>, %arg26: memref<2x1x128xf32, #tpu.memory_space<vmem>>, %arg27: memref<2x128x32xf32, #tpu.memory_space<vmem>>, %arg28: memref<2x1x32xf32, #tpu.memory_space<vmem>>, %arg29: memref<2x6x32xf32, #tpu.memory_space<vmem>>, %arg30: memref<2x6x32xf32, #tpu.memory_space<vmem>>, %arg31: memref<16x32xf32, #tpu.memory_space<vmem>>, %arg32: memref<16x32xf32, #tpu.memory_space<vmem>>) attributes {dimension_semantics = [#tpu.dimension_semantics<arbitrary>], iteration_bounds = array<i64: 1>, scalar_prefetch = 0 : i64, scratch_operands = 0 : i64, tpu.core_type = #tpu.core_type<tc>, window_params = [{pipeline_mode = #tpu.pipeline_mode<synchronous>, transform_indices = @transform_0, window_bounds = array<i64: 16, 32>}, {pipeline_mode = #tpu.pipeline_mode<synchronous>, transform_indices = @transform_1, window_bounds = array<i64: 16, 32>}, {pipeline_mode = #tpu.pipeline_mode<synchronous>, transform_indices = @transform_2, window_bounds = array<i64: 32, 32>}, {pipeline_mode = #tpu.pipeline_mode<synchronous>, transform_indices = @transform_3, window_bounds = array<i64: 32, 32>}, {pipeline_mode = #tpu.pipeline_mode<synchronous>, transform_indices = @transform_4, window_bounds = array<i64: 2, 32, 96>}, {pipeline_mode = #tpu.pipeline_mode<synchronous>, transform_indices = @transform_5, window_bounds = array<i64: 2, 1, 96>}, {pipeline_mode = #tpu.pipeline_mode<synchronous>, transform_indices = @transform_6, window_bounds = array<i64: 2, 32, 96>}, {pipeline_mode = #tpu.pipeline_mode<synchronous>, transform_indices = @transform_7, window_bounds = array<i64: 2, 1, 96>}, {pipeline_mode = #tpu.pipeline_mode<synchronous>, transform_indices = @transform_8, window_bounds = array<i64: 2, 32, 32>}, {pipeline_mode = #tpu.pipeline_mode<synchronous>, transform_indices = @transform_9, window_bounds = array<i64: 2, 1, 32>}, {pipeline_mode = #tpu.pipeline_mode<synchronous>, transform_indices = @transform_10, window_bounds = array<i64: 2, 32, 32>}, {pipeline_mode = #tpu.pipeline_mode<synchronous>, transform_indices = @transform_11, window_bounds = array<i64: 2, 1, 32>}, {pipeline_mode = #tpu.pipeline_mode<synchronous>, transform_indices = @transform_12, window_bounds = array<i64: 2, 32, 96>}, {pipeline_mode = #tpu.pipeline_mode<synchronous>, transform_indices = @transform_13, window_bounds = array<i64: 2, 1, 96>}, {pipeline_mode = #tpu.pipeline_mode<synchronous>, transform_indices = @transform_14, window_bounds = array<i64: 2, 32, 32>}, {pipeline_mode = #tpu.pipeline_mode<synchronous>, transform_indices = @transform_15, window_bounds = array<i64: 2, 1, 32>}, {pipeline_mode = #tpu.pipeline_mode<synchronous>, transform_indices = @transform_16, window_bounds = array<i64: 2, 32, 96>}, {pipeline_mode = #tpu.pipeline_mode<synchronous>, transform_indices = @transform_17, window_bounds = array<i64: 2, 1, 96>}, {pipeline_mode = #tpu.pipeline_mode<synchronous>, transform_indices = @transform_18, window_bounds = array<i64: 2, 32, 32>}, {pipeline_mode = #tpu.pipeline_mode<synchronous>, transform_indices = @transform_19, window_bounds = array<i64: 2, 1, 32>}, {pipeline_mode = #tpu.pipeline_mode<synchronous>, transform_indices = @transform_20, window_bounds = array<i64: 2, 32, 128>}, {pipeline_mode = #tpu.pipeline_mode<synchronous>, transform_indices = @transform_21, window_bounds = array<i64: 2, 1, 128>}, {pipeline_mode = #tpu.pipeline_mode<synchronous>, transform_indices = @transform_22, window_bounds = array<i64: 2, 128, 32>}, {pipeline_mode = #tpu.pipeline_mode<synchronous>, transform_indices = @transform_23, window_bounds = array<i64: 2, 1, 32>}, {pipeline_mode = #tpu.pipeline_mode<synchronous>, transform_indices = @transform_24, window_bounds = array<i64: 2, 32, 128>}, {pipeline_mode = #tpu.pipeline_mode<synchronous>, transform_indices = @transform_25, window_bounds = array<i64: 2, 1, 128>}, {pipeline_mode = #tpu.pipeline_mode<synchronous>, transform_indices = @transform_26, window_bounds = array<i64: 2, 128, 32>}, {pipeline_mode = #tpu.pipeline_mode<synchronous>, transform_indices = @transform_27, window_bounds = array<i64: 2, 1, 32>}, {pipeline_mode = #tpu.pipeline_mode<synchronous>, transform_indices = @transform_28, window_bounds = array<i64: 2, 6, 32>}, {pipeline_mode = #tpu.pipeline_mode<synchronous>, transform_indices = @transform_29, window_bounds = array<i64: 2, 6, 32>}, {pipeline_mode = #tpu.pipeline_mode<synchronous>, transform_indices = @transform_30, window_bounds = array<i64: 16, 32>}, {pipeline_mode = #tpu.pipeline_mode<synchronous>, transform_indices = @transform_31, window_bounds = array<i64: 16, 32>}]} {
    %c0 = arith.constant 0 : index
    %c0_0 = arith.constant 0 : index
    %0 = vector.load %arg3[%c0, %c0_0] : memref<32x32xf32, #tpu.memory_space<vmem>>, vector<32x32xf32>
    %c0_1 = arith.constant 0 : index
    %c0_2 = arith.constant 0 : index
    %1 = vector.load %arg4[%c0_1, %c0_2] : memref<32x32xf32, #tpu.memory_space<vmem>>, vector<32x32xf32>
    %c0_3 = arith.constant 0 : index
    %c0_4 = arith.constant 0 : index
    %2 = vector.load %arg1[%c0_3, %c0_4] : memref<16x32xf32, #tpu.memory_space<vmem>>, vector<16x32xf32>
    %c0_5 = arith.constant 0 : index
    %c0_6 = arith.constant 0 : index
    %3 = vector.load %arg2[%c0_5, %c0_6] : memref<16x32xf32, #tpu.memory_space<vmem>>, vector<16x32xf32>
    %c0_7 = arith.constant 0 : index
    %c0_8 = arith.constant 0 : index
    %c0_9 = arith.constant 0 : index
    %4 = vector.load %arg29[%c0_7, %c0_8, %c0_9] : memref<2x6x32xf32, #tpu.memory_space<vmem>>, vector<1x6x32xf32>
    %5 = vector.shape_cast %4 : vector<1x6x32xf32> to vector<6x32xf32>
    %c0_10 = arith.constant 0 : index
    %c0_11 = arith.constant 0 : index
    %c0_12 = arith.constant 0 : index
    %6 = vector.load %arg30[%c0_10, %c0_11, %c0_12] : memref<2x6x32xf32, #tpu.memory_space<vmem>>, vector<1x6x32xf32>
    %7 = vector.shape_cast %6 : vector<1x6x32xf32> to vector<6x32xf32>
    %c0_13 = arith.constant 0 : index
    %c0_14 = arith.constant 0 : index
    %c0_15 = arith.constant 0 : index
    %8 = vector.load %arg5[%c0_13, %c0_14, %c0_15] : memref<2x32x96xf32, #tpu.memory_space<vmem>>, vector<1x32x96xf32>
    %9 = vector.shape_cast %8 : vector<1x32x96xf32> to vector<32x96xf32>
    %c0_16 = arith.constant 0 : index
    %c0_17 = arith.constant 0 : index
    %c0_18 = arith.constant 0 : index
    %10 = vector.load %arg6[%c0_16, %c0_17, %c0_18] : memref<2x1x96xf32, #tpu.memory_space<vmem>>, vector<1x1x96xf32>
    %11 = vector.shape_cast %10 : vector<1x1x96xf32> to vector<1x96xf32>
    %cst = arith.constant dense<0.000000e+00> : vector<16x96xf32>
    %12 = tpu.matmul %2, %9, %cst {dimension_numbers = #tpu.dot_dimension_numbers<[1], [0], [0], [1], [0, 0, 1, 1], [], []>} : vector<16x32xf32>, vector<32x96xf32>, vector<16x96xf32> -> vector<16x96xf32>
    %13 = vector.broadcast %11 : vector<1x96xf32> to vector<16x96xf32>
    %14 = arith.addf %12, %13 : vector<16x96xf32>
    %c0_19 = arith.constant 0 : index
    %c0_20 = arith.constant 0 : index
    %c0_21 = arith.constant 0 : index
    %15 = vector.load %arg7[%c0_19, %c0_20, %c0_21] : memref<2x32x96xf32, #tpu.memory_space<vmem>>, vector<1x32x96xf32>
    %16 = vector.shape_cast %15 : vector<1x32x96xf32> to vector<32x96xf32>
    %c0_22 = arith.constant 0 : index
    %c0_23 = arith.constant 0 : index
    %c0_24 = arith.constant 0 : index
    %17 = vector.load %arg8[%c0_22, %c0_23, %c0_24] : memref<2x1x96xf32, #tpu.memory_space<vmem>>, vector<1x1x96xf32>
    %18 = vector.shape_cast %17 : vector<1x1x96xf32> to vector<1x96xf32>
    %cst_25 = arith.constant dense<0.000000e+00> : vector<16x96xf32>
    %19 = tpu.matmul %3, %16, %cst_25 {dimension_numbers = #tpu.dot_dimension_numbers<[1], [0], [0], [1], [0, 0, 1, 1], [], []>} : vector<16x32xf32>, vector<32x96xf32>, vector<16x96xf32> -> vector<16x96xf32>
    %20 = vector.broadcast %18 : vector<1x96xf32> to vector<16x96xf32>
    %21 = arith.addf %19, %20 : vector<16x96xf32>
    %c0_26 = arith.constant 0 : index
    %c0_27 = arith.constant 0 : index
    %c0_28 = arith.constant 0 : index
    %22 = vector.load %arg9[%c0_26, %c0_27, %c0_28] : memref<2x32x32xf32, #tpu.memory_space<vmem>>, vector<1x32x32xf32>
    %23 = vector.shape_cast %22 : vector<1x32x32xf32> to vector<32x32xf32>
    %c0_29 = arith.constant 0 : index
    %c0_30 = arith.constant 0 : index
    %c0_31 = arith.constant 0 : index
    %24 = vector.load %arg10[%c0_29, %c0_30, %c0_31] : memref<2x1x32xf32, #tpu.memory_space<vmem>>, vector<1x1x32xf32>
    %25 = vector.shape_cast %24 : vector<1x1x32xf32> to vector<1x32xf32>
    %26 = vector.extract_strided_slice %14 {offsets = [0, 0], sizes = [8, 32], strides = [1, 1]} : vector<16x96xf32> to vector<8x32xf32>
    %27 = vector.extract_strided_slice %21 {offsets = [0, 32], sizes = [8, 32], strides = [1, 1]} : vector<16x96xf32> to vector<8x32xf32>
    %28 = vector.extract_strided_slice %21 {offsets = [0, 64], sizes = [8, 32], strides = [1, 1]} : vector<16x96xf32> to vector<8x32xf32>
    %29 = tpu.concatenate %27, %27, %27, %27 in 0 : vector<8x32xf32>, vector<8x32xf32>, vector<8x32xf32>, vector<8x32xf32> -> vector<32x32xf32>
    %30 = arith.mulf %29, %1 : vector<32x32xf32>
    %31 = tpu.concatenate %28, %28, %28, %28 in 0 : vector<8x32xf32>, vector<8x32xf32>, vector<8x32xf32>, vector<8x32xf32> -> vector<32x32xf32>
    %32 = arith.mulf %31, %1 : vector<32x32xf32>
    %cst_32 = arith.constant dense<0.000000e+00> : vector<8x32xf32>
    %33 = tpu.matmul %26, %30, %cst_32 {dimension_numbers = #tpu.dot_dimension_numbers<[1], [1], [0], [0], [0, 0, 1, 0], [], []>} : vector<8x32xf32>, vector<32x32xf32>, vector<8x32xf32> -> vector<8x32xf32>
    %cst_33 = arith.constant dense<0xFF800000> : vector<8xf32>
    %34 = vector.multi_reduction <maximumf>, %33, %cst_33 [1] : vector<8x32xf32> to vector<8xf32>
    %35 = vector.shape_cast %34 : vector<8xf32> to vector<8x1xf32>
    %36 = vector.broadcast %35 : vector<8x1xf32> to vector<8x32xf32>
    %37 = arith.subf %33, %36 : vector<8x32xf32>
    %38 = math.exp %37 : vector<8x32xf32>
    %cst_34 = arith.constant dense<0.000000e+00> : vector<8x32xf32>
    %39 = tpu.matmul %38, %32, %cst_34 {dimension_numbers = #tpu.dot_dimension_numbers<[1], [0], [0], [1], [0, 0, 1, 1], [], []>} : vector<8x32xf32>, vector<32x32xf32>, vector<8x32xf32> -> vector<8x32xf32>
    %cst_35 = arith.constant dense<0.000000e+00> : vector<8x32xf32>
    %40 = tpu.matmul %38, %1, %cst_35 {dimension_numbers = #tpu.dot_dimension_numbers<[1], [0], [0], [1], [0, 0, 1, 1], [], []>} : vector<8x32xf32>, vector<32x32xf32>, vector<8x32xf32> -> vector<8x32xf32>
    %41 = tpu.reciprocal %40 {approx = true} : vector<8x32xf32> -> vector<8x32xf32>
    %42 = arith.mulf %39, %41 : vector<8x32xf32>
    %43 = vector.extract_strided_slice %14 {offsets = [8, 0], sizes = [8, 32], strides = [1, 1]} : vector<16x96xf32> to vector<8x32xf32>
    %44 = vector.extract_strided_slice %21 {offsets = [8, 32], sizes = [8, 32], strides = [1, 1]} : vector<16x96xf32> to vector<8x32xf32>
    %45 = vector.extract_strided_slice %21 {offsets = [8, 64], sizes = [8, 32], strides = [1, 1]} : vector<16x96xf32> to vector<8x32xf32>
    %46 = tpu.concatenate %44, %44, %44, %44 in 0 : vector<8x32xf32>, vector<8x32xf32>, vector<8x32xf32>, vector<8x32xf32> -> vector<32x32xf32>
    %47 = arith.mulf %46, %1 : vector<32x32xf32>
    %48 = tpu.concatenate %45, %45, %45, %45 in 0 : vector<8x32xf32>, vector<8x32xf32>, vector<8x32xf32>, vector<8x32xf32> -> vector<32x32xf32>
    %49 = arith.mulf %48, %1 : vector<32x32xf32>
    %cst_36 = arith.constant dense<0.000000e+00> : vector<8x32xf32>
    %50 = tpu.matmul %43, %47, %cst_36 {dimension_numbers = #tpu.dot_dimension_numbers<[1], [1], [0], [0], [0, 0, 1, 0], [], []>} : vector<8x32xf32>, vector<32x32xf32>, vector<8x32xf32> -> vector<8x32xf32>
    %cst_37 = arith.constant dense<0xFF800000> : vector<8xf32>
    %51 = vector.multi_reduction <maximumf>, %50, %cst_37 [1] : vector<8x32xf32> to vector<8xf32>
    %52 = vector.shape_cast %51 : vector<8xf32> to vector<8x1xf32>
    %53 = vector.broadcast %52 : vector<8x1xf32> to vector<8x32xf32>
    %54 = arith.subf %50, %53 : vector<8x32xf32>
    %55 = math.exp %54 : vector<8x32xf32>
    %cst_38 = arith.constant dense<0.000000e+00> : vector<8x32xf32>
    %56 = tpu.matmul %55, %49, %cst_38 {dimension_numbers = #tpu.dot_dimension_numbers<[1], [0], [0], [1], [0, 0, 1, 1], [], []>} : vector<8x32xf32>, vector<32x32xf32>, vector<8x32xf32> -> vector<8x32xf32>
    %cst_39 = arith.constant dense<0.000000e+00> : vector<8x32xf32>
    %57 = tpu.matmul %55, %1, %cst_39 {dimension_numbers = #tpu.dot_dimension_numbers<[1], [0], [0], [1], [0, 0, 1, 1], [], []>} : vector<8x32xf32>, vector<32x32xf32>, vector<8x32xf32> -> vector<8x32xf32>
    %58 = tpu.reciprocal %57 {approx = true} : vector<8x32xf32> -> vector<8x32xf32>
    %59 = arith.mulf %56, %58 : vector<8x32xf32>
    %60 = tpu.concatenate %42, %59 in 0 : vector<8x32xf32>, vector<8x32xf32> -> vector<16x32xf32>
    %cst_40 = arith.constant dense<0.000000e+00> : vector<16x32xf32>
    %61 = tpu.matmul %60, %23, %cst_40 {dimension_numbers = #tpu.dot_dimension_numbers<[1], [0], [0], [1], [0, 0, 1, 1], [], []>} : vector<16x32xf32>, vector<32x32xf32>, vector<16x32xf32> -> vector<16x32xf32>
    %62 = vector.broadcast %25 : vector<1x32xf32> to vector<16x32xf32>
    %63 = arith.addf %61, %62 : vector<16x32xf32>
    %c0_41 = arith.constant 0 : index
    %c0_42 = arith.constant 0 : index
    %c0_43 = arith.constant 0 : index
    %64 = vector.load %arg11[%c0_41, %c0_42, %c0_43] : memref<2x32x32xf32, #tpu.memory_space<vmem>>, vector<1x32x32xf32>
    %65 = vector.shape_cast %64 : vector<1x32x32xf32> to vector<32x32xf32>
    %c0_44 = arith.constant 0 : index
    %c0_45 = arith.constant 0 : index
    %c0_46 = arith.constant 0 : index
    %66 = vector.load %arg12[%c0_44, %c0_45, %c0_46] : memref<2x1x32xf32, #tpu.memory_space<vmem>>, vector<1x1x32xf32>
    %67 = vector.shape_cast %66 : vector<1x1x32xf32> to vector<1x32xf32>
    %68 = vector.extract_strided_slice %21 {offsets = [0, 0], sizes = [8, 32], strides = [1, 1]} : vector<16x96xf32> to vector<8x32xf32>
    %69 = vector.extract_strided_slice %14 {offsets = [0, 32], sizes = [8, 32], strides = [1, 1]} : vector<16x96xf32> to vector<8x32xf32>
    %70 = vector.extract_strided_slice %14 {offsets = [0, 64], sizes = [8, 32], strides = [1, 1]} : vector<16x96xf32> to vector<8x32xf32>
    %71 = tpu.concatenate %69, %69, %69, %69 in 0 : vector<8x32xf32>, vector<8x32xf32>, vector<8x32xf32>, vector<8x32xf32> -> vector<32x32xf32>
    %72 = arith.mulf %71, %0 : vector<32x32xf32>
    %73 = tpu.concatenate %70, %70, %70, %70 in 0 : vector<8x32xf32>, vector<8x32xf32>, vector<8x32xf32>, vector<8x32xf32> -> vector<32x32xf32>
    %74 = arith.mulf %73, %0 : vector<32x32xf32>
    %cst_47 = arith.constant dense<0.000000e+00> : vector<8x32xf32>
    %75 = tpu.matmul %68, %72, %cst_47 {dimension_numbers = #tpu.dot_dimension_numbers<[1], [1], [0], [0], [0, 0, 1, 0], [], []>} : vector<8x32xf32>, vector<32x32xf32>, vector<8x32xf32> -> vector<8x32xf32>
    %cst_48 = arith.constant dense<0xFF800000> : vector<8xf32>
    %76 = vector.multi_reduction <maximumf>, %75, %cst_48 [1] : vector<8x32xf32> to vector<8xf32>
    %77 = vector.shape_cast %76 : vector<8xf32> to vector<8x1xf32>
    %78 = vector.broadcast %77 : vector<8x1xf32> to vector<8x32xf32>
    %79 = arith.subf %75, %78 : vector<8x32xf32>
    %80 = math.exp %79 : vector<8x32xf32>
    %cst_49 = arith.constant dense<0.000000e+00> : vector<8x32xf32>
    %81 = tpu.matmul %80, %74, %cst_49 {dimension_numbers = #tpu.dot_dimension_numbers<[1], [0], [0], [1], [0, 0, 1, 1], [], []>} : vector<8x32xf32>, vector<32x32xf32>, vector<8x32xf32> -> vector<8x32xf32>
    %cst_50 = arith.constant dense<0.000000e+00> : vector<8x32xf32>
    %82 = tpu.matmul %80, %0, %cst_50 {dimension_numbers = #tpu.dot_dimension_numbers<[1], [0], [0], [1], [0, 0, 1, 1], [], []>} : vector<8x32xf32>, vector<32x32xf32>, vector<8x32xf32> -> vector<8x32xf32>
    %83 = tpu.reciprocal %82 {approx = true} : vector<8x32xf32> -> vector<8x32xf32>
    %84 = arith.mulf %81, %83 : vector<8x32xf32>
    %85 = vector.extract_strided_slice %21 {offsets = [8, 0], sizes = [8, 32], strides = [1, 1]} : vector<16x96xf32> to vector<8x32xf32>
    %86 = vector.extract_strided_slice %14 {offsets = [8, 32], sizes = [8, 32], strides = [1, 1]} : vector<16x96xf32> to vector<8x32xf32>
    %87 = vector.extract_strided_slice %14 {offsets = [8, 64], sizes = [8, 32], strides = [1, 1]} : vector<16x96xf32> to vector<8x32xf32>
    %88 = tpu.concatenate %86, %86, %86, %86 in 0 : vector<8x32xf32>, vector<8x32xf32>, vector<8x32xf32>, vector<8x32xf32> -> vector<32x32xf32>
    %89 = arith.mulf %88, %0 : vector<32x32xf32>
    %90 = tpu.concatenate %87, %87, %87, %87 in 0 : vector<8x32xf32>, vector<8x32xf32>, vector<8x32xf32>, vector<8x32xf32> -> vector<32x32xf32>
    %91 = arith.mulf %90, %0 : vector<32x32xf32>
    %cst_51 = arith.constant dense<0.000000e+00> : vector<8x32xf32>
    %92 = tpu.matmul %85, %89, %cst_51 {dimension_numbers = #tpu.dot_dimension_numbers<[1], [1], [0], [0], [0, 0, 1, 0], [], []>} : vector<8x32xf32>, vector<32x32xf32>, vector<8x32xf32> -> vector<8x32xf32>
    %cst_52 = arith.constant dense<0xFF800000> : vector<8xf32>
    %93 = vector.multi_reduction <maximumf>, %92, %cst_52 [1] : vector<8x32xf32> to vector<8xf32>
    %94 = vector.shape_cast %93 : vector<8xf32> to vector<8x1xf32>
    %95 = vector.broadcast %94 : vector<8x1xf32> to vector<8x32xf32>
    %96 = arith.subf %92, %95 : vector<8x32xf32>
    %97 = math.exp %96 : vector<8x32xf32>
    %cst_53 = arith.constant dense<0.000000e+00> : vector<8x32xf32>
    %98 = tpu.matmul %97, %91, %cst_53 {dimension_numbers = #tpu.dot_dimension_numbers<[1], [0], [0], [1], [0, 0, 1, 1], [], []>} : vector<8x32xf32>, vector<32x32xf32>, vector<8x32xf32> -> vector<8x32xf32>
    %cst_54 = arith.constant dense<0.000000e+00> : vector<8x32xf32>
    %99 = tpu.matmul %97, %0, %cst_54 {dimension_numbers = #tpu.dot_dimension_numbers<[1], [0], [0], [1], [0, 0, 1, 1], [], []>} : vector<8x32xf32>, vector<32x32xf32>, vector<8x32xf32> -> vector<8x32xf32>
    %100 = tpu.reciprocal %99 {approx = true} : vector<8x32xf32> -> vector<8x32xf32>
    %101 = arith.mulf %98, %100 : vector<8x32xf32>
    %102 = tpu.concatenate %84, %101 in 0 : vector<8x32xf32>, vector<8x32xf32> -> vector<16x32xf32>
    %cst_55 = arith.constant dense<0.000000e+00> : vector<16x32xf32>
    %103 = tpu.matmul %102, %65, %cst_55 {dimension_numbers = #tpu.dot_dimension_numbers<[1], [0], [0], [1], [0, 0, 1, 1], [], []>} : vector<16x32xf32>, vector<32x32xf32>, vector<16x32xf32> -> vector<16x32xf32>
    %104 = vector.broadcast %67 : vector<1x32xf32> to vector<16x32xf32>
    %105 = arith.addf %103, %104 : vector<16x32xf32>
    %106 = arith.addf %63, %2 : vector<16x32xf32>
    %cst_56 = arith.constant dense<0.000000e+00> : vector<16xf32>
    %107 = vector.multi_reduction <add>, %106, %cst_56 [1] : vector<16x32xf32> to vector<16xf32>
    %108 = vector.shape_cast %107 : vector<16xf32> to vector<16x1xf32>
    %cst_57 = arith.constant 3.200000e+01 : f32
    %109 = vector.broadcast %cst_57 : f32 to vector<16x1xf32>
    %110 = arith.divf %108, %109 : vector<16x1xf32>
    %111 = vector.broadcast %110 : vector<16x1xf32> to vector<16x32xf32>
    %112 = arith.subf %106, %111 : vector<16x32xf32>
    %113 = arith.mulf %112, %112 : vector<16x32xf32>
    %cst_58 = arith.constant dense<0.000000e+00> : vector<16xf32>
    %114 = vector.multi_reduction <add>, %113, %cst_58 [1] : vector<16x32xf32> to vector<16xf32>
    %115 = vector.shape_cast %114 : vector<16xf32> to vector<16x1xf32>
    %cst_59 = arith.constant 3.200000e+01 : f32
    %116 = vector.broadcast %cst_59 : f32 to vector<16x1xf32>
    %117 = arith.divf %115, %116 : vector<16x1xf32>
    %118 = vector.broadcast %110 : vector<16x1xf32> to vector<16x32xf32>
    %119 = arith.subf %106, %118 : vector<16x32xf32>
    %cst_60 = arith.constant 9.99999996E-13 : f32
    %120 = vector.broadcast %cst_60 : f32 to vector<16x1xf32>
    %121 = arith.addf %117, %120 : vector<16x1xf32>
    %122 = math.rsqrt %121 : vector<16x1xf32>
    %123 = vector.broadcast %122 : vector<16x1xf32> to vector<16x32xf32>
    %124 = arith.mulf %119, %123 : vector<16x32xf32>
    %125 = vector.extract_strided_slice %5 {offsets = [0, 0], sizes = [1, 32], strides = [1, 1]} : vector<6x32xf32> to vector<1x32xf32>
    %126 = vector.broadcast %125 : vector<1x32xf32> to vector<16x32xf32>
    %127 = arith.mulf %124, %126 : vector<16x32xf32>
    %128 = vector.extract_strided_slice %7 {offsets = [0, 0], sizes = [1, 32], strides = [1, 1]} : vector<6x32xf32> to vector<1x32xf32>
    %129 = vector.broadcast %128 : vector<1x32xf32> to vector<16x32xf32>
    %130 = arith.addf %127, %129 : vector<16x32xf32>
    %c0_61 = arith.constant 0 : index
    %c0_62 = arith.constant 0 : index
    %c0_63 = arith.constant 0 : index
    %131 = vector.load %arg13[%c0_61, %c0_62, %c0_63] : memref<2x32x96xf32, #tpu.memory_space<vmem>>, vector<1x32x96xf32>
    %132 = vector.shape_cast %131 : vector<1x32x96xf32> to vector<32x96xf32>
    %c0_64 = arith.constant 0 : index
    %c0_65 = arith.constant 0 : index
    %c0_66 = arith.constant 0 : index
    %133 = vector.load %arg14[%c0_64, %c0_65, %c0_66] : memref<2x1x96xf32, #tpu.memory_space<vmem>>, vector<1x1x96xf32>
    %134 = vector.shape_cast %133 : vector<1x1x96xf32> to vector<1x96xf32>
    %cst_67 = arith.constant dense<0.000000e+00> : vector<16x96xf32>
    %135 = tpu.matmul %130, %132, %cst_67 {dimension_numbers = #tpu.dot_dimension_numbers<[1], [0], [0], [1], [0, 0, 1, 1], [], []>} : vector<16x32xf32>, vector<32x96xf32>, vector<16x96xf32> -> vector<16x96xf32>
    %136 = vector.broadcast %134 : vector<1x96xf32> to vector<16x96xf32>
    %137 = arith.addf %135, %136 : vector<16x96xf32>
    %c0_68 = arith.constant 0 : index
    %c0_69 = arith.constant 0 : index
    %c0_70 = arith.constant 0 : index
    %138 = vector.load %arg15[%c0_68, %c0_69, %c0_70] : memref<2x32x32xf32, #tpu.memory_space<vmem>>, vector<1x32x32xf32>
    %139 = vector.shape_cast %138 : vector<1x32x32xf32> to vector<32x32xf32>
    %c0_71 = arith.constant 0 : index
    %c0_72 = arith.constant 0 : index
    %c0_73 = arith.constant 0 : index
    %140 = vector.load %arg16[%c0_71, %c0_72, %c0_73] : memref<2x1x32xf32, #tpu.memory_space<vmem>>, vector<1x1x32xf32>
    %141 = vector.shape_cast %140 : vector<1x1x32xf32> to vector<1x32xf32>
    %142 = vector.extract_strided_slice %137 {offsets = [0, 0], sizes = [8, 32], strides = [1, 1]} : vector<16x96xf32> to vector<8x32xf32>
    %143 = vector.extract_strided_slice %137 {offsets = [0, 32], sizes = [8, 32], strides = [1, 1]} : vector<16x96xf32> to vector<8x32xf32>
    %144 = vector.extract_strided_slice %137 {offsets = [0, 64], sizes = [8, 32], strides = [1, 1]} : vector<16x96xf32> to vector<8x32xf32>
    %145 = tpu.concatenate %143, %143, %143, %143 in 0 : vector<8x32xf32>, vector<8x32xf32>, vector<8x32xf32>, vector<8x32xf32> -> vector<32x32xf32>
    %146 = arith.mulf %145, %0 : vector<32x32xf32>
    %147 = tpu.concatenate %144, %144, %144, %144 in 0 : vector<8x32xf32>, vector<8x32xf32>, vector<8x32xf32>, vector<8x32xf32> -> vector<32x32xf32>
    %148 = arith.mulf %147, %0 : vector<32x32xf32>
    %cst_74 = arith.constant dense<0.000000e+00> : vector<8x32xf32>
    %149 = tpu.matmul %142, %146, %cst_74 {dimension_numbers = #tpu.dot_dimension_numbers<[1], [1], [0], [0], [0, 0, 1, 0], [], []>} : vector<8x32xf32>, vector<32x32xf32>, vector<8x32xf32> -> vector<8x32xf32>
    %cst_75 = arith.constant dense<0xFF800000> : vector<8xf32>
    %150 = vector.multi_reduction <maximumf>, %149, %cst_75 [1] : vector<8x32xf32> to vector<8xf32>
    %151 = vector.shape_cast %150 : vector<8xf32> to vector<8x1xf32>
    %152 = vector.broadcast %151 : vector<8x1xf32> to vector<8x32xf32>
    %153 = arith.subf %149, %152 : vector<8x32xf32>
    %154 = math.exp %153 : vector<8x32xf32>
    %cst_76 = arith.constant dense<0.000000e+00> : vector<8x32xf32>
    %155 = tpu.matmul %154, %148, %cst_76 {dimension_numbers = #tpu.dot_dimension_numbers<[1], [0], [0], [1], [0, 0, 1, 1], [], []>} : vector<8x32xf32>, vector<32x32xf32>, vector<8x32xf32> -> vector<8x32xf32>
    %cst_77 = arith.constant dense<0.000000e+00> : vector<8x32xf32>
    %156 = tpu.matmul %154, %0, %cst_77 {dimension_numbers = #tpu.dot_dimension_numbers<[1], [0], [0], [1], [0, 0, 1, 1], [], []>} : vector<8x32xf32>, vector<32x32xf32>, vector<8x32xf32> -> vector<8x32xf32>
    %157 = tpu.reciprocal %156 {approx = true} : vector<8x32xf32> -> vector<8x32xf32>
    %158 = arith.mulf %155, %157 : vector<8x32xf32>
    %159 = vector.extract_strided_slice %137 {offsets = [8, 0], sizes = [8, 32], strides = [1, 1]} : vector<16x96xf32> to vector<8x32xf32>
    %160 = vector.extract_strided_slice %137 {offsets = [8, 32], sizes = [8, 32], strides = [1, 1]} : vector<16x96xf32> to vector<8x32xf32>
    %161 = vector.extract_strided_slice %137 {offsets = [8, 64], sizes = [8, 32], strides = [1, 1]} : vector<16x96xf32> to vector<8x32xf32>
    %162 = tpu.concatenate %160, %160, %160, %160 in 0 : vector<8x32xf32>, vector<8x32xf32>, vector<8x32xf32>, vector<8x32xf32> -> vector<32x32xf32>
    %163 = arith.mulf %162, %0 : vector<32x32xf32>
    %164 = tpu.concatenate %161, %161, %161, %161 in 0 : vector<8x32xf32>, vector<8x32xf32>, vector<8x32xf32>, vector<8x32xf32> -> vector<32x32xf32>
    %165 = arith.mulf %164, %0 : vector<32x32xf32>
    %cst_78 = arith.constant dense<0.000000e+00> : vector<8x32xf32>
    %166 = tpu.matmul %159, %163, %cst_78 {dimension_numbers = #tpu.dot_dimension_numbers<[1], [1], [0], [0], [0, 0, 1, 0], [], []>} : vector<8x32xf32>, vector<32x32xf32>, vector<8x32xf32> -> vector<8x32xf32>
    %cst_79 = arith.constant dense<0xFF800000> : vector<8xf32>
    %167 = vector.multi_reduction <maximumf>, %166, %cst_79 [1] : vector<8x32xf32> to vector<8xf32>
    %168 = vector.shape_cast %167 : vector<8xf32> to vector<8x1xf32>
    %169 = vector.broadcast %168 : vector<8x1xf32> to vector<8x32xf32>
    %170 = arith.subf %166, %169 : vector<8x32xf32>
    %171 = math.exp %170 : vector<8x32xf32>
    %cst_80 = arith.constant dense<0.000000e+00> : vector<8x32xf32>
    %172 = tpu.matmul %171, %165, %cst_80 {dimension_numbers = #tpu.dot_dimension_numbers<[1], [0], [0], [1], [0, 0, 1, 1], [], []>} : vector<8x32xf32>, vector<32x32xf32>, vector<8x32xf32> -> vector<8x32xf32>
    %cst_81 = arith.constant dense<0.000000e+00> : vector<8x32xf32>
    %173 = tpu.matmul %171, %0, %cst_81 {dimension_numbers = #tpu.dot_dimension_numbers<[1], [0], [0], [1], [0, 0, 1, 1], [], []>} : vector<8x32xf32>, vector<32x32xf32>, vector<8x32xf32> -> vector<8x32xf32>
    %174 = tpu.reciprocal %173 {approx = true} : vector<8x32xf32> -> vector<8x32xf32>
    %175 = arith.mulf %172, %174 : vector<8x32xf32>
    %176 = tpu.concatenate %158, %175 in 0 : vector<8x32xf32>, vector<8x32xf32> -> vector<16x32xf32>
    %cst_82 = arith.constant dense<0.000000e+00> : vector<16x32xf32>
    %177 = tpu.matmul %176, %139, %cst_82 {dimension_numbers = #tpu.dot_dimension_numbers<[1], [0], [0], [1], [0, 0, 1, 1], [], []>} : vector<16x32xf32>, vector<32x32xf32>, vector<16x32xf32> -> vector<16x32xf32>
    %178 = vector.broadcast %141 : vector<1x32xf32> to vector<16x32xf32>
    %179 = arith.addf %177, %178 : vector<16x32xf32>
    %180 = arith.addf %179, %130 : vector<16x32xf32>
    %cst_83 = arith.constant dense<0.000000e+00> : vector<16xf32>
    %181 = vector.multi_reduction <add>, %180, %cst_83 [1] : vector<16x32xf32> to vector<16xf32>
    %182 = vector.shape_cast %181 : vector<16xf32> to vector<16x1xf32>
    %cst_84 = arith.constant 3.200000e+01 : f32
    %183 = vector.broadcast %cst_84 : f32 to vector<16x1xf32>
    %184 = arith.divf %182, %183 : vector<16x1xf32>
    %185 = vector.broadcast %184 : vector<16x1xf32> to vector<16x32xf32>
    %186 = arith.subf %180, %185 : vector<16x32xf32>
    %187 = arith.mulf %186, %186 : vector<16x32xf32>
    %cst_85 = arith.constant dense<0.000000e+00> : vector<16xf32>
    %188 = vector.multi_reduction <add>, %187, %cst_85 [1] : vector<16x32xf32> to vector<16xf32>
    %189 = vector.shape_cast %188 : vector<16xf32> to vector<16x1xf32>
    %cst_86 = arith.constant 3.200000e+01 : f32
    %190 = vector.broadcast %cst_86 : f32 to vector<16x1xf32>
    %191 = arith.divf %189, %190 : vector<16x1xf32>
    %192 = vector.broadcast %184 : vector<16x1xf32> to vector<16x32xf32>
    %193 = arith.subf %180, %192 : vector<16x32xf32>
    %cst_87 = arith.constant 9.99999996E-13 : f32
    %194 = vector.broadcast %cst_87 : f32 to vector<16x1xf32>
    %195 = arith.addf %191, %194 : vector<16x1xf32>
    %196 = math.rsqrt %195 : vector<16x1xf32>
    %197 = vector.broadcast %196 : vector<16x1xf32> to vector<16x32xf32>
    %198 = arith.mulf %193, %197 : vector<16x32xf32>
    %199 = vector.extract_strided_slice %5 {offsets = [1, 0], sizes = [1, 32], strides = [1, 1]} : vector<6x32xf32> to vector<1x32xf32>
    %200 = vector.broadcast %199 : vector<1x32xf32> to vector<16x32xf32>
    %201 = arith.mulf %198, %200 : vector<16x32xf32>
    %202 = vector.extract_strided_slice %7 {offsets = [1, 0], sizes = [1, 32], strides = [1, 1]} : vector<6x32xf32> to vector<1x32xf32>
    %203 = vector.broadcast %202 : vector<1x32xf32> to vector<16x32xf32>
    %204 = arith.addf %201, %203 : vector<16x32xf32>
    %c0_88 = arith.constant 0 : index
    %c0_89 = arith.constant 0 : index
    %c0_90 = arith.constant 0 : index
    %205 = vector.load %arg21[%c0_88, %c0_89, %c0_90] : memref<2x32x128xf32, #tpu.memory_space<vmem>>, vector<1x32x128xf32>
    %206 = vector.shape_cast %205 : vector<1x32x128xf32> to vector<32x128xf32>
    %c0_91 = arith.constant 0 : index
    %c0_92 = arith.constant 0 : index
    %c0_93 = arith.constant 0 : index
    %207 = vector.load %arg22[%c0_91, %c0_92, %c0_93] : memref<2x1x128xf32, #tpu.memory_space<vmem>>, vector<1x1x128xf32>
    %208 = vector.shape_cast %207 : vector<1x1x128xf32> to vector<1x128xf32>
    %cst_94 = arith.constant dense<0.000000e+00> : vector<16x128xf32>
    %209 = tpu.matmul %204, %206, %cst_94 {dimension_numbers = #tpu.dot_dimension_numbers<[1], [0], [0], [1], [0, 0, 1, 1], [], []>} : vector<16x32xf32>, vector<32x128xf32>, vector<16x128xf32> -> vector<16x128xf32>
    %210 = vector.broadcast %208 : vector<1x128xf32> to vector<16x128xf32>
    %211 = arith.addf %209, %210 : vector<16x128xf32>
    %212 = arith.mulf %211, %211 : vector<16x128xf32>
    %213 = arith.mulf %211, %212 : vector<16x128xf32>
    %cst_95 = arith.constant 4.471500e-02 : f32
    %214 = vector.broadcast %cst_95 : f32 to vector<16x128xf32>
    %215 = arith.mulf %214, %213 : vector<16x128xf32>
    %216 = arith.addf %211, %215 : vector<16x128xf32>
    %cst_96 = arith.constant 0.797884583 : f32
    %217 = vector.broadcast %cst_96 : f32 to vector<16x128xf32>
    %218 = arith.mulf %217, %216 : vector<16x128xf32>
    %219 = math.tanh %218 : vector<16x128xf32>
    %cst_97 = arith.constant 1.000000e+00 : f32
    %220 = vector.broadcast %cst_97 : f32 to vector<16x128xf32>
    %221 = arith.addf %220, %219 : vector<16x128xf32>
    %cst_98 = arith.constant 5.000000e-01 : f32
    %222 = vector.broadcast %cst_98 : f32 to vector<16x128xf32>
    %223 = arith.mulf %222, %221 : vector<16x128xf32>
    %224 = arith.mulf %211, %223 : vector<16x128xf32>
    %c0_99 = arith.constant 0 : index
    %c0_100 = arith.constant 0 : index
    %c0_101 = arith.constant 0 : index
    %225 = vector.load %arg23[%c0_99, %c0_100, %c0_101] : memref<2x128x32xf32, #tpu.memory_space<vmem>>, vector<1x128x32xf32>
    %226 = vector.shape_cast %225 : vector<1x128x32xf32> to vector<128x32xf32>
    %c0_102 = arith.constant 0 : index
    %c0_103 = arith.constant 0 : index
    %c0_104 = arith.constant 0 : index
    %227 = vector.load %arg24[%c0_102, %c0_103, %c0_104] : memref<2x1x32xf32, #tpu.memory_space<vmem>>, vector<1x1x32xf32>
    %228 = vector.shape_cast %227 : vector<1x1x32xf32> to vector<1x32xf32>
    %cst_105 = arith.constant dense<0.000000e+00> : vector<16x32xf32>
    %229 = tpu.matmul %224, %226, %cst_105 {dimension_numbers = #tpu.dot_dimension_numbers<[1], [0], [0], [1], [0, 0, 1, 1], [], []>} : vector<16x128xf32>, vector<128x32xf32>, vector<16x32xf32> -> vector<16x32xf32>
    %230 = vector.broadcast %228 : vector<1x32xf32> to vector<16x32xf32>
    %231 = arith.addf %229, %230 : vector<16x32xf32>
    %232 = arith.addf %231, %204 : vector<16x32xf32>
    %cst_106 = arith.constant dense<0.000000e+00> : vector<16xf32>
    %233 = vector.multi_reduction <add>, %232, %cst_106 [1] : vector<16x32xf32> to vector<16xf32>
    %234 = vector.shape_cast %233 : vector<16xf32> to vector<16x1xf32>
    %cst_107 = arith.constant 3.200000e+01 : f32
    %235 = vector.broadcast %cst_107 : f32 to vector<16x1xf32>
    %236 = arith.divf %234, %235 : vector<16x1xf32>
    %237 = vector.broadcast %236 : vector<16x1xf32> to vector<16x32xf32>
    %238 = arith.subf %232, %237 : vector<16x32xf32>
    %239 = arith.mulf %238, %238 : vector<16x32xf32>
    %cst_108 = arith.constant dense<0.000000e+00> : vector<16xf32>
    %240 = vector.multi_reduction <add>, %239, %cst_108 [1] : vector<16x32xf32> to vector<16xf32>
    %241 = vector.shape_cast %240 : vector<16xf32> to vector<16x1xf32>
    %cst_109 = arith.constant 3.200000e+01 : f32
    %242 = vector.broadcast %cst_109 : f32 to vector<16x1xf32>
    %243 = arith.divf %241, %242 : vector<16x1xf32>
    %244 = vector.broadcast %236 : vector<16x1xf32> to vector<16x32xf32>
    %245 = arith.subf %232, %244 : vector<16x32xf32>
    %cst_110 = arith.constant 9.99999996E-13 : f32
    %246 = vector.broadcast %cst_110 : f32 to vector<16x1xf32>
    %247 = arith.addf %243, %246 : vector<16x1xf32>
    %248 = math.rsqrt %247 : vector<16x1xf32>
    %249 = vector.broadcast %248 : vector<16x1xf32> to vector<16x32xf32>
    %250 = arith.mulf %245, %249 : vector<16x32xf32>
    %251 = vector.extract_strided_slice %5 {offsets = [2, 0], sizes = [1, 32], strides = [1, 1]} : vector<6x32xf32> to vector<1x32xf32>
    %252 = vector.broadcast %251 : vector<1x32xf32> to vector<16x32xf32>
    %253 = arith.mulf %250, %252 : vector<16x32xf32>
    %254 = vector.extract_strided_slice %7 {offsets = [2, 0], sizes = [1, 32], strides = [1, 1]} : vector<6x32xf32> to vector<1x32xf32>
    %255 = vector.broadcast %254 : vector<1x32xf32> to vector<16x32xf32>
    %256 = arith.addf %253, %255 : vector<16x32xf32>
    %257 = arith.addf %105, %3 : vector<16x32xf32>
    %cst_111 = arith.constant dense<0.000000e+00> : vector<16xf32>
    %258 = vector.multi_reduction <add>, %257, %cst_111 [1] : vector<16x32xf32> to vector<16xf32>
    %259 = vector.shape_cast %258 : vector<16xf32> to vector<16x1xf32>
    %cst_112 = arith.constant 3.200000e+01 : f32
    %260 = vector.broadcast %cst_112 : f32 to vector<16x1xf32>
    %261 = arith.divf %259, %260 : vector<16x1xf32>
    %262 = vector.broadcast %261 : vector<16x1xf32> to vector<16x32xf32>
    %263 = arith.subf %257, %262 : vector<16x32xf32>
    %264 = arith.mulf %263, %263 : vector<16x32xf32>
    %cst_113 = arith.constant dense<0.000000e+00> : vector<16xf32>
    %265 = vector.multi_reduction <add>, %264, %cst_113 [1] : vector<16x32xf32> to vector<16xf32>
    %266 = vector.shape_cast %265 : vector<16xf32> to vector<16x1xf32>
    %cst_114 = arith.constant 3.200000e+01 : f32
    %267 = vector.broadcast %cst_114 : f32 to vector<16x1xf32>
    %268 = arith.divf %266, %267 : vector<16x1xf32>
    %269 = vector.broadcast %261 : vector<16x1xf32> to vector<16x32xf32>
    %270 = arith.subf %257, %269 : vector<16x32xf32>
    %cst_115 = arith.constant 9.99999996E-13 : f32
    %271 = vector.broadcast %cst_115 : f32 to vector<16x1xf32>
    %272 = arith.addf %268, %271 : vector<16x1xf32>
    %273 = math.rsqrt %272 : vector<16x1xf32>
    %274 = vector.broadcast %273 : vector<16x1xf32> to vector<16x32xf32>
    %275 = arith.mulf %270, %274 : vector<16x32xf32>
    %276 = vector.extract_strided_slice %5 {offsets = [3, 0], sizes = [1, 32], strides = [1, 1]} : vector<6x32xf32> to vector<1x32xf32>
    %277 = vector.broadcast %276 : vector<1x32xf32> to vector<16x32xf32>
    %278 = arith.mulf %275, %277 : vector<16x32xf32>
    %279 = vector.extract_strided_slice %7 {offsets = [3, 0], sizes = [1, 32], strides = [1, 1]} : vector<6x32xf32> to vector<1x32xf32>
    %280 = vector.broadcast %279 : vector<1x32xf32> to vector<16x32xf32>
    %281 = arith.addf %278, %280 : vector<16x32xf32>
    %c0_116 = arith.constant 0 : index
    %c0_117 = arith.constant 0 : index
    %c0_118 = arith.constant 0 : index
    %282 = vector.load %arg17[%c0_116, %c0_117, %c0_118] : memref<2x32x96xf32, #tpu.memory_space<vmem>>, vector<1x32x96xf32>
    %283 = vector.shape_cast %282 : vector<1x32x96xf32> to vector<32x96xf32>
    %c0_119 = arith.constant 0 : index
    %c0_120 = arith.constant 0 : index
    %c0_121 = arith.constant 0 : index
    %284 = vector.load %arg18[%c0_119, %c0_120, %c0_121] : memref<2x1x96xf32, #tpu.memory_space<vmem>>, vector<1x1x96xf32>
    %285 = vector.shape_cast %284 : vector<1x1x96xf32> to vector<1x96xf32>
    %cst_122 = arith.constant dense<0.000000e+00> : vector<16x96xf32>
    %286 = tpu.matmul %281, %283, %cst_122 {dimension_numbers = #tpu.dot_dimension_numbers<[1], [0], [0], [1], [0, 0, 1, 1], [], []>} : vector<16x32xf32>, vector<32x96xf32>, vector<16x96xf32> -> vector<16x96xf32>
    %287 = vector.broadcast %285 : vector<1x96xf32> to vector<16x96xf32>
    %288 = arith.addf %286, %287 : vector<16x96xf32>
    %c0_123 = arith.constant 0 : index
    %c0_124 = arith.constant 0 : index
    %c0_125 = arith.constant 0 : index
    %289 = vector.load %arg19[%c0_123, %c0_124, %c0_125] : memref<2x32x32xf32, #tpu.memory_space<vmem>>, vector<1x32x32xf32>
    %290 = vector.shape_cast %289 : vector<1x32x32xf32> to vector<32x32xf32>
    %c0_126 = arith.constant 0 : index
    %c0_127 = arith.constant 0 : index
    %c0_128 = arith.constant 0 : index
    %291 = vector.load %arg20[%c0_126, %c0_127, %c0_128] : memref<2x1x32xf32, #tpu.memory_space<vmem>>, vector<1x1x32xf32>
    %292 = vector.shape_cast %291 : vector<1x1x32xf32> to vector<1x32xf32>
    %293 = vector.extract_strided_slice %288 {offsets = [0, 0], sizes = [8, 32], strides = [1, 1]} : vector<16x96xf32> to vector<8x32xf32>
    %294 = vector.extract_strided_slice %288 {offsets = [0, 32], sizes = [8, 32], strides = [1, 1]} : vector<16x96xf32> to vector<8x32xf32>
    %295 = vector.extract_strided_slice %288 {offsets = [0, 64], sizes = [8, 32], strides = [1, 1]} : vector<16x96xf32> to vector<8x32xf32>
    %296 = tpu.concatenate %294, %294, %294, %294 in 0 : vector<8x32xf32>, vector<8x32xf32>, vector<8x32xf32>, vector<8x32xf32> -> vector<32x32xf32>
    %297 = arith.mulf %296, %1 : vector<32x32xf32>
    %298 = tpu.concatenate %295, %295, %295, %295 in 0 : vector<8x32xf32>, vector<8x32xf32>, vector<8x32xf32>, vector<8x32xf32> -> vector<32x32xf32>
    %299 = arith.mulf %298, %1 : vector<32x32xf32>
    %cst_129 = arith.constant dense<0.000000e+00> : vector<8x32xf32>
    %300 = tpu.matmul %293, %297, %cst_129 {dimension_numbers = #tpu.dot_dimension_numbers<[1], [1], [0], [0], [0, 0, 1, 0], [], []>} : vector<8x32xf32>, vector<32x32xf32>, vector<8x32xf32> -> vector<8x32xf32>
    %cst_130 = arith.constant dense<0xFF800000> : vector<8xf32>
    %301 = vector.multi_reduction <maximumf>, %300, %cst_130 [1] : vector<8x32xf32> to vector<8xf32>
    %302 = vector.shape_cast %301 : vector<8xf32> to vector<8x1xf32>
    %303 = vector.broadcast %302 : vector<8x1xf32> to vector<8x32xf32>
    %304 = arith.subf %300, %303 : vector<8x32xf32>
    %305 = math.exp %304 : vector<8x32xf32>
    %cst_131 = arith.constant dense<0.000000e+00> : vector<8x32xf32>
    %306 = tpu.matmul %305, %299, %cst_131 {dimension_numbers = #tpu.dot_dimension_numbers<[1], [0], [0], [1], [0, 0, 1, 1], [], []>} : vector<8x32xf32>, vector<32x32xf32>, vector<8x32xf32> -> vector<8x32xf32>
    %cst_132 = arith.constant dense<0.000000e+00> : vector<8x32xf32>
    %307 = tpu.matmul %305, %1, %cst_132 {dimension_numbers = #tpu.dot_dimension_numbers<[1], [0], [0], [1], [0, 0, 1, 1], [], []>} : vector<8x32xf32>, vector<32x32xf32>, vector<8x32xf32> -> vector<8x32xf32>
    %308 = tpu.reciprocal %307 {approx = true} : vector<8x32xf32> -> vector<8x32xf32>
    %309 = arith.mulf %306, %308 : vector<8x32xf32>
    %310 = vector.extract_strided_slice %288 {offsets = [8, 0], sizes = [8, 32], strides = [1, 1]} : vector<16x96xf32> to vector<8x32xf32>
    %311 = vector.extract_strided_slice %288 {offsets = [8, 32], sizes = [8, 32], strides = [1, 1]} : vector<16x96xf32> to vector<8x32xf32>
    %312 = vector.extract_strided_slice %288 {offsets = [8, 64], sizes = [8, 32], strides = [1, 1]} : vector<16x96xf32> to vector<8x32xf32>
    %313 = tpu.concatenate %311, %311, %311, %311 in 0 : vector<8x32xf32>, vector<8x32xf32>, vector<8x32xf32>, vector<8x32xf32> -> vector<32x32xf32>
    %314 = arith.mulf %313, %1 : vector<32x32xf32>
    %315 = tpu.concatenate %312, %312, %312, %312 in 0 : vector<8x32xf32>, vector<8x32xf32>, vector<8x32xf32>, vector<8x32xf32> -> vector<32x32xf32>
    %316 = arith.mulf %315, %1 : vector<32x32xf32>
    %cst_133 = arith.constant dense<0.000000e+00> : vector<8x32xf32>
    %317 = tpu.matmul %310, %314, %cst_133 {dimension_numbers = #tpu.dot_dimension_numbers<[1], [1], [0], [0], [0, 0, 1, 0], [], []>} : vector<8x32xf32>, vector<32x32xf32>, vector<8x32xf32> -> vector<8x32xf32>
    %cst_134 = arith.constant dense<0xFF800000> : vector<8xf32>
    %318 = vector.multi_reduction <maximumf>, %317, %cst_134 [1] : vector<8x32xf32> to vector<8xf32>
    %319 = vector.shape_cast %318 : vector<8xf32> to vector<8x1xf32>
    %320 = vector.broadcast %319 : vector<8x1xf32> to vector<8x32xf32>
    %321 = arith.subf %317, %320 : vector<8x32xf32>
    %322 = math.exp %321 : vector<8x32xf32>
    %cst_135 = arith.constant dense<0.000000e+00> : vector<8x32xf32>
    %323 = tpu.matmul %322, %316, %cst_135 {dimension_numbers = #tpu.dot_dimension_numbers<[1], [0], [0], [1], [0, 0, 1, 1], [], []>} : vector<8x32xf32>, vector<32x32xf32>, vector<8x32xf32> -> vector<8x32xf32>
    %cst_136 = arith.constant dense<0.000000e+00> : vector<8x32xf32>
    %324 = tpu.matmul %322, %1, %cst_136 {dimension_numbers = #tpu.dot_dimension_numbers<[1], [0], [0], [1], [0, 0, 1, 1], [], []>} : vector<8x32xf32>, vector<32x32xf32>, vector<8x32xf32> -> vector<8x32xf32>
    %325 = tpu.reciprocal %324 {approx = true} : vector<8x32xf32> -> vector<8x32xf32>
    %326 = arith.mulf %323, %325 : vector<8x32xf32>
    %327 = tpu.concatenate %309, %326 in 0 : vector<8x32xf32>, vector<8x32xf32> -> vector<16x32xf32>
    %cst_137 = arith.constant dense<0.000000e+00> : vector<16x32xf32>
    %328 = tpu.matmul %327, %290, %cst_137 {dimension_numbers = #tpu.dot_dimension_numbers<[1], [0], [0], [1], [0, 0, 1, 1], [], []>} : vector<16x32xf32>, vector<32x32xf32>, vector<16x32xf32> -> vector<16x32xf32>
    %329 = vector.broadcast %292 : vector<1x32xf32> to vector<16x32xf32>
    %330 = arith.addf %328, %329 : vector<16x32xf32>
    %331 = arith.addf %330, %281 : vector<16x32xf32>
    %cst_138 = arith.constant dense<0.000000e+00> : vector<16xf32>
    %332 = vector.multi_reduction <add>, %331, %cst_138 [1] : vector<16x32xf32> to vector<16xf32>
    %333 = vector.shape_cast %332 : vector<16xf32> to vector<16x1xf32>
    %cst_139 = arith.constant 3.200000e+01 : f32
    %334 = vector.broadcast %cst_139 : f32 to vector<16x1xf32>
    %335 = arith.divf %333, %334 : vector<16x1xf32>
    %336 = vector.broadcast %335 : vector<16x1xf32> to vector<16x32xf32>
    %337 = arith.subf %331, %336 : vector<16x32xf32>
    %338 = arith.mulf %337, %337 : vector<16x32xf32>
    %cst_140 = arith.constant dense<0.000000e+00> : vector<16xf32>
    %339 = vector.multi_reduction <add>, %338, %cst_140 [1] : vector<16x32xf32> to vector<16xf32>
    %340 = vector.shape_cast %339 : vector<16xf32> to vector<16x1xf32>
    %cst_141 = arith.constant 3.200000e+01 : f32
    %341 = vector.broadcast %cst_141 : f32 to vector<16x1xf32>
    %342 = arith.divf %340, %341 : vector<16x1xf32>
    %343 = vector.broadcast %335 : vector<16x1xf32> to vector<16x32xf32>
    %344 = arith.subf %331, %343 : vector<16x32xf32>
    %cst_142 = arith.constant 9.99999996E-13 : f32
    %345 = vector.broadcast %cst_142 : f32 to vector<16x1xf32>
    %346 = arith.addf %342, %345 : vector<16x1xf32>
    %347 = math.rsqrt %346 : vector<16x1xf32>
    %348 = vector.broadcast %347 : vector<16x1xf32> to vector<16x32xf32>
    %349 = arith.mulf %344, %348 : vector<16x32xf32>
    %350 = vector.extract_strided_slice %5 {offsets = [4, 0], sizes = [1, 32], strides = [1, 1]} : vector<6x32xf32> to vector<1x32xf32>
    %351 = vector.broadcast %350 : vector<1x32xf32> to vector<16x32xf32>
    %352 = arith.mulf %349, %351 : vector<16x32xf32>
    %353 = vector.extract_strided_slice %7 {offsets = [4, 0], sizes = [1, 32], strides = [1, 1]} : vector<6x32xf32> to vector<1x32xf32>
    %354 = vector.broadcast %353 : vector<1x32xf32> to vector<16x32xf32>
    %355 = arith.addf %352, %354 : vector<16x32xf32>
    %c0_143 = arith.constant 0 : index
    %c0_144 = arith.constant 0 : index
    %c0_145 = arith.constant 0 : index
    %356 = vector.load %arg25[%c0_143, %c0_144, %c0_145] : memref<2x32x128xf32, #tpu.memory_space<vmem>>, vector<1x32x128xf32>
    %357 = vector.shape_cast %356 : vector<1x32x128xf32> to vector<32x128xf32>
    %c0_146 = arith.constant 0 : index
    %c0_147 = arith.constant 0 : index
    %c0_148 = arith.constant 0 : index
    %358 = vector.load %arg26[%c0_146, %c0_147, %c0_148] : memref<2x1x128xf32, #tpu.memory_space<vmem>>, vector<1x1x128xf32>
    %359 = vector.shape_cast %358 : vector<1x1x128xf32> to vector<1x128xf32>
    %cst_149 = arith.constant dense<0.000000e+00> : vector<16x128xf32>
    %360 = tpu.matmul %355, %357, %cst_149 {dimension_numbers = #tpu.dot_dimension_numbers<[1], [0], [0], [1], [0, 0, 1, 1], [], []>} : vector<16x32xf32>, vector<32x128xf32>, vector<16x128xf32> -> vector<16x128xf32>
    %361 = vector.broadcast %359 : vector<1x128xf32> to vector<16x128xf32>
    %362 = arith.addf %360, %361 : vector<16x128xf32>
    %363 = arith.mulf %362, %362 : vector<16x128xf32>
    %364 = arith.mulf %362, %363 : vector<16x128xf32>
    %cst_150 = arith.constant 4.471500e-02 : f32
    %365 = vector.broadcast %cst_150 : f32 to vector<16x128xf32>
    %366 = arith.mulf %365, %364 : vector<16x128xf32>
    %367 = arith.addf %362, %366 : vector<16x128xf32>
    %cst_151 = arith.constant 0.797884583 : f32
    %368 = vector.broadcast %cst_151 : f32 to vector<16x128xf32>
    %369 = arith.mulf %368, %367 : vector<16x128xf32>
    %370 = math.tanh %369 : vector<16x128xf32>
    %cst_152 = arith.constant 1.000000e+00 : f32
    %371 = vector.broadcast %cst_152 : f32 to vector<16x128xf32>
    %372 = arith.addf %371, %370 : vector<16x128xf32>
    %cst_153 = arith.constant 5.000000e-01 : f32
    %373 = vector.broadcast %cst_153 : f32 to vector<16x128xf32>
    %374 = arith.mulf %373, %372 : vector<16x128xf32>
    %375 = arith.mulf %362, %374 : vector<16x128xf32>
    %c0_154 = arith.constant 0 : index
    %c0_155 = arith.constant 0 : index
    %c0_156 = arith.constant 0 : index
    %376 = vector.load %arg27[%c0_154, %c0_155, %c0_156] : memref<2x128x32xf32, #tpu.memory_space<vmem>>, vector<1x128x32xf32>
    %377 = vector.shape_cast %376 : vector<1x128x32xf32> to vector<128x32xf32>
    %c0_157 = arith.constant 0 : index
    %c0_158 = arith.constant 0 : index
    %c0_159 = arith.constant 0 : index
    %378 = vector.load %arg28[%c0_157, %c0_158, %c0_159] : memref<2x1x32xf32, #tpu.memory_space<vmem>>, vector<1x1x32xf32>
    %379 = vector.shape_cast %378 : vector<1x1x32xf32> to vector<1x32xf32>
    %cst_160 = arith.constant dense<0.000000e+00> : vector<16x32xf32>
    %380 = tpu.matmul %375, %377, %cst_160 {dimension_numbers = #tpu.dot_dimension_numbers<[1], [0], [0], [1], [0, 0, 1, 1], [], []>} : vector<16x128xf32>, vector<128x32xf32>, vector<16x32xf32> -> vector<16x32xf32>
    %381 = vector.broadcast %379 : vector<1x32xf32> to vector<16x32xf32>
    %382 = arith.addf %380, %381 : vector<16x32xf32>
    %383 = arith.addf %382, %355 : vector<16x32xf32>
    %cst_161 = arith.constant dense<0.000000e+00> : vector<16xf32>
    %384 = vector.multi_reduction <add>, %383, %cst_161 [1] : vector<16x32xf32> to vector<16xf32>
    %385 = vector.shape_cast %384 : vector<16xf32> to vector<16x1xf32>
    %cst_162 = arith.constant 3.200000e+01 : f32
    %386 = vector.broadcast %cst_162 : f32 to vector<16x1xf32>
    %387 = arith.divf %385, %386 : vector<16x1xf32>
    %388 = vector.broadcast %387 : vector<16x1xf32> to vector<16x32xf32>
    %389 = arith.subf %383, %388 : vector<16x32xf32>
    %390 = arith.mulf %389, %389 : vector<16x32xf32>
    %cst_163 = arith.constant dense<0.000000e+00> : vector<16xf32>
    %391 = vector.multi_reduction <add>, %390, %cst_163 [1] : vector<16x32xf32> to vector<16xf32>
    %392 = vector.shape_cast %391 : vector<16xf32> to vector<16x1xf32>
    %cst_164 = arith.constant 3.200000e+01 : f32
    %393 = vector.broadcast %cst_164 : f32 to vector<16x1xf32>
    %394 = arith.divf %392, %393 : vector<16x1xf32>
    %395 = vector.broadcast %387 : vector<16x1xf32> to vector<16x32xf32>
    %396 = arith.subf %383, %395 : vector<16x32xf32>
    %cst_165 = arith.constant 9.99999996E-13 : f32
    %397 = vector.broadcast %cst_165 : f32 to vector<16x1xf32>
    %398 = arith.addf %394, %397 : vector<16x1xf32>
    %399 = math.rsqrt %398 : vector<16x1xf32>
    %400 = vector.broadcast %399 : vector<16x1xf32> to vector<16x32xf32>
    %401 = arith.mulf %396, %400 : vector<16x32xf32>
    %402 = vector.extract_strided_slice %5 {offsets = [5, 0], sizes = [1, 32], strides = [1, 1]} : vector<6x32xf32> to vector<1x32xf32>
    %403 = vector.broadcast %402 : vector<1x32xf32> to vector<16x32xf32>
    %404 = arith.mulf %401, %403 : vector<16x32xf32>
    %405 = vector.extract_strided_slice %7 {offsets = [5, 0], sizes = [1, 32], strides = [1, 1]} : vector<6x32xf32> to vector<1x32xf32>
    %406 = vector.broadcast %405 : vector<1x32xf32> to vector<16x32xf32>
    %407 = arith.addf %404, %406 : vector<16x32xf32>
    %c1 = arith.constant 1 : index
    %c0_166 = arith.constant 0 : index
    %c0_167 = arith.constant 0 : index
    %408 = vector.load %arg29[%c1, %c0_166, %c0_167] : memref<2x6x32xf32, #tpu.memory_space<vmem>>, vector<1x6x32xf32>
    %409 = vector.shape_cast %408 : vector<1x6x32xf32> to vector<6x32xf32>
    %c1_168 = arith.constant 1 : index
    %c0_169 = arith.constant 0 : index
    %c0_170 = arith.constant 0 : index
    %410 = vector.load %arg30[%c1_168, %c0_169, %c0_170] : memref<2x6x32xf32, #tpu.memory_space<vmem>>, vector<1x6x32xf32>
    %411 = vector.shape_cast %410 : vector<1x6x32xf32> to vector<6x32xf32>
    %c1_171 = arith.constant 1 : index
    %c0_172 = arith.constant 0 : index
    %c0_173 = arith.constant 0 : index
    %412 = vector.load %arg5[%c1_171, %c0_172, %c0_173] : memref<2x32x96xf32, #tpu.memory_space<vmem>>, vector<1x32x96xf32>
    %413 = vector.shape_cast %412 : vector<1x32x96xf32> to vector<32x96xf32>
    %c1_174 = arith.constant 1 : index
    %c0_175 = arith.constant 0 : index
    %c0_176 = arith.constant 0 : index
    %414 = vector.load %arg6[%c1_174, %c0_175, %c0_176] : memref<2x1x96xf32, #tpu.memory_space<vmem>>, vector<1x1x96xf32>
    %415 = vector.shape_cast %414 : vector<1x1x96xf32> to vector<1x96xf32>
    %cst_177 = arith.constant dense<0.000000e+00> : vector<16x96xf32>
    %416 = tpu.matmul %256, %413, %cst_177 {dimension_numbers = #tpu.dot_dimension_numbers<[1], [0], [0], [1], [0, 0, 1, 1], [], []>} : vector<16x32xf32>, vector<32x96xf32>, vector<16x96xf32> -> vector<16x96xf32>
    %417 = vector.broadcast %415 : vector<1x96xf32> to vector<16x96xf32>
    %418 = arith.addf %416, %417 : vector<16x96xf32>
    %c1_178 = arith.constant 1 : index
    %c0_179 = arith.constant 0 : index
    %c0_180 = arith.constant 0 : index
    %419 = vector.load %arg7[%c1_178, %c0_179, %c0_180] : memref<2x32x96xf32, #tpu.memory_space<vmem>>, vector<1x32x96xf32>
    %420 = vector.shape_cast %419 : vector<1x32x96xf32> to vector<32x96xf32>
    %c1_181 = arith.constant 1 : index
    %c0_182 = arith.constant 0 : index
    %c0_183 = arith.constant 0 : index
    %421 = vector.load %arg8[%c1_181, %c0_182, %c0_183] : memref<2x1x96xf32, #tpu.memory_space<vmem>>, vector<1x1x96xf32>
    %422 = vector.shape_cast %421 : vector<1x1x96xf32> to vector<1x96xf32>
    %cst_184 = arith.constant dense<0.000000e+00> : vector<16x96xf32>
    %423 = tpu.matmul %407, %420, %cst_184 {dimension_numbers = #tpu.dot_dimension_numbers<[1], [0], [0], [1], [0, 0, 1, 1], [], []>} : vector<16x32xf32>, vector<32x96xf32>, vector<16x96xf32> -> vector<16x96xf32>
    %424 = vector.broadcast %422 : vector<1x96xf32> to vector<16x96xf32>
    %425 = arith.addf %423, %424 : vector<16x96xf32>
    %c1_185 = arith.constant 1 : index
    %c0_186 = arith.constant 0 : index
    %c0_187 = arith.constant 0 : index
    %426 = vector.load %arg9[%c1_185, %c0_186, %c0_187] : memref<2x32x32xf32, #tpu.memory_space<vmem>>, vector<1x32x32xf32>
    %427 = vector.shape_cast %426 : vector<1x32x32xf32> to vector<32x32xf32>
    %c1_188 = arith.constant 1 : index
    %c0_189 = arith.constant 0 : index
    %c0_190 = arith.constant 0 : index
    %428 = vector.load %arg10[%c1_188, %c0_189, %c0_190] : memref<2x1x32xf32, #tpu.memory_space<vmem>>, vector<1x1x32xf32>
    %429 = vector.shape_cast %428 : vector<1x1x32xf32> to vector<1x32xf32>
    %430 = vector.extract_strided_slice %418 {offsets = [0, 0], sizes = [8, 32], strides = [1, 1]} : vector<16x96xf32> to vector<8x32xf32>
    %431 = vector.extract_strided_slice %425 {offsets = [0, 32], sizes = [8, 32], strides = [1, 1]} : vector<16x96xf32> to vector<8x32xf32>
    %432 = vector.extract_strided_slice %425 {offsets = [0, 64], sizes = [8, 32], strides = [1, 1]} : vector<16x96xf32> to vector<8x32xf32>
    %433 = tpu.concatenate %431, %431, %431, %431 in 0 : vector<8x32xf32>, vector<8x32xf32>, vector<8x32xf32>, vector<8x32xf32> -> vector<32x32xf32>
    %434 = arith.mulf %433, %1 : vector<32x32xf32>
    %435 = tpu.concatenate %432, %432, %432, %432 in 0 : vector<8x32xf32>, vector<8x32xf32>, vector<8x32xf32>, vector<8x32xf32> -> vector<32x32xf32>
    %436 = arith.mulf %435, %1 : vector<32x32xf32>
    %cst_191 = arith.constant dense<0.000000e+00> : vector<8x32xf32>
    %437 = tpu.matmul %430, %434, %cst_191 {dimension_numbers = #tpu.dot_dimension_numbers<[1], [1], [0], [0], [0, 0, 1, 0], [], []>} : vector<8x32xf32>, vector<32x32xf32>, vector<8x32xf32> -> vector<8x32xf32>
    %cst_192 = arith.constant dense<0xFF800000> : vector<8xf32>
    %438 = vector.multi_reduction <maximumf>, %437, %cst_192 [1] : vector<8x32xf32> to vector<8xf32>
    %439 = vector.shape_cast %438 : vector<8xf32> to vector<8x1xf32>
    %440 = vector.broadcast %439 : vector<8x1xf32> to vector<8x32xf32>
    %441 = arith.subf %437, %440 : vector<8x32xf32>
    %442 = math.exp %441 : vector<8x32xf32>
    %cst_193 = arith.constant dense<0.000000e+00> : vector<8x32xf32>
    %443 = tpu.matmul %442, %436, %cst_193 {dimension_numbers = #tpu.dot_dimension_numbers<[1], [0], [0], [1], [0, 0, 1, 1], [], []>} : vector<8x32xf32>, vector<32x32xf32>, vector<8x32xf32> -> vector<8x32xf32>
    %cst_194 = arith.constant dense<0.000000e+00> : vector<8x32xf32>
    %444 = tpu.matmul %442, %1, %cst_194 {dimension_numbers = #tpu.dot_dimension_numbers<[1], [0], [0], [1], [0, 0, 1, 1], [], []>} : vector<8x32xf32>, vector<32x32xf32>, vector<8x32xf32> -> vector<8x32xf32>
    %445 = tpu.reciprocal %444 {approx = true} : vector<8x32xf32> -> vector<8x32xf32>
    %446 = arith.mulf %443, %445 : vector<8x32xf32>
    %447 = vector.extract_strided_slice %418 {offsets = [8, 0], sizes = [8, 32], strides = [1, 1]} : vector<16x96xf32> to vector<8x32xf32>
    %448 = vector.extract_strided_slice %425 {offsets = [8, 32], sizes = [8, 32], strides = [1, 1]} : vector<16x96xf32> to vector<8x32xf32>
    %449 = vector.extract_strided_slice %425 {offsets = [8, 64], sizes = [8, 32], strides = [1, 1]} : vector<16x96xf32> to vector<8x32xf32>
    %450 = tpu.concatenate %448, %448, %448, %448 in 0 : vector<8x32xf32>, vector<8x32xf32>, vector<8x32xf32>, vector<8x32xf32> -> vector<32x32xf32>
    %451 = arith.mulf %450, %1 : vector<32x32xf32>
    %452 = tpu.concatenate %449, %449, %449, %449 in 0 : vector<8x32xf32>, vector<8x32xf32>, vector<8x32xf32>, vector<8x32xf32> -> vector<32x32xf32>
    %453 = arith.mulf %452, %1 : vector<32x32xf32>
    %cst_195 = arith.constant dense<0.000000e+00> : vector<8x32xf32>
    %454 = tpu.matmul %447, %451, %cst_195 {dimension_numbers = #tpu.dot_dimension_numbers<[1], [1], [0], [0], [0, 0, 1, 0], [], []>} : vector<8x32xf32>, vector<32x32xf32>, vector<8x32xf32> -> vector<8x32xf32>
    %cst_196 = arith.constant dense<0xFF800000> : vector<8xf32>
    %455 = vector.multi_reduction <maximumf>, %454, %cst_196 [1] : vector<8x32xf32> to vector<8xf32>
    %456 = vector.shape_cast %455 : vector<8xf32> to vector<8x1xf32>
    %457 = vector.broadcast %456 : vector<8x1xf32> to vector<8x32xf32>
    %458 = arith.subf %454, %457 : vector<8x32xf32>
    %459 = math.exp %458 : vector<8x32xf32>
    %cst_197 = arith.constant dense<0.000000e+00> : vector<8x32xf32>
    %460 = tpu.matmul %459, %453, %cst_197 {dimension_numbers = #tpu.dot_dimension_numbers<[1], [0], [0], [1], [0, 0, 1, 1], [], []>} : vector<8x32xf32>, vector<32x32xf32>, vector<8x32xf32> -> vector<8x32xf32>
    %cst_198 = arith.constant dense<0.000000e+00> : vector<8x32xf32>
    %461 = tpu.matmul %459, %1, %cst_198 {dimension_numbers = #tpu.dot_dimension_numbers<[1], [0], [0], [1], [0, 0, 1, 1], [], []>} : vector<8x32xf32>, vector<32x32xf32>, vector<8x32xf32> -> vector<8x32xf32>
    %462 = tpu.reciprocal %461 {approx = true} : vector<8x32xf32> -> vector<8x32xf32>
    %463 = arith.mulf %460, %462 : vector<8x32xf32>
    %464 = tpu.concatenate %446, %463 in 0 : vector<8x32xf32>, vector<8x32xf32> -> vector<16x32xf32>
    %cst_199 = arith.constant dense<0.000000e+00> : vector<16x32xf32>
    %465 = tpu.matmul %464, %427, %cst_199 {dimension_numbers = #tpu.dot_dimension_numbers<[1], [0], [0], [1], [0, 0, 1, 1], [], []>} : vector<16x32xf32>, vector<32x32xf32>, vector<16x32xf32> -> vector<16x32xf32>
    %466 = vector.broadcast %429 : vector<1x32xf32> to vector<16x32xf32>
    %467 = arith.addf %465, %466 : vector<16x32xf32>
    %c1_200 = arith.constant 1 : index
    %c0_201 = arith.constant 0 : index
    %c0_202 = arith.constant 0 : index
    %468 = vector.load %arg11[%c1_200, %c0_201, %c0_202] : memref<2x32x32xf32, #tpu.memory_space<vmem>>, vector<1x32x32xf32>
    %469 = vector.shape_cast %468 : vector<1x32x32xf32> to vector<32x32xf32>
    %c1_203 = arith.constant 1 : index
    %c0_204 = arith.constant 0 : index
    %c0_205 = arith.constant 0 : index
    %470 = vector.load %arg12[%c1_203, %c0_204, %c0_205] : memref<2x1x32xf32, #tpu.memory_space<vmem>>, vector<1x1x32xf32>
    %471 = vector.shape_cast %470 : vector<1x1x32xf32> to vector<1x32xf32>
    %472 = vector.extract_strided_slice %425 {offsets = [0, 0], sizes = [8, 32], strides = [1, 1]} : vector<16x96xf32> to vector<8x32xf32>
    %473 = vector.extract_strided_slice %418 {offsets = [0, 32], sizes = [8, 32], strides = [1, 1]} : vector<16x96xf32> to vector<8x32xf32>
    %474 = vector.extract_strided_slice %418 {offsets = [0, 64], sizes = [8, 32], strides = [1, 1]} : vector<16x96xf32> to vector<8x32xf32>
    %475 = tpu.concatenate %473, %473, %473, %473 in 0 : vector<8x32xf32>, vector<8x32xf32>, vector<8x32xf32>, vector<8x32xf32> -> vector<32x32xf32>
    %476 = arith.mulf %475, %0 : vector<32x32xf32>
    %477 = tpu.concatenate %474, %474, %474, %474 in 0 : vector<8x32xf32>, vector<8x32xf32>, vector<8x32xf32>, vector<8x32xf32> -> vector<32x32xf32>
    %478 = arith.mulf %477, %0 : vector<32x32xf32>
    %cst_206 = arith.constant dense<0.000000e+00> : vector<8x32xf32>
    %479 = tpu.matmul %472, %476, %cst_206 {dimension_numbers = #tpu.dot_dimension_numbers<[1], [1], [0], [0], [0, 0, 1, 0], [], []>} : vector<8x32xf32>, vector<32x32xf32>, vector<8x32xf32> -> vector<8x32xf32>
    %cst_207 = arith.constant dense<0xFF800000> : vector<8xf32>
    %480 = vector.multi_reduction <maximumf>, %479, %cst_207 [1] : vector<8x32xf32> to vector<8xf32>
    %481 = vector.shape_cast %480 : vector<8xf32> to vector<8x1xf32>
    %482 = vector.broadcast %481 : vector<8x1xf32> to vector<8x32xf32>
    %483 = arith.subf %479, %482 : vector<8x32xf32>
    %484 = math.exp %483 : vector<8x32xf32>
    %cst_208 = arith.constant dense<0.000000e+00> : vector<8x32xf32>
    %485 = tpu.matmul %484, %478, %cst_208 {dimension_numbers = #tpu.dot_dimension_numbers<[1], [0], [0], [1], [0, 0, 1, 1], [], []>} : vector<8x32xf32>, vector<32x32xf32>, vector<8x32xf32> -> vector<8x32xf32>
    %cst_209 = arith.constant dense<0.000000e+00> : vector<8x32xf32>
    %486 = tpu.matmul %484, %0, %cst_209 {dimension_numbers = #tpu.dot_dimension_numbers<[1], [0], [0], [1], [0, 0, 1, 1], [], []>} : vector<8x32xf32>, vector<32x32xf32>, vector<8x32xf32> -> vector<8x32xf32>
    %487 = tpu.reciprocal %486 {approx = true} : vector<8x32xf32> -> vector<8x32xf32>
    %488 = arith.mulf %485, %487 : vector<8x32xf32>
    %489 = vector.extract_strided_slice %425 {offsets = [8, 0], sizes = [8, 32], strides = [1, 1]} : vector<16x96xf32> to vector<8x32xf32>
    %490 = vector.extract_strided_slice %418 {offsets = [8, 32], sizes = [8, 32], strides = [1, 1]} : vector<16x96xf32> to vector<8x32xf32>
    %491 = vector.extract_strided_slice %418 {offsets = [8, 64], sizes = [8, 32], strides = [1, 1]} : vector<16x96xf32> to vector<8x32xf32>
    %492 = tpu.concatenate %490, %490, %490, %490 in 0 : vector<8x32xf32>, vector<8x32xf32>, vector<8x32xf32>, vector<8x32xf32> -> vector<32x32xf32>
    %493 = arith.mulf %492, %0 : vector<32x32xf32>
    %494 = tpu.concatenate %491, %491, %491, %491 in 0 : vector<8x32xf32>, vector<8x32xf32>, vector<8x32xf32>, vector<8x32xf32> -> vector<32x32xf32>
    %495 = arith.mulf %494, %0 : vector<32x32xf32>
    %cst_210 = arith.constant dense<0.000000e+00> : vector<8x32xf32>
    %496 = tpu.matmul %489, %493, %cst_210 {dimension_numbers = #tpu.dot_dimension_numbers<[1], [1], [0], [0], [0, 0, 1, 0], [], []>} : vector<8x32xf32>, vector<32x32xf32>, vector<8x32xf32> -> vector<8x32xf32>
    %cst_211 = arith.constant dense<0xFF800000> : vector<8xf32>
    %497 = vector.multi_reduction <maximumf>, %496, %cst_211 [1] : vector<8x32xf32> to vector<8xf32>
    %498 = vector.shape_cast %497 : vector<8xf32> to vector<8x1xf32>
    %499 = vector.broadcast %498 : vector<8x1xf32> to vector<8x32xf32>
    %500 = arith.subf %496, %499 : vector<8x32xf32>
    %501 = math.exp %500 : vector<8x32xf32>
    %cst_212 = arith.constant dense<0.000000e+00> : vector<8x32xf32>
    %502 = tpu.matmul %501, %495, %cst_212 {dimension_numbers = #tpu.dot_dimension_numbers<[1], [0], [0], [1], [0, 0, 1, 1], [], []>} : vector<8x32xf32>, vector<32x32xf32>, vector<8x32xf32> -> vector<8x32xf32>
    %cst_213 = arith.constant dense<0.000000e+00> : vector<8x32xf32>
    %503 = tpu.matmul %501, %0, %cst_213 {dimension_numbers = #tpu.dot_dimension_numbers<[1], [0], [0], [1], [0, 0, 1, 1], [], []>} : vector<8x32xf32>, vector<32x32xf32>, vector<8x32xf32> -> vector<8x32xf32>
    %504 = tpu.reciprocal %503 {approx = true} : vector<8x32xf32> -> vector<8x32xf32>
    %505 = arith.mulf %502, %504 : vector<8x32xf32>
    %506 = tpu.concatenate %488, %505 in 0 : vector<8x32xf32>, vector<8x32xf32> -> vector<16x32xf32>
    %cst_214 = arith.constant dense<0.000000e+00> : vector<16x32xf32>
    %507 = tpu.matmul %506, %469, %cst_214 {dimension_numbers = #tpu.dot_dimension_numbers<[1], [0], [0], [1], [0, 0, 1, 1], [], []>} : vector<16x32xf32>, vector<32x32xf32>, vector<16x32xf32> -> vector<16x32xf32>
    %508 = vector.broadcast %471 : vector<1x32xf32> to vector<16x32xf32>
    %509 = arith.addf %507, %508 : vector<16x32xf32>
    %510 = arith.addf %467, %256 : vector<16x32xf32>
    %cst_215 = arith.constant dense<0.000000e+00> : vector<16xf32>
    %511 = vector.multi_reduction <add>, %510, %cst_215 [1] : vector<16x32xf32> to vector<16xf32>
    %512 = vector.shape_cast %511 : vector<16xf32> to vector<16x1xf32>
    %cst_216 = arith.constant 3.200000e+01 : f32
    %513 = vector.broadcast %cst_216 : f32 to vector<16x1xf32>
    %514 = arith.divf %512, %513 : vector<16x1xf32>
    %515 = vector.broadcast %514 : vector<16x1xf32> to vector<16x32xf32>
    %516 = arith.subf %510, %515 : vector<16x32xf32>
    %517 = arith.mulf %516, %516 : vector<16x32xf32>
    %cst_217 = arith.constant dense<0.000000e+00> : vector<16xf32>
    %518 = vector.multi_reduction <add>, %517, %cst_217 [1] : vector<16x32xf32> to vector<16xf32>
    %519 = vector.shape_cast %518 : vector<16xf32> to vector<16x1xf32>
    %cst_218 = arith.constant 3.200000e+01 : f32
    %520 = vector.broadcast %cst_218 : f32 to vector<16x1xf32>
    %521 = arith.divf %519, %520 : vector<16x1xf32>
    %522 = vector.broadcast %514 : vector<16x1xf32> to vector<16x32xf32>
    %523 = arith.subf %510, %522 : vector<16x32xf32>
    %cst_219 = arith.constant 9.99999996E-13 : f32
    %524 = vector.broadcast %cst_219 : f32 to vector<16x1xf32>
    %525 = arith.addf %521, %524 : vector<16x1xf32>
    %526 = math.rsqrt %525 : vector<16x1xf32>
    %527 = vector.broadcast %526 : vector<16x1xf32> to vector<16x32xf32>
    %528 = arith.mulf %523, %527 : vector<16x32xf32>
    %529 = vector.extract_strided_slice %409 {offsets = [0, 0], sizes = [1, 32], strides = [1, 1]} : vector<6x32xf32> to vector<1x32xf32>
    %530 = vector.broadcast %529 : vector<1x32xf32> to vector<16x32xf32>
    %531 = arith.mulf %528, %530 : vector<16x32xf32>
    %532 = vector.extract_strided_slice %411 {offsets = [0, 0], sizes = [1, 32], strides = [1, 1]} : vector<6x32xf32> to vector<1x32xf32>
    %533 = vector.broadcast %532 : vector<1x32xf32> to vector<16x32xf32>
    %534 = arith.addf %531, %533 : vector<16x32xf32>
    %c1_220 = arith.constant 1 : index
    %c0_221 = arith.constant 0 : index
    %c0_222 = arith.constant 0 : index
    %535 = vector.load %arg13[%c1_220, %c0_221, %c0_222] : memref<2x32x96xf32, #tpu.memory_space<vmem>>, vector<1x32x96xf32>
    %536 = vector.shape_cast %535 : vector<1x32x96xf32> to vector<32x96xf32>
    %c1_223 = arith.constant 1 : index
    %c0_224 = arith.constant 0 : index
    %c0_225 = arith.constant 0 : index
    %537 = vector.load %arg14[%c1_223, %c0_224, %c0_225] : memref<2x1x96xf32, #tpu.memory_space<vmem>>, vector<1x1x96xf32>
    %538 = vector.shape_cast %537 : vector<1x1x96xf32> to vector<1x96xf32>
    %cst_226 = arith.constant dense<0.000000e+00> : vector<16x96xf32>
    %539 = tpu.matmul %534, %536, %cst_226 {dimension_numbers = #tpu.dot_dimension_numbers<[1], [0], [0], [1], [0, 0, 1, 1], [], []>} : vector<16x32xf32>, vector<32x96xf32>, vector<16x96xf32> -> vector<16x96xf32>
    %540 = vector.broadcast %538 : vector<1x96xf32> to vector<16x96xf32>
    %541 = arith.addf %539, %540 : vector<16x96xf32>
    %c1_227 = arith.constant 1 : index
    %c0_228 = arith.constant 0 : index
    %c0_229 = arith.constant 0 : index
    %542 = vector.load %arg15[%c1_227, %c0_228, %c0_229] : memref<2x32x32xf32, #tpu.memory_space<vmem>>, vector<1x32x32xf32>
    %543 = vector.shape_cast %542 : vector<1x32x32xf32> to vector<32x32xf32>
    %c1_230 = arith.constant 1 : index
    %c0_231 = arith.constant 0 : index
    %c0_232 = arith.constant 0 : index
    %544 = vector.load %arg16[%c1_230, %c0_231, %c0_232] : memref<2x1x32xf32, #tpu.memory_space<vmem>>, vector<1x1x32xf32>
    %545 = vector.shape_cast %544 : vector<1x1x32xf32> to vector<1x32xf32>
    %546 = vector.extract_strided_slice %541 {offsets = [0, 0], sizes = [8, 32], strides = [1, 1]} : vector<16x96xf32> to vector<8x32xf32>
    %547 = vector.extract_strided_slice %541 {offsets = [0, 32], sizes = [8, 32], strides = [1, 1]} : vector<16x96xf32> to vector<8x32xf32>
    %548 = vector.extract_strided_slice %541 {offsets = [0, 64], sizes = [8, 32], strides = [1, 1]} : vector<16x96xf32> to vector<8x32xf32>
    %549 = tpu.concatenate %547, %547, %547, %547 in 0 : vector<8x32xf32>, vector<8x32xf32>, vector<8x32xf32>, vector<8x32xf32> -> vector<32x32xf32>
    %550 = arith.mulf %549, %0 : vector<32x32xf32>
    %551 = tpu.concatenate %548, %548, %548, %548 in 0 : vector<8x32xf32>, vector<8x32xf32>, vector<8x32xf32>, vector<8x32xf32> -> vector<32x32xf32>
    %552 = arith.mulf %551, %0 : vector<32x32xf32>
    %cst_233 = arith.constant dense<0.000000e+00> : vector<8x32xf32>
    %553 = tpu.matmul %546, %550, %cst_233 {dimension_numbers = #tpu.dot_dimension_numbers<[1], [1], [0], [0], [0, 0, 1, 0], [], []>} : vector<8x32xf32>, vector<32x32xf32>, vector<8x32xf32> -> vector<8x32xf32>
    %cst_234 = arith.constant dense<0xFF800000> : vector<8xf32>
    %554 = vector.multi_reduction <maximumf>, %553, %cst_234 [1] : vector<8x32xf32> to vector<8xf32>
    %555 = vector.shape_cast %554 : vector<8xf32> to vector<8x1xf32>
    %556 = vector.broadcast %555 : vector<8x1xf32> to vector<8x32xf32>
    %557 = arith.subf %553, %556 : vector<8x32xf32>
    %558 = math.exp %557 : vector<8x32xf32>
    %cst_235 = arith.constant dense<0.000000e+00> : vector<8x32xf32>
    %559 = tpu.matmul %558, %552, %cst_235 {dimension_numbers = #tpu.dot_dimension_numbers<[1], [0], [0], [1], [0, 0, 1, 1], [], []>} : vector<8x32xf32>, vector<32x32xf32>, vector<8x32xf32> -> vector<8x32xf32>
    %cst_236 = arith.constant dense<0.000000e+00> : vector<8x32xf32>
    %560 = tpu.matmul %558, %0, %cst_236 {dimension_numbers = #tpu.dot_dimension_numbers<[1], [0], [0], [1], [0, 0, 1, 1], [], []>} : vector<8x32xf32>, vector<32x32xf32>, vector<8x32xf32> -> vector<8x32xf32>
    %561 = tpu.reciprocal %560 {approx = true} : vector<8x32xf32> -> vector<8x32xf32>
    %562 = arith.mulf %559, %561 : vector<8x32xf32>
    %563 = vector.extract_strided_slice %541 {offsets = [8, 0], sizes = [8, 32], strides = [1, 1]} : vector<16x96xf32> to vector<8x32xf32>
    %564 = vector.extract_strided_slice %541 {offsets = [8, 32], sizes = [8, 32], strides = [1, 1]} : vector<16x96xf32> to vector<8x32xf32>
    %565 = vector.extract_strided_slice %541 {offsets = [8, 64], sizes = [8, 32], strides = [1, 1]} : vector<16x96xf32> to vector<8x32xf32>
    %566 = tpu.concatenate %564, %564, %564, %564 in 0 : vector<8x32xf32>, vector<8x32xf32>, vector<8x32xf32>, vector<8x32xf32> -> vector<32x32xf32>
    %567 = arith.mulf %566, %0 : vector<32x32xf32>
    %568 = tpu.concatenate %565, %565, %565, %565 in 0 : vector<8x32xf32>, vector<8x32xf32>, vector<8x32xf32>, vector<8x32xf32> -> vector<32x32xf32>
    %569 = arith.mulf %568, %0 : vector<32x32xf32>
    %cst_237 = arith.constant dense<0.000000e+00> : vector<8x32xf32>
    %570 = tpu.matmul %563, %567, %cst_237 {dimension_numbers = #tpu.dot_dimension_numbers<[1], [1], [0], [0], [0, 0, 1, 0], [], []>} : vector<8x32xf32>, vector<32x32xf32>, vector<8x32xf32> -> vector<8x32xf32>
    %cst_238 = arith.constant dense<0xFF800000> : vector<8xf32>
    %571 = vector.multi_reduction <maximumf>, %570, %cst_238 [1] : vector<8x32xf32> to vector<8xf32>
    %572 = vector.shape_cast %571 : vector<8xf32> to vector<8x1xf32>
    %573 = vector.broadcast %572 : vector<8x1xf32> to vector<8x32xf32>
    %574 = arith.subf %570, %573 : vector<8x32xf32>
    %575 = math.exp %574 : vector<8x32xf32>
    %cst_239 = arith.constant dense<0.000000e+00> : vector<8x32xf32>
    %576 = tpu.matmul %575, %569, %cst_239 {dimension_numbers = #tpu.dot_dimension_numbers<[1], [0], [0], [1], [0, 0, 1, 1], [], []>} : vector<8x32xf32>, vector<32x32xf32>, vector<8x32xf32> -> vector<8x32xf32>
    %cst_240 = arith.constant dense<0.000000e+00> : vector<8x32xf32>
    %577 = tpu.matmul %575, %0, %cst_240 {dimension_numbers = #tpu.dot_dimension_numbers<[1], [0], [0], [1], [0, 0, 1, 1], [], []>} : vector<8x32xf32>, vector<32x32xf32>, vector<8x32xf32> -> vector<8x32xf32>
    %578 = tpu.reciprocal %577 {approx = true} : vector<8x32xf32> -> vector<8x32xf32>
    %579 = arith.mulf %576, %578 : vector<8x32xf32>
    %580 = tpu.concatenate %562, %579 in 0 : vector<8x32xf32>, vector<8x32xf32> -> vector<16x32xf32>
    %cst_241 = arith.constant dense<0.000000e+00> : vector<16x32xf32>
    %581 = tpu.matmul %580, %543, %cst_241 {dimension_numbers = #tpu.dot_dimension_numbers<[1], [0], [0], [1], [0, 0, 1, 1], [], []>} : vector<16x32xf32>, vector<32x32xf32>, vector<16x32xf32> -> vector<16x32xf32>
    %582 = vector.broadcast %545 : vector<1x32xf32> to vector<16x32xf32>
    %583 = arith.addf %581, %582 : vector<16x32xf32>
    %584 = arith.addf %583, %534 : vector<16x32xf32>
    %cst_242 = arith.constant dense<0.000000e+00> : vector<16xf32>
    %585 = vector.multi_reduction <add>, %584, %cst_242 [1] : vector<16x32xf32> to vector<16xf32>
    %586 = vector.shape_cast %585 : vector<16xf32> to vector<16x1xf32>
    %cst_243 = arith.constant 3.200000e+01 : f32
    %587 = vector.broadcast %cst_243 : f32 to vector<16x1xf32>
    %588 = arith.divf %586, %587 : vector<16x1xf32>
    %589 = vector.broadcast %588 : vector<16x1xf32> to vector<16x32xf32>
    %590 = arith.subf %584, %589 : vector<16x32xf32>
    %591 = arith.mulf %590, %590 : vector<16x32xf32>
    %cst_244 = arith.constant dense<0.000000e+00> : vector<16xf32>
    %592 = vector.multi_reduction <add>, %591, %cst_244 [1] : vector<16x32xf32> to vector<16xf32>
    %593 = vector.shape_cast %592 : vector<16xf32> to vector<16x1xf32>
    %cst_245 = arith.constant 3.200000e+01 : f32
    %594 = vector.broadcast %cst_245 : f32 to vector<16x1xf32>
    %595 = arith.divf %593, %594 : vector<16x1xf32>
    %596 = vector.broadcast %588 : vector<16x1xf32> to vector<16x32xf32>
    %597 = arith.subf %584, %596 : vector<16x32xf32>
    %cst_246 = arith.constant 9.99999996E-13 : f32
    %598 = vector.broadcast %cst_246 : f32 to vector<16x1xf32>
    %599 = arith.addf %595, %598 : vector<16x1xf32>
    %600 = math.rsqrt %599 : vector<16x1xf32>
    %601 = vector.broadcast %600 : vector<16x1xf32> to vector<16x32xf32>
    %602 = arith.mulf %597, %601 : vector<16x32xf32>
    %603 = vector.extract_strided_slice %409 {offsets = [1, 0], sizes = [1, 32], strides = [1, 1]} : vector<6x32xf32> to vector<1x32xf32>
    %604 = vector.broadcast %603 : vector<1x32xf32> to vector<16x32xf32>
    %605 = arith.mulf %602, %604 : vector<16x32xf32>
    %606 = vector.extract_strided_slice %411 {offsets = [1, 0], sizes = [1, 32], strides = [1, 1]} : vector<6x32xf32> to vector<1x32xf32>
    %607 = vector.broadcast %606 : vector<1x32xf32> to vector<16x32xf32>
    %608 = arith.addf %605, %607 : vector<16x32xf32>
    %c1_247 = arith.constant 1 : index
    %c0_248 = arith.constant 0 : index
    %c0_249 = arith.constant 0 : index
    %609 = vector.load %arg21[%c1_247, %c0_248, %c0_249] : memref<2x32x128xf32, #tpu.memory_space<vmem>>, vector<1x32x128xf32>
    %610 = vector.shape_cast %609 : vector<1x32x128xf32> to vector<32x128xf32>
    %c1_250 = arith.constant 1 : index
    %c0_251 = arith.constant 0 : index
    %c0_252 = arith.constant 0 : index
    %611 = vector.load %arg22[%c1_250, %c0_251, %c0_252] : memref<2x1x128xf32, #tpu.memory_space<vmem>>, vector<1x1x128xf32>
    %612 = vector.shape_cast %611 : vector<1x1x128xf32> to vector<1x128xf32>
    %cst_253 = arith.constant dense<0.000000e+00> : vector<16x128xf32>
    %613 = tpu.matmul %608, %610, %cst_253 {dimension_numbers = #tpu.dot_dimension_numbers<[1], [0], [0], [1], [0, 0, 1, 1], [], []>} : vector<16x32xf32>, vector<32x128xf32>, vector<16x128xf32> -> vector<16x128xf32>
    %614 = vector.broadcast %612 : vector<1x128xf32> to vector<16x128xf32>
    %615 = arith.addf %613, %614 : vector<16x128xf32>
    %616 = arith.mulf %615, %615 : vector<16x128xf32>
    %617 = arith.mulf %615, %616 : vector<16x128xf32>
    %cst_254 = arith.constant 4.471500e-02 : f32
    %618 = vector.broadcast %cst_254 : f32 to vector<16x128xf32>
    %619 = arith.mulf %618, %617 : vector<16x128xf32>
    %620 = arith.addf %615, %619 : vector<16x128xf32>
    %cst_255 = arith.constant 0.797884583 : f32
    %621 = vector.broadcast %cst_255 : f32 to vector<16x128xf32>
    %622 = arith.mulf %621, %620 : vector<16x128xf32>
    %623 = math.tanh %622 : vector<16x128xf32>
    %cst_256 = arith.constant 1.000000e+00 : f32
    %624 = vector.broadcast %cst_256 : f32 to vector<16x128xf32>
    %625 = arith.addf %624, %623 : vector<16x128xf32>
    %cst_257 = arith.constant 5.000000e-01 : f32
    %626 = vector.broadcast %cst_257 : f32 to vector<16x128xf32>
    %627 = arith.mulf %626, %625 : vector<16x128xf32>
    %628 = arith.mulf %615, %627 : vector<16x128xf32>
    %c1_258 = arith.constant 1 : index
    %c0_259 = arith.constant 0 : index
    %c0_260 = arith.constant 0 : index
    %629 = vector.load %arg23[%c1_258, %c0_259, %c0_260] : memref<2x128x32xf32, #tpu.memory_space<vmem>>, vector<1x128x32xf32>
    %630 = vector.shape_cast %629 : vector<1x128x32xf32> to vector<128x32xf32>
    %c1_261 = arith.constant 1 : index
    %c0_262 = arith.constant 0 : index
    %c0_263 = arith.constant 0 : index
    %631 = vector.load %arg24[%c1_261, %c0_262, %c0_263] : memref<2x1x32xf32, #tpu.memory_space<vmem>>, vector<1x1x32xf32>
    %632 = vector.shape_cast %631 : vector<1x1x32xf32> to vector<1x32xf32>
    %cst_264 = arith.constant dense<0.000000e+00> : vector<16x32xf32>
    %633 = tpu.matmul %628, %630, %cst_264 {dimension_numbers = #tpu.dot_dimension_numbers<[1], [0], [0], [1], [0, 0, 1, 1], [], []>} : vector<16x128xf32>, vector<128x32xf32>, vector<16x32xf32> -> vector<16x32xf32>
    %634 = vector.broadcast %632 : vector<1x32xf32> to vector<16x32xf32>
    %635 = arith.addf %633, %634 : vector<16x32xf32>
    %636 = arith.addf %635, %608 : vector<16x32xf32>
    %cst_265 = arith.constant dense<0.000000e+00> : vector<16xf32>
    %637 = vector.multi_reduction <add>, %636, %cst_265 [1] : vector<16x32xf32> to vector<16xf32>
    %638 = vector.shape_cast %637 : vector<16xf32> to vector<16x1xf32>
    %cst_266 = arith.constant 3.200000e+01 : f32
    %639 = vector.broadcast %cst_266 : f32 to vector<16x1xf32>
    %640 = arith.divf %638, %639 : vector<16x1xf32>
    %641 = vector.broadcast %640 : vector<16x1xf32> to vector<16x32xf32>
    %642 = arith.subf %636, %641 : vector<16x32xf32>
    %643 = arith.mulf %642, %642 : vector<16x32xf32>
    %cst_267 = arith.constant dense<0.000000e+00> : vector<16xf32>
    %644 = vector.multi_reduction <add>, %643, %cst_267 [1] : vector<16x32xf32> to vector<16xf32>
    %645 = vector.shape_cast %644 : vector<16xf32> to vector<16x1xf32>
    %cst_268 = arith.constant 3.200000e+01 : f32
    %646 = vector.broadcast %cst_268 : f32 to vector<16x1xf32>
    %647 = arith.divf %645, %646 : vector<16x1xf32>
    %648 = vector.broadcast %640 : vector<16x1xf32> to vector<16x32xf32>
    %649 = arith.subf %636, %648 : vector<16x32xf32>
    %cst_269 = arith.constant 9.99999996E-13 : f32
    %650 = vector.broadcast %cst_269 : f32 to vector<16x1xf32>
    %651 = arith.addf %647, %650 : vector<16x1xf32>
    %652 = math.rsqrt %651 : vector<16x1xf32>
    %653 = vector.broadcast %652 : vector<16x1xf32> to vector<16x32xf32>
    %654 = arith.mulf %649, %653 : vector<16x32xf32>
    %655 = vector.extract_strided_slice %409 {offsets = [2, 0], sizes = [1, 32], strides = [1, 1]} : vector<6x32xf32> to vector<1x32xf32>
    %656 = vector.broadcast %655 : vector<1x32xf32> to vector<16x32xf32>
    %657 = arith.mulf %654, %656 : vector<16x32xf32>
    %658 = vector.extract_strided_slice %411 {offsets = [2, 0], sizes = [1, 32], strides = [1, 1]} : vector<6x32xf32> to vector<1x32xf32>
    %659 = vector.broadcast %658 : vector<1x32xf32> to vector<16x32xf32>
    %660 = arith.addf %657, %659 : vector<16x32xf32>
    %661 = arith.addf %509, %407 : vector<16x32xf32>
    %cst_270 = arith.constant dense<0.000000e+00> : vector<16xf32>
    %662 = vector.multi_reduction <add>, %661, %cst_270 [1] : vector<16x32xf32> to vector<16xf32>
    %663 = vector.shape_cast %662 : vector<16xf32> to vector<16x1xf32>
    %cst_271 = arith.constant 3.200000e+01 : f32
    %664 = vector.broadcast %cst_271 : f32 to vector<16x1xf32>
    %665 = arith.divf %663, %664 : vector<16x1xf32>
    %666 = vector.broadcast %665 : vector<16x1xf32> to vector<16x32xf32>
    %667 = arith.subf %661, %666 : vector<16x32xf32>
    %668 = arith.mulf %667, %667 : vector<16x32xf32>
    %cst_272 = arith.constant dense<0.000000e+00> : vector<16xf32>
    %669 = vector.multi_reduction <add>, %668, %cst_272 [1] : vector<16x32xf32> to vector<16xf32>
    %670 = vector.shape_cast %669 : vector<16xf32> to vector<16x1xf32>
    %cst_273 = arith.constant 3.200000e+01 : f32
    %671 = vector.broadcast %cst_273 : f32 to vector<16x1xf32>
    %672 = arith.divf %670, %671 : vector<16x1xf32>
    %673 = vector.broadcast %665 : vector<16x1xf32> to vector<16x32xf32>
    %674 = arith.subf %661, %673 : vector<16x32xf32>
    %cst_274 = arith.constant 9.99999996E-13 : f32
    %675 = vector.broadcast %cst_274 : f32 to vector<16x1xf32>
    %676 = arith.addf %672, %675 : vector<16x1xf32>
    %677 = math.rsqrt %676 : vector<16x1xf32>
    %678 = vector.broadcast %677 : vector<16x1xf32> to vector<16x32xf32>
    %679 = arith.mulf %674, %678 : vector<16x32xf32>
    %680 = vector.extract_strided_slice %409 {offsets = [3, 0], sizes = [1, 32], strides = [1, 1]} : vector<6x32xf32> to vector<1x32xf32>
    %681 = vector.broadcast %680 : vector<1x32xf32> to vector<16x32xf32>
    %682 = arith.mulf %679, %681 : vector<16x32xf32>
    %683 = vector.extract_strided_slice %411 {offsets = [3, 0], sizes = [1, 32], strides = [1, 1]} : vector<6x32xf32> to vector<1x32xf32>
    %684 = vector.broadcast %683 : vector<1x32xf32> to vector<16x32xf32>
    %685 = arith.addf %682, %684 : vector<16x32xf32>
    %c1_275 = arith.constant 1 : index
    %c0_276 = arith.constant 0 : index
    %c0_277 = arith.constant 0 : index
    %686 = vector.load %arg17[%c1_275, %c0_276, %c0_277] : memref<2x32x96xf32, #tpu.memory_space<vmem>>, vector<1x32x96xf32>
    %687 = vector.shape_cast %686 : vector<1x32x96xf32> to vector<32x96xf32>
    %c1_278 = arith.constant 1 : index
    %c0_279 = arith.constant 0 : index
    %c0_280 = arith.constant 0 : index
    %688 = vector.load %arg18[%c1_278, %c0_279, %c0_280] : memref<2x1x96xf32, #tpu.memory_space<vmem>>, vector<1x1x96xf32>
    %689 = vector.shape_cast %688 : vector<1x1x96xf32> to vector<1x96xf32>
    %cst_281 = arith.constant dense<0.000000e+00> : vector<16x96xf32>
    %690 = tpu.matmul %685, %687, %cst_281 {dimension_numbers = #tpu.dot_dimension_numbers<[1], [0], [0], [1], [0, 0, 1, 1], [], []>} : vector<16x32xf32>, vector<32x96xf32>, vector<16x96xf32> -> vector<16x96xf32>
    %691 = vector.broadcast %689 : vector<1x96xf32> to vector<16x96xf32>
    %692 = arith.addf %690, %691 : vector<16x96xf32>
    %c1_282 = arith.constant 1 : index
    %c0_283 = arith.constant 0 : index
    %c0_284 = arith.constant 0 : index
    %693 = vector.load %arg19[%c1_282, %c0_283, %c0_284] : memref<2x32x32xf32, #tpu.memory_space<vmem>>, vector<1x32x32xf32>
    %694 = vector.shape_cast %693 : vector<1x32x32xf32> to vector<32x32xf32>
    %c1_285 = arith.constant 1 : index
    %c0_286 = arith.constant 0 : index
    %c0_287 = arith.constant 0 : index
    %695 = vector.load %arg20[%c1_285, %c0_286, %c0_287] : memref<2x1x32xf32, #tpu.memory_space<vmem>>, vector<1x1x32xf32>
    %696 = vector.shape_cast %695 : vector<1x1x32xf32> to vector<1x32xf32>
    %697 = vector.extract_strided_slice %692 {offsets = [0, 0], sizes = [8, 32], strides = [1, 1]} : vector<16x96xf32> to vector<8x32xf32>
    %698 = vector.extract_strided_slice %692 {offsets = [0, 32], sizes = [8, 32], strides = [1, 1]} : vector<16x96xf32> to vector<8x32xf32>
    %699 = vector.extract_strided_slice %692 {offsets = [0, 64], sizes = [8, 32], strides = [1, 1]} : vector<16x96xf32> to vector<8x32xf32>
    %700 = tpu.concatenate %698, %698, %698, %698 in 0 : vector<8x32xf32>, vector<8x32xf32>, vector<8x32xf32>, vector<8x32xf32> -> vector<32x32xf32>
    %701 = arith.mulf %700, %1 : vector<32x32xf32>
    %702 = tpu.concatenate %699, %699, %699, %699 in 0 : vector<8x32xf32>, vector<8x32xf32>, vector<8x32xf32>, vector<8x32xf32> -> vector<32x32xf32>
    %703 = arith.mulf %702, %1 : vector<32x32xf32>
    %cst_288 = arith.constant dense<0.000000e+00> : vector<8x32xf32>
    %704 = tpu.matmul %697, %701, %cst_288 {dimension_numbers = #tpu.dot_dimension_numbers<[1], [1], [0], [0], [0, 0, 1, 0], [], []>} : vector<8x32xf32>, vector<32x32xf32>, vector<8x32xf32> -> vector<8x32xf32>
    %cst_289 = arith.constant dense<0xFF800000> : vector<8xf32>
    %705 = vector.multi_reduction <maximumf>, %704, %cst_289 [1] : vector<8x32xf32> to vector<8xf32>
    %706 = vector.shape_cast %705 : vector<8xf32> to vector<8x1xf32>
    %707 = vector.broadcast %706 : vector<8x1xf32> to vector<8x32xf32>
    %708 = arith.subf %704, %707 : vector<8x32xf32>
    %709 = math.exp %708 : vector<8x32xf32>
    %cst_290 = arith.constant dense<0.000000e+00> : vector<8x32xf32>
    %710 = tpu.matmul %709, %703, %cst_290 {dimension_numbers = #tpu.dot_dimension_numbers<[1], [0], [0], [1], [0, 0, 1, 1], [], []>} : vector<8x32xf32>, vector<32x32xf32>, vector<8x32xf32> -> vector<8x32xf32>
    %cst_291 = arith.constant dense<0.000000e+00> : vector<8x32xf32>
    %711 = tpu.matmul %709, %1, %cst_291 {dimension_numbers = #tpu.dot_dimension_numbers<[1], [0], [0], [1], [0, 0, 1, 1], [], []>} : vector<8x32xf32>, vector<32x32xf32>, vector<8x32xf32> -> vector<8x32xf32>
    %712 = tpu.reciprocal %711 {approx = true} : vector<8x32xf32> -> vector<8x32xf32>
    %713 = arith.mulf %710, %712 : vector<8x32xf32>
    %714 = vector.extract_strided_slice %692 {offsets = [8, 0], sizes = [8, 32], strides = [1, 1]} : vector<16x96xf32> to vector<8x32xf32>
    %715 = vector.extract_strided_slice %692 {offsets = [8, 32], sizes = [8, 32], strides = [1, 1]} : vector<16x96xf32> to vector<8x32xf32>
    %716 = vector.extract_strided_slice %692 {offsets = [8, 64], sizes = [8, 32], strides = [1, 1]} : vector<16x96xf32> to vector<8x32xf32>
    %717 = tpu.concatenate %715, %715, %715, %715 in 0 : vector<8x32xf32>, vector<8x32xf32>, vector<8x32xf32>, vector<8x32xf32> -> vector<32x32xf32>
    %718 = arith.mulf %717, %1 : vector<32x32xf32>
    %719 = tpu.concatenate %716, %716, %716, %716 in 0 : vector<8x32xf32>, vector<8x32xf32>, vector<8x32xf32>, vector<8x32xf32> -> vector<32x32xf32>
    %720 = arith.mulf %719, %1 : vector<32x32xf32>
    %cst_292 = arith.constant dense<0.000000e+00> : vector<8x32xf32>
    %721 = tpu.matmul %714, %718, %cst_292 {dimension_numbers = #tpu.dot_dimension_numbers<[1], [1], [0], [0], [0, 0, 1, 0], [], []>} : vector<8x32xf32>, vector<32x32xf32>, vector<8x32xf32> -> vector<8x32xf32>
    %cst_293 = arith.constant dense<0xFF800000> : vector<8xf32>
    %722 = vector.multi_reduction <maximumf>, %721, %cst_293 [1] : vector<8x32xf32> to vector<8xf32>
    %723 = vector.shape_cast %722 : vector<8xf32> to vector<8x1xf32>
    %724 = vector.broadcast %723 : vector<8x1xf32> to vector<8x32xf32>
    %725 = arith.subf %721, %724 : vector<8x32xf32>
    %726 = math.exp %725 : vector<8x32xf32>
    %cst_294 = arith.constant dense<0.000000e+00> : vector<8x32xf32>
    %727 = tpu.matmul %726, %720, %cst_294 {dimension_numbers = #tpu.dot_dimension_numbers<[1], [0], [0], [1], [0, 0, 1, 1], [], []>} : vector<8x32xf32>, vector<32x32xf32>, vector<8x32xf32> -> vector<8x32xf32>
    %cst_295 = arith.constant dense<0.000000e+00> : vector<8x32xf32>
    %728 = tpu.matmul %726, %1, %cst_295 {dimension_numbers = #tpu.dot_dimension_numbers<[1], [0], [0], [1], [0, 0, 1, 1], [], []>} : vector<8x32xf32>, vector<32x32xf32>, vector<8x32xf32> -> vector<8x32xf32>
    %729 = tpu.reciprocal %728 {approx = true} : vector<8x32xf32> -> vector<8x32xf32>
    %730 = arith.mulf %727, %729 : vector<8x32xf32>
    %731 = tpu.concatenate %713, %730 in 0 : vector<8x32xf32>, vector<8x32xf32> -> vector<16x32xf32>
    %cst_296 = arith.constant dense<0.000000e+00> : vector<16x32xf32>
    %732 = tpu.matmul %731, %694, %cst_296 {dimension_numbers = #tpu.dot_dimension_numbers<[1], [0], [0], [1], [0, 0, 1, 1], [], []>} : vector<16x32xf32>, vector<32x32xf32>, vector<16x32xf32> -> vector<16x32xf32>
    %733 = vector.broadcast %696 : vector<1x32xf32> to vector<16x32xf32>
    %734 = arith.addf %732, %733 : vector<16x32xf32>
    %735 = arith.addf %734, %685 : vector<16x32xf32>
    %cst_297 = arith.constant dense<0.000000e+00> : vector<16xf32>
    %736 = vector.multi_reduction <add>, %735, %cst_297 [1] : vector<16x32xf32> to vector<16xf32>
    %737 = vector.shape_cast %736 : vector<16xf32> to vector<16x1xf32>
    %cst_298 = arith.constant 3.200000e+01 : f32
    %738 = vector.broadcast %cst_298 : f32 to vector<16x1xf32>
    %739 = arith.divf %737, %738 : vector<16x1xf32>
    %740 = vector.broadcast %739 : vector<16x1xf32> to vector<16x32xf32>
    %741 = arith.subf %735, %740 : vector<16x32xf32>
    %742 = arith.mulf %741, %741 : vector<16x32xf32>
    %cst_299 = arith.constant dense<0.000000e+00> : vector<16xf32>
    %743 = vector.multi_reduction <add>, %742, %cst_299 [1] : vector<16x32xf32> to vector<16xf32>
    %744 = vector.shape_cast %743 : vector<16xf32> to vector<16x1xf32>
    %cst_300 = arith.constant 3.200000e+01 : f32
    %745 = vector.broadcast %cst_300 : f32 to vector<16x1xf32>
    %746 = arith.divf %744, %745 : vector<16x1xf32>
    %747 = vector.broadcast %739 : vector<16x1xf32> to vector<16x32xf32>
    %748 = arith.subf %735, %747 : vector<16x32xf32>
    %cst_301 = arith.constant 9.99999996E-13 : f32
    %749 = vector.broadcast %cst_301 : f32 to vector<16x1xf32>
    %750 = arith.addf %746, %749 : vector<16x1xf32>
    %751 = math.rsqrt %750 : vector<16x1xf32>
    %752 = vector.broadcast %751 : vector<16x1xf32> to vector<16x32xf32>
    %753 = arith.mulf %748, %752 : vector<16x32xf32>
    %754 = vector.extract_strided_slice %409 {offsets = [4, 0], sizes = [1, 32], strides = [1, 1]} : vector<6x32xf32> to vector<1x32xf32>
    %755 = vector.broadcast %754 : vector<1x32xf32> to vector<16x32xf32>
    %756 = arith.mulf %753, %755 : vector<16x32xf32>
    %757 = vector.extract_strided_slice %411 {offsets = [4, 0], sizes = [1, 32], strides = [1, 1]} : vector<6x32xf32> to vector<1x32xf32>
    %758 = vector.broadcast %757 : vector<1x32xf32> to vector<16x32xf32>
    %759 = arith.addf %756, %758 : vector<16x32xf32>
    %c1_302 = arith.constant 1 : index
    %c0_303 = arith.constant 0 : index
    %c0_304 = arith.constant 0 : index
    %760 = vector.load %arg25[%c1_302, %c0_303, %c0_304] : memref<2x32x128xf32, #tpu.memory_space<vmem>>, vector<1x32x128xf32>
    %761 = vector.shape_cast %760 : vector<1x32x128xf32> to vector<32x128xf32>
    %c1_305 = arith.constant 1 : index
    %c0_306 = arith.constant 0 : index
    %c0_307 = arith.constant 0 : index
    %762 = vector.load %arg26[%c1_305, %c0_306, %c0_307] : memref<2x1x128xf32, #tpu.memory_space<vmem>>, vector<1x1x128xf32>
    %763 = vector.shape_cast %762 : vector<1x1x128xf32> to vector<1x128xf32>
    %cst_308 = arith.constant dense<0.000000e+00> : vector<16x128xf32>
    %764 = tpu.matmul %759, %761, %cst_308 {dimension_numbers = #tpu.dot_dimension_numbers<[1], [0], [0], [1], [0, 0, 1, 1], [], []>} : vector<16x32xf32>, vector<32x128xf32>, vector<16x128xf32> -> vector<16x128xf32>
    %765 = vector.broadcast %763 : vector<1x128xf32> to vector<16x128xf32>
    %766 = arith.addf %764, %765 : vector<16x128xf32>
    %767 = arith.mulf %766, %766 : vector<16x128xf32>
    %768 = arith.mulf %766, %767 : vector<16x128xf32>
    %cst_309 = arith.constant 4.471500e-02 : f32
    %769 = vector.broadcast %cst_309 : f32 to vector<16x128xf32>
    %770 = arith.mulf %769, %768 : vector<16x128xf32>
    %771 = arith.addf %766, %770 : vector<16x128xf32>
    %cst_310 = arith.constant 0.797884583 : f32
    %772 = vector.broadcast %cst_310 : f32 to vector<16x128xf32>
    %773 = arith.mulf %772, %771 : vector<16x128xf32>
    %774 = math.tanh %773 : vector<16x128xf32>
    %cst_311 = arith.constant 1.000000e+00 : f32
    %775 = vector.broadcast %cst_311 : f32 to vector<16x128xf32>
    %776 = arith.addf %775, %774 : vector<16x128xf32>
    %cst_312 = arith.constant 5.000000e-01 : f32
    %777 = vector.broadcast %cst_312 : f32 to vector<16x128xf32>
    %778 = arith.mulf %777, %776 : vector<16x128xf32>
    %779 = arith.mulf %766, %778 : vector<16x128xf32>
    %c1_313 = arith.constant 1 : index
    %c0_314 = arith.constant 0 : index
    %c0_315 = arith.constant 0 : index
    %780 = vector.load %arg27[%c1_313, %c0_314, %c0_315] : memref<2x128x32xf32, #tpu.memory_space<vmem>>, vector<1x128x32xf32>
    %781 = vector.shape_cast %780 : vector<1x128x32xf32> to vector<128x32xf32>
    %c1_316 = arith.constant 1 : index
    %c0_317 = arith.constant 0 : index
    %c0_318 = arith.constant 0 : index
    %782 = vector.load %arg28[%c1_316, %c0_317, %c0_318] : memref<2x1x32xf32, #tpu.memory_space<vmem>>, vector<1x1x32xf32>
    %783 = vector.shape_cast %782 : vector<1x1x32xf32> to vector<1x32xf32>
    %cst_319 = arith.constant dense<0.000000e+00> : vector<16x32xf32>
    %784 = tpu.matmul %779, %781, %cst_319 {dimension_numbers = #tpu.dot_dimension_numbers<[1], [0], [0], [1], [0, 0, 1, 1], [], []>} : vector<16x128xf32>, vector<128x32xf32>, vector<16x32xf32> -> vector<16x32xf32>
    %785 = vector.broadcast %783 : vector<1x32xf32> to vector<16x32xf32>
    %786 = arith.addf %784, %785 : vector<16x32xf32>
    %787 = arith.addf %786, %759 : vector<16x32xf32>
    %cst_320 = arith.constant dense<0.000000e+00> : vector<16xf32>
    %788 = vector.multi_reduction <add>, %787, %cst_320 [1] : vector<16x32xf32> to vector<16xf32>
    %789 = vector.shape_cast %788 : vector<16xf32> to vector<16x1xf32>
    %cst_321 = arith.constant 3.200000e+01 : f32
    %790 = vector.broadcast %cst_321 : f32 to vector<16x1xf32>
    %791 = arith.divf %789, %790 : vector<16x1xf32>
    %792 = vector.broadcast %791 : vector<16x1xf32> to vector<16x32xf32>
    %793 = arith.subf %787, %792 : vector<16x32xf32>
    %794 = arith.mulf %793, %793 : vector<16x32xf32>
    %cst_322 = arith.constant dense<0.000000e+00> : vector<16xf32>
    %795 = vector.multi_reduction <add>, %794, %cst_322 [1] : vector<16x32xf32> to vector<16xf32>
    %796 = vector.shape_cast %795 : vector<16xf32> to vector<16x1xf32>
    %cst_323 = arith.constant 3.200000e+01 : f32
    %797 = vector.broadcast %cst_323 : f32 to vector<16x1xf32>
    %798 = arith.divf %796, %797 : vector<16x1xf32>
    %799 = vector.broadcast %791 : vector<16x1xf32> to vector<16x32xf32>
    %800 = arith.subf %787, %799 : vector<16x32xf32>
    %cst_324 = arith.constant 9.99999996E-13 : f32
    %801 = vector.broadcast %cst_324 : f32 to vector<16x1xf32>
    %802 = arith.addf %798, %801 : vector<16x1xf32>
    %803 = math.rsqrt %802 : vector<16x1xf32>
    %804 = vector.broadcast %803 : vector<16x1xf32> to vector<16x32xf32>
    %805 = arith.mulf %800, %804 : vector<16x32xf32>
    %806 = vector.extract_strided_slice %409 {offsets = [5, 0], sizes = [1, 32], strides = [1, 1]} : vector<6x32xf32> to vector<1x32xf32>
    %807 = vector.broadcast %806 : vector<1x32xf32> to vector<16x32xf32>
    %808 = arith.mulf %805, %807 : vector<16x32xf32>
    %809 = vector.extract_strided_slice %411 {offsets = [5, 0], sizes = [1, 32], strides = [1, 1]} : vector<6x32xf32> to vector<1x32xf32>
    %810 = vector.broadcast %809 : vector<1x32xf32> to vector<16x32xf32>
    %811 = arith.addf %808, %810 : vector<16x32xf32>
    %c0_325 = arith.constant 0 : index
    %c0_326 = arith.constant 0 : index
    %812 = vector.load %arg31[%c0_325, %c0_326] : memref<16x32xf32, #tpu.memory_space<vmem>>, vector<16x32xf32>
    tpu.vector_store %arg31[%c0_325, %c0_326], %660 {strides = array<i32>} : memref<16x32xf32, #tpu.memory_space<vmem>>, vector<16x32xf32>,
    %c0_327 = arith.constant 0 : index
    %c0_328 = arith.constant 0 : index
    %813 = vector.load %arg32[%c0_327, %c0_328] : memref<16x32xf32, #tpu.memory_space<vmem>>, vector<16x32xf32>
    tpu.vector_store %arg32[%c0_327, %c0_328], %811 {strides = array<i32>} : memref<16x32xf32, #tpu.memory_space<vmem>>, vector<16x32xf32>,
    return
  }
  func.func @transform_0(%arg0: i32) -> (i32, i32) {
    %c0_i32 = arith.constant 0 : i32
    %c0_i32_0 = arith.constant 0 : i32
    %c0_i32_1 = arith.constant 0 : i32
    return %c0_i32, %c0_i32_0 : i32, i32
  }
  func.func @transform_1(%arg0: i32) -> (i32, i32) {
    %c0_i32 = arith.constant 0 : i32
    %c0_i32_0 = arith.constant 0 : i32
    %c0_i32_1 = arith.constant 0 : i32
    return %c0_i32, %c0_i32_0 : i32, i32
  }
  func.func @transform_2(%arg0: i32) -> (i32, i32) {
    %c0_i32 = arith.constant 0 : i32
    %c0_i32_0 = arith.constant 0 : i32
    %c0_i32_1 = arith.constant 0 : i32
    return %c0_i32, %c0_i32_0 : i32, i32
  }
  func.func @transform_3(%arg0: i32) -> (i32, i32) {
    %c0_i32 = arith.constant 0 : i32
    %c0_i32_0 = arith.constant 0 : i32
    %c0_i32_1 = arith.constant 0 : i32
    return %c0_i32, %c0_i32_0 : i32, i32
  }
  func.func @transform_4(%arg0: i32) -> (i32, i32, i32) {
    %c0_i32 = arith.constant 0 : i32
    %c0_i32_0 = arith.constant 0 : i32
    %c0_i32_1 = arith.constant 0 : i32
    %c0_i32_2 = arith.constant 0 : i32
    return %c0_i32, %c0_i32_0, %c0_i32_1 : i32, i32, i32
  }
  func.func @transform_5(%arg0: i32) -> (i32, i32, i32) {
    %c0_i32 = arith.constant 0 : i32
    %c0_i32_0 = arith.constant 0 : i32
    %c0_i32_1 = arith.constant 0 : i32
    %c0_i32_2 = arith.constant 0 : i32
    return %c0_i32, %c0_i32_0, %c0_i32_1 : i32, i32, i32
  }
  func.func @transform_6(%arg0: i32) -> (i32, i32, i32) {
    %c0_i32 = arith.constant 0 : i32
    %c0_i32_0 = arith.constant 0 : i32
    %c0_i32_1 = arith.constant 0 : i32
    %c0_i32_2 = arith.constant 0 : i32
    return %c0_i32, %c0_i32_0, %c0_i32_1 : i32, i32, i32
  }
  func.func @transform_7(%arg0: i32) -> (i32, i32, i32) {
    %c0_i32 = arith.constant 0 : i32
    %c0_i32_0 = arith.constant 0 : i32
    %c0_i32_1 = arith.constant 0 : i32
    %c0_i32_2 = arith.constant 0 : i32
    return %c0_i32, %c0_i32_0, %c0_i32_1 : i32, i32, i32
  }
  func.func @transform_8(%arg0: i32) -> (i32, i32, i32) {
    %c0_i32 = arith.constant 0 : i32
    %c0_i32_0 = arith.constant 0 : i32
    %c0_i32_1 = arith.constant 0 : i32
    %c0_i32_2 = arith.constant 0 : i32
    return %c0_i32, %c0_i32_0, %c0_i32_1 : i32, i32, i32
  }
  func.func @transform_9(%arg0: i32) -> (i32, i32, i32) {
    %c0_i32 = arith.constant 0 : i32
    %c0_i32_0 = arith.constant 0 : i32
    %c0_i32_1 = arith.constant 0 : i32
    %c0_i32_2 = arith.constant 0 : i32
    return %c0_i32, %c0_i32_0, %c0_i32_1 : i32, i32, i32
  }
  func.func @transform_10(%arg0: i32) -> (i32, i32, i32) {
    %c0_i32 = arith.constant 0 : i32
    %c0_i32_0 = arith.constant 0 : i32
    %c0_i32_1 = arith.constant 0 : i32
    %c0_i32_2 = arith.constant 0 : i32
    return %c0_i32, %c0_i32_0, %c0_i32_1 : i32, i32, i32
  }
  func.func @transform_11(%arg0: i32) -> (i32, i32, i32) {
    %c0_i32 = arith.constant 0 : i32
    %c0_i32_0 = arith.constant 0 : i32
    %c0_i32_1 = arith.constant 0 : i32
    %c0_i32_2 = arith.constant 0 : i32
    return %c0_i32, %c0_i32_0, %c0_i32_1 : i32, i32, i32
  }
  func.func @transform_12(%arg0: i32) -> (i32, i32, i32) {
    %c0_i32 = arith.constant 0 : i32
    %c0_i32_0 = arith.constant 0 : i32
    %c0_i32_1 = arith.constant 0 : i32
    %c0_i32_2 = arith.constant 0 : i32
    return %c0_i32, %c0_i32_0, %c0_i32_1 : i32, i32, i32
  }
  func.func @transform_13(%arg0: i32) -> (i32, i32, i32) {
    %c0_i32 = arith.constant 0 : i32
    %c0_i32_0 = arith.constant 0 : i32
    %c0_i32_1 = arith.constant 0 : i32
    %c0_i32_2 = arith.constant 0 : i32
    return %c0_i32, %c0_i32_0, %c0_i32_1 : i32, i32, i32
  }
  func.func @transform_14(%arg0: i32) -> (i32, i32, i32) {
    %c0_i32 = arith.constant 0 : i32
    %c0_i32_0 = arith.constant 0 : i32
    %c0_i32_1 = arith.constant 0 : i32
    %c0_i32_2 = arith.constant 0 : i32
    return %c0_i32, %c0_i32_0, %c0_i32_1 : i32, i32, i32
  }
  func.func @transform_15(%arg0: i32) -> (i32, i32, i32) {
    %c0_i32 = arith.constant 0 : i32
    %c0_i32_0 = arith.constant 0 : i32
    %c0_i32_1 = arith.constant 0 : i32
    %c0_i32_2 = arith.constant 0 : i32
    return %c0_i32, %c0_i32_0, %c0_i32_1 : i32, i32, i32
  }
  func.func @transform_16(%arg0: i32) -> (i32, i32, i32) {
    %c0_i32 = arith.constant 0 : i32
    %c0_i32_0 = arith.constant 0 : i32
    %c0_i32_1 = arith.constant 0 : i32
    %c0_i32_2 = arith.constant 0 : i32
    return %c0_i32, %c0_i32_0, %c0_i32_1 : i32, i32, i32
  }
  func.func @transform_17(%arg0: i32) -> (i32, i32, i32) {
    %c0_i32 = arith.constant 0 : i32
    %c0_i32_0 = arith.constant 0 : i32
    %c0_i32_1 = arith.constant 0 : i32
    %c0_i32_2 = arith.constant 0 : i32
    return %c0_i32, %c0_i32_0, %c0_i32_1 : i32, i32, i32
  }
  func.func @transform_18(%arg0: i32) -> (i32, i32, i32) {
    %c0_i32 = arith.constant 0 : i32
    %c0_i32_0 = arith.constant 0 : i32
    %c0_i32_1 = arith.constant 0 : i32
    %c0_i32_2 = arith.constant 0 : i32
    return %c0_i32, %c0_i32_0, %c0_i32_1 : i32, i32, i32
  }
  func.func @transform_19(%arg0: i32) -> (i32, i32, i32) {
    %c0_i32 = arith.constant 0 : i32
    %c0_i32_0 = arith.constant 0 : i32
    %c0_i32_1 = arith.constant 0 : i32
    %c0_i32_2 = arith.constant 0 : i32
    return %c0_i32, %c0_i32_0, %c0_i32_1 : i32, i32, i32
  }
  func.func @transform_20(%arg0: i32) -> (i32, i32, i32) {
    %c0_i32 = arith.constant 0 : i32
    %c0_i32_0 = arith.constant 0 : i32
    %c0_i32_1 = arith.constant 0 : i32
    %c0_i32_2 = arith.constant 0 : i32
    return %c0_i32, %c0_i32_0, %c0_i32_1 : i32, i32, i32
  }
  func.func @transform_21(%arg0: i32) -> (i32, i32, i32) {
    %c0_i32 = arith.constant 0 : i32
    %c0_i32_0 = arith.constant 0 : i32
    %c0_i32_1 = arith.constant 0 : i32
    %c0_i32_2 = arith.constant 0 : i32
    return %c0_i32, %c0_i32_0, %c0_i32_1 : i32, i32, i32
  }
  func.func @transform_22(%arg0: i32) -> (i32, i32, i32) {
    %c0_i32 = arith.constant 0 : i32
    %c0_i32_0 = arith.constant 0 : i32
    %c0_i32_1 = arith.constant 0 : i32
    %c0_i32_2 = arith.constant 0 : i32
    return %c0_i32, %c0_i32_0, %c0_i32_1 : i32, i32, i32
  }
  func.func @transform_23(%arg0: i32) -> (i32, i32, i32) {
    %c0_i32 = arith.constant 0 : i32
    %c0_i32_0 = arith.constant 0 : i32
    %c0_i32_1 = arith.constant 0 : i32
    %c0_i32_2 = arith.constant 0 : i32
    return %c0_i32, %c0_i32_0, %c0_i32_1 : i32, i32, i32
  }
  func.func @transform_24(%arg0: i32) -> (i32, i32, i32) {
    %c0_i32 = arith.constant 0 : i32
    %c0_i32_0 = arith.constant 0 : i32
    %c0_i32_1 = arith.constant 0 : i32
    %c0_i32_2 = arith.constant 0 : i32
    return %c0_i32, %c0_i32_0, %c0_i32_1 : i32, i32, i32
  }
  func.func @transform_25(%arg0: i32) -> (i32, i32, i32) {
    %c0_i32 = arith.constant 0 : i32
    %c0_i32_0 = arith.constant 0 : i32
    %c0_i32_1 = arith.constant 0 : i32
    %c0_i32_2 = arith.constant 0 : i32
    return %c0_i32, %c0_i32_0, %c0_i32_1 : i32, i32, i32
  }
  func.func @transform_26(%arg0: i32) -> (i32, i32, i32) {
    %c0_i32 = arith.constant 0 : i32
    %c0_i32_0 = arith.constant 0 : i32
    %c0_i32_1 = arith.constant 0 : i32
    %c0_i32_2 = arith.constant 0 : i32
    return %c0_i32, %c0_i32_0, %c0_i32_1 : i32, i32, i32
  }
  func.func @transform_27(%arg0: i32) -> (i32, i32, i32) {
    %c0_i32 = arith.constant 0 : i32
    %c0_i32_0 = arith.constant 0 : i32
    %c0_i32_1 = arith.constant 0 : i32
    %c0_i32_2 = arith.constant 0 : i32
    return %c0_i32, %c0_i32_0, %c0_i32_1 : i32, i32, i32
  }
  func.func @transform_28(%arg0: i32) -> (i32, i32, i32) {
    %c0_i32 = arith.constant 0 : i32
    %c0_i32_0 = arith.constant 0 : i32
    %c0_i32_1 = arith.constant 0 : i32
    %c0_i32_2 = arith.constant 0 : i32
    return %c0_i32, %c0_i32_0, %c0_i32_1 : i32, i32, i32
  }
  func.func @transform_29(%arg0: i32) -> (i32, i32, i32) {
    %c0_i32 = arith.constant 0 : i32
    %c0_i32_0 = arith.constant 0 : i32
    %c0_i32_1 = arith.constant 0 : i32
    %c0_i32_2 = arith.constant 0 : i32
    return %c0_i32, %c0_i32_0, %c0_i32_1 : i32, i32, i32
  }
  func.func @transform_30(%arg0: i32) -> (i32, i32) {
    %c0_i32 = arith.constant 0 : i32
    %c0_i32_0 = arith.constant 0 : i32
    %c0_i32_1 = arith.constant 0 : i32
    return %c0_i32, %c0_i32_0 : i32, i32
  }
  func.func @transform_31(%arg0: i32) -> (i32, i32) {
    %c0_i32 = arith.constant 0 : i32
    %c0_i32_0 = arith.constant 0 : i32
    %c0_i32_1 = arith.constant 0 : i32
    return %c0_i32, %c0_i32_0 : i32, i32
  }
}

</mosaic_0001>

<llo_original>
// kernel: _lambda_.1
$region0: #{_lambda_.1}
  #allocation0 [shape = 'u32[]', space=smem, size = 0x4, offset = 0x4, fixed_abs, tag = 'smem constant byte address 0x4 - core index']
  #allocation1 [shape = 'u32[144,128]{1,0:T(1,128)}', space=vmem, size = 0x12000, scoped, tag = 'internal scratch']
  %s0 = inlined_call_operand.smem [shape: u32[32], index: -1, kind: input, shape index: {}]
  %s1 = sld [smem:[%s0]]
  %s2 = scalar_lea.smem %s0, 1
  %s3 = sld [smem:[%s2]]
  %s4 = scalar_lea.smem %s0, 2
  %s5 = sld [smem:[%s4]]
  %s6 = scalar_lea.smem %s0, 3
  %s7 = sld [smem:[%s6]]
  %s8 = scalar_lea.smem %s0, 4
  %s9 = sld [smem:[%s8]]
  %s10 = scalar_lea.smem %s0, 5
  %s11 = sld [smem:[%s10]]
  %s12 = scalar_lea.smem %s0, 6
  %s13 = sld [smem:[%s12]]
  %s14 = scalar_lea.smem %s0, 7
  %s15 = sld [smem:[%s14]]
  %s16 = scalar_lea.smem %s0, 8
  %s17 = sld [smem:[%s16]]
  %s18 = scalar_lea.smem %s0, 9
  %s19 = sld [smem:[%s18]]
  %s20 = scalar_lea.smem %s0, 10
  %s21 = sld [smem:[%s20]]
  %s22 = scalar_lea.smem %s0, 11
  %s23 = sld [smem:[%s22]]
  %s24 = scalar_lea.smem %s0, 12
  %s25 = sld [smem:[%s24]]
  %s26 = scalar_lea.smem %s0, 13
  %s27 = sld [smem:[%s26]]
  %s28 = scalar_lea.smem %s0, 14
  %s29 = sld [smem:[%s28]]
  %s30 = scalar_lea.smem %s0, 15
  %s31 = sld [smem:[%s30]]
  %s32 = scalar_lea.smem %s0, 16
  %s33 = sld [smem:[%s32]]
  %s34 = scalar_lea.smem %s0, 17
  %s35 = sld [smem:[%s34]]
  %s36 = scalar_lea.smem %s0, 18
  %s37 = sld [smem:[%s36]]
  %s38 = scalar_lea.smem %s0, 19
  %s39 = sld [smem:[%s38]]
  %s40 = scalar_lea.smem %s0, 20
  %s41 = sld [smem:[%s40]]
  %s42 = scalar_lea.smem %s0, 21
  %s43 = sld [smem:[%s42]]
  %s44 = scalar_lea.smem %s0, 22
  %s45 = sld [smem:[%s44]]
  %s46 = scalar_lea.smem %s0, 23
  %s47 = sld [smem:[%s46]]
  %s48 = scalar_lea.smem %s0, 24
  %s49 = sld [smem:[%s48]]
  %s50 = scalar_lea.smem %s0, 25
  %s51 = sld [smem:[%s50]]
  %s52 = scalar_lea.smem %s0, 26
  %s53 = sld [smem:[%s52]]
  %s54 = scalar_lea.smem %s0, 27
  %s55 = sld [smem:[%s54]]
  %s56 = scalar_lea.smem %s0, 28
  %s57 = sld [smem:[%s56]]
  %s58 = scalar_lea.smem %s0, 29
  %s59 = sld [smem:[%s58]]
  %s60 = scalar_lea.smem %s0, 30
  %s61 = sld [smem:[%s60]]
  %s62 = scalar_lea.smem %s0, 31
  %s63 = sld [smem:[%s62]]
  %64 = xla_tuple %s61, %s63
  %s65 = sld [smem:[#allocation0]]
  $region162: #{_lambda_.1} parent=0
    _
  %s67 = ssub.s32 1, %s65
  %s68 = scalar_select 0, %s67, %s65
  $region1: #{_lambda_.1} parent=0
    #allocation2 [shape = 'u8[8192]{0}', space=vmem, size = 0x2000, scoped, tag = 'input window, operand 0, single buffered']
    #allocation3 [shape = 's32[1]{0}', space=sflag, size = 0x4, scoped, tag = 'scoped memory for _lambda_.1']
    #allocation4 [shape = 's32[1]{0}', space=sflag, size = 0x4, scoped, tag = 'scoped memory for _lambda_.1']
    #allocation5 [shape = 'u8[8192]{0}', space=vmem, size = 0x2000, scoped, tag = 'input window, operand 1, single buffered']
    #allocation6 [shape = 's32[1]{0}', space=sflag, size = 0x4, scoped, tag = 'scoped memory for _lambda_.1']
    #allocation7 [shape = 'u8[1024]{0}', space=vmem, size = 0x400, scoped, tag = 'input window, operand 5, single buffered']
    #allocation8 [shape = 'u8[1024]{0}', space=vmem, size = 0x400, scoped, tag = 'input window, operand 7, single buffered']
    #allocation9 [shape = 's32[1]{0}', space=sflag, size = 0x4, scoped, tag = 'scoped memory for _lambda_.1']
    #allocation10 [shape = 'u8[1024]{0}', space=vmem, size = 0x400, scoped, tag = 'input window, operand 11, single buffered']
    #allocation11 [shape = 'u8[1024]{0}', space=vmem, size = 0x400, scoped, tag = 'input window, operand 13, single buffered']
    #allocation12 [shape = 's32[1]{0}', space=sflag, size = 0x4, scoped, tag = 'scoped memory for _lambda_.1']
    #allocation13 [shape = 'u8[8192]{0}', space=vmem, size = 0x2000, scoped, tag = 'output window, operand 0, single buffered']
    #allocation14 [shape = 'u8[8192]{0}', space=vmem, size = 0x2000, scoped, tag = 'output window, operand 1, single buffered']
    #allocation15 [shape = 's32[1]{0}', space=sflag, size = 0x4, scoped, tag = 'scoped memory for _lambda_.1']
    %69 = vsyncpa [#allocation3], 0
    %70 = vsyncpa [#allocation6], 0
    %71 = vsyncpa [#allocation9], 0
    %72 = vsyncpa [#allocation12], 0
    %73 = vsyncpa [#allocation4], 0
    %74 = vsyncpa [#allocation15], 0
    // Predicated region
    $region2: #{_lambda_.1} parent=1 // pred_check
      _
    $region3: #{_lambda_.1} parent=1 // pred_check_branch
      %76 = sbr.rel (0) target = $region5
    $region4: #{_lambda_.1} parent=1 // pred_region
      %s78 = ssub.s32 256, 256
      %79 = vsyncadd [#allocation3], %s78
      %s80 = sshll.u32 [#allocation2], 4
      %s81 = int_to_ptr.vmem [resolvable:$true] %s80
      %86 = dma.hbm_to_vmem [thread:$0]  %s1, 256, %s81, [#allocation3], 128, 128, 8
    $region5: #{_lambda_.1} parent=1 // pred_fallthru
      _
    // Predicated region
    $region6: #{_lambda_.1} parent=1 // pred_check
      _
    $region7: #{_lambda_.1} parent=1 // pred_check_branch
      %88 = sbr.rel (0) target = $region9
    $region8: #{_lambda_.1} parent=1 // pred_region
      %s90 = ssub.s32 256, 256
      %91 = vsyncadd [#allocation6], %s90
      %s92 = sshll.u32 [#allocation5], 4
      %s93 = int_to_ptr.vmem [resolvable:$true] %s92
      %98 = dma.hbm_to_vmem [thread:$0]  %s3, 256, %s93, [#allocation6], 128, 128, 8
    $region9: #{_lambda_.1} parent=1 // pred_fallthru
      _
    // Predicated region
    $region10: #{_lambda_.1} parent=1 // pred_check
      _
    $region11: #{_lambda_.1} parent=1 // pred_check_branch
      %100 = sbr.rel (0) target = $region13
    $region12: #{_lambda_.1} parent=1 // pred_region
      _
    $region13: #{_lambda_.1} parent=1 // pred_fallthru
      _
    // Predicated region
    $region14: #{_lambda_.1} parent=1 // pred_check
      _
    $region15: #{_lambda_.1} parent=1 // pred_check_branch
      %102 = sbr.rel (0) target = $region17
    $region16: #{_lambda_.1} parent=1 // pred_region
      _
    $region17: #{_lambda_.1} parent=1 // pred_fallthru
      _
    // Predicated region
    $region18: #{_lambda_.1} parent=1 // pred_check
      _
    $region19: #{_lambda_.1} parent=1 // pred_check_branch
      %104 = sbr.rel (0) target = $region21
    $region20: #{_lambda_.1} parent=1 // pred_region
      _
    $region21: #{_lambda_.1} parent=1 // pred_fallthru
      _
    // Predicated region
    $region22: #{_lambda_.1} parent=1 // pred_check
      _
    $region23: #{_lambda_.1} parent=1 // pred_check_branch
      %106 = sbr.rel (0) target = $region25
    $region24: #{_lambda_.1} parent=1 // pred_region
      %s108 = ssub.s32 32, 32
      %109 = vsyncadd [#allocation6], %s108
      %s110 = sshll.u32 [#allocation7], 4
      %s111 = int_to_ptr.vmem [resolvable:$true] %s110
      %116 = dma.hbm_to_vmem [thread:$0]  %s11, 32, %s111, [#allocation6], 16, 16, 1
    $region25: #{_lambda_.1} parent=1 // pred_fallthru
      _
    // Predicated region
    $region26: #{_lambda_.1} parent=1 // pred_check
      _
    $region27: #{_lambda_.1} parent=1 // pred_check_branch
      %118 = sbr.rel (0) target = $region29
    $region28: #{_lambda_.1} parent=1 // pred_region
      _
    $region29: #{_lambda_.1} parent=1 // pred_fallthru
      _
    // Predicated region
    $region30: #{_lambda_.1} parent=1 // pred_check
      _
    $region31: #{_lambda_.1} parent=1 // pred_check_branch
      %120 = sbr.rel (0) target = $region33
    $region32: #{_lambda_.1} parent=1 // pred_region
      %s122 = ssub.s32 32, 32
      %123 = vsyncadd [#allocation9], %s122
      %s124 = sshll.u32 [#allocation8], 4
      %s125 = int_to_ptr.vmem [resolvable:$true] %s124
      %130 = dma.hbm_to_vmem [thread:$0]  %s15, 32, %s125, [#allocation9], 16, 16, 1
    $region33: #{_lambda_.1} parent=1 // pred_fallthru
      _
    // Predicated region
    $region34: #{_lambda_.1} parent=1 // pred_check
      _
    $region35: #{_lambda_.1} parent=1 // pred_check_branch
      %132 = sbr.rel (0) target = $region37
    $region36: #{_lambda_.1} parent=1 // pred_region
      _
    $region37: #{_lambda_.1} parent=1 // pred_fallthru
      _
    // Predicated region
    $region38: #{_lambda_.1} parent=1 // pred_check
      _
    $region39: #{_lambda_.1} parent=1 // pred_check_branch
      %134 = sbr.rel (0) target = $region41
    $region40: #{_lambda_.1} parent=1 // pred_region
      _
    $region41: #{_lambda_.1} parent=1 // pred_fallthru
      _
    // Predicated region
    $region42: #{_lambda_.1} parent=1 // pred_check
      _
    $region43: #{_lambda_.1} parent=1 // pred_check_branch
      %136 = sbr.rel (0) target = $region45
    $region44: #{_lambda_.1} parent=1 // pred_region
      _
    $region45: #{_lambda_.1} parent=1 // pred_fallthru
      _
    // Predicated region
    $region46: #{_lambda_.1} parent=1 // pred_check
      _
    $region47: #{_lambda_.1} parent=1 // pred_check_branch
      %138 = sbr.rel (0) target = $region49
    $region48: #{_lambda_.1} parent=1 // pred_region
      %s140 = ssub.s32 32, 32
      %141 = vsyncadd [#allocation9], %s140
      %s142 = sshll.u32 [#allocation10], 4
      %s143 = int_to_ptr.vmem [resolvable:$true] %s142
      %148 = dma.hbm_to_vmem [thread:$0]  %s23, 32, %s143, [#allocation9], 16, 16, 1
    $region49: #{_lambda_.1} parent=1 // pred_fallthru
      _
    // Predicated region
    $region50: #{_lambda_.1} parent=1 // pred_check
      _
    $region51: #{_lambda_.1} parent=1 // pred_check_branch
      %150 = sbr.rel (0) target = $region53
    $region52: #{_lambda_.1} parent=1 // pred_region
      _
    $region53: #{_lambda_.1} parent=1 // pred_fallthru
      _
    // Predicated region
    $region54: #{_lambda_.1} parent=1 // pred_check
      _
    $region55: #{_lambda_.1} parent=1 // pred_check_branch
      %152 = sbr.rel (0) target = $region57
    $region56: #{_lambda_.1} parent=1 // pred_region
      %s154 = ssub.s32 32, 32
      %155 = vsyncadd [#allocation12], %s154
      %s156 = sshll.u32 [#allocation11], 4
      %s157 = int_to_ptr.vmem [resolvable:$true] %s156
      %162 = dma.hbm_to_vmem [thread:$0]  %s27, 32, %s157, [#allocation12], 16, 16, 1
    $region57: #{_lambda_.1} parent=1 // pred_fallthru
      _
    // Predicated region
    $region58: #{_lambda_.1} parent=1 // pred_check
      _
    $region59: #{_lambda_.1} parent=1 // pred_check_branch
      %164 = sbr.rel (0) target = $region61
    $region60: #{_lambda_.1} parent=1 // pred_region
      _
    $region61: #{_lambda_.1} parent=1 // pred_fallthru
      _
    // Predicated region
    $region62: #{_lambda_.1} parent=1 // pred_check
      _
    $region63: #{_lambda_.1} parent=1 // pred_check_branch
      %166 = sbr.rel (0) target = $region65
    $region64: #{_lambda_.1} parent=1 // pred_region
      _
    $region65: #{_lambda_.1} parent=1 // pred_fallthru
      _
    // Predicated region
    $region66: #{_lambda_.1} parent=1 // pred_check
      _
    $region67: #{_lambda_.1} parent=1 // pred_check_branch
      %168 = sbr.rel (0) target = $region69
    $region68: #{_lambda_.1} parent=1 // pred_region
      _
    $region69: #{_lambda_.1} parent=1 // pred_fallthru
      _
    // Predicated region
    $region70: #{_lambda_.1} parent=1 // pred_check
      _
    $region71: #{_lambda_.1} parent=1 // pred_check_branch
      %170 = sbr.rel (0) target = $region73
    $region72: #{_lambda_.1} parent=1 // pred_region
      _
    $region73: #{_lambda_.1} parent=1 // pred_fallthru
      _
    // Predicated region
    $region74: #{_lambda_.1} parent=1 // pred_check
      _
    $region75: #{_lambda_.1} parent=1 // pred_check_branch
      %172 = sbr.rel (0) target = $region77
    $region76: #{_lambda_.1} parent=1 // pred_region
      _
    $region77: #{_lambda_.1} parent=1 // pred_fallthru
      _
    // Predicated region
    $region78: #{_lambda_.1} parent=1 // pred_check
      _
    $region79: #{_lambda_.1} parent=1 // pred_check_branch
      %174 = sbr.rel (0) target = $region81
    $region80: #{_lambda_.1} parent=1 // pred_region
      _
    $region81: #{_lambda_.1} parent=1 // pred_fallthru
      _
    // Predicated region
    $region82: #{_lambda_.1} parent=1 // pred_check
      _
    $region83: #{_lambda_.1} parent=1 // pred_check_branch
      %176 = sbr.rel (0) target = $region85
    $region84: #{_lambda_.1} parent=1 // pred_region
      _
    $region85: #{_lambda_.1} parent=1 // pred_fallthru
      _
    // Predicated region
    $region86: #{_lambda_.1} parent=1 // pred_check
      _
    $region87: #{_lambda_.1} parent=1 // pred_check_branch
      %178 = sbr.rel (0) target = $region89
    $region88: #{_lambda_.1} parent=1 // pred_region
      _
    $region89: #{_lambda_.1} parent=1 // pred_fallthru
      _
    // Predicated region
    $region90: #{_lambda_.1} parent=1 // pred_check
      _
    $region91: #{_lambda_.1} parent=1 // pred_check_branch
      %180 = sbr.rel (0) target = $region93
    $region92: #{_lambda_.1} parent=1 // pred_region
      _
    $region93: #{_lambda_.1} parent=1 // pred_fallthru
      _
    // Predicated region
    $region94: #{_lambda_.1} parent=1 // pred_check
      _
    $region95: #{_lambda_.1} parent=1 // pred_check_branch
      %182 = sbr.rel (0) target = $region97
    $region96: #{_lambda_.1} parent=1 // pred_region
      _
    $region97: #{_lambda_.1} parent=1 // pred_fallthru
      _
    // Predicated region
    $region98: #{_lambda_.1} parent=1 // pred_check
      _
    $region99: #{_lambda_.1} parent=1 // pred_check_branch
      %184 = sbr.rel (0) target = $region101
    $region100: #{_lambda_.1} parent=1 // pred_region
      _
    $region101: #{_lambda_.1} parent=1 // pred_fallthru
      _
    // Predicated region
    $region102: #{_lambda_.1} parent=1 // pred_check
      _
    $region103: #{_lambda_.1} parent=1 // pred_check_branch
      %186 = sbr.rel (0) target = $region105
    $region104: #{_lambda_.1} parent=1 // pred_region
      _
    $region105: #{_lambda_.1} parent=1 // pred_fallthru
      _
    // Predicated region
    $region106: #{_lambda_.1} parent=1 // pred_check
      _
    $region107: #{_lambda_.1} parent=1 // pred_check_branch
      %188 = sbr.rel (0) target = $region109
    $region108: #{_lambda_.1} parent=1 // pred_region
      _
    $region109: #{_lambda_.1} parent=1 // pred_fallthru
      _
    // Predicated region
    $region110: #{_lambda_.1} parent=1 // pred_check
      _
    $region111: #{_lambda_.1} parent=1 // pred_check_branch
      %190 = sbr.rel (0) target = $region113
    $region112: #{_lambda_.1} parent=1 // pred_region
      _
    $region113: #{_lambda_.1} parent=1 // pred_fallthru
      _
    // Predicated region
    $region114: #{_lambda_.1} parent=1 // pred_check
      _
    $region115: #{_lambda_.1} parent=1 // pred_check_branch
      %192 = sbr.rel (0) target = $region117
    $region116: #{_lambda_.1} parent=1 // pred_region
      _
    $region117: #{_lambda_.1} parent=1 // pred_fallthru
      _
    // Predicated region
    $region118: #{_lambda_.1} parent=1 // pred_check
      _
    $region119: #{_lambda_.1} parent=1 // pred_check_branch
      %194 = sbr.rel (0) target = $region121
    $region120: #{_lambda_.1} parent=1 // pred_region
      _
    $region121: #{_lambda_.1} parent=1 // pred_fallthru
      _
    // Predicated region
    $region122: #{_lambda_.1} parent=1 // pred_check
      _
    $region123: #{_lambda_.1} parent=1 // pred_check_branch
      %196 = sbr.rel (0) target = $region125
    $region124: #{_lambda_.1} parent=1 // pred_region
      %197 = dma.done [#allocation3], 256
    $region125: #{_lambda_.1} parent=1 // pred_fallthru
      _
    // Predicated region
    $region126: #{_lambda_.1} parent=1 // pred_check
      _
    $region127: #{_lambda_.1} parent=1 // pred_check_branch
      %199 = sbr.rel (0) target = $region129
    $region128: #{_lambda_.1} parent=1 // pred_region
      %200 = dma.done [#allocation6], 256
    $region129: #{_lambda_.1} parent=1 // pred_fallthru
      _
    // Predicated region
    $region130: #{_lambda_.1} parent=1 // pred_check
      _
    $region131: #{_lambda_.1} parent=1 // pred_check_branch
      %202 = sbr.rel (0) target = $region133
    $region132: #{_lambda_.1} parent=1 // pred_region
      %203 = dma.done [#allocation6], 32
    $region133: #{_lambda_.1} parent=1 // pred_fallthru
      _
    // Predicated region
    $region134: #{_lambda_.1} parent=1 // pred_check
      _
    $region135: #{_lambda_.1} parent=1 // pred_check_branch
      %205 = sbr.rel (0) target = $region137
    $region136: #{_lambda_.1} parent=1 // pred_region
      %206 = dma.done [#allocation9], 32
    $region137: #{_lambda_.1} parent=1 // pred_fallthru
      _
    // Predicated region
    $region138: #{_lambda_.1} parent=1 // pred_check
      _
    $region139: #{_lambda_.1} parent=1 // pred_check_branch
      %208 = sbr.rel (0) target = $region141
    $region140: #{_lambda_.1} parent=1 // pred_region
      %209 = dma.done [#allocation9], 32
    $region141: #{_lambda_.1} parent=1 // pred_fallthru
      _
    // Predicated region
    $region142: #{_lambda_.1} parent=1 // pred_check
      _
    $region143: #{_lambda_.1} parent=1 // pred_check_branch
      %211 = sbr.rel (0) target = $region145
    $region144: #{_lambda_.1} parent=1 // pred_region
      %212 = dma.done [#allocation12], 32
    $region145: #{_lambda_.1} parent=1 // pred_fallthru
      _
    %v213 = vld [vmem:[%s5] sm:$0xff]
    %v214 = vld [vmem:[%s5 + $0x8] sm:$0xff]
    %v215 = vld [vmem:[%s5 + $0x10] sm:$0xff]
    %v216 = vld [vmem:[%s5 + $0x18] sm:$0xff]
    %v217 = vld [vmem:[%s7] sm:$0xff]
    %v218 = vld [vmem:[%s7 + $0x8] sm:$0xff]
    %v219 = vld [vmem:[%s7 + $0x10] sm:$0xff]
    %v220 = vld [vmem:[%s7 + $0x18] sm:$0xff]
    %v221 = vld [vmem:[#allocation2] sm:$0xff]
    %v222 = vld [vmem:[#allocation2 + $0x8] sm:$0xff]
    %v223 = vld [vmem:[#allocation5] sm:$0xff]
    %v224 = vld [vmem:[#allocation5 + $0x8] sm:$0xff]
    %v225 = vld [vmem:[%s57] sm:$0x3f]
    %v226 = vld [vmem:[%s59] sm:$0x3f]
    %v227 = vld [vmem:[%s9] sm:$0xff]
    %v228 = vld [vmem:[%s9 + $0x8] sm:$0xff]
    %v229 = vld [vmem:[%s9 + $0x10] sm:$0xff]
    %v230 = vld [vmem:[%s9 + $0x18] sm:$0xff]
    %v231 = vld [vmem:[#allocation7] sm:$0x1]
    %v233 = vlaneseq
    %v234 = vshrl.u32 %v233, 7
    %v235 = vsub.s32 0, %v234
    %v236 = vrot.slane %v231, %v235
    %vm238 = vcmask 261120
    %v240 = vsel %vm238, %v221, 0
    %v243 = vsel %vm238, %v222, 0
    %245 = vmatprep.subr.mxu0 0.0
    %246 = vmatpush1.msra.mxu0 %v227
    %247 = vmatprep.subr.mxu0 0.0
    %248 = vmatpush1.msra.mxu0 %v228
    %249 = vmatprep.subr.mxu0 0.0
    %250 = vmatpush1.msra.mxu0 %v229
    %251 = vmatprep.subr.mxu0 0.0
    %252 = vmatpush1.msra.mxu0 %v230
    %253 = vmatprep.subr.mxu0 0.0
    %254 = vmatpush1.msra.mxu0 0.0
    %255 = vmatprep.subr.mxu0 0.0
    %256 = vmatpush1.msra.mxu0 0.0
    %257 = vmatprep.subr.mxu0 0.0
    %258 = vmatpush1.msra.mxu0 0.0
    %259 = vmatprep.subr.mxu0 0.0
    %260 = vmatpush1.msra.mxu0 0.0
    %261 = vmatprep.subr.mxu0 0.0
    %262 = vmatpush1.msra.mxu0 0.0
    %263 = vmatprep.subr.mxu0 0.0
    %264 = vmatpush1.msra.mxu0 0.0
    %265 = vmatprep.subr.mxu0 0.0
    %266 = vmatpush1.msra.mxu0 0.0
    %267 = vmatprep.subr.mxu0 0.0
    %268 = vmatpush1.msra.mxu0 0.0
    %269 = vmatprep.subr.mxu0 0.0
    %270 = vmatpush1.msra.mxu0 0.0
    %271 = vmatprep.subr.mxu0 0.0
    %272 = vmatpush1.msra.mxu0 0.0
    %273 = vmatprep.subr.mxu0 0.0
    %274 = vmatpush1.msra.mxu0 0.0
    %275 = vmatprep.subr.mxu0 0.0
    %276 = vmatpush1.msra.mxu0 0.0
    %277 = vmatprep.subr.mxu0 0.0
    %278 = vmatpush1.msra.mxu0 0.0
    %279 = vmatprep.subr.mxu0 0.0
    %280 = vmatpush1.msra.mxu0 0.0
    %281 = vmatprep.subr.mxu0 0.0
    %282 = vmatpush1.msra.mxu0 0.0
    %283 = vmatprep.subr.mxu0 0.0
    %284 = vmatpush1.msra.mxu0 0.0
    %285 = vmatprep.subr.mxu0 0.0
    %286 = vmatpush1.msra.mxu0 0.0
    %287 = vmatprep.subr.mxu0 0.0
    %288 = vmatpush1.msra.mxu0 0.0
    %289 = vmatprep.subr.mxu0 0.0
    %290 = vmatpush1.msra.mxu0 0.0
    %291 = vmatprep.subr.mxu0 0.0
    %292 = vmatpush1.msra.mxu0 0.0
    %293 = vmatprep.subr.mxu0 0.0
    %294 = vmatpush1.msra.mxu0 0.0
    %295 = vmatprep.subr.mxu0 0.0
    %296 = vmatpush1.msra.mxu0 0.0
    %297 = vmatprep.subr.mxu0 0.0
    %298 = vmatpush1.msra.mxu0 0.0
    %299 = vmatprep.subr.mxu0 0.0
    %300 = vmatpush1.msra.mxu0 0.0
    %301 = vmatprep.subr.mxu0 0.0
    %302 = vmatpush1.msra.mxu0 0.0
    %303 = vmatprep.subr.mxu0 0.0
    %304 = vmatpush1.msra.mxu0 0.0
    %305 = vmatprep.subr.mxu0 0.0
    %306 = vmatpush1.msra.mxu0 0.0
    %307 = vmatprep.subr.mxu0 0.0
    %308 = vmatpush1.msra.mxu0 0.0
    %309 = vmatprep.mubr.f32.mxu0 0.0
    %310 = vmatmul.mubr.f32.gmra.mrb[0].mxu0 %v240
    %v311 = vpop.f32.mrb[0].mxu0
    %v312 = vadd.f32 %v236, %v311
    %v313 = vpop.f32.mrb[0].mxu0
    %314 = vmatprep.mubr.f32.mxu0 0.0
    %315 = vmatmul.mubr.f32.gmra.mrb[0].mxu0 %v243
    %v316 = vpop.f32.mrb[0].mxu0
    %v317 = vadd.f32 %v236, %v316
    %v318 = vpop.f32.mrb[0].mxu0
    %319 = vdwg.mxu0
    %v320 = vld [vmem:[%s13] sm:$0xff]
    %v321 = vld [vmem:[%s13 + $0x8] sm:$0xff]
    %v322 = vld [vmem:[%s13 + $0x10] sm:$0xff]
    %v323 = vld [vmem:[%s13 + $0x18] sm:$0xff]
    %v324 = vld [vmem:[#allocation8] sm:$0x1]
    %v326 = vlaneseq
    %v327 = vshrl.u32 %v326, 7
    %v328 = vsub.s32 0, %v327
    %v329 = vrot.slane %v324, %v328
    %v332 = vsel %vm238, %v223, 0
    %v335 = vsel %vm238, %v224, 0
    %337 = vmatprep.subr.mxu0 0.0
    %338 = vmatpush1.msra.mxu0 %v320
    %339 = vmatprep.subr.mxu0 0.0
    %340 = vmatpush1.msra.mxu0 %v321
    %341 = vmatprep.subr.mxu0 0.0
    %342 = vmatpush1.msra.mxu0 %v322
    %343 = vmatprep.subr.mxu0 0.0
    %344 = vmatpush1.msra.mxu0 %v323
    %345 = vmatprep.subr.mxu0 0.0
    %346 = vmatpush1.msra.mxu0 0.0
    %347 = vmatprep.subr.mxu0 0.0
    %348 = vmatpush1.msra.mxu0 0.0
    %349 = vmatprep.subr.mxu0 0.0
    %350 = vmatpush1.msra.mxu0 0.0
    %351 = vmatprep.subr.mxu0 0.0
    %352 = vmatpush1.msra.mxu0 0.0
    %353 = vmatprep.subr.mxu0 0.0
    %354 = vmatpush1.msra.mxu0 0.0
    %355 = vmatprep.subr.mxu0 0.0
    %356 = vmatpush1.msra.mxu0 0.0
    %357 = vmatprep.subr.mxu0 0.0
    %358 = vmatpush1.msra.mxu0 0.0
    %359 = vmatprep.subr.mxu0 0.0
    %360 = vmatpush1.msra.mxu0 0.0
    %361 = vmatprep.subr.mxu0 0.0
    %362 = vmatpush1.msra.mxu0 0.0
    %363 = vmatprep.subr.mxu0 0.0
    %364 = vmatpush1.msra.mxu0 0.0
    %365 = vmatprep.subr.mxu0 0.0
    %366 = vmatpush1.msra.mxu0 0.0
    %367 = vmatprep.subr.mxu0 0.0
    %368 = vmatpush1.msra.mxu0 0.0
    %369 = vmatprep.subr.mxu0 0.0
    %370 = vmatpush1.msra.mxu0 0.0
    %371 = vmatprep.subr.mxu0 0.0
    %372 = vmatpush1.msra.mxu0 0.0
    %373 = vmatprep.subr.mxu0 0.0
    %374 = vmatpush1.msra.mxu0 0.0
    %375 = vmatprep.subr.mxu0 0.0
    %376 = vmatpush1.msra.mxu0 0.0
    %377 = vmatprep.subr.mxu0 0.0
    %378 = vmatpush1.msra.mxu0 0.0
    %379 = vmatprep.subr.mxu0 0.0
    %380 = vmatpush1.msra.mxu0 0.0
    %381 = vmatprep.subr.mxu0 0.0
    %382 = vmatpush1.msra.mxu0 0.0
    %383 = vmatprep.subr.mxu0 0.0
    %384 = vmatpush1.msra.mxu0 0.0
    %385 = vmatprep.subr.mxu0 0.0
    %386 = vmatpush1.msra.mxu0 0.0
    %387 = vmatprep.subr.mxu0 0.0
    %388 = vmatpush1.msra.mxu0 0.0
    %389 = vmatprep.subr.mxu0 0.0
    %390 = vmatpush1.msra.mxu0 0.0
    %391 = vmatprep.subr.mxu0 0.0
    %392 = vmatpush1.msra.mxu0 0.0
    %393 = vmatprep.subr.mxu0 0.0
    %394 = vmatpush1.msra.mxu0 0.0
    %395 = vmatprep.subr.mxu0 0.0
    %396 = vmatpush1.msra.mxu0 0.0
    %397 = vmatprep.subr.mxu0 0.0
    %398 = vmatpush1.msra.mxu0 0.0
    %399 = vmatprep.subr.mxu0 0.0
    %400 = vmatpush1.msra.mxu0 0.0
    %401 = vmatprep.mubr.f32.mxu0 0.0
    %402 = vmatmul.mubr.f32.gmra.mrb[0].mxu0 %v332
    %v403 = vpop.f32.mrb[0].mxu0
    %v404 = vadd.f32 %v329, %v403
    %v405 = vpop.f32.mrb[0].mxu0
    %406 = vmatprep.mubr.f32.mxu0 0.0
    %407 = vmatmul.mubr.f32.gmra.mrb[0].mxu0 %v335
    %v408 = vpop.f32.mrb[0].mxu0
    %v409 = vadd.f32 %v329, %v408
    %v410 = vpop.f32.mrb[0].mxu0
    %411 = vdwg.mxu0
    %v412 = vld [vmem:[%s17] sm:$0xff]
    %v413 = vld [vmem:[%s17 + $0x8] sm:$0xff]
    %v414 = vld [vmem:[%s17 + $0x10] sm:$0xff]
    %v415 = vld [vmem:[%s17 + $0x18] sm:$0xff]
    %v416 = vld [vmem:[%s19] sm:$0x1]
    %421 = vrot.lane.b32.xlu0 %v217, 32
    %v422 = vpop.permute.xlu0 %421
    %423 = vrot.lane.b32.xlu0 %v218, 32
    %v424 = vpop.permute.xlu0 %423
    %425 = vrot.lane.b32.xlu0 %v219, 32
    %v426 = vpop.permute.xlu0 %425
    %427 = vrot.lane.b32.xlu0 %v220, 32
    %v428 = vpop.permute.xlu0 %427
    %v433 = vmul.f32 %v404, %v422
    %v434 = vmul.f32 %v404, %v424
    %v435 = vmul.f32 %v404, %v426
    %v436 = vmul.f32 %v404, %v428
    %437 = vrot.lane.b32.xlu0 %v217, 64
    %v438 = vpop.permute.xlu0 %437
    %439 = vrot.lane.b32.xlu0 %v218, 64
    %v440 = vpop.permute.xlu0 %439
    %441 = vrot.lane.b32.xlu0 %v219, 64
    %v442 = vpop.permute.xlu0 %441
    %443 = vrot.lane.b32.xlu0 %v220, 64
    %v444 = vpop.permute.xlu0 %443
    %v449 = vmul.f32 %v404, %v438
    %v450 = vmul.f32 %v404, %v440
    %v451 = vmul.f32 %v404, %v442
    %v452 = vmul.f32 %v404, %v444
    %457 = vrot.lane.b32.xlu0 %v433, 96
    %v458 = vpop.permute.xlu0 %457
    %459 = vrot.lane.b32.xlu0 %v434, 96
    %v460 = vpop.permute.xlu0 %459
    %461 = vrot.lane.b32.xlu0 %v435, 96
    %v462 = vpop.permute.xlu0 %461
    %463 = vrot.lane.b32.xlu0 %v436, 96
    %v464 = vpop.permute.xlu0 %463
    %v466 = vsel %vm238, %v312, 0
    %v468 = vsel %vm238, %v458, 0
    %v470 = vsel %vm238, %v460, 0
    %v472 = vsel %vm238, %v462, 0
    %v474 = vsel %vm238, %v464, 0
    %476 = vmatprep.subr.mxu0 0.0
    %477 = vmatpush1.xpose.msra.mxu0 %v468
    %478 = vmatprep.subr.mxu0 0.0
    %479 = vmatpush1.xpose.msra.mxu0 %v470
    %480 = vmatprep.subr.mxu0 0.0
    %481 = vmatpush1.xpose.msra.mxu0 %v472
    %482 = vmatprep.subr.mxu0 0.0
    %483 = vmatpush1.xpose.msra.mxu0 %v474
    %484 = vmatprep.subr.mxu0 0.0
    %485 = vmatpush1.xpose.msra.mxu0 0.0
    %486 = vmatprep.subr.mxu0 0.0
    %487 = vmatpush1.xpose.msra.mxu0 0.0
    %488 = vmatprep.subr.mxu0 0.0
    %489 = vmatpush1.xpose.msra.mxu0 0.0
    %490 = vmatprep.subr.mxu0 0.0
    %491 = vmatpush1.xpose.msra.mxu0 0.0
    %492 = vmatprep.subr.mxu0 0.0
    %493 = vmatpush1.xpose.msra.mxu0 0.0
    %494 = vmatprep.subr.mxu0 0.0
    %495 = vmatpush1.xpose.msra.mxu0 0.0
    %496 = vmatprep.subr.mxu0 0.0
    %497 = vmatpush1.xpose.msra.mxu0 0.0
    %498 = vmatprep.subr.mxu0 0.0
    %499 = vmatpush1.xpose.msra.mxu0 0.0
    %500 = vmatprep.subr.mxu0 0.0
    %501 = vmatpush1.xpose.msra.mxu0 0.0
    %502 = vmatprep.subr.mxu0 0.0
    %503 = vmatpush1.xpose.msra.mxu0 0.0
    %504 = vmatprep.subr.mxu0 0.0
    %505 = vmatpush1.xpose.msra.mxu0 0.0
    %506 = vmatprep.subr.mxu0 0.0
    %507 = vmatpush1.xpose.msra.mxu0 0.0
    %508 = vmatprep.subr.mxu0 0.0
    %509 = vmatpush1.xpose.msra.mxu0 0.0
    %510 = vmatprep.subr.mxu0 0.0
    %511 = vmatpush1.xpose.msra.mxu0 0.0
    %512 = vmatprep.subr.mxu0 0.0
    %513 = vmatpush1.xpose.msra.mxu0 0.0
    %514 = vmatprep.subr.mxu0 0.0
    %515 = vmatpush1.xpose.msra.mxu0 0.0
    %516 = vmatprep.subr.mxu0 0.0
    %517 = vmatpush1.xpose.msra.mxu0 0.0
    %518 = vmatprep.subr.mxu0 0.0
    %519 = vmatpush1.xpose.msra.mxu0 0.0
    %520 = vmatprep.subr.mxu0 0.0
    %521 = vmatpush1.xpose.msra.mxu0 0.0
    %522 = vmatprep.subr.mxu0 0.0
    %523 = vmatpush1.xpose.msra.mxu0 0.0
    %524 = vmatprep.subr.mxu0 0.0
    %525 = vmatpush1.xpose.msra.mxu0 0.0
    %526 = vmatprep.subr.mxu0 0.0
    %527 = vmatpush1.xpose.msra.mxu0 0.0
    %528 = vmatprep.subr.mxu0 0.0
    %529 = vmatpush1.xpose.msra.mxu0 0.0
    %530 = vmatprep.subr.mxu0 0.0
    %531 = vmatpush1.xpose.msra.mxu0 0.0
    %532 = vmatprep.subr.mxu0 0.0
    %533 = vmatpush1.xpose.msra.mxu0 0.0
    %534 = vmatprep.subr.mxu0 0.0
    %535 = vmatpush1.xpose.msra.mxu0 0.0
    %536 = vmatprep.subr.mxu0 0.0
    %537 = vmatpush1.xpose.msra.mxu0 0.0
    %538 = vmatprep.subr.mxu0 0.0
    %539 = vmatpush1.xpose.msra.mxu0 0.0
    %540 = vmatprep.mubr.f32.mxu0 0.0
    %541 = vmatmul.mubr.f32.gmra.mrb[0].mxu0 %v466
    %v542 = vpop.f32.mrb[0].mxu0
    %v543 = vadd.f32 0.0, %v542
    %v544 = vpop.f32.mrb[0].mxu0
    %545 = vdwg.mxu0
    %v546 = vsel %vm238, %v543, -inf
    %547 = vmax.xlane.f32.xlu0 %v546
    %v548 = vpop.xlane.xlu0 %547
    %v549 = vsub.f32 %v543, %v548
    %v550 = vmul.f32 %v549, 1.442695
    %v551 = vpow.pop %v550
    %556 = vrot.lane.b32.xlu0 %v449, 64
    %v557 = vpop.permute.xlu0 %556
    %558 = vrot.lane.b32.xlu0 %v450, 64
    %v559 = vpop.permute.xlu0 %558
    %560 = vrot.lane.b32.xlu0 %v451, 64
    %v561 = vpop.permute.xlu0 %560
    %562 = vrot.lane.b32.xlu0 %v452, 64
    %v563 = vpop.permute.xlu0 %562
    %v569 = vsel %vm238, %v551, 0
    %571 = vmatprep.subr.mxu0 0.0
    %572 = vmatpush1.msra.mxu0 %v557
    %573 = vmatprep.subr.mxu0 0.0
    %574 = vmatpush1.msra.mxu0 %v559
    %575 = vmatprep.subr.mxu0 0.0
    %576 = vmatpush1.msra.mxu0 %v561
    %577 = vmatprep.subr.mxu0 0.0
    %578 = vmatpush1.msra.mxu0 %v563
    %579 = vmatprep.subr.mxu0 0.0
    %580 = vmatpush1.msra.mxu0 0.0
    %581 = vmatprep.subr.mxu0 0.0
    %582 = vmatpush1.msra.mxu0 0.0
    %583 = vmatprep.subr.mxu0 0.0
    %584 = vmatpush1.msra.mxu0 0.0
    %585 = vmatprep.subr.mxu0 0.0
    %586 = vmatpush1.msra.mxu0 0.0
    %587 = vmatprep.subr.mxu0 0.0
    %588 = vmatpush1.msra.mxu0 0.0
    %589 = vmatprep.subr.mxu0 0.0
    %590 = vmatpush1.msra.mxu0 0.0
    %591 = vmatprep.subr.mxu0 0.0
    %592 = vmatpush1.msra.mxu0 0.0
    %593 = vmatprep.subr.mxu0 0.0
    %594 = vmatpush1.msra.mxu0 0.0
    %595 = vmatprep.subr.mxu0 0.0
    %596 = vmatpush1.msra.mxu0 0.0
    %597 = vmatprep.subr.mxu0 0.0
    %598 = vmatpush1.msra.mxu0 0.0
    %599 = vmatprep.subr.mxu0 0.0
    %600 = vmatpush1.msra.mxu0 0.0
    %601 = vmatprep.subr.mxu0 0.0
    %602 = vmatpush1.msra.mxu0 0.0
    %603 = vmatprep.subr.mxu0 0.0
    %604 = vmatpush1.msra.mxu0 0.0
    %605 = vmatprep.subr.mxu0 0.0
    %606 = vmatpush1.msra.mxu0 0.0
    %607 = vmatprep.subr.mxu0 0.0
    %608 = vmatpush1.msra.mxu0 0.0
    %609 = vmatprep.subr.mxu0 0.0
    %610 = vmatpush1.msra.mxu0 0.0
    %611 = vmatprep.subr.mxu0 0.0
    %612 = vmatpush1.msra.mxu0 0.0
    %613 = vmatprep.subr.mxu0 0.0
    %614 = vmatpush1.msra.mxu0 0.0
    %615 = vmatprep.subr.mxu0 0.0
    %616 = vmatpush1.msra.mxu0 0.0
    %617 = vmatprep.subr.mxu0 0.0
    %618 = vmatpush1.msra.mxu0 0.0
    %619 = vmatprep.subr.mxu0 0.0
    %620 = vmatpush1.msra.mxu0 0.0
    %621 = vmatprep.subr.mxu0 0.0
    %622 = vmatpush1.msra.mxu0 0.0
    %623 = vmatprep.subr.mxu0 0.0
    %624 = vmatpush1.msra.mxu0 0.0
    %625 = vmatprep.subr.mxu0 0.0
    %626 = vmatpush1.msra.mxu0 0.0
    %627 = vmatprep.subr.mxu0 0.0
    %628 = vmatpush1.msra.mxu0 0.0
    %629 = vmatprep.subr.mxu0 0.0
    %630 = vmatpush1.msra.mxu0 0.0
    %631 = vmatprep.subr.mxu0 0.0
    %632 = vmatpush1.msra.mxu0 0.0
    %633 = vmatprep.subr.mxu0 0.0
    %634 = vmatpush1.msra.mxu0 0.0
    %635 = vmatprep.mubr.f32.mxu0 0.0
    %636 = vmatmul.mubr.f32.gmra.mrb[0].mxu0 %v569
    %v637 = vpop.f32.mrb[0].mxu0
    %v638 = vadd.f32 0.0, %v637
    %v639 = vpop.f32.mrb[0].mxu0
    %640 = vdwg.mxu0
    %641 = vmatprep.subr.mxu0 0.0
    %642 = vmatpush1.msra.mxu0 %v217
    %643 = vmatprep.subr.mxu0 0.0
    %644 = vmatpush1.msra.mxu0 %v218
    %645 = vmatprep.subr.mxu0 0.0
    %646 = vmatpush1.msra.mxu0 %v219
    %647 = vmatprep.subr.mxu0 0.0
    %648 = vmatpush1.msra.mxu0 %v220
    %649 = vmatprep.subr.mxu0 0.0
    %650 = vmatpush1.msra.mxu0 0.0
    %651 = vmatprep.subr.mxu0 0.0
    %652 = vmatpush1.msra.mxu0 0.0
    %653 = vmatprep.subr.mxu0 0.0
    %654 = vmatpush1.msra.mxu0 0.0
    %655 = vmatprep.subr.mxu0 0.0
    %656 = vmatpush1.msra.mxu0 0.0
    %657 = vmatprep.subr.mxu0 0.0
    %658 = vmatpush1.msra.mxu0 0.0
    %659 = vmatprep.subr.mxu0 0.0
    %660 = vmatpush1.msra.mxu0 0.0
    %661 = vmatprep.subr.mxu0 0.0
    %662 = vmatpush1.msra.mxu0 0.0
    %663 = vmatprep.subr.mxu0 0.0
    %664 = vmatpush1.msra.mxu0 0.0
    %665 = vmatprep.subr.mxu0 0.0
    %666 = vmatpush1.msra.mxu0 0.0
    %667 = vmatprep.subr.mxu0 0.0
    %668 = vmatpush1.msra.mxu0 0.0
    %669 = vmatprep.subr.mxu0 0.0
    %670 = vmatpush1.msra.mxu0 0.0
    %671 = vmatprep.subr.mxu0 0.0
    %672 = vmatpush1.msra.mxu0 0.0
    %673 = vmatprep.subr.mxu0 0.0
    %674 = vmatpush1.msra.mxu0 0.0
    %675 = vmatprep.subr.mxu0 0.0
    %676 = vmatpush1.msra.mxu0 0.0
    %677 = vmatprep.subr.mxu0 0.0
    %678 = vmatpush1.msra.mxu0 0.0
    %679 = vmatprep.subr.mxu0 0.0
    %680 = vmatpush1.msra.mxu0 0.0
    %681 = vmatprep.subr.mxu0 0.0
    %682 = vmatpush1.msra.mxu0 0.0
    %683 = vmatprep.subr.mxu0 0.0
    %684 = vmatpush1.msra.mxu0 0.0
    %685 = vmatprep.subr.mxu0 0.0
    %686 = vmatpush1.msra.mxu0 0.0
    %687 = vmatprep.subr.mxu0 0.0
    %688 = vmatpush1.msra.mxu0 0.0
    %689 = vmatprep.subr.mxu0 0.0
    %690 = vmatpush1.msra.mxu0 0.0
    %691 = vmatprep.subr.mxu0 0.0
    %692 = vmatpush1.msra.mxu0 0.0
    %693 = vmatprep.subr.mxu0 0.0
    %694 = vmatpush1.msra.mxu0 0.0
    %695 = vmatprep.subr.mxu0 0.0
    %696 = vmatpush1.msra.mxu0 0.0
    %697 = vmatprep.subr.mxu0 0.0
    %698 = vmatpush1.msra.mxu0 0.0
    %699 = vmatprep.subr.mxu0 0.0
    %700 = vmatpush1.msra.mxu0 0.0
    %701 = vmatprep.subr.mxu0 0.0
    %702 = vmatpush1.msra.mxu0 0.0
    %703 = vmatprep.subr.mxu0 0.0
    %704 = vmatpush1.msra.mxu0 0.0
    %705 = vmatprep.mubr.f32.mxu0 0.0
    %706 = vmatmul.mubr.f32.gmra.mrb[0].mxu0 %v569
    %v707 = vpop.f32.mrb[0].mxu0
    %v708 = vadd.f32 0.0, %v707
    %v709 = vpop.f32.mrb[0].mxu0
    %710 = vdwg.mxu0
    %v711 = vrcp.pop %v708
    %v712 = vmul.f32 %v638, %v711
    %v713 = vmul.f32 %v409, %v422
    %v714 = vmul.f32 %v409, %v424
    %v715 = vmul.f32 %v409, %v426
    %v716 = vmul.f32 %v409, %v428
    %v717 = vmul.f32 %v409, %v438
    %v718 = vmul.f32 %v409, %v440
    %v719 = vmul.f32 %v409, %v442
    %v720 = vmul.f32 %v409, %v444
    %725 = vrot.lane.b32.xlu0 %v713, 96
    %v726 = vpop.permute.xlu0 %725
    %727 = vrot.lane.b32.xlu0 %v714, 96
    %v728 = vpop.permute.xlu0 %727
    %729 = vrot.lane.b32.xlu0 %v715, 96
    %v730 = vpop.permute.xlu0 %729
    %731 = vrot.lane.b32.xlu0 %v716, 96
    %v732 = vpop.permute.xlu0 %731
    %v734 = vsel %vm238, %v317, 0
    %v736 = vsel %vm238, %v726, 0
    %v738 = vsel %vm238, %v728, 0
    %v740 = vsel %vm238, %v730, 0
    %v742 = vsel %vm238, %v732, 0
    %744 = vmatprep.subr.mxu0 0.0
    %745 = vmatpush1.xpose.msra.mxu0 %v736
    %746 = vmatprep.subr.mxu0 0.0
    %747 = vmatpush1.xpose.msra.mxu0 %v738
    %748 = vmatprep.subr.mxu0 0.0
    %749 = vmatpush1.xpose.msra.mxu0 %v740
    %750 = vmatprep.subr.mxu0 0.0
    %751 = vmatpush1.xpose.msra.mxu0 %v742
    %752 = vmatprep.subr.mxu0 0.0
    %753 = vmatpush1.xpose.msra.mxu0 0.0
    %754 = vmatprep.subr.mxu0 0.0
    %755 = vmatpush1.xpose.msra.mxu0 0.0
    %756 = vmatprep.subr.mxu0 0.0
    %757 = vmatpush1.xpose.msra.mxu0 0.0
    %758 = vmatprep.subr.mxu0 0.0
    %759 = vmatpush1.xpose.msra.mxu0 0.0
    %760 = vmatprep.subr.mxu0 0.0
    %761 = vmatpush1.xpose.msra.mxu0 0.0
    %762 = vmatprep.subr.mxu0 0.0
    %763 = vmatpush1.xpose.msra.mxu0 0.0
    %764 = vmatprep.subr.mxu0 0.0
    %765 = vmatpush1.xpose.msra.mxu0 0.0
    %766 = vmatprep.subr.mxu0 0.0
    %767 = vmatpush1.xpose.msra.mxu0 0.0
    %768 = vmatprep.subr.mxu0 0.0
    %769 = vmatpush1.xpose.msra.mxu0 0.0
    %770 = vmatprep.subr.mxu0 0.0
    %771 = vmatpush1.xpose.msra.mxu0 0.0
    %772 = vmatprep.subr.mxu0 0.0
    %773 = vmatpush1.xpose.msra.mxu0 0.0
    %774 = vmatprep.subr.mxu0 0.0
    %775 = vmatpush1.xpose.msra.mxu0 0.0
    %776 = vmatprep.subr.mxu0 0.0
    %777 = vmatpush1.xpose.msra.mxu0 0.0
    %778 = vmatprep.subr.mxu0 0.0
    %779 = vmatpush1.xpose.msra.mxu0 0.0
    %780 = vmatprep.subr.mxu0 0.0
    %781 = vmatpush1.xpose.msra.mxu0 0.0
    %782 = vmatprep.subr.mxu0 0.0
    %783 = vmatpush1.xpose.msra.mxu0 0.0
    %784 = vmatprep.subr.mxu0 0.0
    %785 = vmatpush1.xpose.msra.mxu0 0.0
    %786 = vmatprep.subr.mxu0 0.0
    %787 = vmatpush1.xpose.msra.mxu0 0.0
    %788 = vmatprep.subr.mxu0 0.0
    %789 = vmatpush1.xpose.msra.mxu0 0.0
    %790 = vmatprep.subr.mxu0 0.0
    %791 = vmatpush1.xpose.msra.mxu0 0.0
    %792 = vmatprep.subr.mxu0 0.0
    %793 = vmatpush1.xpose.msra.mxu0 0.0
    %794 = vmatprep.subr.mxu0 0.0
    %795 = vmatpush1.xpose.msra.mxu0 0.0
    %796 = vmatprep.subr.mxu0 0.0
    %797 = vmatpush1.xpose.msra.mxu0 0.0
    %798 = vmatprep.subr.mxu0 0.0
    %799 = vmatpush1.xpose.msra.mxu0 0.0
    %800 = vmatprep.subr.mxu0 0.0
    %801 = vmatpush1.xpose.msra.mxu0 0.0
    %802 = vmatprep.subr.mxu0 0.0
    %803 = vmatpush1.xpose.msra.mxu0 0.0
    %804 = vmatprep.subr.mxu0 0.0
    %805 = vmatpush1.xpose.msra.mxu0 0.0
    %806 = vmatprep.subr.mxu0 0.0
    %807 = vmatpush1.xpose.msra.mxu0 0.0
    %808 = vmatprep.mubr.f32.mxu0 0.0
    %809 = vmatmul.mubr.f32.gmra.mrb[0].mxu0 %v734
    %v810 = vpop.f32.mrb[0].mxu0
    %v811 = vadd.f32 0.0, %v810
    %v812 = vpop.f32.mrb[0].mxu0
    %813 = vdwg.mxu0
    %v814 = vsel %vm238, %v811, -inf
    %815 = vmax.xlane.f32.xlu0 %v814
    %v816 = vpop.xlane.xlu0 %815
    %v817 = vsub.f32 %v811, %v816
    %v818 = vmul.f32 %v817, 1.442695
    %v819 = vpow.pop %v818
    %824 = vrot.lane.b32.xlu0 %v717, 64
    %v825 = vpop.permute.xlu0 %824
    %826 = vrot.lane.b32.xlu0 %v718, 64
    %v827 = vpop.permute.xlu0 %826
    %828 = vrot.lane.b32.xlu0 %v719, 64
    %v829 = vpop.permute.xlu0 %828
    %830 = vrot.lane.b32.xlu0 %v720, 64
    %v831 = vpop.permute.xlu0 %830
    %v837 = vsel %vm238, %v819, 0
    %839 = vmatprep.subr.mxu0 0.0
    %840 = vmatpush1.msra.mxu0 %v825
    %841 = vmatprep.subr.mxu0 0.0
    %842 = vmatpush1.msra.mxu0 %v827
    %843 = vmatprep.subr.mxu0 0.0
    %844 = vmatpush1.msra.mxu0 %v829
    %845 = vmatprep.subr.mxu0 0.0
    %846 = vmatpush1.msra.mxu0 %v831
    %847 = vmatprep.subr.mxu0 0.0
    %848 = vmatpush1.msra.mxu0 0.0
    %849 = vmatprep.subr.mxu0 0.0
    %850 = vmatpush1.msra.mxu0 0.0
    %851 = vmatprep.subr.mxu0 0.0
    %852 = vmatpush1.msra.mxu0 0.0
    %853 = vmatprep.subr.mxu0 0.0
    %854 = vmatpush1.msra.mxu0 0.0
    %855 = vmatprep.subr.mxu0 0.0
    %856 = vmatpush1.msra.mxu0 0.0
    %857 = vmatprep.subr.mxu0 0.0
    %858 = vmatpush1.msra.mxu0 0.0
    %859 = vmatprep.subr.mxu0 0.0
    %860 = vmatpush1.msra.mxu0 0.0
    %861 = vmatprep.subr.mxu0 0.0
    %862 = vmatpush1.msra.mxu0 0.0
    %863 = vmatprep.subr.mxu0 0.0
    %864 = vmatpush1.msra.mxu0 0.0
    %865 = vmatprep.subr.mxu0 0.0
    %866 = vmatpush1.msra.mxu0 0.0
    %867 = vmatprep.subr.mxu0 0.0
    %868 = vmatpush1.msra.mxu0 0.0
    %869 = vmatprep.subr.mxu0 0.0
    %870 = vmatpush1.msra.mxu0 0.0
    %871 = vmatprep.subr.mxu0 0.0
    %872 = vmatpush1.msra.mxu0 0.0
    %873 = vmatprep.subr.mxu0 0.0
    %874 = vmatpush1.msra.mxu0 0.0
    %875 = vmatprep.subr.mxu0 0.0
    %876 = vmatpush1.msra.mxu0 0.0
    %877 = vmatprep.subr.mxu0 0.0
    %878 = vmatpush1.msra.mxu0 0.0
    %879 = vmatprep.subr.mxu0 0.0
    %880 = vmatpush1.msra.mxu0 0.0
    %881 = vmatprep.subr.mxu0 0.0
    %882 = vmatpush1.msra.mxu0 0.0
    %883 = vmatprep.subr.mxu0 0.0
    %884 = vmatpush1.msra.mxu0 0.0
    %885 = vmatprep.subr.mxu0 0.0
    %886 = vmatpush1.msra.mxu0 0.0
    %887 = vmatprep.subr.mxu0 0.0
    %888 = vmatpush1.msra.mxu0 0.0
    %889 = vmatprep.subr.mxu0 0.0
    %890 = vmatpush1.msra.mxu0 0.0
    %891 = vmatprep.subr.mxu0 0.0
    %892 = vmatpush1.msra.mxu0 0.0
    %893 = vmatprep.subr.mxu0 0.0
    %894 = vmatpush1.msra.mxu0 0.0
    %895 = vmatprep.subr.mxu0 0.0
    %896 = vmatpush1.msra.mxu0 0.0
    %897 = vmatprep.subr.mxu0 0.0
    %898 = vmatpush1.msra.mxu0 0.0
    %899 = vmatprep.subr.mxu0 0.0
    %900 = vmatpush1.msra.mxu0 0.0
    %901 = vmatprep.subr.mxu0 0.0
    %902 = vmatpush1.msra.mxu0 0.0
    %903 = vmatprep.mubr.f32.mxu0 0.0
    %904 = vmatmul.mubr.f32.gmra.mrb[0].mxu0 %v837
    %v905 = vpop.f32.mrb[0].mxu0
    %v906 = vadd.f32 0.0, %v905
    %v907 = vpop.f32.mrb[0].mxu0
    %908 = vdwg.mxu0
    %909 = vmatprep.subr.mxu0 0.0
    %910 = vmatpush1.msra.mxu0 %v217
    %911 = vmatprep.subr.mxu0 0.0
    %912 = vmatpush1.msra.mxu0 %v218
    %913 = vmatprep.subr.mxu0 0.0
    %914 = vmatpush1.msra.mxu0 %v219
    %915 = vmatprep.subr.mxu0 0.0
    %916 = vmatpush1.msra.mxu0 %v220
    %917 = vmatprep.subr.mxu0 0.0
    %918 = vmatpush1.msra.mxu0 0.0
    %919 = vmatprep.subr.mxu0 0.0
    %920 = vmatpush1.msra.mxu0 0.0
    %921 = vmatprep.subr.mxu0 0.0
    %922 = vmatpush1.msra.mxu0 0.0
    %923 = vmatprep.subr.mxu0 0.0
    %924 = vmatpush1.msra.mxu0 0.0
    %925 = vmatprep.subr.mxu0 0.0
    %926 = vmatpush1.msra.mxu0 0.0
    %927 = vmatprep.subr.mxu0 0.0
    %928 = vmatpush1.msra.mxu0 0.0
    %929 = vmatprep.subr.mxu0 0.0
    %930 = vmatpush1.msra.mxu0 0.0
    %931 = vmatprep.subr.mxu0 0.0
    %932 = vmatpush1.msra.mxu0 0.0
    %933 = vmatprep.subr.mxu0 0.0
    %934 = vmatpush1.msra.mxu0 0.0
    %935 = vmatprep.subr.mxu0 0.0
    %936 = vmatpush1.msra.mxu0 0.0
    %937 = vmatprep.subr.mxu0 0.0
    %938 = vmatpush1.msra.mxu0 0.0
    %939 = vmatprep.subr.mxu0 0.0
    %940 = vmatpush1.msra.mxu0 0.0
    %941 = vmatprep.subr.mxu0 0.0
    %942 = vmatpush1.msra.mxu0 0.0
    %943 = vmatprep.subr.mxu0 0.0
    %944 = vmatpush1.msra.mxu0 0.0
    %945 = vmatprep.subr.mxu0 0.0
    %946 = vmatpush1.msra.mxu0 0.0
    %947 = vmatprep.subr.mxu0 0.0
    %948 = vmatpush1.msra.mxu0 0.0
    %949 = vmatprep.subr.mxu0 0.0
    %950 = vmatpush1.msra.mxu0 0.0
    %951 = vmatprep.subr.mxu0 0.0
    %952 = vmatpush1.msra.mxu0 0.0
    %953 = vmatprep.subr.mxu0 0.0
    %954 = vmatpush1.msra.mxu0 0.0
    %955 = vmatprep.subr.mxu0 0.0
    %956 = vmatpush1.msra.mxu0 0.0
    %957 = vmatprep.subr.mxu0 0.0
    %958 = vmatpush1.msra.mxu0 0.0
    %959 = vmatprep.subr.mxu0 0.0
    %960 = vmatpush1.msra.mxu0 0.0
    %961 = vmatprep.subr.mxu0 0.0
    %962 = vmatpush1.msra.mxu0 0.0
    %963 = vmatprep.subr.mxu0 0.0
    %964 = vmatpush1.msra.mxu0 0.0
    %965 = vmatprep.subr.mxu0 0.0
    %966 = vmatpush1.msra.mxu0 0.0
    %967 = vmatprep.subr.mxu0 0.0
    %968 = vmatpush1.msra.mxu0 0.0
    %969 = vmatprep.subr.mxu0 0.0
    %970 = vmatpush1.msra.mxu0 0.0
    %971 = vmatprep.subr.mxu0 0.0
    %972 = vmatpush1.msra.mxu0 0.0
    %973 = vmatprep.mubr.f32.mxu0 0.0
    %974 = vmatmul.mubr.f32.gmra.mrb[0].mxu0 %v837
    %v975 = vpop.f32.mrb[0].mxu0
    %v976 = vadd.f32 0.0, %v975
    %v977 = vpop.f32.mrb[0].mxu0
    %978 = vdwg.mxu0
    %v979 = vrcp.pop %v976
    %v980 = vmul.f32 %v906, %v979
    %v982 = vlaneseq
    %v983 = vshrl.u32 %v982, 7
    %v984 = vsub.s32 0, %v983
    %v985 = vrot.slane %v416, %v984
    %v988 = vsel %vm238, %v712, 0
    %v991 = vsel %vm238, %v980, 0
    %993 = vmatprep.subr.mxu0 0.0
    %994 = vmatpush1.msra.mxu0 %v412
    %995 = vmatprep.subr.mxu0 0.0
    %996 = vmatpush1.msra.mxu0 %v413
    %997 = vmatprep.subr.mxu0 0.0
    %998 = vmatpush1.msra.mxu0 %v414
    %999 = vmatprep.subr.mxu0 0.0
    %1000 = vmatpush1.msra.mxu0 %v415
    %1001 = vmatprep.subr.mxu0 0.0
    %1002 = vmatpush1.msra.mxu0 0.0
    %1003 = vmatprep.subr.mxu0 0.0
    %1004 = vmatpush1.msra.mxu0 0.0
    %1005 = vmatprep.subr.mxu0 0.0
    %1006 = vmatpush1.msra.mxu0 0.0
    %1007 = vmatprep.subr.mxu0 0.0
    %1008 = vmatpush1.msra.mxu0 0.0
    %1009 = vmatprep.subr.mxu0 0.0
    %1010 = vmatpush1.msra.mxu0 0.0
    %1011 = vmatprep.subr.mxu0 0.0
    %1012 = vmatpush1.msra.mxu0 0.0
    %1013 = vmatprep.subr.mxu0 0.0
    %1014 = vmatpush1.msra.mxu0 0.0
    %1015 = vmatprep.subr.mxu0 0.0
    %1016 = vmatpush1.msra.mxu0 0.0
    %1017 = vmatprep.subr.mxu0 0.0
    %1018 = vmatpush1.msra.mxu0 0.0
    %1019 = vmatprep.subr.mxu0 0.0
    %1020 = vmatpush1.msra.mxu0 0.0
    %1021 = vmatprep.subr.mxu0 0.0
    %1022 = vmatpush1.msra.mxu0 0.0
    %1023 = vmatprep.subr.mxu0 0.0
    %1024 = vmatpush1.msra.mxu0 0.0
    %1025 = vmatprep.subr.mxu0 0.0
    %1026 = vmatpush1.msra.mxu0 0.0
    %1027 = vmatprep.subr.mxu0 0.0
    %1028 = vmatpush1.msra.mxu0 0.0
    %1029 = vmatprep.subr.mxu0 0.0
    %1030 = vmatpush1.msra.mxu0 0.0
    %1031 = vmatprep.subr.mxu0 0.0
    %1032 = vmatpush1.msra.mxu0 0.0
    %1033 = vmatprep.subr.mxu0 0.0
    %1034 = vmatpush1.msra.mxu0 0.0
    %1035 = vmatprep.subr.mxu0 0.0
    %1036 = vmatpush1.msra.mxu0 0.0
    %1037 = vmatprep.subr.mxu0 0.0
    %1038 = vmatpush1.msra.mxu0 0.0
    %1039 = vmatprep.subr.mxu0 0.0
    %1040 = vmatpush1.msra.mxu0 0.0
    %1041 = vmatprep.subr.mxu0 0.0
    %1042 = vmatpush1.msra.mxu0 0.0
    %1043 = vmatprep.subr.mxu0 0.0
    %1044 = vmatpush1.msra.mxu0 0.0
    %1045 = vmatprep.subr.mxu0 0.0
    %1046 = vmatpush1.msra.mxu0 0.0
    %1047 = vmatprep.subr.mxu0 0.0
    %1048 = vmatpush1.msra.mxu0 0.0
    %1049 = vmatprep.subr.mxu0 0.0
    %1050 = vmatpush1.msra.mxu0 0.0
    %1051 = vmatprep.subr.mxu0 0.0
    %1052 = vmatpush1.msra.mxu0 0.0
    %1053 = vmatprep.subr.mxu0 0.0
    %1054 = vmatpush1.msra.mxu0 0.0
    %1055 = vmatprep.subr.mxu0 0.0
    %1056 = vmatpush1.msra.mxu0 0.0
    %1057 = vmatprep.mubr.f32.mxu0 0.0
    %1058 = vmatmul.mubr.f32.gmra.mrb[0].mxu0 %v988
    %v1059 = vpop.f32.mrb[0].mxu0
    %v1060 = vadd.f32 %v985, %v1059
    %v1061 = vpop.f32.mrb[0].mxu0
    %1062 = vmatprep.mubr.f32.mxu0 0.0
    %1063 = vmatmul.mubr.f32.gmra.mrb[0].mxu0 %v991
    %v1064 = vpop.f32.mrb[0].mxu0
    %v1065 = vadd.f32 %v985, %v1064
    %v1066 = vpop.f32.mrb[0].mxu0
    %1067 = vdwg.mxu0
    %v1068 = vld [vmem:[%s21] sm:$0xff]
    %v1069 = vld [vmem:[%s21 + $0x8] sm:$0xff]
    %v1070 = vld [vmem:[%s21 + $0x10] sm:$0xff]
    %v1071 = vld [vmem:[%s21 + $0x18] sm:$0xff]
    %v1072 = vld [vmem:[#allocation10] sm:$0x1]
    %1077 = vrot.lane.b32.xlu0 %v213, 32
    %v1078 = vpop.permute.xlu0 %1077
    %1079 = vrot.lane.b32.xlu0 %v214, 32
    %v1080 = vpop.permute.xlu0 %1079
    %1081 = vrot.lane.b32.xlu0 %v215, 32
    %v1082 = vpop.permute.xlu0 %1081
    %1083 = vrot.lane.b32.xlu0 %v216, 32
    %v1084 = vpop.permute.xlu0 %1083
    %v1089 = vmul.f32 %v312, %v1078
    %v1090 = vmul.f32 %v312, %v1080
    %v1091 = vmul.f32 %v312, %v1082
    %v1092 = vmul.f32 %v312, %v1084
    %1093 = vrot.lane.b32.xlu0 %v213, 64
    %v1094 = vpop.permute.xlu0 %1093
    %1095 = vrot.lane.b32.xlu0 %v214, 64
    %v1096 = vpop.permute.xlu0 %1095
    %1097 = vrot.lane.b32.xlu0 %v215, 64
    %v1098 = vpop.permute.xlu0 %1097
    %1099 = vrot.lane.b32.xlu0 %v216, 64
    %v1100 = vpop.permute.xlu0 %1099
    %v1105 = vmul.f32 %v312, %v1094
    %v1106 = vmul.f32 %v312, %v1096
    %v1107 = vmul.f32 %v312, %v1098
    %v1108 = vmul.f32 %v312, %v1100
    %1113 = vrot.lane.b32.xlu0 %v1089, 96
    %v1114 = vpop.permute.xlu0 %1113
    %1115 = vrot.lane.b32.xlu0 %v1090, 96
    %v1116 = vpop.permute.xlu0 %1115
    %1117 = vrot.lane.b32.xlu0 %v1091, 96
    %v1118 = vpop.permute.xlu0 %1117
    %1119 = vrot.lane.b32.xlu0 %v1092, 96
    %v1120 = vpop.permute.xlu0 %1119
    %v1122 = vsel %vm238, %v404, 0
    %v1124 = vsel %vm238, %v1114, 0
    %v1126 = vsel %vm238, %v1116, 0
    %v1128 = vsel %vm238, %v1118, 0
    %v1130 = vsel %vm238, %v1120, 0
    %1132 = vmatprep.subr.mxu0 0.0
    %1133 = vmatpush1.xpose.msra.mxu0 %v1124
    %1134 = vmatprep.subr.mxu0 0.0
    %1135 = vmatpush1.xpose.msra.mxu0 %v1126
    %1136 = vmatprep.subr.mxu0 0.0
    %1137 = vmatpush1.xpose.msra.mxu0 %v1128
    %1138 = vmatprep.subr.mxu0 0.0
    %1139 = vmatpush1.xpose.msra.mxu0 %v1130
    %1140 = vmatprep.subr.mxu0 0.0
    %1141 = vmatpush1.xpose.msra.mxu0 0.0
    %1142 = vmatprep.subr.mxu0 0.0
    %1143 = vmatpush1.xpose.msra.mxu0 0.0
    %1144 = vmatprep.subr.mxu0 0.0
    %1145 = vmatpush1.xpose.msra.mxu0 0.0
    %1146 = vmatprep.subr.mxu0 0.0
    %1147 = vmatpush1.xpose.msra.mxu0 0.0
    %1148 = vmatprep.subr.mxu0 0.0
    %1149 = vmatpush1.xpose.msra.mxu0 0.0
    %1150 = vmatprep.subr.mxu0 0.0
    %1151 = vmatpush1.xpose.msra.mxu0 0.0
    %1152 = vmatprep.subr.mxu0 0.0
    %1153 = vmatpush1.xpose.msra.mxu0 0.0
    %1154 = vmatprep.subr.mxu0 0.0
    %1155 = vmatpush1.xpose.msra.mxu0 0.0
    %1156 = vmatprep.subr.mxu0 0.0
    %1157 = vmatpush1.xpose.msra.mxu0 0.0
    %1158 = vmatprep.subr.mxu0 0.0
    %1159 = vmatpush1.xpose.msra.mxu0 0.0
    %1160 = vmatprep.subr.mxu0 0.0
    %1161 = vmatpush1.xpose.msra.mxu0 0.0
    %1162 = vmatprep.subr.mxu0 0.0
    %1163 = vmatpush1.xpose.msra.mxu0 0.0
    %1164 = vmatprep.subr.mxu0 0.0
    %1165 = vmatpush1.xpose.msra.mxu0 0.0
    %1166 = vmatprep.subr.mxu0 0.0
    %1167 = vmatpush1.xpose.msra.mxu0 0.0
    %1168 = vmatprep.subr.mxu0 0.0
    %1169 = vmatpush1.xpose.msra.mxu0 0.0
    %1170 = vmatprep.subr.mxu0 0.0
    %1171 = vmatpush1.xpose.msra.mxu0 0.0
    %1172 = vmatprep.subr.mxu0 0.0
    %1173 = vmatpush1.xpose.msra.mxu0 0.0
    %1174 = vmatprep.subr.mxu0 0.0
    %1175 = vmatpush1.xpose.msra.mxu0 0.0
    %1176 = vmatprep.subr.mxu0 0.0
    %1177 = vmatpush1.xpose.msra.mxu0 0.0
    %1178 = vmatprep.subr.mxu0 0.0
    %1179 = vmatpush1.xpose.msra.mxu0 0.0
    %1180 = vmatprep.subr.mxu0 0.0
    %1181 = vmatpush1.xpose.msra.mxu0 0.0
    %1182 = vmatprep.subr.mxu0 0.0
    %1183 = vmatpush1.xpose.msra.mxu0 0.0
    %1184 = vmatprep.subr.mxu0 0.0
    %1185 = vmatpush1.xpose.msra.mxu0 0.0
    %1186 = vmatprep.subr.mxu0 0.0
    %1187 = vmatpush1.xpose.msra.mxu0 0.0
    %1188 = vmatprep.subr.mxu0 0.0
    %1189 = vmatpush1.xpose.msra.mxu0 0.0
    %1190 = vmatprep.subr.mxu0 0.0
    %1191 = vmatpush1.xpose.msra.mxu0 0.0
    %1192 = vmatprep.subr.mxu0 0.0
    %1193 = vmatpush1.xpose.msra.mxu0 0.0
    %1194 = vmatprep.subr.mxu0 0.0
    %1195 = vmatpush1.xpose.msra.mxu0 0.0
    %1196 = vmatprep.mubr.f32.mxu0 0.0
    %1197 = vmatmul.mubr.f32.gmra.mrb[0].mxu0 %v1122
    %v1198 = vpop.f32.mrb[0].mxu0
    %v1199 = vadd.f32 0.0, %v1198
    %v1200 = vpop.f32.mrb[0].mxu0
    %1201 = vdwg.mxu0
    %v1202 = vsel %vm238, %v1199, -inf
    %1203 = vmax.xlane.f32.xlu0 %v1202
    %v1204 = vpop.xlane.xlu0 %1203
    %v1205 = vsub.f32 %v1199, %v1204
    %v1206 = vmul.f32 %v1205, 1.442695
    %v1207 = vpow.pop %v1206
    %1212 = vrot.lane.b32.xlu0 %v1105, 64
    %v1213 = vpop.permute.xlu0 %1212
    %1214 = vrot.lane.b32.xlu0 %v1106, 64
    %v1215 = vpop.permute.xlu0 %1214
    %1216 = vrot.lane.b32.xlu0 %v1107, 64
    %v1217 = vpop.permute.xlu0 %1216
    %1218 = vrot.lane.b32.xlu0 %v1108, 64
    %v1219 = vpop.permute.xlu0 %1218
    %v1225 = vsel %vm238, %v1207, 0
    %1227 = vmatprep.subr.mxu0 0.0
    %1228 = vmatpush1.msra.mxu0 %v1213
    %1229 = vmatprep.subr.mxu0 0.0
    %1230 = vmatpush1.msra.mxu0 %v1215
    %1231 = vmatprep.subr.mxu0 0.0
    %1232 = vmatpush1.msra.mxu0 %v1217
    %1233 = vmatprep.subr.mxu0 0.0
    %1234 = vmatpush1.msra.mxu0 %v1219
    %1235 = vmatprep.subr.mxu0 0.0
    %1236 = vmatpush1.msra.mxu0 0.0
    %1237 = vmatprep.subr.mxu0 0.0
    %1238 = vmatpush1.msra.mxu0 0.0
    %1239 = vmatprep.subr.mxu0 0.0
    %1240 = vmatpush1.msra.mxu0 0.0
    %1241 = vmatprep.subr.mxu0 0.0
    %1242 = vmatpush1.msra.mxu0 0.0
    %1243 = vmatprep.subr.mxu0 0.0
    %1244 = vmatpush1.msra.mxu0 0.0
    %1245 = vmatprep.subr.mxu0 0.0
    %1246 = vmatpush1.msra.mxu0 0.0
    %1247 = vmatprep.subr.mxu0 0.0
    %1248 = vmatpush1.msra.mxu0 0.0
    %1249 = vmatprep.subr.mxu0 0.0
    %1250 = vmatpush1.msra.mxu0 0.0
    %1251 = vmatprep.subr.mxu0 0.0
    %1252 = vmatpush1.msra.mxu0 0.0
    %1253 = vmatprep.subr.mxu0 0.0
    %1254 = vmatpush1.msra.mxu0 0.0
    %1255 = vmatprep.subr.mxu0 0.0
    %1256 = vmatpush1.msra.mxu0 0.0
    %1257 = vmatprep.subr.mxu0 0.0
    %1258 = vmatpush1.msra.mxu0 0.0
    %1259 = vmatprep.subr.mxu0 0.0
    %1260 = vmatpush1.msra.mxu0 0.0
    %1261 = vmatprep.subr.mxu0 0.0
    %1262 = vmatpush1.msra.mxu0 0.0
    %1263 = vmatprep.subr.mxu0 0.0
    %1264 = vmatpush1.msra.mxu0 0.0
    %1265 = vmatprep.subr.mxu0 0.0
    %1266 = vmatpush1.msra.mxu0 0.0
    %1267 = vmatprep.subr.mxu0 0.0
    %1268 = vmatpush1.msra.mxu0 0.0
    %1269 = vmatprep.subr.mxu0 0.0
    %1270 = vmatpush1.msra.mxu0 0.0
    %1271 = vmatprep.subr.mxu0 0.0
    %1272 = vmatpush1.msra.mxu0 0.0
    %1273 = vmatprep.subr.mxu0 0.0
    %1274 = vmatpush1.msra.mxu0 0.0
    %1275 = vmatprep.subr.mxu0 0.0
    %1276 = vmatpush1.msra.mxu0 0.0
    %1277 = vmatprep.subr.mxu0 0.0
    %1278 = vmatpush1.msra.mxu0 0.0
    %1279 = vmatprep.subr.mxu0 0.0
    %1280 = vmatpush1.msra.mxu0 0.0
    %1281 = vmatprep.subr.mxu0 0.0
    %1282 = vmatpush1.msra.mxu0 0.0
    %1283 = vmatprep.subr.mxu0 0.0
    %1284 = vmatpush1.msra.mxu0 0.0
    %1285 = vmatprep.subr.mxu0 0.0
    %1286 = vmatpush1.msra.mxu0 0.0
    %1287 = vmatprep.subr.mxu0 0.0
    %1288 = vmatpush1.msra.mxu0 0.0
    %1289 = vmatprep.subr.mxu0 0.0
    %1290 = vmatpush1.msra.mxu0 0.0
    %1291 = vmatprep.mubr.f32.mxu0 0.0
    %1292 = vmatmul.mubr.f32.gmra.mrb[0].mxu0 %v1225
    %v1293 = vpop.f32.mrb[0].mxu0
    %v1294 = vadd.f32 0.0, %v1293
    %v1295 = vpop.f32.mrb[0].mxu0
    %1296 = vdwg.mxu0
    %1297 = vmatprep.subr.mxu0 0.0
    %1298 = vmatpush1.msra.mxu0 %v213
    %1299 = vmatprep.subr.mxu0 0.0
    %1300 = vmatpush1.msra.mxu0 %v214
    %1301 = vmatprep.subr.mxu0 0.0
    %1302 = vmatpush1.msra.mxu0 %v215
    %1303 = vmatprep.subr.mxu0 0.0
    %1304 = vmatpush1.msra.mxu0 %v216
    %1305 = vmatprep.subr.mxu0 0.0
    %1306 = vmatpush1.msra.mxu0 0.0
    %1307 = vmatprep.subr.mxu0 0.0
    %1308 = vmatpush1.msra.mxu0 0.0
    %1309 = vmatprep.subr.mxu0 0.0
    %1310 = vmatpush1.msra.mxu0 0.0
    %1311 = vmatprep.subr.mxu0 0.0
    %1312 = vmatpush1.msra.mxu0 0.0
    %1313 = vmatprep.subr.mxu0 0.0
    %1314 = vmatpush1.msra.mxu0 0.0
    %1315 = vmatprep.subr.mxu0 0.0
    %1316 = vmatpush1.msra.mxu0 0.0
    %1317 = vmatprep.subr.mxu0 0.0
    %1318 = vmatpush1.msra.mxu0 0.0
    %1319 = vmatprep.subr.mxu0 0.0
    %1320 = vmatpush1.msra.mxu0 0.0
    %1321 = vmatprep.subr.mxu0 0.0
    %1322 = vmatpush1.msra.mxu0 0.0
    %1323 = vmatprep.subr.mxu0 0.0
    %1324 = vmatpush1.msra.mxu0 0.0
    %1325 = vmatprep.subr.mxu0 0.0
    %1326 = vmatpush1.msra.mxu0 0.0
    %1327 = vmatprep.subr.mxu0 0.0
    %1328 = vmatpush1.msra.mxu0 0.0
    %1329 = vmatprep.subr.mxu0 0.0
    %1330 = vmatpush1.msra.mxu0 0.0
    %1331 = vmatprep.subr.mxu0 0.0
    %1332 = vmatpush1.msra.mxu0 0.0
    %1333 = vmatprep.subr.mxu0 0.0
    %1334 = vmatpush1.msra.mxu0 0.0
    %1335 = vmatprep.subr.mxu0 0.0
    %1336 = vmatpush1.msra.mxu0 0.0
    %1337 = vmatprep.subr.mxu0 0.0
    %1338 = vmatpush1.msra.mxu0 0.0
    %1339 = vmatprep.subr.mxu0 0.0
    %1340 = vmatpush1.msra.mxu0 0.0
    %1341 = vmatprep.subr.mxu0 0.0
    %1342 = vmatpush1.msra.mxu0 0.0
    %1343 = vmatprep.subr.mxu0 0.0
    %1344 = vmatpush1.msra.mxu0 0.0
    %1345 = vmatprep.subr.mxu0 0.0
    %1346 = vmatpush1.msra.mxu0 0.0
    %1347 = vmatprep.subr.mxu0 0.0
    %1348 = vmatpush1.msra.mxu0 0.0
    %1349 = vmatprep.subr.mxu0 0.0
    %1350 = vmatpush1.msra.mxu0 0.0
    %1351 = vmatprep.subr.mxu0 0.0
    %1352 = vmatpush1.msra.mxu0 0.0
    %1353 = vmatprep.subr.mxu0 0.0
    %1354 = vmatpush1.msra.mxu0 0.0
    %1355 = vmatprep.subr.mxu0 0.0
    %1356 = vmatpush1.msra.mxu0 0.0
    %1357 = vmatprep.subr.mxu0 0.0
    %1358 = vmatpush1.msra.mxu0 0.0
    %1359 = vmatprep.subr.mxu0 0.0
    %1360 = vmatpush1.msra.mxu0 0.0
    %1361 = vmatprep.mubr.f32.mxu0 0.0
    %1362 = vmatmul.mubr.f32.gmra.mrb[0].mxu0 %v1225
    %v1363 = vpop.f32.mrb[0].mxu0
    %v1364 = vadd.f32 0.0, %v1363
    %v1365 = vpop.f32.mrb[0].mxu0
    %1366 = vdwg.mxu0
    %v1367 = vrcp.pop %v1364
    %v1368 = vmul.f32 %v1294, %v1367
    %v1369 = vmul.f32 %v317, %v1078
    %v1370 = vmul.f32 %v317, %v1080
    %v1371 = vmul.f32 %v317, %v1082
    %v1372 = vmul.f32 %v317, %v1084
    %v1373 = vmul.f32 %v317, %v1094
    %v1374 = vmul.f32 %v317, %v1096
    %v1375 = vmul.f32 %v317, %v1098
    %v1376 = vmul.f32 %v317, %v1100
    %1381 = vrot.lane.b32.xlu0 %v1369, 96
    %v1382 = vpop.permute.xlu0 %1381
    %1383 = vrot.lane.b32.xlu0 %v1370, 96
    %v1384 = vpop.permute.xlu0 %1383
    %1385 = vrot.lane.b32.xlu0 %v1371, 96
    %v1386 = vpop.permute.xlu0 %1385
    %1387 = vrot.lane.b32.xlu0 %v1372, 96
    %v1388 = vpop.permute.xlu0 %1387
    %v1390 = vsel %vm238, %v409, 0
    %v1392 = vsel %vm238, %v1382, 0
    %v1394 = vsel %vm238, %v1384, 0
    %v1396 = vsel %vm238, %v1386, 0
    %v1398 = vsel %vm238, %v1388, 0
    %1400 = vmatprep.subr.mxu0 0.0
    %1401 = vmatpush1.xpose.msra.mxu0 %v1392
    %1402 = vmatprep.subr.mxu0 0.0
    %1403 = vmatpush1.xpose.msra.mxu0 %v1394
    %1404 = vmatprep.subr.mxu0 0.0
    %1405 = vmatpush1.xpose.msra.mxu0 %v1396
    %1406 = vmatprep.subr.mxu0 0.0
    %1407 = vmatpush1.xpose.msra.mxu0 %v1398
    %1408 = vmatprep.subr.mxu0 0.0
    %1409 = vmatpush1.xpose.msra.mxu0 0.0
    %1410 = vmatprep.subr.mxu0 0.0
    %1411 = vmatpush1.xpose.msra.mxu0 0.0
    %1412 = vmatprep.subr.mxu0 0.0
    %1413 = vmatpush1.xpose.msra.mxu0 0.0
    %1414 = vmatprep.subr.mxu0 0.0
    %1415 = vmatpush1.xpose.msra.mxu0 0.0
    %1416 = vmatprep.subr.mxu0 0.0
    %1417 = vmatpush1.xpose.msra.mxu0 0.0
    %1418 = vmatprep.subr.mxu0 0.0
    %1419 = vmatpush1.xpose.msra.mxu0 0.0
    %1420 = vmatprep.subr.mxu0 0.0
    %1421 = vmatpush1.xpose.msra.mxu0 0.0
    %1422 = vmatprep.subr.mxu0 0.0
    %1423 = vmatpush1.xpose.msra.mxu0 0.0
    %1424 = vmatprep.subr.mxu0 0.0
    %1425 = vmatpush1.xpose.msra.mxu0 0.0
    %1426 = vmatprep.subr.mxu0 0.0
    %1427 = vmatpush1.xpose.msra.mxu0 0.0
    %1428 = vmatprep.subr.mxu0 0.0
    %1429 = vmatpush1.xpose.msra.mxu0 0.0
    %1430 = vmatprep.subr.mxu0 0.0
    %1431 = vmatpush1.xpose.msra.mxu0 0.0
    %1432 = vmatprep.subr.mxu0 0.0
    %1433 = vmatpush1.xpose.msra.mxu0 0.0
    %1434 = vmatprep.subr.mxu0 0.0
    %1435 = vmatpush1.xpose.msra.mxu0 0.0
    %1436 = vmatprep.subr.mxu0 0.0
    %1437 = vmatpush1.xpose.msra.mxu0 0.0
    %1438 = vmatprep.subr.mxu0 0.0
    %1439 = vmatpush1.xpose.msra.mxu0 0.0
    %1440 = vmatprep.subr.mxu0 0.0
    %1441 = vmatpush1.xpose.msra.mxu0 0.0
    %1442 = vmatprep.subr.mxu0 0.0
    %1443 = vmatpush1.xpose.msra.mxu0 0.0
    %1444 = vmatprep.subr.mxu0 0.0
    %1445 = vmatpush1.xpose.msra.mxu0 0.0
    %1446 = vmatprep.subr.mxu0 0.0
    %1447 = vmatpush1.xpose.msra.mxu0 0.0
    %1448 = vmatprep.subr.mxu0 0.0
    %1449 = vmatpush1.xpose.msra.mxu0 0.0
    %1450 = vmatprep.subr.mxu0 0.0
    %1451 = vmatpush1.xpose.msra.mxu0 0.0
    %1452 = vmatprep.subr.mxu0 0.0
    %1453 = vmatpush1.xpose.msra.mxu0 0.0
    %1454 = vmatprep.subr.mxu0 0.0
    %1455 = vmatpush1.xpose.msra.mxu0 0.0
    %1456 = vmatprep.subr.mxu0 0.0
    %1457 = vmatpush1.xpose.msra.mxu0 0.0
    %1458 = vmatprep.subr.mxu0 0.0
    %1459 = vmatpush1.xpose.msra.mxu0 0.0
    %1460 = vmatprep.subr.mxu0 0.0
    %1461 = vmatpush1.xpose.msra.mxu0 0.0
    %1462 = vmatprep.subr.mxu0 0.0
    %1463 = vmatpush1.xpose.msra.mxu0 0.0
    %1464 = vmatprep.mubr.f32.mxu0 0.0
    %1465 = vmatmul.mubr.f32.gmra.mrb[0].mxu0 %v1390
    %v1466 = vpop.f32.mrb[0].mxu0
    %v1467 = vadd.f32 0.0, %v1466
    %v1468 = vpop.f32.mrb[0].mxu0
    %1469 = vdwg.mxu0
    %v1470 = vsel %vm238, %v1467, -inf
    %1471 = vmax.xlane.f32.xlu0 %v1470
    %v1472 = vpop.xlane.xlu0 %1471
    %v1473 = vsub.f32 %v1467, %v1472
    %v1474 = vmul.f32 %v1473, 1.442695
    %v1475 = vpow.pop %v1474
    %1480 = vrot.lane.b32.xlu0 %v1373, 64
    %v1481 = vpop.permute.xlu0 %1480
    %1482 = vrot.lane.b32.xlu0 %v1374, 64
    %v1483 = vpop.permute.xlu0 %1482
    %1484 = vrot.lane.b32.xlu0 %v1375, 64
    %v1485 = vpop.permute.xlu0 %1484
    %1486 = vrot.lane.b32.xlu0 %v1376, 64
    %v1487 = vpop.permute.xlu0 %1486
    %v1493 = vsel %vm238, %v1475, 0
    %1495 = vmatprep.subr.mxu0 0.0
    %1496 = vmatpush1.msra.mxu0 %v1481
    %1497 = vmatprep.subr.mxu0 0.0
    %1498 = vmatpush1.msra.mxu0 %v1483
    %1499 = vmatprep.subr.mxu0 0.0
    %1500 = vmatpush1.msra.mxu0 %v1485
    %1501 = vmatprep.subr.mxu0 0.0
    %1502 = vmatpush1.msra.mxu0 %v1487
    %1503 = vmatprep.subr.mxu0 0.0
    %1504 = vmatpush1.msra.mxu0 0.0
    %1505 = vmatprep.subr.mxu0 0.0
    %1506 = vmatpush1.msra.mxu0 0.0
    %1507 = vmatprep.subr.mxu0 0.0
    %1508 = vmatpush1.msra.mxu0 0.0
    %1509 = vmatprep.subr.mxu0 0.0
    %1510 = vmatpush1.msra.mxu0 0.0
    %1511 = vmatprep.subr.mxu0 0.0
    %1512 = vmatpush1.msra.mxu0 0.0
    %1513 = vmatprep.subr.mxu0 0.0
    %1514 = vmatpush1.msra.mxu0 0.0
    %1515 = vmatprep.subr.mxu0 0.0
    %1516 = vmatpush1.msra.mxu0 0.0
    %1517 = vmatprep.subr.mxu0 0.0
    %1518 = vmatpush1.msra.mxu0 0.0
    %1519 = vmatprep.subr.mxu0 0.0
    %1520 = vmatpush1.msra.mxu0 0.0
    %1521 = vmatprep.subr.mxu0 0.0
    %1522 = vmatpush1.msra.mxu0 0.0
    %1523 = vmatprep.subr.mxu0 0.0
    %1524 = vmatpush1.msra.mxu0 0.0
    %1525 = vmatprep.subr.mxu0 0.0
    %1526 = vmatpush1.msra.mxu0 0.0
    %1527 = vmatprep.subr.mxu0 0.0
    %1528 = vmatpush1.msra.mxu0 0.0
    %1529 = vmatprep.subr.mxu0 0.0
    %1530 = vmatpush1.msra.mxu0 0.0
    %1531 = vmatprep.subr.mxu0 0.0
    %1532 = vmatpush1.msra.mxu0 0.0
    %1533 = vmatprep.subr.mxu0 0.0
    %1534 = vmatpush1.msra.mxu0 0.0
    %1535 = vmatprep.subr.mxu0 0.0
    %1536 = vmatpush1.msra.mxu0 0.0
    %1537 = vmatprep.subr.mxu0 0.0
    %1538 = vmatpush1.msra.mxu0 0.0
    %1539 = vmatprep.subr.mxu0 0.0
    %1540 = vmatpush1.msra.mxu0 0.0
    %1541 = vmatprep.subr.mxu0 0.0
    %1542 = vmatpush1.msra.mxu0 0.0
    %1543 = vmatprep.subr.mxu0 0.0
    %1544 = vmatpush1.msra.mxu0 0.0
    %1545 = vmatprep.subr.mxu0 0.0
    %1546 = vmatpush1.msra.mxu0 0.0
    %1547 = vmatprep.subr.mxu0 0.0
    %1548 = vmatpush1.msra.mxu0 0.0
    %1549 = vmatprep.subr.mxu0 0.0
    %1550 = vmatpush1.msra.mxu0 0.0
    %1551 = vmatprep.subr.mxu0 0.0
    %1552 = vmatpush1.msra.mxu0 0.0
    %1553 = vmatprep.subr.mxu0 0.0
    %1554 = vmatpush1.msra.mxu0 0.0
    %1555 = vmatprep.subr.mxu0 0.0
    %1556 = vmatpush1.msra.mxu0 0.0
    %1557 = vmatprep.subr.mxu0 0.0
    %1558 = vmatpush1.msra.mxu0 0.0
    %1559 = vmatprep.mubr.f32.mxu0 0.0
    %1560 = vmatmul.mubr.f32.gmra.mrb[0].mxu0 %v1493
    %v1561 = vpop.f32.mrb[0].mxu0
    %v1562 = vadd.f32 0.0, %v1561
    %v1563 = vpop.f32.mrb[0].mxu0
    %1564 = vdwg.mxu0
    %1565 = vmatprep.subr.mxu0 0.0
    %1566 = vmatpush1.msra.mxu0 %v213
    %1567 = vmatprep.subr.mxu0 0.0
    %1568 = vmatpush1.msra.mxu0 %v214
    %1569 = vmatprep.subr.mxu0 0.0
    %1570 = vmatpush1.msra.mxu0 %v215
    %1571 = vmatprep.subr.mxu0 0.0
    %1572 = vmatpush1.msra.mxu0 %v216
    %1573 = vmatprep.subr.mxu0 0.0
    %1574 = vmatpush1.msra.mxu0 0.0
    %1575 = vmatprep.subr.mxu0 0.0
    %1576 = vmatpush1.msra.mxu0 0.0
    %1577 = vmatprep.subr.mxu0 0.0
    %1578 = vmatpush1.msra.mxu0 0.0
    %1579 = vmatprep.subr.mxu0 0.0
    %1580 = vmatpush1.msra.mxu0 0.0
    %1581 = vmatprep.subr.mxu0 0.0
    %1582 = vmatpush1.msra.mxu0 0.0
    %1583 = vmatprep.subr.mxu0 0.0
    %1584 = vmatpush1.msra.mxu0 0.0
    %1585 = vmatprep.subr.mxu0 0.0
    %1586 = vmatpush1.msra.mxu0 0.0
    %1587 = vmatprep.subr.mxu0 0.0
    %1588 = vmatpush1.msra.mxu0 0.0
    %1589 = vmatprep.subr.mxu0 0.0
    %1590 = vmatpush1.msra.mxu0 0.0
    %1591 = vmatprep.subr.mxu0 0.0
    %1592 = vmatpush1.msra.mxu0 0.0
    %1593 = vmatprep.subr.mxu0 0.0
    %1594 = vmatpush1.msra.mxu0 0.0
    %1595 = vmatprep.subr.mxu0 0.0
    %1596 = vmatpush1.msra.mxu0 0.0
    %1597 = vmatprep.subr.mxu0 0.0
    %1598 = vmatpush1.msra.mxu0 0.0
    %1599 = vmatprep.subr.mxu0 0.0
    %1600 = vmatpush1.msra.mxu0 0.0
    %1601 = vmatprep.subr.mxu0 0.0
    %1602 = vmatpush1.msra.mxu0 0.0
    %1603 = vmatprep.subr.mxu0 0.0
    %1604 = vmatpush1.msra.mxu0 0.0
    %1605 = vmatprep.subr.mxu0 0.0
    %1606 = vmatpush1.msra.mxu0 0.0
    %1607 = vmatprep.subr.mxu0 0.0
    %1608 = vmatpush1.msra.mxu0 0.0
    %1609 = vmatprep.subr.mxu0 0.0
    %1610 = vmatpush1.msra.mxu0 0.0
    %1611 = vmatprep.subr.mxu0 0.0
    %1612 = vmatpush1.msra.mxu0 0.0
    %1613 = vmatprep.subr.mxu0 0.0
    %1614 = vmatpush1.msra.mxu0 0.0
    %1615 = vmatprep.subr.mxu0 0.0
    %1616 = vmatpush1.msra.mxu0 0.0
    %1617 = vmatprep.subr.mxu0 0.0
    %1618 = vmatpush1.msra.mxu0 0.0
    %1619 = vmatprep.subr.mxu0 0.0
    %1620 = vmatpush1.msra.mxu0 0.0
    %1621 = vmatprep.subr.mxu0 0.0
    %1622 = vmatpush1.msra.mxu0 0.0
    %1623 = vmatprep.subr.mxu0 0.0
    %1624 = vmatpush1.msra.mxu0 0.0
    %1625 = vmatprep.subr.mxu0 0.0
    %1626 = vmatpush1.msra.mxu0 0.0
    %1627 = vmatprep.subr.mxu0 0.0
    %1628 = vmatpush1.msra.mxu0 0.0
    %1629 = vmatprep.mubr.f32.mxu0 0.0
    %1630 = vmatmul.mubr.f32.gmra.mrb[0].mxu0 %v1493
    %v1631 = vpop.f32.mrb[0].mxu0
    %v1632 = vadd.f32 0.0, %v1631
    %v1633 = vpop.f32.mrb[0].mxu0
    %1634 = vdwg.mxu0
    %v1635 = vrcp.pop %v1632
    %v1636 = vmul.f32 %v1562, %v1635
    %v1638 = vlaneseq
    %v1639 = vshrl.u32 %v1638, 7
    %v1640 = vsub.s32 0, %v1639
    %v1641 = vrot.slane %v1072, %v1640
    %v1644 = vsel %vm238, %v1368, 0
    %v1647 = vsel %vm238, %v1636, 0
    %1649 = vmatprep.subr.mxu0 0.0
    %1650 = vmatpush1.msra.mxu0 %v1068
    %1651 = vmatprep.subr.mxu0 0.0
    %1652 = vmatpush1.msra.mxu0 %v1069
    %1653 = vmatprep.subr.mxu0 0.0
    %1654 = vmatpush1.msra.mxu0 %v1070
    %1655 = vmatprep.subr.mxu0 0.0
    %1656 = vmatpush1.msra.mxu0 %v1071
    %1657 = vmatprep.subr.mxu0 0.0
    %1658 = vmatpush1.msra.mxu0 0.0
    %1659 = vmatprep.subr.mxu0 0.0
    %1660 = vmatpush1.msra.mxu0 0.0
    %1661 = vmatprep.subr.mxu0 0.0
    %1662 = vmatpush1.msra.mxu0 0.0
    %1663 = vmatprep.subr.mxu0 0.0
    %1664 = vmatpush1.msra.mxu0 0.0
    %1665 = vmatprep.subr.mxu0 0.0
    %1666 = vmatpush1.msra.mxu0 0.0
    %1667 = vmatprep.subr.mxu0 0.0
    %1668 = vmatpush1.msra.mxu0 0.0
    %1669 = vmatprep.subr.mxu0 0.0
    %1670 = vmatpush1.msra.mxu0 0.0
    %1671 = vmatprep.subr.mxu0 0.0
    %1672 = vmatpush1.msra.mxu0 0.0
    %1673 = vmatprep.subr.mxu0 0.0
    %1674 = vmatpush1.msra.mxu0 0.0
    %1675 = vmatprep.subr.mxu0 0.0
    %1676 = vmatpush1.msra.mxu0 0.0
    %1677 = vmatprep.subr.mxu0 0.0
    %1678 = vmatpush1.msra.mxu0 0.0
    %1679 = vmatprep.subr.mxu0 0.0
    %1680 = vmatpush1.msra.mxu0 0.0
    %1681 = vmatprep.subr.mxu0 0.0
    %1682 = vmatpush1.msra.mxu0 0.0
    %1683 = vmatprep.subr.mxu0 0.0
    %1684 = vmatpush1.msra.mxu0 0.0
    %1685 = vmatprep.subr.mxu0 0.0
    %1686 = vmatpush1.msra.mxu0 0.0
    %1687 = vmatprep.subr.mxu0 0.0
    %1688 = vmatpush1.msra.mxu0 0.0
    %1689 = vmatprep.subr.mxu0 0.0
    %1690 = vmatpush1.msra.mxu0 0.0
    %1691 = vmatprep.subr.mxu0 0.0
    %1692 = vmatpush1.msra.mxu0 0.0
    %1693 = vmatprep.subr.mxu0 0.0
    %1694 = vmatpush1.msra.mxu0 0.0
    %1695 = vmatprep.subr.mxu0 0.0
    %1696 = vmatpush1.msra.mxu0 0.0
    %1697 = vmatprep.subr.mxu0 0.0
    %1698 = vmatpush1.msra.mxu0 0.0
    %1699 = vmatprep.subr.mxu0 0.0
    %1700 = vmatpush1.msra.mxu0 0.0
    %1701 = vmatprep.subr.mxu0 0.0
    %1702 = vmatpush1.msra.mxu0 0.0
    %1703 = vmatprep.subr.mxu0 0.0
    %1704 = vmatpush1.msra.mxu0 0.0
    %1705 = vmatprep.subr.mxu0 0.0
    %1706 = vmatpush1.msra.mxu0 0.0
    %1707 = vmatprep.subr.mxu0 0.0
    %1708 = vmatpush1.msra.mxu0 0.0
    %1709 = vmatprep.subr.mxu0 0.0
    %1710 = vmatpush1.msra.mxu0 0.0
    %1711 = vmatprep.subr.mxu0 0.0
    %1712 = vmatpush1.msra.mxu0 0.0
    %1713 = vmatprep.mubr.f32.mxu0 0.0
    %1714 = vmatmul.mubr.f32.gmra.mrb[0].mxu0 %v1644
    %v1715 = vpop.f32.mrb[0].mxu0
    %v1716 = vadd.f32 %v1641, %v1715
    %v1717 = vpop.f32.mrb[0].mxu0
    %1718 = vmatprep.mubr.f32.mxu0 0.0
    %1719 = vmatmul.mubr.f32.gmra.mrb[0].mxu0 %v1647
    %v1720 = vpop.f32.mrb[0].mxu0
    %v1721 = vadd.f32 %v1641, %v1720
    %v1722 = vpop.f32.mrb[0].mxu0
    %1723 = vdwg.mxu0
    %v1724 = vadd.f32 %v1060, %v221
    %v1725 = vadd.f32 %v1065, %v222
    %v1726 = vsel %vm238, %v1724, 0.0
    %1727 = vadd.xlane.f32.xlu0 %v1726
    %v1728 = vpop.xlane.xlu0 %1727
    %v1729 = vsel %vm238, %v1725, 0.0
    %1730 = vadd.xlane.f32.xlu0 %v1729
    %v1731 = vpop.xlane.xlu0 %1730
    %v1732 = vrcp.pop 32.0
    %v1733 = vmul.f32 %v1728, %v1732
    %v1734 = vmul.f32 %v1731, %v1732
    %v1735 = vsub.f32 %v1724, %v1733
    %v1736 = vsub.f32 %v1725, %v1734
    %v1737 = vmul.f32 %v1735, %v1735
    %v1738 = vmul.f32 %v1736, %v1736
    %v1739 = vsel %vm238, %v1737, 0.0
    %1740 = vadd.xlane.f32.xlu0 %v1739
    %v1741 = vpop.xlane.xlu0 %1740
    %v1742 = vsel %vm238, %v1738, 0.0
    %1743 = vadd.xlane.f32.xlu0 %v1742
    %v1744 = vpop.xlane.xlu0 %1743
    %v1745 = vmul.f32 %v1741, %v1732
    %v1746 = vmul.f32 %v1744, %v1732
    %v1747 = vadd.f32 %v1745, 1e-12
    %v1748 = vadd.f32 %v1746, 1e-12
    %v1749 = vrsqrt.pop %v1747
    %v1750 = vrsqrt.pop %v1748
    %v1751 = vmul.f32 %v1735, %v1749
    %v1752 = vmul.f32 %v1736, %v1750
    %v1753 = vlaneseq
    %v1754 = vshrl.u32 %v1753, 7
    %v1755 = vsub.s32 0, %v1754
    %v1756 = vrot.slane %v225, %v1755
    %v1757 = vmul.f32 %v1751, %v1756
    %v1758 = vmul.f32 %v1752, %v1756
    %v1759 = vlaneseq
    %v1760 = vshrl.u32 %v1759, 7
    %v1761 = vsub.s32 0, %v1760
    %v1762 = vrot.slane %v226, %v1761
    %v1763 = vadd.f32 %v1757, %v1762
    %v1764 = vadd.f32 %v1758, %v1762
    %v1765 = vld [vmem:[%s25] sm:$0xff]
    %v1766 = vld [vmem:[%s25 + $0x8] sm:$0xff]
    %v1767 = vld [vmem:[%s25 + $0x10] sm:$0xff]
    %v1768 = vld [vmem:[%s25 + $0x18] sm:$0xff]
    %v1769 = vld [vmem:[#allocation11] sm:$0x1]
    %v1771 = vlaneseq
    %v1772 = vshrl.u32 %v1771, 7
    %v1773 = vsub.s32 0, %v1772
    %v1774 = vrot.slane %v1769, %v1773
    %v1777 = vsel %vm238, %v1763, 0
    %v1780 = vsel %vm238, %v1764, 0
    %1782 = vmatprep.subr.mxu0 0.0
    %1783 = vmatpush1.msra.mxu0 %v1765
    %1784 = vmatprep.subr.mxu0 0.0
    %1785 = vmatpush1.msra.mxu0 %v1766
    %1786 = vmatprep.subr.mxu0 0.0
    %1787 = vmatpush1.msra.mxu0 %v1767
    %1788 = vmatprep.subr.mxu0 0.0
    %1789 = vmatpush1.msra.mxu0 %v1768
    %1790 = vmatprep.subr.mxu0 0.0
    %1791 = vmatpush1.msra.mxu0 0.0
    %1792 = vmatprep.subr.mxu0 0.0
    %1793 = vmatpush1.msra.mxu0 0.0
    %1794 = vmatprep.subr.mxu0 0.0
    %1795 = vmatpush1.msra.mxu0 0.0
    %1796 = vmatprep.subr.mxu0 0.0
    %1797 = vmatpush1.msra.mxu0 0.0
    %1798 = vmatprep.subr.mxu0 0.0
    %1799 = vmatpush1.msra.mxu0 0.0
    %1800 = vmatprep.subr.mxu0 0.0
    %1801 = vmatpush1.msra.mxu0 0.0
    %1802 = vmatprep.subr.mxu0 0.0
    %1803 = vmatpush1.msra.mxu0 0.0
    %1804 = vmatprep.subr.mxu0 0.0
    %1805 = vmatpush1.msra.mxu0 0.0
    %1806 = vmatprep.subr.mxu0 0.0
    %1807 = vmatpush1.msra.mxu0 0.0
    %1808 = vmatprep.subr.mxu0 0.0
    %1809 = vmatpush1.msra.mxu0 0.0
    %1810 = vmatprep.subr.mxu0 0.0
    %1811 = vmatpush1.msra.mxu0 0.0
    %1812 = vmatprep.subr.mxu0 0.0
    %1813 = vmatpush1.msra.mxu0 0.0
    %1814 = vmatprep.subr.mxu0 0.0
    %1815 = vmatpush1.msra.mxu0 0.0
    %1816 = vmatprep.subr.mxu0 0.0
    %1817 = vmatpush1.msra.mxu0 0.0
    %1818 = vmatprep.subr.mxu0 0.0
    %1819 = vmatpush1.msra.mxu0 0.0
    %1820 = vmatprep.subr.mxu0 0.0
    %1821 = vmatpush1.msra.mxu0 0.0
    %1822 = vmatprep.subr.mxu0 0.0
    %1823 = vmatpush1.msra.mxu0 0.0
    %1824 = vmatprep.subr.mxu0 0.0
    %1825 = vmatpush1.msra.mxu0 0.0
    %1826 = vmatprep.subr.mxu0 0.0
    %1827 = vmatpush1.msra.mxu0 0.0
    %1828 = vmatprep.subr.mxu0 0.0
    %1829 = vmatpush1.msra.mxu0 0.0
    %1830 = vmatprep.subr.mxu0 0.0
    %1831 = vmatpush1.msra.mxu0 0.0
    %1832 = vmatprep.subr.mxu0 0.0
    %1833 = vmatpush1.msra.mxu0 0.0
    %1834 = vmatprep.subr.mxu0 0.0
    %1835 = vmatpush1.msra.mxu0 0.0
    %1836 = vmatprep.subr.mxu0 0.0
    %1837 = vmatpush1.msra.mxu0 0.0
    %1838 = vmatprep.subr.mxu0 0.0
    %1839 = vmatpush1.msra.mxu0 0.0
    %1840 = vmatprep.subr.mxu0 0.0
    %1841 = vmatpush1.msra.mxu0 0.0
    %1842 = vmatprep.subr.mxu0 0.0
    %1843 = vmatpush1.msra.mxu0 0.0
    %1844 = vmatprep.subr.mxu0 0.0
    %1845 = vmatpush1.msra.mxu0 0.0
    %1846 = vmatprep.mubr.f32.mxu0 0.0
    %1847 = vmatmul.mubr.f32.gmra.mrb[0].mxu0 %v1777
    %v1848 = vpop.f32.mrb[0].mxu0
    %v1849 = vadd.f32 %v1774, %v1848
    %v1850 = vpop.f32.mrb[0].mxu0
    %1851 = vmatprep.mubr.f32.mxu0 0.0
    %1852 = vmatmul.mubr.f32.gmra.mrb[0].mxu0 %v1780
    %v1853 = vpop.f32.mrb[0].mxu0
    %v1854 = vadd.f32 %v1774, %v1853
    %v1855 = vpop.f32.mrb[0].mxu0
    %1856 = vdwg.mxu0
    %v1857 = vld [vmem:[%s29] sm:$0xff]
    %v1858 = vld [vmem:[%s29 + $0x8] sm:$0xff]
    %v1859 = vld [vmem:[%s29 + $0x10] sm:$0xff]
    %v1860 = vld [vmem:[%s29 + $0x18] sm:$0xff]
    %v1861 = vld [vmem:[%s31] sm:$0x1]
    %v1862 = vmul.f32 %v1849, %v1078
    %v1863 = vmul.f32 %v1849, %v1080
    %v1864 = vmul.f32 %v1849, %v1082
    %v1865 = vmul.f32 %v1849, %v1084
    %v1866 = vmul.f32 %v1849, %v1094
    %v1867 = vmul.f32 %v1849, %v1096
    %v1868 = vmul.f32 %v1849, %v1098
    %v1869 = vmul.f32 %v1849, %v1100
    %1874 = vrot.lane.b32.xlu0 %v1862, 96
    %v1875 = vpop.permute.xlu0 %1874
    %1876 = vrot.lane.b32.xlu0 %v1863, 96
    %v1877 = vpop.permute.xlu0 %1876
    %1878 = vrot.lane.b32.xlu0 %v1864, 96
    %v1879 = vpop.permute.xlu0 %1878
    %1880 = vrot.lane.b32.xlu0 %v1865, 96
    %v1881 = vpop.permute.xlu0 %1880
    %v1883 = vsel %vm238, %v1849, 0
    %v1885 = vsel %vm238, %v1875, 0
    %v1887 = vsel %vm238, %v1877, 0
    %v1889 = vsel %vm238, %v1879, 0
    %v1891 = vsel %vm238, %v1881, 0
    %1893 = vmatprep.subr.mxu0 0.0
    %1894 = vmatpush1.xpose.msra.mxu0 %v1885
    %1895 = vmatprep.subr.mxu0 0.0
    %1896 = vmatpush1.xpose.msra.mxu0 %v1887
    %1897 = vmatprep.subr.mxu0 0.0
    %1898 = vmatpush1.xpose.msra.mxu0 %v1889
    %1899 = vmatprep.subr.mxu0 0.0
    %1900 = vmatpush1.xpose.msra.mxu0 %v1891
    %1901 = vmatprep.subr.mxu0 0.0
    %1902 = vmatpush1.xpose.msra.mxu0 0.0
    %1903 = vmatprep.subr.mxu0 0.0
    %1904 = vmatpush1.xpose.msra.mxu0 0.0
    %1905 = vmatprep.subr.mxu0 0.0
    %1906 = vmatpush1.xpose.msra.mxu0 0.0
    %1907 = vmatprep.subr.mxu0 0.0
    %1908 = vmatpush1.xpose.msra.mxu0 0.0
    %1909 = vmatprep.subr.mxu0 0.0
    %1910 = vmatpush1.xpose.msra.mxu0 0.0
    %1911 = vmatprep.subr.mxu0 0.0
    %1912 = vmatpush1.xpose.msra.mxu0 0.0
    %1913 = vmatprep.subr.mxu0 0.0
    %1914 = vmatpush1.xpose.msra.mxu0 0.0
    %1915 = vmatprep.subr.mxu0 0.0
    %1916 = vmatpush1.xpose.msra.mxu0 0.0
    %1917 = vmatprep.subr.mxu0 0.0
    %1918 = vmatpush1.xpose.msra.mxu0 0.0
    %1919 = vmatprep.subr.mxu0 0.0
    %1920 = vmatpush1.xpose.msra.mxu0 0.0
    %1921 = vmatprep.subr.mxu0 0.0
    %1922 = vmatpush1.xpose.msra.mxu0 0.0
    %1923 = vmatprep.subr.mxu0 0.0
    %1924 = vmatpush1.xpose.msra.mxu0 0.0
    %1925 = vmatprep.subr.mxu0 0.0
    %1926 = vmatpush1.xpose.msra.mxu0 0.0
    %1927 = vmatprep.subr.mxu0 0.0
    %1928 = vmatpush1.xpose.msra.mxu0 0.0
    %1929 = vmatprep.subr.mxu0 0.0
    %1930 = vmatpush1.xpose.msra.mxu0 0.0
    %1931 = vmatprep.subr.mxu0 0.0
    %1932 = vmatpush1.xpose.msra.mxu0 0.0
    %1933 = vmatprep.subr.mxu0 0.0
    %1934 = vmatpush1.xpose.msra.mxu0 0.0
    %1935 = vmatprep.subr.mxu0 0.0
    %1936 = vmatpush1.xpose.msra.mxu0 0.0
    %1937 = vmatprep.subr.mxu0 0.0
    %1938 = vmatpush1.xpose.msra.mxu0 0.0
    %1939 = vmatprep.subr.mxu0 0.0
    %1940 = vmatpush1.xpose.msra.mxu0 0.0
    %1941 = vmatprep.subr.mxu0 0.0
    %1942 = vmatpush1.xpose.msra.mxu0 0.0
    %1943 = vmatprep.subr.mxu0 0.0
    %1944 = vmatpush1.xpose.msra.mxu0 0.0
    %1945 = vmatprep.subr.mxu0 0.0
    %1946 = vmatpush1.xpose.msra.mxu0 0.0
    %1947 = vmatprep.subr.mxu0 0.0
    %1948 = vmatpush1.xpose.msra.mxu0 0.0
    %1949 = vmatprep.subr.mxu0 0.0
    %1950 = vmatpush1.xpose.msra.mxu0 0.0
    %1951 = vmatprep.subr.mxu0 0.0
    %1952 = vmatpush1.xpose.msra.mxu0 0.0
    %1953 = vmatprep.subr.mxu0 0.0
    %1954 = vmatpush1.xpose.msra.mxu0 0.0
    %1955 = vmatprep.subr.mxu0 0.0
    %1956 = vmatpush1.xpose.msra.mxu0 0.0
    %1957 = vmatprep.mubr.f32.mxu0 0.0
    %1958 = vmatmul.mubr.f32.gmra.mrb[0].mxu0 %v1883
    %v1959 = vpop.f32.mrb[0].mxu0
    %v1960 = vadd.f32 0.0, %v1959
    %v1961 = vpop.f32.mrb[0].mxu0
    %1962 = vdwg.mxu0
    %v1963 = vsel %vm238, %v1960, -inf
    %1964 = vmax.xlane.f32.xlu0 %v1963
    %v1965 = vpop.xlane.xlu0 %1964
    %v1966 = vsub.f32 %v1960, %v1965
    %v1967 = vmul.f32 %v1966, 1.442695
    %v1968 = vpow.pop %v1967
    %1973 = vrot.lane.b32.xlu0 %v1866, 64
    %v1974 = vpop.permute.xlu0 %1973
    %1975 = vrot.lane.b32.xlu0 %v1867, 64
    %v1976 = vpop.permute.xlu0 %1975
    %1977 = vrot.lane.b32.xlu0 %v1868, 64
    %v1978 = vpop.permute.xlu0 %1977
    %1979 = vrot.lane.b32.xlu0 %v1869, 64
    %v1980 = vpop.permute.xlu0 %1979
    %v1986 = vsel %vm238, %v1968, 0
    %1988 = vmatprep.subr.mxu0 0.0
    %1989 = vmatpush1.msra.mxu0 %v1974
    %1990 = vmatprep.subr.mxu0 0.0
    %1991 = vmatpush1.msra.mxu0 %v1976
    %1992 = vmatprep.subr.mxu0 0.0
    %1993 = vmatpush1.msra.mxu0 %v1978
    %1994 = vmatprep.subr.mxu0 0.0
    %1995 = vmatpush1.msra.mxu0 %v1980
    %1996 = vmatprep.subr.mxu0 0.0
    %1997 = vmatpush1.msra.mxu0 0.0
    %1998 = vmatprep.subr.mxu0 0.0
    %1999 = vmatpush1.msra.mxu0 0.0
    %2000 = vmatprep.subr.mxu0 0.0
    %2001 = vmatpush1.msra.mxu0 0.0
    %2002 = vmatprep.subr.mxu0 0.0
    %2003 = vmatpush1.msra.mxu0 0.0
    %2004 = vmatprep.subr.mxu0 0.0
    %2005 = vmatpush1.msra.mxu0 0.0
    %2006 = vmatprep.subr.mxu0 0.0
    %2007 = vmatpush1.msra.mxu0 0.0
    %2008 = vmatprep.subr.mxu0 0.0
    %2009 = vmatpush1.msra.mxu0 0.0
    %2010 = vmatprep.subr.mxu0 0.0
    %2011 = vmatpush1.msra.mxu0 0.0
    %2012 = vmatprep.subr.mxu0 0.0
    %2013 = vmatpush1.msra.mxu0 0.0
    %2014 = vmatprep.subr.mxu0 0.0
    %2015 = vmatpush1.msra.mxu0 0.0
    %2016 = vmatprep.subr.mxu0 0.0
    %2017 = vmatpush1.msra.mxu0 0.0
    %2018 = vmatprep.subr.mxu0 0.0
    %2019 = vmatpush1.msra.mxu0 0.0
    %2020 = vmatprep.subr.mxu0 0.0
    %2021 = vmatpush1.msra.mxu0 0.0
    %2022 = vmatprep.subr.mxu0 0.0
    %2023 = vmatpush1.msra.mxu0 0.0
    %2024 = vmatprep.subr.mxu0 0.0
    %2025 = vmatpush1.msra.mxu0 0.0
    %2026 = vmatprep.subr.mxu0 0.0
    %2027 = vmatpush1.msra.mxu0 0.0
    %2028 = vmatprep.subr.mxu0 0.0
    %2029 = vmatpush1.msra.mxu0 0.0
    %2030 = vmatprep.subr.mxu0 0.0
    %2031 = vmatpush1.msra.mxu0 0.0
    %2032 = vmatprep.subr.mxu0 0.0
    %2033 = vmatpush1.msra.mxu0 0.0
    %2034 = vmatprep.subr.mxu0 0.0
    %2035 = vmatpush1.msra.mxu0 0.0
    %2036 = vmatprep.subr.mxu0 0.0
    %2037 = vmatpush1.msra.mxu0 0.0
    %2038 = vmatprep.subr.mxu0 0.0
    %2039 = vmatpush1.msra.mxu0 0.0
    %2040 = vmatprep.subr.mxu0 0.0
    %2041 = vmatpush1.msra.mxu0 0.0
    %2042 = vmatprep.subr.mxu0 0.0
    %2043 = vmatpush1.msra.mxu0 0.0
    %2044 = vmatprep.subr.mxu0 0.0
    %2045 = vmatpush1.msra.mxu0 0.0
    %2046 = vmatprep.subr.mxu0 0.0
    %2047 = vmatpush1.msra.mxu0 0.0
    %2048 = vmatprep.subr.mxu0 0.0
    %2049 = vmatpush1.msra.mxu0 0.0
    %2050 = vmatprep.subr.mxu0 0.0
    %2051 = vmatpush1.msra.mxu0 0.0
    %2052 = vmatprep.mubr.f32.mxu0 0.0
    %2053 = vmatmul.mubr.f32.gmra.mrb[0].mxu0 %v1986
    %v2054 = vpop.f32.mrb[0].mxu0
    %v2055 = vadd.f32 0.0, %v2054
    %v2056 = vpop.f32.mrb[0].mxu0
    %2057 = vdwg.mxu0
    %2058 = vmatprep.subr.mxu0 0.0
    %2059 = vmatpush1.msra.mxu0 %v213
    %2060 = vmatprep.subr.mxu0 0.0
    %2061 = vmatpush1.msra.mxu0 %v214
    %2062 = vmatprep.subr.mxu0 0.0
    %2063 = vmatpush1.msra.mxu0 %v215
    %2064 = vmatprep.subr.mxu0 0.0
    %2065 = vmatpush1.msra.mxu0 %v216
    %2066 = vmatprep.subr.mxu0 0.0
    %2067 = vmatpush1.msra.mxu0 0.0
    %2068 = vmatprep.subr.mxu0 0.0
    %2069 = vmatpush1.msra.mxu0 0.0
    %2070 = vmatprep.subr.mxu0 0.0
    %2071 = vmatpush1.msra.mxu0 0.0
    %2072 = vmatprep.subr.mxu0 0.0
    %2073 = vmatpush1.msra.mxu0 0.0
    %2074 = vmatprep.subr.mxu0 0.0
    %2075 = vmatpush1.msra.mxu0 0.0
    %2076 = vmatprep.subr.mxu0 0.0
    %2077 = vmatpush1.msra.mxu0 0.0
    %2078 = vmatprep.subr.mxu0 0.0
    %2079 = vmatpush1.msra.mxu0 0.0
    %2080 = vmatprep.subr.mxu0 0.0
    %2081 = vmatpush1.msra.mxu0 0.0
    %2082 = vmatprep.subr.mxu0 0.0
    %2083 = vmatpush1.msra.mxu0 0.0
    %2084 = vmatprep.subr.mxu0 0.0
    %2085 = vmatpush1.msra.mxu0 0.0
    %2086 = vmatprep.subr.mxu0 0.0
    %2087 = vmatpush1.msra.mxu0 0.0
    %2088 = vmatprep.subr.mxu0 0.0
    %2089 = vmatpush1.msra.mxu0 0.0
    %2090 = vmatprep.subr.mxu0 0.0
    %2091 = vmatpush1.msra.mxu0 0.0
    %2092 = vmatprep.subr.mxu0 0.0
    %2093 = vmatpush1.msra.mxu0 0.0
    %2094 = vmatprep.subr.mxu0 0.0
    %2095 = vmatpush1.msra.mxu0 0.0
    %2096 = vmatprep.subr.mxu0 0.0
    %2097 = vmatpush1.msra.mxu0 0.0
    %2098 = vmatprep.subr.mxu0 0.0
    %2099 = vmatpush1.msra.mxu0 0.0
    %2100 = vmatprep.subr.mxu0 0.0
    %2101 = vmatpush1.msra.mxu0 0.0
    %2102 = vmatprep.subr.mxu0 0.0
    %2103 = vmatpush1.msra.mxu0 0.0
    %2104 = vmatprep.subr.mxu0 0.0
    %2105 = vmatpush1.msra.mxu0 0.0
    %2106 = vmatprep.subr.mxu0 0.0
    %2107 = vmatpush1.msra.mxu0 0.0
    %2108 = vmatprep.subr.mxu0 0.0
    %2109 = vmatpush1.msra.mxu0 0.0
    %2110 = vmatprep.subr.mxu0 0.0
    %2111 = vmatpush1.msra.mxu0 0.0
    %2112 = vmatprep.subr.mxu0 0.0
    %2113 = vmatpush1.msra.mxu0 0.0
    %2114 = vmatprep.subr.mxu0 0.0
    %2115 = vmatpush1.msra.mxu0 0.0
    %2116 = vmatprep.subr.mxu0 0.0
    %2117 = vmatpush1.msra.mxu0 0.0
    %2118 = vmatprep.subr.mxu0 0.0
    %2119 = vmatpush1.msra.mxu0 0.0
    %2120 = vmatprep.subr.mxu0 0.0
    %2121 = vmatpush1.msra.mxu0 0.0
    %2122 = vmatprep.mubr.f32.mxu0 0.0
    %2123 = vmatmul.mubr.f32.gmra.mrb[0].mxu0 %v1986
    %v2124 = vpop.f32.mrb[0].mxu0
    %v2125 = vadd.f32 0.0, %v2124
    %v2126 = vpop.f32.mrb[0].mxu0
    %2127 = vdwg.mxu0
    %v2128 = vrcp.pop %v2125
    %v2129 = vmul.f32 %v2055, %v2128
    %v2130 = vmul.f32 %v1854, %v1078
    %v2131 = vmul.f32 %v1854, %v1080
    %v2132 = vmul.f32 %v1854, %v1082
    %v2133 = vmul.f32 %v1854, %v1084
    %v2134 = vmul.f32 %v1854, %v1094
    %v2135 = vmul.f32 %v1854, %v1096
    %v2136 = vmul.f32 %v1854, %v1098
    %v2137 = vmul.f32 %v1854, %v1100
    %2142 = vrot.lane.b32.xlu0 %v2130, 96
    %v2143 = vpop.permute.xlu0 %2142
    %2144 = vrot.lane.b32.xlu0 %v2131, 96
    %v2145 = vpop.permute.xlu0 %2144
    %2146 = vrot.lane.b32.xlu0 %v2132, 96
    %v2147 = vpop.permute.xlu0 %2146
    %2148 = vrot.lane.b32.xlu0 %v2133, 96
    %v2149 = vpop.permute.xlu0 %2148
    %v2151 = vsel %vm238, %v1854, 0
    %v2153 = vsel %vm238, %v2143, 0
    %v2155 = vsel %vm238, %v2145, 0
    %v2157 = vsel %vm238, %v2147, 0
    %v2159 = vsel %vm238, %v2149, 0
    %2161 = vmatprep.subr.mxu0 0.0
    %2162 = vmatpush1.xpose.msra.mxu0 %v2153
    %2163 = vmatprep.subr.mxu0 0.0
    %2164 = vmatpush1.xpose.msra.mxu0 %v2155
    %2165 = vmatprep.subr.mxu0 0.0
    %2166 = vmatpush1.xpose.msra.mxu0 %v2157
    %2167 = vmatprep.subr.mxu0 0.0
    %2168 = vmatpush1.xpose.msra.mxu0 %v2159
    %2169 = vmatprep.subr.mxu0 0.0
    %2170 = vmatpush1.xpose.msra.mxu0 0.0
    %2171 = vmatprep.subr.mxu0 0.0
    %2172 = vmatpush1.xpose.msra.mxu0 0.0
    %2173 = vmatprep.subr.mxu0 0.0
    %2174 = vmatpush1.xpose.msra.mxu0 0.0
    %2175 = vmatprep.subr.mxu0 0.0
    %2176 = vmatpush1.xpose.msra.mxu0 0.0
    %2177 = vmatprep.subr.mxu0 0.0
    %2178 = vmatpush1.xpose.msra.mxu0 0.0
    %2179 = vmatprep.subr.mxu0 0.0
    %2180 = vmatpush1.xpose.msra.mxu0 0.0
    %2181 = vmatprep.subr.mxu0 0.0
    %2182 = vmatpush1.xpose.msra.mxu0 0.0
    %2183 = vmatprep.subr.mxu0 0.0
    %2184 = vmatpush1.xpose.msra.mxu0 0.0
    %2185 = vmatprep.subr.mxu0 0.0
    %2186 = vmatpush1.xpose.msra.mxu0 0.0
    %2187 = vmatprep.subr.mxu0 0.0
    %2188 = vmatpush1.xpose.msra.mxu0 0.0
    %2189 = vmatprep.subr.mxu0 0.0
    %2190 = vmatpush1.xpose.msra.mxu0 0.0
    %2191 = vmatprep.subr.mxu0 0.0
    %2192 = vmatpush1.xpose.msra.mxu0 0.0
    %2193 = vmatprep.subr.mxu0 0.0
    %2194 = vmatpush1.xpose.msra.mxu0 0.0
    %2195 = vmatprep.subr.mxu0 0.0
    %2196 = vmatpush1.xpose.msra.mxu0 0.0
    %2197 = vmatprep.subr.mxu0 0.0
    %2198 = vmatpush1.xpose.msra.mxu0 0.0
    %2199 = vmatprep.subr.mxu0 0.0
    %2200 = vmatpush1.xpose.msra.mxu0 0.0
    %2201 = vmatprep.subr.mxu0 0.0
    %2202 = vmatpush1.xpose.msra.mxu0 0.0
    %2203 = vmatprep.subr.mxu0 0.0
    %2204 = vmatpush1.xpose.msra.mxu0 0.0
    %2205 = vmatprep.subr.mxu0 0.0
    %2206 = vmatpush1.xpose.msra.mxu0 0.0
    %2207 = vmatprep.subr.mxu0 0.0
    %2208 = vmatpush1.xpose.msra.mxu0 0.0
    %2209 = vmatprep.subr.mxu0 0.0
    %2210 = vmatpush1.xpose.msra.mxu0 0.0
    %2211 = vmatprep.subr.mxu0 0.0
    %2212 = vmatpush1.xpose.msra.mxu0 0.0
    %2213 = vmatprep.subr.mxu0 0.0
    %2214 = vmatpush1.xpose.msra.mxu0 0.0
    %2215 = vmatprep.subr.mxu0 0.0
    %2216 = vmatpush1.xpose.msra.mxu0 0.0
    %2217 = vmatprep.subr.mxu0 0.0
    %2218 = vmatpush1.xpose.msra.mxu0 0.0
    %2219 = vmatprep.subr.mxu0 0.0
    %2220 = vmatpush1.xpose.msra.mxu0 0.0
    %2221 = vmatprep.subr.mxu0 0.0
    %2222 = vmatpush1.xpose.msra.mxu0 0.0
    %2223 = vmatprep.subr.mxu0 0.0
    %2224 = vmatpush1.xpose.msra.mxu0 0.0
    %2225 = vmatprep.mubr.f32.mxu0 0.0
    %2226 = vmatmul.mubr.f32.gmra.mrb[0].mxu0 %v2151
    %v2227 = vpop.f32.mrb[0].mxu0
    %v2228 = vadd.f32 0.0, %v2227
    %v2229 = vpop.f32.mrb[0].mxu0
    %2230 = vdwg.mxu0
    %v2231 = vsel %vm238, %v2228, -inf
    %2232 = vmax.xlane.f32.xlu0 %v2231
    %v2233 = vpop.xlane.xlu0 %2232
    %v2234 = vsub.f32 %v2228, %v2233
    %v2235 = vmul.f32 %v2234, 1.442695
    %v2236 = vpow.pop %v2235
    %2241 = vrot.lane.b32.xlu0 %v2134, 64
    %v2242 = vpop.permute.xlu0 %2241
    %2243 = vrot.lane.b32.xlu0 %v2135, 64
    %v2244 = vpop.permute.xlu0 %2243
    %2245 = vrot.lane.b32.xlu0 %v2136, 64
    %v2246 = vpop.permute.xlu0 %2245
    %2247 = vrot.lane.b32.xlu0 %v2137, 64
    %v2248 = vpop.permute.xlu0 %2247
    %v2254 = vsel %vm238, %v2236, 0
    %2256 = vmatprep.subr.mxu0 0.0
    %2257 = vmatpush1.msra.mxu0 %v2242
    %2258 = vmatprep.subr.mxu0 0.0
    %2259 = vmatpush1.msra.mxu0 %v2244
    %2260 = vmatprep.subr.mxu0 0.0
    %2261 = vmatpush1.msra.mxu0 %v2246
    %2262 = vmatprep.subr.mxu0 0.0
    %2263 = vmatpush1.msra.mxu0 %v2248
    %2264 = vmatprep.subr.mxu0 0.0
    %2265 = vmatpush1.msra.mxu0 0.0
    %2266 = vmatprep.subr.mxu0 0.0
    %2267 = vmatpush1.msra.mxu0 0.0
    %2268 = vmatprep.subr.mxu0 0.0
    %2269 = vmatpush1.msra.mxu0 0.0
    %2270 = vmatprep.subr.mxu0 0.0
    %2271 = vmatpush1.msra.mxu0 0.0
    %2272 = vmatprep.subr.mxu0 0.0
    %2273 = vmatpush1.msra.mxu0 0.0
    %2274 = vmatprep.subr.mxu0 0.0
    %2275 = vmatpush1.msra.mxu0 0.0
    %2276 = vmatprep.subr.mxu0 0.0
    %2277 = vmatpush1.msra.mxu0 0.0
    %2278 = vmatprep.subr.mxu0 0.0
    %2279 = vmatpush1.msra.mxu0 0.0
    %2280 = vmatprep.subr.mxu0 0.0
    %2281 = vmatpush1.msra.mxu0 0.0
    %2282 = vmatprep.subr.mxu0 0.0
    %2283 = vmatpush1.msra.mxu0 0.0
    %2284 = vmatprep.subr.mxu0 0.0
    %2285 = vmatpush1.msra.mxu0 0.0
    %2286 = vmatprep.subr.mxu0 0.0
    %2287 = vmatpush1.msra.mxu0 0.0
    %2288 = vmatprep.subr.mxu0 0.0
    %2289 = vmatpush1.msra.mxu0 0.0
    %2290 = vmatprep.subr.mxu0 0.0
    %2291 = vmatpush1.msra.mxu0 0.0
    %2292 = vmatprep.subr.mxu0 0.0
    %2293 = vmatpush1.msra.mxu0 0.0
    %2294 = vmatprep.subr.mxu0 0.0
    %2295 = vmatpush1.msra.mxu0 0.0
    %2296 = vmatprep.subr.mxu0 0.0
    %2297 = vmatpush1.msra.mxu0 0.0
    %2298 = vmatprep.subr.mxu0 0.0
    %2299 = vmatpush1.msra.mxu0 0.0
    %2300 = vmatprep.subr.mxu0 0.0
    %2301 = vmatpush1.msra.mxu0 0.0
    %2302 = vmatprep.subr.mxu0 0.0
    %2303 = vmatpush1.msra.mxu0 0.0
    %2304 = vmatprep.subr.mxu0 0.0
    %2305 = vmatpush1.msra.mxu0 0.0
    %2306 = vmatprep.subr.mxu0 0.0
    %2307 = vmatpush1.msra.mxu0 0.0
    %2308 = vmatprep.subr.mxu0 0.0
    %2309 = vmatpush1.msra.mxu0 0.0
    %2310 = vmatprep.subr.mxu0 0.0
    %2311 = vmatpush1.msra.mxu0 0.0
    %2312 = vmatprep.subr.mxu0 0.0
    %2313 = vmatpush1.msra.mxu0 0.0
    %2314 = vmatprep.subr.mxu0 0.0
    %2315 = vmatpush1.msra.mxu0 0.0
    %2316 = vmatprep.subr.mxu0 0.0
    %2317 = vmatpush1.msra.mxu0 0.0
    %2318 = vmatprep.subr.mxu0 0.0
    %2319 = vmatpush1.msra.mxu0 0.0
    %2320 = vmatprep.mubr.f32.mxu0 0.0
    %2321 = vmatmul.mubr.f32.gmra.mrb[0].mxu0 %v2254
    %v2322 = vpop.f32.mrb[0].mxu0
    %v2323 = vadd.f32 0.0, %v2322
    %v2324 = vpop.f32.mrb[0].mxu0
    %2325 = vdwg.mxu0
    %2326 = vmatprep.subr.mxu0 0.0
    %2327 = vmatpush1.msra.mxu0 %v213
    %2328 = vmatprep.subr.mxu0 0.0
    %2329 = vmatpush1.msra.mxu0 %v214
    %2330 = vmatprep.subr.mxu0 0.0
    %2331 = vmatpush1.msra.mxu0 %v215
    %2332 = vmatprep.subr.mxu0 0.0
    %2333 = vmatpush1.msra.mxu0 %v216
    %2334 = vmatprep.subr.mxu0 0.0
    %2335 = vmatpush1.msra.mxu0 0.0
    %2336 = vmatprep.subr.mxu0 0.0
    %2337 = vmatpush1.msra.mxu0 0.0
    %2338 = vmatprep.subr.mxu0 0.0
    %2339 = vmatpush1.msra.mxu0 0.0
    %2340 = vmatprep.subr.mxu0 0.0
    %2341 = vmatpush1.msra.mxu0 0.0
    %2342 = vmatprep.subr.mxu0 0.0
    %2343 = vmatpush1.msra.mxu0 0.0
    %2344 = vmatprep.subr.mxu0 0.0
    %2345 = vmatpush1.msra.mxu0 0.0
    %2346 = vmatprep.subr.mxu0 0.0
    %2347 = vmatpush1.msra.mxu0 0.0
    %2348 = vmatprep.subr.mxu0 0.0
    %2349 = vmatpush1.msra.mxu0 0.0
    %2350 = vmatprep.subr.mxu0 0.0
    %2351 = vmatpush1.msra.mxu0 0.0
    %2352 = vmatprep.subr.mxu0 0.0
    %2353 = vmatpush1.msra.mxu0 0.0
    %2354 = vmatprep.subr.mxu0 0.0
    %2355 = vmatpush1.msra.mxu0 0.0
    %2356 = vmatprep.subr.mxu0 0.0
    %2357 = vmatpush1.msra.mxu0 0.0
    %2358 = vmatprep.subr.mxu0 0.0
    %2359 = vmatpush1.msra.mxu0 0.0
    %2360 = vmatprep.subr.mxu0 0.0
    %2361 = vmatpush1.msra.mxu0 0.0
    %2362 = vmatprep.subr.mxu0 0.0
    %2363 = vmatpush1.msra.mxu0 0.0
    %2364 = vmatprep.subr.mxu0 0.0
    %2365 = vmatpush1.msra.mxu0 0.0
    %2366 = vmatprep.subr.mxu0 0.0
    %2367 = vmatpush1.msra.mxu0 0.0
    %2368 = vmatprep.subr.mxu0 0.0
    %2369 = vmatpush1.msra.mxu0 0.0
    %2370 = vmatprep.subr.mxu0 0.0
    %2371 = vmatpush1.msra.mxu0 0.0
    %2372 = vmatprep.subr.mxu0 0.0
    %2373 = vmatpush1.msra.mxu0 0.0
    %2374 = vmatprep.subr.mxu0 0.0
    %2375 = vmatpush1.msra.mxu0 0.0
    %2376 = vmatprep.subr.mxu0 0.0
    %2377 = vmatpush1.msra.mxu0 0.0
    %2378 = vmatprep.subr.mxu0 0.0
    %2379 = vmatpush1.msra.mxu0 0.0
    %2380 = vmatprep.subr.mxu0 0.0
    %2381 = vmatpush1.msra.mxu0 0.0
    %2382 = vmatprep.subr.mxu0 0.0
    %2383 = vmatpush1.msra.mxu0 0.0
    %2384 = vmatprep.subr.mxu0 0.0
    %2385 = vmatpush1.msra.mxu0 0.0
    %2386 = vmatprep.subr.mxu0 0.0
    %2387 = vmatpush1.msra.mxu0 0.0
    %2388 = vmatprep.subr.mxu0 0.0
    %2389 = vmatpush1.msra.mxu0 0.0
    %2390 = vmatprep.mubr.f32.mxu0 0.0
    %2391 = vmatmul.mubr.f32.gmra.mrb[0].mxu0 %v2254
    %v2392 = vpop.f32.mrb[0].mxu0
    %v2393 = vadd.f32 0.0, %v2392
    %v2394 = vpop.f32.mrb[0].mxu0
    %2395 = vdwg.mxu0
    %v2396 = vrcp.pop %v2393
    %v2397 = vmul.f32 %v2323, %v2396
    %v2399 = vlaneseq
    %v2400 = vshrl.u32 %v2399, 7
    %v2401 = vsub.s32 0, %v2400
    %v2402 = vrot.slane %v1861, %v2401
    %v2405 = vsel %vm238, %v2129, 0
    %v2408 = vsel %vm238, %v2397, 0
    %2410 = vmatprep.subr.mxu0 0.0
    %2411 = vmatpush1.msra.mxu0 %v1857
    %2412 = vmatprep.subr.mxu0 0.0
    %2413 = vmatpush1.msra.mxu0 %v1858
    %2414 = vmatprep.subr.mxu0 0.0
    %2415 = vmatpush1.msra.mxu0 %v1859
    %2416 = vmatprep.subr.mxu0 0.0
    %2417 = vmatpush1.msra.mxu0 %v1860
    %2418 = vmatprep.subr.mxu0 0.0
    %2419 = vmatpush1.msra.mxu0 0.0
    %2420 = vmatprep.subr.mxu0 0.0
    %2421 = vmatpush1.msra.mxu0 0.0
    %2422 = vmatprep.subr.mxu0 0.0
    %2423 = vmatpush1.msra.mxu0 0.0
    %2424 = vmatprep.subr.mxu0 0.0
    %2425 = vmatpush1.msra.mxu0 0.0
    %2426 = vmatprep.subr.mxu0 0.0
    %2427 = vmatpush1.msra.mxu0 0.0
    %2428 = vmatprep.subr.mxu0 0.0
    %2429 = vmatpush1.msra.mxu0 0.0
    %2430 = vmatprep.subr.mxu0 0.0
    %2431 = vmatpush1.msra.mxu0 0.0
    %2432 = vmatprep.subr.mxu0 0.0
    %2433 = vmatpush1.msra.mxu0 0.0
    %2434 = vmatprep.subr.mxu0 0.0
    %2435 = vmatpush1.msra.mxu0 0.0
    %2436 = vmatprep.subr.mxu0 0.0
    %2437 = vmatpush1.msra.mxu0 0.0
    %2438 = vmatprep.subr.mxu0 0.0
    %2439 = vmatpush1.msra.mxu0 0.0
    %2440 = vmatprep.subr.mxu0 0.0
    %2441 = vmatpush1.msra.mxu0 0.0
    %2442 = vmatprep.subr.mxu0 0.0
    %2443 = vmatpush1.msra.mxu0 0.0
    %2444 = vmatprep.subr.mxu0 0.0
    %2445 = vmatpush1.msra.mxu0 0.0
    %2446 = vmatprep.subr.mxu0 0.0
    %2447 = vmatpush1.msra.mxu0 0.0
    %2448 = vmatprep.subr.mxu0 0.0
    %2449 = vmatpush1.msra.mxu0 0.0
    %2450 = vmatprep.subr.mxu0 0.0
    %2451 = vmatpush1.msra.mxu0 0.0
    %2452 = vmatprep.subr.mxu0 0.0
    %2453 = vmatpush1.msra.mxu0 0.0
    %2454 = vmatprep.subr.mxu0 0.0
    %2455 = vmatpush1.msra.mxu0 0.0
    %2456 = vmatprep.subr.mxu0 0.0
    %2457 = vmatpush1.msra.mxu0 0.0
    %2458 = vmatprep.subr.mxu0 0.0
    %2459 = vmatpush1.msra.mxu0 0.0
    %2460 = vmatprep.subr.mxu0 0.0
    %2461 = vmatpush1.msra.mxu0 0.0
    %2462 = vmatprep.subr.mxu0 0.0
    %2463 = vmatpush1.msra.mxu0 0.0
    %2464 = vmatprep.subr.mxu0 0.0
    %2465 = vmatpush1.msra.mxu0 0.0
    %2466 = vmatprep.subr.mxu0 0.0
    %2467 = vmatpush1.msra.mxu0 0.0
    %2468 = vmatprep.subr.mxu0 0.0
    %2469 = vmatpush1.msra.mxu0 0.0
    %2470 = vmatprep.subr.mxu0 0.0
    %2471 = vmatpush1.msra.mxu0 0.0
    %2472 = vmatprep.subr.mxu0 0.0
    %2473 = vmatpush1.msra.mxu0 0.0
    %2474 = vmatprep.mubr.f32.mxu0 0.0
    %2475 = vmatmul.mubr.f32.gmra.mrb[0].mxu0 %v2405
    %v2476 = vpop.f32.mrb[0].mxu0
    %v2477 = vadd.f32 %v2402, %v2476
    %v2478 = vpop.f32.mrb[0].mxu0
    %2479 = vmatprep.mubr.f32.mxu0 0.0
    %2480 = vmatmul.mubr.f32.gmra.mrb[0].mxu0 %v2408
    %v2481 = vpop.f32.mrb[0].mxu0
    %v2482 = vadd.f32 %v2402, %v2481
    %v2483 = vpop.f32.mrb[0].mxu0
    %2484 = vdwg.mxu0
    %v2485 = vadd.f32 %v2477, %v1763
    %v2486 = vadd.f32 %v2482, %v1764
    %v2487 = vsel %vm238, %v2485, 0.0
    %2488 = vadd.xlane.f32.xlu0 %v2487
    %v2489 = vpop.xlane.xlu0 %2488
    %v2490 = vsel %vm238, %v2486, 0.0
    %2491 = vadd.xlane.f32.xlu0 %v2490
    %v2492 = vpop.xlane.xlu0 %2491
    %v2493 = vmul.f32 %v2489, %v1732
    %v2494 = vmul.f32 %v2492, %v1732
    %v2495 = vsub.f32 %v2485, %v2493
    %v2496 = vsub.f32 %v2486, %v2494
    %v2497 = vmul.f32 %v2495, %v2495
    %v2498 = vmul.f32 %v2496, %v2496
    %v2499 = vsel %vm238, %v2497, 0.0
    %2500 = vadd.xlane.f32.xlu0 %v2499
    %v2501 = vpop.xlane.xlu0 %2500
    %v2502 = vsel %vm238, %v2498, 0.0
    %2503 = vadd.xlane.f32.xlu0 %v2502
    %v2504 = vpop.xlane.xlu0 %2503
    %v2505 = vmul.f32 %v2501, %v1732
    %v2506 = vmul.f32 %v2504, %v1732
    %v2507 = vadd.f32 %v2505, 1e-12
    %v2508 = vadd.f32 %v2506, 1e-12
    %v2509 = vrsqrt.pop %v2507
    %v2510 = vrsqrt.pop %v2508
    %v2511 = vmul.f32 %v2495, %v2509
    %v2512 = vmul.f32 %v2496, %v2510
    %v2513 = vlaneseq
    %v2514 = vshrl.u32 %v2513, 7
    %v2515 = vsub.s32 1, %v2514
    %v2516 = vrot.slane %v225, %v2515
    %v2517 = vmul.f32 %v2511, %v2516
    %v2518 = vmul.f32 %v2512, %v2516
    %v2519 = vlaneseq
    %v2520 = vshrl.u32 %v2519, 7
    %v2521 = vsub.s32 1, %v2520
    %v2522 = vrot.slane %v226, %v2521
    %v2523 = vadd.f32 %v2517, %v2522
    %v2524 = vadd.f32 %v2518, %v2522
    %v2525 = vld [vmem:[%s41] sm:$0xff]
    %v2526 = vld [vmem:[%s41 + $0x8] sm:$0xff]
    %v2527 = vld [vmem:[%s41 + $0x10] sm:$0xff]
    %v2528 = vld [vmem:[%s41 + $0x18] sm:$0xff]
    %v2529 = vld [vmem:[%s43] sm:$0x1]
    %v2531 = vlaneseq
    %v2532 = vshrl.u32 %v2531, 7
    %v2533 = vsub.s32 0, %v2532
    %v2534 = vrot.slane %v2529, %v2533
    %v2537 = vsel %vm238, %v2523, 0
    %v2540 = vsel %vm238, %v2524, 0
    %2542 = vmatprep.subr.mxu0 0.0
    %2543 = vmatpush1.msra.mxu0 %v2525
    %2544 = vmatprep.subr.mxu0 0.0
    %2545 = vmatpush1.msra.mxu0 %v2526
    %2546 = vmatprep.subr.mxu0 0.0
    %2547 = vmatpush1.msra.mxu0 %v2527
    %2548 = vmatprep.subr.mxu0 0.0
    %2549 = vmatpush1.msra.mxu0 %v2528
    %2550 = vmatprep.subr.mxu0 0.0
    %2551 = vmatpush1.msra.mxu0 0.0
    %2552 = vmatprep.subr.mxu0 0.0
    %2553 = vmatpush1.msra.mxu0 0.0
    %2554 = vmatprep.subr.mxu0 0.0
    %2555 = vmatpush1.msra.mxu0 0.0
    %2556 = vmatprep.subr.mxu0 0.0
    %2557 = vmatpush1.msra.mxu0 0.0
    %2558 = vmatprep.subr.mxu0 0.0
    %2559 = vmatpush1.msra.mxu0 0.0
    %2560 = vmatprep.subr.mxu0 0.0
    %2561 = vmatpush1.msra.mxu0 0.0
    %2562 = vmatprep.subr.mxu0 0.0
    %2563 = vmatpush1.msra.mxu0 0.0
    %2564 = vmatprep.subr.mxu0 0.0
    %2565 = vmatpush1.msra.mxu0 0.0
    %2566 = vmatprep.subr.mxu0 0.0
    %2567 = vmatpush1.msra.mxu0 0.0
    %2568 = vmatprep.subr.mxu0 0.0
    %2569 = vmatpush1.msra.mxu0 0.0
    %2570 = vmatprep.subr.mxu0 0.0
    %2571 = vmatpush1.msra.mxu0 0.0
    %2572 = vmatprep.subr.mxu0 0.0
    %2573 = vmatpush1.msra.mxu0 0.0
    %2574 = vmatprep.subr.mxu0 0.0
    %2575 = vmatpush1.msra.mxu0 0.0
    %2576 = vmatprep.subr.mxu0 0.0
    %2577 = vmatpush1.msra.mxu0 0.0
    %2578 = vmatprep.subr.mxu0 0.0
    %2579 = vmatpush1.msra.mxu0 0.0
    %2580 = vmatprep.subr.mxu0 0.0
    %2581 = vmatpush1.msra.mxu0 0.0
    %2582 = vmatprep.subr.mxu0 0.0
    %2583 = vmatpush1.msra.mxu0 0.0
    %2584 = vmatprep.subr.mxu0 0.0
    %2585 = vmatpush1.msra.mxu0 0.0
    %2586 = vmatprep.subr.mxu0 0.0
    %2587 = vmatpush1.msra.mxu0 0.0
    %2588 = vmatprep.subr.mxu0 0.0
    %2589 = vmatpush1.msra.mxu0 0.0
    %2590 = vmatprep.subr.mxu0 0.0
    %2591 = vmatpush1.msra.mxu0 0.0
    %2592 = vmatprep.subr.mxu0 0.0
    %2593 = vmatpush1.msra.mxu0 0.0
    %2594 = vmatprep.subr.mxu0 0.0
    %2595 = vmatpush1.msra.mxu0 0.0
    %2596 = vmatprep.subr.mxu0 0.0
    %2597 = vmatpush1.msra.mxu0 0.0
    %2598 = vmatprep.subr.mxu0 0.0
    %2599 = vmatpush1.msra.mxu0 0.0
    %2600 = vmatprep.subr.mxu0 0.0
    %2601 = vmatpush1.msra.mxu0 0.0
    %2602 = vmatprep.subr.mxu0 0.0
    %2603 = vmatpush1.msra.mxu0 0.0
    %2604 = vmatprep.subr.mxu0 0.0
    %2605 = vmatpush1.msra.mxu0 0.0
    %2606 = vmatprep.mubr.f32.mxu0 0.0
    %2607 = vmatmul.mubr.f32.gmra.mrb[0].mxu0 %v2537
    %v2608 = vpop.f32.mrb[0].mxu0
    %v2609 = vadd.f32 %v2534, %v2608
    %v2610 = vpop.f32.mrb[0].mxu0
    %2611 = vmatprep.mubr.f32.mxu0 0.0
    %2612 = vmatmul.mubr.f32.gmra.mrb[0].mxu0 %v2540
    %v2613 = vpop.f32.mrb[0].mxu0
    %v2614 = vadd.f32 %v2534, %v2613
    %v2615 = vpop.f32.mrb[0].mxu0
    %2616 = vdwg.mxu0
    %v2617 = vmul.f32 %v2609, %v2609
    %v2618 = vmul.f32 %v2614, %v2614
    %v2619 = vmul.f32 %v2609, %v2617
    %v2620 = vmul.f32 %v2614, %v2618
    %v2621 = vmul.f32 %v2619, 0.044715
    %v2622 = vmul.f32 %v2620, 0.044715
    %v2623 = vadd.f32 %v2609, %v2621
    %v2624 = vadd.f32 %v2614, %v2622
    %v2625 = vmul.f32 %v2623, 0.7978846
    %v2626 = vmul.f32 %v2624, 0.7978846
    %v2627 = vtanh.pop %v2625
    %v2628 = vtanh.pop %v2626
    %v2629 = vadd.f32 %v2627, 1.0
    %v2630 = vadd.f32 %v2628, 1.0
    %v2631 = vmul.f32 %v2629, 0.5
    %v2632 = vmul.f32 %v2630, 0.5
    %v2633 = vmul.f32 %v2609, %v2631
    %v2634 = vmul.f32 %v2614, %v2632
    %v2635 = vld [vmem:[%s45] sm:$0xff]
    %v2636 = vld [vmem:[%s45 + $0x8] sm:$0xff]
    %v2637 = vld [vmem:[%s45 + $0x10] sm:$0xff]
    %v2638 = vld [vmem:[%s45 + $0x18] sm:$0xff]
    %v2639 = vld [vmem:[%s45 + $0x20] sm:$0xff]
    %v2640 = vld [vmem:[%s45 + $0x28] sm:$0xff]
    %v2641 = vld [vmem:[%s45 + $0x30] sm:$0xff]
    %v2642 = vld [vmem:[%s45 + $0x38] sm:$0xff]
    %v2643 = vld [vmem:[%s45 + $0x40] sm:$0xff]
    %v2644 = vld [vmem:[%s45 + $0x48] sm:$0xff]
    %v2645 = vld [vmem:[%s45 + $0x50] sm:$0xff]
    %v2646 = vld [vmem:[%s45 + $0x58] sm:$0xff]
    %v2647 = vld [vmem:[%s45 + $0x60] sm:$0xff]
    %v2648 = vld [vmem:[%s45 + $0x68] sm:$0xff]
    %v2649 = vld [vmem:[%s45 + $0x70] sm:$0xff]
    %v2650 = vld [vmem:[%s45 + $0x78] sm:$0xff]
    %v2651 = vld [vmem:[%s47] sm:$0x1]
    %v2653 = vlaneseq
    %v2654 = vshrl.u32 %v2653, 7
    %v2655 = vsub.s32 0, %v2654
    %v2656 = vrot.slane %v2651, %v2655
    %2658 = vmatprep.subr.mxu0 0.0
    %2659 = vmatpush1.msra.mxu0 %v2635
    %2660 = vmatprep.subr.mxu0 0.0
    %2661 = vmatpush1.msra.mxu0 %v2636
    %2662 = vmatprep.subr.mxu0 0.0
    %2663 = vmatpush1.msra.mxu0 %v2637
    %2664 = vmatprep.subr.mxu0 0.0
    %2665 = vmatpush1.msra.mxu0 %v2638
    %2666 = vmatprep.subr.mxu0 0.0
    %2667 = vmatpush1.msra.mxu0 %v2639
    %2668 = vmatprep.subr.mxu0 0.0
    %2669 = vmatpush1.msra.mxu0 %v2640
    %2670 = vmatprep.subr.mxu0 0.0
    %2671 = vmatpush1.msra.mxu0 %v2641
    %2672 = vmatprep.subr.mxu0 0.0
    %2673 = vmatpush1.msra.mxu0 %v2642
    %2674 = vmatprep.subr.mxu0 0.0
    %2675 = vmatpush1.msra.mxu0 %v2643
    %2676 = vmatprep.subr.mxu0 0.0
    %2677 = vmatpush1.msra.mxu0 %v2644
    %2678 = vmatprep.subr.mxu0 0.0
    %2679 = vmatpush1.msra.mxu0 %v2645
    %2680 = vmatprep.subr.mxu0 0.0
    %2681 = vmatpush1.msra.mxu0 %v2646
    %2682 = vmatprep.subr.mxu0 0.0
    %2683 = vmatpush1.msra.mxu0 %v2647
    %2684 = vmatprep.subr.mxu0 0.0
    %2685 = vmatpush1.msra.mxu0 %v2648
    %2686 = vmatprep.subr.mxu0 0.0
    %2687 = vmatpush1.msra.mxu0 %v2649
    %2688 = vmatprep.subr.mxu0 0.0
    %2689 = vmatpush1.msra.mxu0 %v2650
    %2690 = vmatprep.subr.mxu0 0.0
    %2691 = vmatpush1.msra.mxu0 0.0
    %2692 = vmatprep.subr.mxu0 0.0
    %2693 = vmatpush1.msra.mxu0 0.0
    %2694 = vmatprep.subr.mxu0 0.0
    %2695 = vmatpush1.msra.mxu0 0.0
    %2696 = vmatprep.subr.mxu0 0.0
    %2697 = vmatpush1.msra.mxu0 0.0
    %2698 = vmatprep.subr.mxu0 0.0
    %2699 = vmatpush1.msra.mxu0 0.0
    %2700 = vmatprep.subr.mxu0 0.0
    %2701 = vmatpush1.msra.mxu0 0.0
    %2702 = vmatprep.subr.mxu0 0.0
    %2703 = vmatpush1.msra.mxu0 0.0
    %2704 = vmatprep.subr.mxu0 0.0
    %2705 = vmatpush1.msra.mxu0 0.0
    %2706 = vmatprep.subr.mxu0 0.0
    %2707 = vmatpush1.msra.mxu0 0.0
    %2708 = vmatprep.subr.mxu0 0.0
    %2709 = vmatpush1.msra.mxu0 0.0
    %2710 = vmatprep.subr.mxu0 0.0
    %2711 = vmatpush1.msra.mxu0 0.0
    %2712 = vmatprep.subr.mxu0 0.0
    %2713 = vmatpush1.msra.mxu0 0.0
    %2714 = vmatprep.subr.mxu0 0.0
    %2715 = vmatpush1.msra.mxu0 0.0
    %2716 = vmatprep.subr.mxu0 0.0
    %2717 = vmatpush1.msra.mxu0 0.0
    %2718 = vmatprep.subr.mxu0 0.0
    %2719 = vmatpush1.msra.mxu0 0.0
    %2720 = vmatprep.subr.mxu0 0.0
    %2721 = vmatpush1.msra.mxu0 0.0
    %2722 = vmatprep.mubr.f32.mxu0 0.0
    %2723 = vmatmul.mubr.f32.gmra.mrb[0].mxu0 %v2633
    %v2724 = vpop.f32.mrb[0].mxu0
    %v2725 = vadd.f32 %v2656, %v2724
    %v2726 = vpop.f32.mrb[0].mxu0
    %2727 = vmatprep.mubr.f32.mxu0 0.0
    %2728 = vmatmul.mubr.f32.gmra.mrb[0].mxu0 %v2634
    %v2729 = vpop.f32.mrb[0].mxu0
    %v2730 = vadd.f32 %v2656, %v2729
    %v2731 = vpop.f32.mrb[0].mxu0
    %2732 = vdwg.mxu0
    %v2733 = vadd.f32 %v2725, %v2523
    %v2734 = vadd.f32 %v2730, %v2524
    %v2735 = vsel %vm238, %v2733, 0.0
    %2736 = vadd.xlane.f32.xlu0 %v2735
    %v2737 = vpop.xlane.xlu0 %2736
    %v2738 = vsel %vm238, %v2734, 0.0
    %2739 = vadd.xlane.f32.xlu0 %v2738
    %v2740 = vpop.xlane.xlu0 %2739
    %v2741 = vmul.f32 %v2737, %v1732
    %v2742 = vmul.f32 %v2740, %v1732
    %v2743 = vsub.f32 %v2733, %v2741
    %v2744 = vsub.f32 %v2734, %v2742
    %v2745 = vmul.f32 %v2743, %v2743
    %v2746 = vmul.f32 %v2744, %v2744
    %v2747 = vsel %vm238, %v2745, 0.0
    %2748 = vadd.xlane.f32.xlu0 %v2747
    %v2749 = vpop.xlane.xlu0 %2748
    %v2750 = vsel %vm238, %v2746, 0.0
    %2751 = vadd.xlane.f32.xlu0 %v2750
    %v2752 = vpop.xlane.xlu0 %2751
    %v2753 = vmul.f32 %v2749, %v1732
    %v2754 = vmul.f32 %v2752, %v1732
    %v2755 = vadd.f32 %v2753, 1e-12
    %v2756 = vadd.f32 %v2754, 1e-12
    %v2757 = vrsqrt.pop %v2755
    %v2758 = vrsqrt.pop %v2756
    %v2759 = vmul.f32 %v2743, %v2757
    %v2760 = vmul.f32 %v2744, %v2758
    %v2761 = vlaneseq
    %v2762 = vshrl.u32 %v2761, 7
    %v2763 = vsub.s32 2, %v2762
    %v2764 = vrot.slane %v225, %v2763
    %v2765 = vmul.f32 %v2759, %v2764
    %v2766 = vmul.f32 %v2760, %v2764
    %v2767 = vlaneseq
    %v2768 = vshrl.u32 %v2767, 7
    %v2769 = vsub.s32 2, %v2768
    %v2770 = vrot.slane %v226, %v2769
    %v2771 = vadd.f32 %v2765, %v2770
    %v2772 = vadd.f32 %v2766, %v2770
    %v2773 = vadd.f32 %v1716, %v223
    %v2774 = vadd.f32 %v1721, %v224
    %v2775 = vsel %vm238, %v2773, 0.0
    %2776 = vadd.xlane.f32.xlu0 %v2775
    %v2777 = vpop.xlane.xlu0 %2776
    %v2778 = vsel %vm238, %v2774, 0.0
    %2779 = vadd.xlane.f32.xlu0 %v2778
    %v2780 = vpop.xlane.xlu0 %2779
    %v2781 = vmul.f32 %v2777, %v1732
    %v2782 = vmul.f32 %v2780, %v1732
    %v2783 = vsub.f32 %v2773, %v2781
    %v2784 = vsub.f32 %v2774, %v2782
    %v2785 = vmul.f32 %v2783, %v2783
    %v2786 = vmul.f32 %v2784, %v2784
    %v2787 = vsel %vm238, %v2785, 0.0
    %2788 = vadd.xlane.f32.xlu0 %v2787
    %v2789 = vpop.xlane.xlu0 %2788
    %v2790 = vsel %vm238, %v2786, 0.0
    %2791 = vadd.xlane.f32.xlu0 %v2790
    %v2792 = vpop.xlane.xlu0 %2791
    %v2793 = vmul.f32 %v2789, %v1732
    %v2794 = vmul.f32 %v2792, %v1732
    %v2795 = vadd.f32 %v2793, 1e-12
    %v2796 = vadd.f32 %v2794, 1e-12
    %v2797 = vrsqrt.pop %v2795
    %v2798 = vrsqrt.pop %v2796
    %v2799 = vmul.f32 %v2783, %v2797
    %v2800 = vmul.f32 %v2784, %v2798
    %v2801 = vlaneseq
    %v2802 = vshrl.u32 %v2801, 7
    %v2803 = vsub.s32 3, %v2802
    %v2804 = vrot.slane %v225, %v2803
    %v2805 = vmul.f32 %v2799, %v2804
    %v2806 = vmul.f32 %v2800, %v2804
    %v2807 = vlaneseq
    %v2808 = vshrl.u32 %v2807, 7
    %v2809 = vsub.s32 3, %v2808
    %v2810 = vrot.slane %v226, %v2809
    %v2811 = vadd.f32 %v2805, %v2810
    %v2812 = vadd.f32 %v2806, %v2810
    %v2813 = vld [vmem:[%s33] sm:$0xff]
    %v2814 = vld [vmem:[%s33 + $0x8] sm:$0xff]
    %v2815 = vld [vmem:[%s33 + $0x10] sm:$0xff]
    %v2816 = vld [vmem:[%s33 + $0x18] sm:$0xff]
    %v2817 = vld [vmem:[%s35] sm:$0x1]
    %v2819 = vlaneseq
    %v2820 = vshrl.u32 %v2819, 7
    %v2821 = vsub.s32 0, %v2820
    %v2822 = vrot.slane %v2817, %v2821
    %v2825 = vsel %vm238, %v2811, 0
    %v2828 = vsel %vm238, %v2812, 0
    %2830 = vmatprep.subr.mxu0 0.0
    %2831 = vmatpush1.msra.mxu0 %v2813
    %2832 = vmatprep.subr.mxu0 0.0
    %2833 = vmatpush1.msra.mxu0 %v2814
    %2834 = vmatprep.subr.mxu0 0.0
    %2835 = vmatpush1.msra.mxu0 %v2815
    %2836 = vmatprep.subr.mxu0 0.0
    %2837 = vmatpush1.msra.mxu0 %v2816
    %2838 = vmatprep.subr.mxu0 0.0
    %2839 = vmatpush1.msra.mxu0 0.0
    %2840 = vmatprep.subr.mxu0 0.0
    %2841 = vmatpush1.msra.mxu0 0.0
    %2842 = vmatprep.subr.mxu0 0.0
    %2843 = vmatpush1.msra.mxu0 0.0
    %2844 = vmatprep.subr.mxu0 0.0
    %2845 = vmatpush1.msra.mxu0 0.0
    %2846 = vmatprep.subr.mxu0 0.0
    %2847 = vmatpush1.msra.mxu0 0.0
    %2848 = vmatprep.subr.mxu0 0.0
    %2849 = vmatpush1.msra.mxu0 0.0
    %2850 = vmatprep.subr.mxu0 0.0
    %2851 = vmatpush1.msra.mxu0 0.0
    %2852 = vmatprep.subr.mxu0 0.0
    %2853 = vmatpush1.msra.mxu0 0.0
    %2854 = vmatprep.subr.mxu0 0.0
    %2855 = vmatpush1.msra.mxu0 0.0
    %2856 = vmatprep.subr.mxu0 0.0
    %2857 = vmatpush1.msra.mxu0 0.0
    %2858 = vmatprep.subr.mxu0 0.0
    %2859 = vmatpush1.msra.mxu0 0.0
    %2860 = vmatprep.subr.mxu0 0.0
    %2861 = vmatpush1.msra.mxu0 0.0
    %2862 = vmatprep.subr.mxu0 0.0
    %2863 = vmatpush1.msra.mxu0 0.0
    %2864 = vmatprep.subr.mxu0 0.0
    %2865 = vmatpush1.msra.mxu0 0.0
    %2866 = vmatprep.subr.mxu0 0.0
    %2867 = vmatpush1.msra.mxu0 0.0
    %2868 = vmatprep.subr.mxu0 0.0
    %2869 = vmatpush1.msra.mxu0 0.0
    %2870 = vmatprep.subr.mxu0 0.0
    %2871 = vmatpush1.msra.mxu0 0.0
    %2872 = vmatprep.subr.mxu0 0.0
    %2873 = vmatpush1.msra.mxu0 0.0
    %2874 = vmatprep.subr.mxu0 0.0
    %2875 = vmatpush1.msra.mxu0 0.0
    %2876 = vmatprep.subr.mxu0 0.0
    %2877 = vmatpush1.msra.mxu0 0.0
    %2878 = vmatprep.subr.mxu0 0.0
    %2879 = vmatpush1.msra.mxu0 0.0
    %2880 = vmatprep.subr.mxu0 0.0
    %2881 = vmatpush1.msra.mxu0 0.0
    %2882 = vmatprep.subr.mxu0 0.0
    %2883 = vmatpush1.msra.mxu0 0.0
    %2884 = vmatprep.subr.mxu0 0.0
    %2885 = vmatpush1.msra.mxu0 0.0
    %2886 = vmatprep.subr.mxu0 0.0
    %2887 = vmatpush1.msra.mxu0 0.0
    %2888 = vmatprep.subr.mxu0 0.0
    %2889 = vmatpush1.msra.mxu0 0.0
    %2890 = vmatprep.subr.mxu0 0.0
    %2891 = vmatpush1.msra.mxu0 0.0
    %2892 = vmatprep.subr.mxu0 0.0
    %2893 = vmatpush1.msra.mxu0 0.0
    %2894 = vmatprep.mubr.f32.mxu0 0.0
    %2895 = vmatmul.mubr.f32.gmra.mrb[0].mxu0 %v2825
    %v2896 = vpop.f32.mrb[0].mxu0
    %v2897 = vadd.f32 %v2822, %v2896
    %v2898 = vpop.f32.mrb[0].mxu0
    %2899 = vmatprep.mubr.f32.mxu0 0.0
    %2900 = vmatmul.mubr.f32.gmra.mrb[0].mxu0 %v2828
    %v2901 = vpop.f32.mrb[0].mxu0
    %v2902 = vadd.f32 %v2822, %v2901
    %v2903 = vpop.f32.mrb[0].mxu0
    %2904 = vdwg.mxu0
    %v2905 = vld [vmem:[%s37] sm:$0xff]
    %v2906 = vld [vmem:[%s37 + $0x8] sm:$0xff]
    %v2907 = vld [vmem:[%s37 + $0x10] sm:$0xff]
    %v2908 = vld [vmem:[%s37 + $0x18] sm:$0xff]
    %v2909 = vld [vmem:[%s39] sm:$0x1]
    %v2910 = vmul.f32 %v2897, %v422
    %v2911 = vmul.f32 %v2897, %v424
    %v2912 = vmul.f32 %v2897, %v426
    %v2913 = vmul.f32 %v2897, %v428
    %v2914 = vmul.f32 %v2897, %v438
    %v2915 = vmul.f32 %v2897, %v440
    %v2916 = vmul.f32 %v2897, %v442
    %v2917 = vmul.f32 %v2897, %v444
    %2922 = vrot.lane.b32.xlu0 %v2910, 96
    %v2923 = vpop.permute.xlu0 %2922
    %2924 = vrot.lane.b32.xlu0 %v2911, 96
    %v2925 = vpop.permute.xlu0 %2924
    %2926 = vrot.lane.b32.xlu0 %v2912, 96
    %v2927 = vpop.permute.xlu0 %2926
    %2928 = vrot.lane.b32.xlu0 %v2913, 96
    %v2929 = vpop.permute.xlu0 %2928
    %v2931 = vsel %vm238, %v2897, 0
    %v2933 = vsel %vm238, %v2923, 0
    %v2935 = vsel %vm238, %v2925, 0
    %v2937 = vsel %vm238, %v2927, 0
    %v2939 = vsel %vm238, %v2929, 0
    %2941 = vmatprep.subr.mxu0 0.0
    %2942 = vmatpush1.xpose.msra.mxu0 %v2933
    %2943 = vmatprep.subr.mxu0 0.0
    %2944 = vmatpush1.xpose.msra.mxu0 %v2935
    %2945 = vmatprep.subr.mxu0 0.0
    %2946 = vmatpush1.xpose.msra.mxu0 %v2937
    %2947 = vmatprep.subr.mxu0 0.0
    %2948 = vmatpush1.xpose.msra.mxu0 %v2939
    %2949 = vmatprep.subr.mxu0 0.0
    %2950 = vmatpush1.xpose.msra.mxu0 0.0
    %2951 = vmatprep.subr.mxu0 0.0
    %2952 = vmatpush1.xpose.msra.mxu0 0.0
    %2953 = vmatprep.subr.mxu0 0.0
    %2954 = vmatpush1.xpose.msra.mxu0 0.0
    %2955 = vmatprep.subr.mxu0 0.0
    %2956 = vmatpush1.xpose.msra.mxu0 0.0
    %2957 = vmatprep.subr.mxu0 0.0
    %2958 = vmatpush1.xpose.msra.mxu0 0.0
    %2959 = vmatprep.subr.mxu0 0.0
    %2960 = vmatpush1.xpose.msra.mxu0 0.0
    %2961 = vmatprep.subr.mxu0 0.0
    %2962 = vmatpush1.xpose.msra.mxu0 0.0
    %2963 = vmatprep.subr.mxu0 0.0
    %2964 = vmatpush1.xpose.msra.mxu0 0.0
    %2965 = vmatprep.subr.mxu0 0.0
    %2966 = vmatpush1.xpose.msra.mxu0 0.0
    %2967 = vmatprep.subr.mxu0 0.0
    %2968 = vmatpush1.xpose.msra.mxu0 0.0
    %2969 = vmatprep.subr.mxu0 0.0
    %2970 = vmatpush1.xpose.msra.mxu0 0.0
    %2971 = vmatprep.subr.mxu0 0.0
    %2972 = vmatpush1.xpose.msra.mxu0 0.0
    %2973 = vmatprep.subr.mxu0 0.0
    %2974 = vmatpush1.xpose.msra.mxu0 0.0
    %2975 = vmatprep.subr.mxu0 0.0
    %2976 = vmatpush1.xpose.msra.mxu0 0.0
    %2977 = vmatprep.subr.mxu0 0.0
    %2978 = vmatpush1.xpose.msra.mxu0 0.0
    %2979 = vmatprep.subr.mxu0 0.0
    %2980 = vmatpush1.xpose.msra.mxu0 0.0
    %2981 = vmatprep.subr.mxu0 0.0
    %2982 = vmatpush1.xpose.msra.mxu0 0.0
    %2983 = vmatprep.subr.mxu0 0.0
    %2984 = vmatpush1.xpose.msra.mxu0 0.0
    %2985 = vmatprep.subr.mxu0 0.0
    %2986 = vmatpush1.xpose.msra.mxu0 0.0
    %2987 = vmatprep.subr.mxu0 0.0
    %2988 = vmatpush1.xpose.msra.mxu0 0.0
    %2989 = vmatprep.subr.mxu0 0.0
    %2990 = vmatpush1.xpose.msra.mxu0 0.0
    %2991 = vmatprep.subr.mxu0 0.0
    %2992 = vmatpush1.xpose.msra.mxu0 0.0
    %2993 = vmatprep.subr.mxu0 0.0
    %2994 = vmatpush1.xpose.msra.mxu0 0.0
    %2995 = vmatprep.subr.mxu0 0.0
    %2996 = vmatpush1.xpose.msra.mxu0 0.0
    %2997 = vmatprep.subr.mxu0 0.0
    %2998 = vmatpush1.xpose.msra.mxu0 0.0
    %2999 = vmatprep.subr.mxu0 0.0
    %3000 = vmatpush1.xpose.msra.mxu0 0.0
    %3001 = vmatprep.subr.mxu0 0.0
    %3002 = vmatpush1.xpose.msra.mxu0 0.0
    %3003 = vmatprep.subr.mxu0 0.0
    %3004 = vmatpush1.xpose.msra.mxu0 0.0
    %3005 = vmatprep.mubr.f32.mxu0 0.0
    %3006 = vmatmul.mubr.f32.gmra.mrb[0].mxu0 %v2931
    %v3007 = vpop.f32.mrb[0].mxu0
    %v3008 = vadd.f32 0.0, %v3007
    %v3009 = vpop.f32.mrb[0].mxu0
    %3010 = vdwg.mxu0
    %v3011 = vsel %vm238, %v3008, -inf
    %3012 = vmax.xlane.f32.xlu0 %v3011
    %v3013 = vpop.xlane.xlu0 %3012
    %v3014 = vsub.f32 %v3008, %v3013
    %v3015 = vmul.f32 %v3014, 1.442695
    %v3016 = vpow.pop %v3015
    %3021 = vrot.lane.b32.xlu0 %v2914, 64
    %v3022 = vpop.permute.xlu0 %3021
    %3023 = vrot.lane.b32.xlu0 %v2915, 64
    %v3024 = vpop.permute.xlu0 %3023
    %3025 = vrot.lane.b32.xlu0 %v2916, 64
    %v3026 = vpop.permute.xlu0 %3025
    %3027 = vrot.lane.b32.xlu0 %v2917, 64
    %v3028 = vpop.permute.xlu0 %3027
    %v3034 = vsel %vm238, %v3016, 0
    %3036 = vmatprep.subr.mxu0 0.0
    %3037 = vmatpush1.msra.mxu0 %v3022
    %3038 = vmatprep.subr.mxu0 0.0
    %3039 = vmatpush1.msra.mxu0 %v3024
    %3040 = vmatprep.subr.mxu0 0.0
    %3041 = vmatpush1.msra.mxu0 %v3026
    %3042 = vmatprep.subr.mxu0 0.0
    %3043 = vmatpush1.msra.mxu0 %v3028
    %3044 = vmatprep.subr.mxu0 0.0
    %3045 = vmatpush1.msra.mxu0 0.0
    %3046 = vmatprep.subr.mxu0 0.0
    %3047 = vmatpush1.msra.mxu0 0.0
    %3048 = vmatprep.subr.mxu0 0.0
    %3049 = vmatpush1.msra.mxu0 0.0
    %3050 = vmatprep.subr.mxu0 0.0
    %3051 = vmatpush1.msra.mxu0 0.0
    %3052 = vmatprep.subr.mxu0 0.0
    %3053 = vmatpush1.msra.mxu0 0.0
    %3054 = vmatprep.subr.mxu0 0.0
    %3055 = vmatpush1.msra.mxu0 0.0
    %3056 = vmatprep.subr.mxu0 0.0
    %3057 = vmatpush1.msra.mxu0 0.0
    %3058 = vmatprep.subr.mxu0 0.0
    %3059 = vmatpush1.msra.mxu0 0.0
    %3060 = vmatprep.subr.mxu0 0.0
    %3061 = vmatpush1.msra.mxu0 0.0
    %3062 = vmatprep.subr.mxu0 0.0
    %3063 = vmatpush1.msra.mxu0 0.0
    %3064 = vmatprep.subr.mxu0 0.0
    %3065 = vmatpush1.msra.mxu0 0.0
    %3066 = vmatprep.subr.mxu0 0.0
    %3067 = vmatpush1.msra.mxu0 0.0
    %3068 = vmatprep.subr.mxu0 0.0
    %3069 = vmatpush1.msra.mxu0 0.0
    %3070 = vmatprep.subr.mxu0 0.0
    %3071 = vmatpush1.msra.mxu0 0.0
    %3072 = vmatprep.subr.mxu0 0.0
    %3073 = vmatpush1.msra.mxu0 0.0
    %3074 = vmatprep.subr.mxu0 0.0
    %3075 = vmatpush1.msra.mxu0 0.0
    %3076 = vmatprep.subr.mxu0 0.0
    %3077 = vmatpush1.msra.mxu0 0.0
    %3078 = vmatprep.subr.mxu0 0.0
    %3079 = vmatpush1.msra.mxu0 0.0
    %3080 = vmatprep.subr.mxu0 0.0
    %3081 = vmatpush1.msra.mxu0 0.0
    %3082 = vmatprep.subr.mxu0 0.0
    %3083 = vmatpush1.msra.mxu0 0.0
    %3084 = vmatprep.subr.mxu0 0.0
    %3085 = vmatpush1.msra.mxu0 0.0
    %3086 = vmatprep.subr.mxu0 0.0
    %3087 = vmatpush1.msra.mxu0 0.0
    %3088 = vmatprep.subr.mxu0 0.0
    %3089 = vmatpush1.msra.mxu0 0.0
    %3090 = vmatprep.subr.mxu0 0.0
    %3091 = vmatpush1.msra.mxu0 0.0
    %3092 = vmatprep.subr.mxu0 0.0
    %3093 = vmatpush1.msra.mxu0 0.0
    %3094 = vmatprep.subr.mxu0 0.0
    %3095 = vmatpush1.msra.mxu0 0.0
    %3096 = vmatprep.subr.mxu0 0.0
    %3097 = vmatpush1.msra.mxu0 0.0
    %3098 = vmatprep.subr.mxu0 0.0
    %3099 = vmatpush1.msra.mxu0 0.0
    %3100 = vmatprep.mubr.f32.mxu0 0.0
    %3101 = vmatmul.mubr.f32.gmra.mrb[0].mxu0 %v3034
    %v3102 = vpop.f32.mrb[0].mxu0
    %v3103 = vadd.f32 0.0, %v3102
    %v3104 = vpop.f32.mrb[0].mxu0
    %3105 = vdwg.mxu0
    %3106 = vmatprep.subr.mxu0 0.0
    %3107 = vmatpush1.msra.mxu0 %v217
    %3108 = vmatprep.subr.mxu0 0.0
    %3109 = vmatpush1.msra.mxu0 %v218
    %3110 = vmatprep.subr.mxu0 0.0
    %3111 = vmatpush1.msra.mxu0 %v219
    %3112 = vmatprep.subr.mxu0 0.0
    %3113 = vmatpush1.msra.mxu0 %v220
    %3114 = vmatprep.subr.mxu0 0.0
    %3115 = vmatpush1.msra.mxu0 0.0
    %3116 = vmatprep.subr.mxu0 0.0
    %3117 = vmatpush1.msra.mxu0 0.0
    %3118 = vmatprep.subr.mxu0 0.0
    %3119 = vmatpush1.msra.mxu0 0.0
    %3120 = vmatprep.subr.mxu0 0.0
    %3121 = vmatpush1.msra.mxu0 0.0
    %3122 = vmatprep.subr.mxu0 0.0
    %3123 = vmatpush1.msra.mxu0 0.0
    %3124 = vmatprep.subr.mxu0 0.0
    %3125 = vmatpush1.msra.mxu0 0.0
    %3126 = vmatprep.subr.mxu0 0.0
    %3127 = vmatpush1.msra.mxu0 0.0
    %3128 = vmatprep.subr.mxu0 0.0
    %3129 = vmatpush1.msra.mxu0 0.0
    %3130 = vmatprep.subr.mxu0 0.0
    %3131 = vmatpush1.msra.mxu0 0.0
    %3132 = vmatprep.subr.mxu0 0.0
    %3133 = vmatpush1.msra.mxu0 0.0
    %3134 = vmatprep.subr.mxu0 0.0
    %3135 = vmatpush1.msra.mxu0 0.0
    %3136 = vmatprep.subr.mxu0 0.0
    %3137 = vmatpush1.msra.mxu0 0.0
    %3138 = vmatprep.subr.mxu0 0.0
    %3139 = vmatpush1.msra.mxu0 0.0
    %3140 = vmatprep.subr.mxu0 0.0
    %3141 = vmatpush1.msra.mxu0 0.0
    %3142 = vmatprep.subr.mxu0 0.0
    %3143 = vmatpush1.msra.mxu0 0.0
    %3144 = vmatprep.subr.mxu0 0.0
    %3145 = vmatpush1.msra.mxu0 0.0
    %3146 = vmatprep.subr.mxu0 0.0
    %3147 = vmatpush1.msra.mxu0 0.0
    %3148 = vmatprep.subr.mxu0 0.0
    %3149 = vmatpush1.msra.mxu0 0.0
    %3150 = vmatprep.subr.mxu0 0.0
    %3151 = vmatpush1.msra.mxu0 0.0
    %3152 = vmatprep.subr.mxu0 0.0
    %3153 = vmatpush1.msra.mxu0 0.0
    %3154 = vmatprep.subr.mxu0 0.0
    %3155 = vmatpush1.msra.mxu0 0.0
    %3156 = vmatprep.subr.mxu0 0.0
    %3157 = vmatpush1.msra.mxu0 0.0
    %3158 = vmatprep.subr.mxu0 0.0
    %3159 = vmatpush1.msra.mxu0 0.0
    %3160 = vmatprep.subr.mxu0 0.0
    %3161 = vmatpush1.msra.mxu0 0.0
    %3162 = vmatprep.subr.mxu0 0.0
    %3163 = vmatpush1.msra.mxu0 0.0
    %3164 = vmatprep.subr.mxu0 0.0
    %3165 = vmatpush1.msra.mxu0 0.0
    %3166 = vmatprep.subr.mxu0 0.0
    %3167 = vmatpush1.msra.mxu0 0.0
    %3168 = vmatprep.subr.mxu0 0.0
    %3169 = vmatpush1.msra.mxu0 0.0
    %3170 = vmatprep.mubr.f32.mxu0 0.0
    %3171 = vmatmul.mubr.f32.gmra.mrb[0].mxu0 %v3034
    %v3172 = vpop.f32.mrb[0].mxu0
    %v3173 = vadd.f32 0.0, %v3172
    %v3174 = vpop.f32.mrb[0].mxu0
    %3175 = vdwg.mxu0
    %v3176 = vrcp.pop %v3173
    %v3177 = vmul.f32 %v3103, %v3176
    %v3178 = vmul.f32 %v2902, %v422
    %v3179 = vmul.f32 %v2902, %v424
    %v3180 = vmul.f32 %v2902, %v426
    %v3181 = vmul.f32 %v2902, %v428
    %v3182 = vmul.f32 %v2902, %v438
    %v3183 = vmul.f32 %v2902, %v440
    %v3184 = vmul.f32 %v2902, %v442
    %v3185 = vmul.f32 %v2902, %v444
    %3190 = vrot.lane.b32.xlu0 %v3178, 96
    %v3191 = vpop.permute.xlu0 %3190
    %3192 = vrot.lane.b32.xlu0 %v3179, 96
    %v3193 = vpop.permute.xlu0 %3192
    %3194 = vrot.lane.b32.xlu0 %v3180, 96
    %v3195 = vpop.permute.xlu0 %3194
    %3196 = vrot.lane.b32.xlu0 %v3181, 96
    %v3197 = vpop.permute.xlu0 %3196
    %v3199 = vsel %vm238, %v2902, 0
    %v3201 = vsel %vm238, %v3191, 0
    %v3203 = vsel %vm238, %v3193, 0
    %v3205 = vsel %vm238, %v3195, 0
    %v3207 = vsel %vm238, %v3197, 0
    %3209 = vmatprep.subr.mxu0 0.0
    %3210 = vmatpush1.xpose.msra.mxu0 %v3201
    %3211 = vmatprep.subr.mxu0 0.0
    %3212 = vmatpush1.xpose.msra.mxu0 %v3203
    %3213 = vmatprep.subr.mxu0 0.0
    %3214 = vmatpush1.xpose.msra.mxu0 %v3205
    %3215 = vmatprep.subr.mxu0 0.0
    %3216 = vmatpush1.xpose.msra.mxu0 %v3207
    %3217 = vmatprep.subr.mxu0 0.0
    %3218 = vmatpush1.xpose.msra.mxu0 0.0
    %3219 = vmatprep.subr.mxu0 0.0
    %3220 = vmatpush1.xpose.msra.mxu0 0.0
    %3221 = vmatprep.subr.mxu0 0.0
    %3222 = vmatpush1.xpose.msra.mxu0 0.0
    %3223 = vmatprep.subr.mxu0 0.0
    %3224 = vmatpush1.xpose.msra.mxu0 0.0
    %3225 = vmatprep.subr.mxu0 0.0
    %3226 = vmatpush1.xpose.msra.mxu0 0.0
    %3227 = vmatprep.subr.mxu0 0.0
    %3228 = vmatpush1.xpose.msra.mxu0 0.0
    %3229 = vmatprep.subr.mxu0 0.0
    %3230 = vmatpush1.xpose.msra.mxu0 0.0
    %3231 = vmatprep.subr.mxu0 0.0
    %3232 = vmatpush1.xpose.msra.mxu0 0.0
    %3233 = vmatprep.subr.mxu0 0.0
    %3234 = vmatpush1.xpose.msra.mxu0 0.0
    %3235 = vmatprep.subr.mxu0 0.0
    %3236 = vmatpush1.xpose.msra.mxu0 0.0
    %3237 = vmatprep.subr.mxu0 0.0
    %3238 = vmatpush1.xpose.msra.mxu0 0.0
    %3239 = vmatprep.subr.mxu0 0.0
    %3240 = vmatpush1.xpose.msra.mxu0 0.0
    %3241 = vmatprep.subr.mxu0 0.0
    %3242 = vmatpush1.xpose.msra.mxu0 0.0
    %3243 = vmatprep.subr.mxu0 0.0
    %3244 = vmatpush1.xpose.msra.mxu0 0.0
    %3245 = vmatprep.subr.mxu0 0.0
    %3246 = vmatpush1.xpose.msra.mxu0 0.0
    %3247 = vmatprep.subr.mxu0 0.0
    %3248 = vmatpush1.xpose.msra.mxu0 0.0
    %3249 = vmatprep.subr.mxu0 0.0
    %3250 = vmatpush1.xpose.msra.mxu0 0.0
    %3251 = vmatprep.subr.mxu0 0.0
    %3252 = vmatpush1.xpose.msra.mxu0 0.0
    %3253 = vmatprep.subr.mxu0 0.0
    %3254 = vmatpush1.xpose.msra.mxu0 0.0
    %3255 = vmatprep.subr.mxu0 0.0
    %3256 = vmatpush1.xpose.msra.mxu0 0.0
    %3257 = vmatprep.subr.mxu0 0.0
    %3258 = vmatpush1.xpose.msra.mxu0 0.0
    %3259 = vmatprep.subr.mxu0 0.0
    %3260 = vmatpush1.xpose.msra.mxu0 0.0
    %3261 = vmatprep.subr.mxu0 0.0
    %3262 = vmatpush1.xpose.msra.mxu0 0.0
    %3263 = vmatprep.subr.mxu0 0.0
    %3264 = vmatpush1.xpose.msra.mxu0 0.0
    %3265 = vmatprep.subr.mxu0 0.0
    %3266 = vmatpush1.xpose.msra.mxu0 0.0
    %3267 = vmatprep.subr.mxu0 0.0
    %3268 = vmatpush1.xpose.msra.mxu0 0.0
    %3269 = vmatprep.subr.mxu0 0.0
    %3270 = vmatpush1.xpose.msra.mxu0 0.0
    %3271 = vmatprep.subr.mxu0 0.0
    %3272 = vmatpush1.xpose.msra.mxu0 0.0
    %3273 = vmatprep.mubr.f32.mxu0 0.0
    %3274 = vmatmul.mubr.f32.gmra.mrb[0].mxu0 %v3199
    %v3275 = vpop.f32.mrb[0].mxu0
    %v3276 = vadd.f32 0.0, %v3275
    %v3277 = vpop.f32.mrb[0].mxu0
    %3278 = vdwg.mxu0
    %v3279 = vsel %vm238, %v3276, -inf
    %3280 = vmax.xlane.f32.xlu0 %v3279
    %v3281 = vpop.xlane.xlu0 %3280
    %v3282 = vsub.f32 %v3276, %v3281
    %v3283 = vmul.f32 %v3282, 1.442695
    %v3284 = vpow.pop %v3283
    %3289 = vrot.lane.b32.xlu0 %v3182, 64
    %v3290 = vpop.permute.xlu0 %3289
    %3291 = vrot.lane.b32.xlu0 %v3183, 64
    %v3292 = vpop.permute.xlu0 %3291
    %3293 = vrot.lane.b32.xlu0 %v3184, 64
    %v3294 = vpop.permute.xlu0 %3293
    %3295 = vrot.lane.b32.xlu0 %v3185, 64
    %v3296 = vpop.permute.xlu0 %3295
    %v3302 = vsel %vm238, %v3284, 0
    %3304 = vmatprep.subr.mxu0 0.0
    %3305 = vmatpush1.msra.mxu0 %v3290
    %3306 = vmatprep.subr.mxu0 0.0
    %3307 = vmatpush1.msra.mxu0 %v3292
    %3308 = vmatprep.subr.mxu0 0.0
    %3309 = vmatpush1.msra.mxu0 %v3294
    %3310 = vmatprep.subr.mxu0 0.0
    %3311 = vmatpush1.msra.mxu0 %v3296
    %3312 = vmatprep.subr.mxu0 0.0
    %3313 = vmatpush1.msra.mxu0 0.0
    %3314 = vmatprep.subr.mxu0 0.0
    %3315 = vmatpush1.msra.mxu0 0.0
    %3316 = vmatprep.subr.mxu0 0.0
    %3317 = vmatpush1.msra.mxu0 0.0
    %3318 = vmatprep.subr.mxu0 0.0
    %3319 = vmatpush1.msra.mxu0 0.0
    %3320 = vmatprep.subr.mxu0 0.0
    %3321 = vmatpush1.msra.mxu0 0.0
    %3322 = vmatprep.subr.mxu0 0.0
    %3323 = vmatpush1.msra.mxu0 0.0
    %3324 = vmatprep.subr.mxu0 0.0
    %3325 = vmatpush1.msra.mxu0 0.0
    %3326 = vmatprep.subr.mxu0 0.0
    %3327 = vmatpush1.msra.mxu0 0.0
    %3328 = vmatprep.subr.mxu0 0.0
    %3329 = vmatpush1.msra.mxu0 0.0
    %3330 = vmatprep.subr.mxu0 0.0
    %3331 = vmatpush1.msra.mxu0 0.0
    %3332 = vmatprep.subr.mxu0 0.0
    %3333 = vmatpush1.msra.mxu0 0.0
    %3334 = vmatprep.subr.mxu0 0.0
    %3335 = vmatpush1.msra.mxu0 0.0
    %3336 = vmatprep.subr.mxu0 0.0
    %3337 = vmatpush1.msra.mxu0 0.0
    %3338 = vmatprep.subr.mxu0 0.0
    %3339 = vmatpush1.msra.mxu0 0.0
    %3340 = vmatprep.subr.mxu0 0.0
    %3341 = vmatpush1.msra.mxu0 0.0
    %3342 = vmatprep.subr.mxu0 0.0
    %3343 = vmatpush1.msra.mxu0 0.0
    %3344 = vmatprep.subr.mxu0 0.0
    %3345 = vmatpush1.msra.mxu0 0.0
    %3346 = vmatprep.subr.mxu0 0.0
    %3347 = vmatpush1.msra.mxu0 0.0
    %3348 = vmatprep.subr.mxu0 0.0
    %3349 = vmatpush1.msra.mxu0 0.0
    %3350 = vmatprep.subr.mxu0 0.0
    %3351 = vmatpush1.msra.mxu0 0.0
    %3352 = vmatprep.subr.mxu0 0.0
    %3353 = vmatpush1.msra.mxu0 0.0
    %3354 = vmatprep.subr.mxu0 0.0
    %3355 = vmatpush1.msra.mxu0 0.0
    %3356 = vmatprep.subr.mxu0 0.0
    %3357 = vmatpush1.msra.mxu0 0.0
    %3358 = vmatprep.subr.mxu0 0.0
    %3359 = vmatpush1.msra.mxu0 0.0
    %3360 = vmatprep.subr.mxu0 0.0
    %3361 = vmatpush1.msra.mxu0 0.0
    %3362 = vmatprep.subr.mxu0 0.0
    %3363 = vmatpush1.msra.mxu0 0.0
    %3364 = vmatprep.subr.mxu0 0.0
    %3365 = vmatpush1.msra.mxu0 0.0
    %3366 = vmatprep.subr.mxu0 0.0
    %3367 = vmatpush1.msra.mxu0 0.0
    %3368 = vmatprep.mubr.f32.mxu0 0.0
    %3369 = vmatmul.mubr.f32.gmra.mrb[0].mxu0 %v3302
    %v3370 = vpop.f32.mrb[0].mxu0
    %v3371 = vadd.f32 0.0, %v3370
    %v3372 = vpop.f32.mrb[0].mxu0
    %3373 = vdwg.mxu0
    %3374 = vmatprep.subr.mxu0 0.0
    %3375 = vmatpush1.msra.mxu0 %v217
    %3376 = vmatprep.subr.mxu0 0.0
    %3377 = vmatpush1.msra.mxu0 %v218
    %3378 = vmatprep.subr.mxu0 0.0
    %3379 = vmatpush1.msra.mxu0 %v219
    %3380 = vmatprep.subr.mxu0 0.0
    %3381 = vmatpush1.msra.mxu0 %v220
    %3382 = vmatprep.subr.mxu0 0.0
    %3383 = vmatpush1.msra.mxu0 0.0
    %3384 = vmatprep.subr.mxu0 0.0
    %3385 = vmatpush1.msra.mxu0 0.0
    %3386 = vmatprep.subr.mxu0 0.0
    %3387 = vmatpush1.msra.mxu0 0.0
    %3388 = vmatprep.subr.mxu0 0.0
    %3389 = vmatpush1.msra.mxu0 0.0
    %3390 = vmatprep.subr.mxu0 0.0
    %3391 = vmatpush1.msra.mxu0 0.0
    %3392 = vmatprep.subr.mxu0 0.0
    %3393 = vmatpush1.msra.mxu0 0.0
    %3394 = vmatprep.subr.mxu0 0.0
    %3395 = vmatpush1.msra.mxu0 0.0
    %3396 = vmatprep.subr.mxu0 0.0
    %3397 = vmatpush1.msra.mxu0 0.0
    %3398 = vmatprep.subr.mxu0 0.0
    %3399 = vmatpush1.msra.mxu0 0.0
    %3400 = vmatprep.subr.mxu0 0.0
    %3401 = vmatpush1.msra.mxu0 0.0
    %3402 = vmatprep.subr.mxu0 0.0
    %3403 = vmatpush1.msra.mxu0 0.0
    %3404 = vmatprep.subr.mxu0 0.0
    %3405 = vmatpush1.msra.mxu0 0.0
    %3406 = vmatprep.subr.mxu0 0.0
    %3407 = vmatpush1.msra.mxu0 0.0
    %3408 = vmatprep.subr.mxu0 0.0
    %3409 = vmatpush1.msra.mxu0 0.0
    %3410 = vmatprep.subr.mxu0 0.0
    %3411 = vmatpush1.msra.mxu0 0.0
    %3412 = vmatprep.subr.mxu0 0.0
    %3413 = vmatpush1.msra.mxu0 0.0
    %3414 = vmatprep.subr.mxu0 0.0
    %3415 = vmatpush1.msra.mxu0 0.0
    %3416 = vmatprep.subr.mxu0 0.0
    %3417 = vmatpush1.msra.mxu0 0.0
    %3418 = vmatprep.subr.mxu0 0.0
    %3419 = vmatpush1.msra.mxu0 0.0
    %3420 = vmatprep.subr.mxu0 0.0
    %3421 = vmatpush1.msra.mxu0 0.0
    %3422 = vmatprep.subr.mxu0 0.0
    %3423 = vmatpush1.msra.mxu0 0.0
    %3424 = vmatprep.subr.mxu0 0.0
    %3425 = vmatpush1.msra.mxu0 0.0
    %3426 = vmatprep.subr.mxu0 0.0
    %3427 = vmatpush1.msra.mxu0 0.0
    %3428 = vmatprep.subr.mxu0 0.0
    %3429 = vmatpush1.msra.mxu0 0.0
    %3430 = vmatprep.subr.mxu0 0.0
    %3431 = vmatpush1.msra.mxu0 0.0
    %3432 = vmatprep.subr.mxu0 0.0
    %3433 = vmatpush1.msra.mxu0 0.0
    %3434 = vmatprep.subr.mxu0 0.0
    %3435 = vmatpush1.msra.mxu0 0.0
    %3436 = vmatprep.subr.mxu0 0.0
    %3437 = vmatpush1.msra.mxu0 0.0
    %3438 = vmatprep.mubr.f32.mxu0 0.0
    %3439 = vmatmul.mubr.f32.gmra.mrb[0].mxu0 %v3302
    %v3440 = vpop.f32.mrb[0].mxu0
    %v3441 = vadd.f32 0.0, %v3440
    %v3442 = vpop.f32.mrb[0].mxu0
    %3443 = vdwg.mxu0
    %v3444 = vrcp.pop %v3441
    %v3445 = vmul.f32 %v3371, %v3444
    %v3447 = vlaneseq
    %v3448 = vshrl.u32 %v3447, 7
    %v3449 = vsub.s32 0, %v3448
    %v3450 = vrot.slane %v2909, %v3449
    %v3453 = vsel %vm238, %v3177, 0
    %v3456 = vsel %vm238, %v3445, 0
    %3458 = vmatprep.subr.mxu0 0.0
    %3459 = vmatpush1.msra.mxu0 %v2905
    %3460 = vmatprep.subr.mxu0 0.0
    %3461 = vmatpush1.msra.mxu0 %v2906
    %3462 = vmatprep.subr.mxu0 0.0
    %3463 = vmatpush1.msra.mxu0 %v2907
    %3464 = vmatprep.subr.mxu0 0.0
    %3465 = vmatpush1.msra.mxu0 %v2908
    %3466 = vmatprep.subr.mxu0 0.0
    %3467 = vmatpush1.msra.mxu0 0.0
    %3468 = vmatprep.subr.mxu0 0.0
    %3469 = vmatpush1.msra.mxu0 0.0
    %3470 = vmatprep.subr.mxu0 0.0
    %3471 = vmatpush1.msra.mxu0 0.0
    %3472 = vmatprep.subr.mxu0 0.0
    %3473 = vmatpush1.msra.mxu0 0.0
    %3474 = vmatprep.subr.mxu0 0.0
    %3475 = vmatpush1.msra.mxu0 0.0
    %3476 = vmatprep.subr.mxu0 0.0
    %3477 = vmatpush1.msra.mxu0 0.0
    %3478 = vmatprep.subr.mxu0 0.0
    %3479 = vmatpush1.msra.mxu0 0.0
    %3480 = vmatprep.subr.mxu0 0.0
    %3481 = vmatpush1.msra.mxu0 0.0
    %3482 = vmatprep.subr.mxu0 0.0
    %3483 = vmatpush1.msra.mxu0 0.0
    %3484 = vmatprep.subr.mxu0 0.0
    %3485 = vmatpush1.msra.mxu0 0.0
    %3486 = vmatprep.subr.mxu0 0.0
    %3487 = vmatpush1.msra.mxu0 0.0
    %3488 = vmatprep.subr.mxu0 0.0
    %3489 = vmatpush1.msra.mxu0 0.0
    %3490 = vmatprep.subr.mxu0 0.0
    %3491 = vmatpush1.msra.mxu0 0.0
    %3492 = vmatprep.subr.mxu0 0.0
    %3493 = vmatpush1.msra.mxu0 0.0
    %3494 = vmatprep.subr.mxu0 0.0
    %3495 = vmatpush1.msra.mxu0 0.0
    %3496 = vmatprep.subr.mxu0 0.0
    %3497 = vmatpush1.msra.mxu0 0.0
    %3498 = vmatprep.subr.mxu0 0.0
    %3499 = vmatpush1.msra.mxu0 0.0
    %3500 = vmatprep.subr.mxu0 0.0
    %3501 = vmatpush1.msra.mxu0 0.0
    %3502 = vmatprep.subr.mxu0 0.0
    %3503 = vmatpush1.msra.mxu0 0.0
    %3504 = vmatprep.subr.mxu0 0.0
    %3505 = vmatpush1.msra.mxu0 0.0
    %3506 = vmatprep.subr.mxu0 0.0
    %3507 = vmatpush1.msra.mxu0 0.0
    %3508 = vmatprep.subr.mxu0 0.0
    %3509 = vmatpush1.msra.mxu0 0.0
    %3510 = vmatprep.subr.mxu0 0.0
    %3511 = vmatpush1.msra.mxu0 0.0
    %3512 = vmatprep.subr.mxu0 0.0
    %3513 = vmatpush1.msra.mxu0 0.0
    %3514 = vmatprep.subr.mxu0 0.0
    %3515 = vmatpush1.msra.mxu0 0.0
    %3516 = vmatprep.subr.mxu0 0.0
    %3517 = vmatpush1.msra.mxu0 0.0
    %3518 = vmatprep.subr.mxu0 0.0
    %3519 = vmatpush1.msra.mxu0 0.0
    %3520 = vmatprep.subr.mxu0 0.0
    %3521 = vmatpush1.msra.mxu0 0.0
    %3522 = vmatprep.mubr.f32.mxu0 0.0
    %3523 = vmatmul.mubr.f32.gmra.mrb[0].mxu0 %v3453
    %v3524 = vpop.f32.mrb[0].mxu0
    %v3525 = vadd.f32 %v3450, %v3524
    %v3526 = vpop.f32.mrb[0].mxu0
    %3527 = vmatprep.mubr.f32.mxu0 0.0
    %3528 = vmatmul.mubr.f32.gmra.mrb[0].mxu0 %v3456
    %v3529 = vpop.f32.mrb[0].mxu0
    %v3530 = vadd.f32 %v3450, %v3529
    %v3531 = vpop.f32.mrb[0].mxu0
    %3532 = vdwg.mxu0
    %v3533 = vadd.f32 %v3525, %v2811
    %v3534 = vadd.f32 %v3530, %v2812
    %v3535 = vsel %vm238, %v3533, 0.0
    %3536 = vadd.xlane.f32.xlu0 %v3535
    %v3537 = vpop.xlane.xlu0 %3536
    %v3538 = vsel %vm238, %v3534, 0.0
    %3539 = vadd.xlane.f32.xlu0 %v3538
    %v3540 = vpop.xlane.xlu0 %3539
    %v3541 = vmul.f32 %v3537, %v1732
    %v3542 = vmul.f32 %v3540, %v1732
    %v3543 = vsub.f32 %v3533, %v3541
    %v3544 = vsub.f32 %v3534, %v3542
    %v3545 = vmul.f32 %v3543, %v3543
    %v3546 = vmul.f32 %v3544, %v3544
    %v3547 = vsel %vm238, %v3545, 0.0
    %3548 = vadd.xlane.f32.xlu0 %v3547
    %v3549 = vpop.xlane.xlu0 %3548
    %v3550 = vsel %vm238, %v3546, 0.0
    %3551 = vadd.xlane.f32.xlu0 %v3550
    %v3552 = vpop.xlane.xlu0 %3551
    %v3553 = vmul.f32 %v3549, %v1732
    %v3554 = vmul.f32 %v3552, %v1732
    %v3555 = vadd.f32 %v3553, 1e-12
    %v3556 = vadd.f32 %v3554, 1e-12
    %v3557 = vrsqrt.pop %v3555
    %v3558 = vrsqrt.pop %v3556
    %v3559 = vmul.f32 %v3543, %v3557
    %v3560 = vmul.f32 %v3544, %v3558
    %v3561 = vlaneseq
    %v3562 = vshrl.u32 %v3561, 7
    %v3563 = vsub.s32 4, %v3562
    %v3564 = vrot.slane %v225, %v3563
    %v3565 = vmul.f32 %v3559, %v3564
    %v3566 = vmul.f32 %v3560, %v3564
    %v3567 = vlaneseq
    %v3568 = vshrl.u32 %v3567, 7
    %v3569 = vsub.s32 4, %v3568
    %v3570 = vrot.slane %v226, %v3569
    %v3571 = vadd.f32 %v3565, %v3570
    %v3572 = vadd.f32 %v3566, %v3570
    %v3573 = vld [vmem:[%s49] sm:$0xff]
    %v3574 = vld [vmem:[%s49 + $0x8] sm:$0xff]
    %v3575 = vld [vmem:[%s49 + $0x10] sm:$0xff]
    %v3576 = vld [vmem:[%s49 + $0x18] sm:$0xff]
    %v3577 = vld [vmem:[%s51] sm:$0x1]
    %v3579 = vlaneseq
    %v3580 = vshrl.u32 %v3579, 7
    %v3581 = vsub.s32 0, %v3580
    %v3582 = vrot.slane %v3577, %v3581
    %v3585 = vsel %vm238, %v3571, 0
    %v3588 = vsel %vm238, %v3572, 0
    %3590 = vmatprep.subr.mxu0 0.0
    %3591 = vmatpush1.msra.mxu0 %v3573
    %3592 = vmatprep.subr.mxu0 0.0
    %3593 = vmatpush1.msra.mxu0 %v3574
    %3594 = vmatprep.subr.mxu0 0.0
    %3595 = vmatpush1.msra.mxu0 %v3575
    %3596 = vmatprep.subr.mxu0 0.0
    %3597 = vmatpush1.msra.mxu0 %v3576
    %3598 = vmatprep.subr.mxu0 0.0
    %3599 = vmatpush1.msra.mxu0 0.0
    %3600 = vmatprep.subr.mxu0 0.0
    %3601 = vmatpush1.msra.mxu0 0.0
    %3602 = vmatprep.subr.mxu0 0.0
    %3603 = vmatpush1.msra.mxu0 0.0
    %3604 = vmatprep.subr.mxu0 0.0
    %3605 = vmatpush1.msra.mxu0 0.0
    %3606 = vmatprep.subr.mxu0 0.0
    %3607 = vmatpush1.msra.mxu0 0.0
    %3608 = vmatprep.subr.mxu0 0.0
    %3609 = vmatpush1.msra.mxu0 0.0
    %3610 = vmatprep.subr.mxu0 0.0
    %3611 = vmatpush1.msra.mxu0 0.0
    %3612 = vmatprep.subr.mxu0 0.0
    %3613 = vmatpush1.msra.mxu0 0.0
    %3614 = vmatprep.subr.mxu0 0.0
    %3615 = vmatpush1.msra.mxu0 0.0
    %3616 = vmatprep.subr.mxu0 0.0
    %3617 = vmatpush1.msra.mxu0 0.0
    %3618 = vmatprep.subr.mxu0 0.0
    %3619 = vmatpush1.msra.mxu0 0.0
    %3620 = vmatprep.subr.mxu0 0.0
    %3621 = vmatpush1.msra.mxu0 0.0
    %3622 = vmatprep.subr.mxu0 0.0
    %3623 = vmatpush1.msra.mxu0 0.0
    %3624 = vmatprep.subr.mxu0 0.0
    %3625 = vmatpush1.msra.mxu0 0.0
    %3626 = vmatprep.subr.mxu0 0.0
    %3627 = vmatpush1.msra.mxu0 0.0
    %3628 = vmatprep.subr.mxu0 0.0
    %3629 = vmatpush1.msra.mxu0 0.0
    %3630 = vmatprep.subr.mxu0 0.0
    %3631 = vmatpush1.msra.mxu0 0.0
    %3632 = vmatprep.subr.mxu0 0.0
    %3633 = vmatpush1.msra.mxu0 0.0
    %3634 = vmatprep.subr.mxu0 0.0
    %3635 = vmatpush1.msra.mxu0 0.0
    %3636 = vmatprep.subr.mxu0 0.0
    %3637 = vmatpush1.msra.mxu0 0.0
    %3638 = vmatprep.subr.mxu0 0.0
    %3639 = vmatpush1.msra.mxu0 0.0
    %3640 = vmatprep.subr.mxu0 0.0
    %3641 = vmatpush1.msra.mxu0 0.0
    %3642 = vmatprep.subr.mxu0 0.0
    %3643 = vmatpush1.msra.mxu0 0.0
    %3644 = vmatprep.subr.mxu0 0.0
    %3645 = vmatpush1.msra.mxu0 0.0
    %3646 = vmatprep.subr.mxu0 0.0
    %3647 = vmatpush1.msra.mxu0 0.0
    %3648 = vmatprep.subr.mxu0 0.0
    %3649 = vmatpush1.msra.mxu0 0.0
    %3650 = vmatprep.subr.mxu0 0.0
    %3651 = vmatpush1.msra.mxu0 0.0
    %3652 = vmatprep.subr.mxu0 0.0
    %3653 = vmatpush1.msra.mxu0 0.0
    %3654 = vmatprep.mubr.f32.mxu0 0.0
    %3655 = vmatmul.mubr.f32.gmra.mrb[0].mxu0 %v3585
    %v3656 = vpop.f32.mrb[0].mxu0
    %v3657 = vadd.f32 %v3582, %v3656
    %v3658 = vpop.f32.mrb[0].mxu0
    %3659 = vmatprep.mubr.f32.mxu0 0.0
    %3660 = vmatmul.mubr.f32.gmra.mrb[0].mxu0 %v3588
    %v3661 = vpop.f32.mrb[0].mxu0
    %v3662 = vadd.f32 %v3582, %v3661
    %v3663 = vpop.f32.mrb[0].mxu0
    %3664 = vdwg.mxu0
    %v3665 = vmul.f32 %v3657, %v3657
    %v3666 = vmul.f32 %v3662, %v3662
    %v3667 = vmul.f32 %v3657, %v3665
    %v3668 = vmul.f32 %v3662, %v3666
    %v3669 = vmul.f32 %v3667, 0.044715
    %v3670 = vmul.f32 %v3668, 0.044715
    %v3671 = vadd.f32 %v3657, %v3669
    %v3672 = vadd.f32 %v3662, %v3670
    %v3673 = vmul.f32 %v3671, 0.7978846
    %v3674 = vmul.f32 %v3672, 0.7978846
    %v3675 = vtanh.pop %v3673
    %v3676 = vtanh.pop %v3674
    %v3677 = vadd.f32 %v3675, 1.0
    %v3678 = vadd.f32 %v3676, 1.0
    %v3679 = vmul.f32 %v3677, 0.5
    %v3680 = vmul.f32 %v3678, 0.5
    %v3681 = vmul.f32 %v3657, %v3679
    %v3682 = vmul.f32 %v3662, %v3680
    %v3683 = vld [vmem:[%s53] sm:$0xff]
    %v3684 = vld [vmem:[%s53 + $0x8] sm:$0xff]
    %v3685 = vld [vmem:[%s53 + $0x10] sm:$0xff]
    %v3686 = vld [vmem:[%s53 + $0x18] sm:$0xff]
    %v3687 = vld [vmem:[%s53 + $0x20] sm:$0xff]
    %v3688 = vld [vmem:[%s53 + $0x28] sm:$0xff]
    %v3689 = vld [vmem:[%s53 + $0x30] sm:$0xff]
    %v3690 = vld [vmem:[%s53 + $0x38] sm:$0xff]
    %v3691 = vld [vmem:[%s53 + $0x40] sm:$0xff]
    %v3692 = vld [vmem:[%s53 + $0x48] sm:$0xff]
    %v3693 = vld [vmem:[%s53 + $0x50] sm:$0xff]
    %v3694 = vld [vmem:[%s53 + $0x58] sm:$0xff]
    %v3695 = vld [vmem:[%s53 + $0x60] sm:$0xff]
    %v3696 = vld [vmem:[%s53 + $0x68] sm:$0xff]
    %v3697 = vld [vmem:[%s53 + $0x70] sm:$0xff]
    %v3698 = vld [vmem:[%s53 + $0x78] sm:$0xff]
    %v3699 = vld [vmem:[%s55] sm:$0x1]
    %v3701 = vlaneseq
    %v3702 = vshrl.u32 %v3701, 7
    %v3703 = vsub.s32 0, %v3702
    %v3704 = vrot.slane %v3699, %v3703
    %3706 = vmatprep.subr.mxu0 0.0
    %3707 = vmatpush1.msra.mxu0 %v3683
    %3708 = vmatprep.subr.mxu0 0.0
    %3709 = vmatpush1.msra.mxu0 %v3684
    %3710 = vmatprep.subr.mxu0 0.0
    %3711 = vmatpush1.msra.mxu0 %v3685
    %3712 = vmatprep.subr.mxu0 0.0
    %3713 = vmatpush1.msra.mxu0 %v3686
    %3714 = vmatprep.subr.mxu0 0.0
    %3715 = vmatpush1.msra.mxu0 %v3687
    %3716 = vmatprep.subr.mxu0 0.0
    %3717 = vmatpush1.msra.mxu0 %v3688
    %3718 = vmatprep.subr.mxu0 0.0
    %3719 = vmatpush1.msra.mxu0 %v3689
    %3720 = vmatprep.subr.mxu0 0.0
    %3721 = vmatpush1.msra.mxu0 %v3690
    %3722 = vmatprep.subr.mxu0 0.0
    %3723 = vmatpush1.msra.mxu0 %v3691
    %3724 = vmatprep.subr.mxu0 0.0
    %3725 = vmatpush1.msra.mxu0 %v3692
    %3726 = vmatprep.subr.mxu0 0.0
    %3727 = vmatpush1.msra.mxu0 %v3693
    %3728 = vmatprep.subr.mxu0 0.0
    %3729 = vmatpush1.msra.mxu0 %v3694
    %3730 = vmatprep.subr.mxu0 0.0
    %3731 = vmatpush1.msra.mxu0 %v3695
    %3732 = vmatprep.subr.mxu0 0.0
    %3733 = vmatpush1.msra.mxu0 %v3696
    %3734 = vmatprep.subr.mxu0 0.0
    %3735 = vmatpush1.msra.mxu0 %v3697
    %3736 = vmatprep.subr.mxu0 0.0
    %3737 = vmatpush1.msra.mxu0 %v3698
    %3738 = vmatprep.subr.mxu0 0.0
    %3739 = vmatpush1.msra.mxu0 0.0
    %3740 = vmatprep.subr.mxu0 0.0
    %3741 = vmatpush1.msra.mxu0 0.0
    %3742 = vmatprep.subr.mxu0 0.0
    %3743 = vmatpush1.msra.mxu0 0.0
    %3744 = vmatprep.subr.mxu0 0.0
    %3745 = vmatpush1.msra.mxu0 0.0
    %3746 = vmatprep.subr.mxu0 0.0
    %3747 = vmatpush1.msra.mxu0 0.0
    %3748 = vmatprep.subr.mxu0 0.0
    %3749 = vmatpush1.msra.mxu0 0.0
    %3750 = vmatprep.subr.mxu0 0.0
    %3751 = vmatpush1.msra.mxu0 0.0
    %3752 = vmatprep.subr.mxu0 0.0
    %3753 = vmatpush1.msra.mxu0 0.0
    %3754 = vmatprep.subr.mxu0 0.0
    %3755 = vmatpush1.msra.mxu0 0.0
    %3756 = vmatprep.subr.mxu0 0.0
    %3757 = vmatpush1.msra.mxu0 0.0
    %3758 = vmatprep.subr.mxu0 0.0
    %3759 = vmatpush1.msra.mxu0 0.0
    %3760 = vmatprep.subr.mxu0 0.0
    %3761 = vmatpush1.msra.mxu0 0.0
    %3762 = vmatprep.subr.mxu0 0.0
    %3763 = vmatpush1.msra.mxu0 0.0
    %3764 = vmatprep.subr.mxu0 0.0
    %3765 = vmatpush1.msra.mxu0 0.0
    %3766 = vmatprep.subr.mxu0 0.0
    %3767 = vmatpush1.msra.mxu0 0.0
    %3768 = vmatprep.subr.mxu0 0.0
    %3769 = vmatpush1.msra.mxu0 0.0
    %3770 = vmatprep.mubr.f32.mxu0 0.0
    %3771 = vmatmul.mubr.f32.gmra.mrb[0].mxu0 %v3681
    %v3772 = vpop.f32.mrb[0].mxu0
    %v3773 = vadd.f32 %v3704, %v3772
    %v3774 = vpop.f32.mrb[0].mxu0
    %3775 = vmatprep.mubr.f32.mxu0 0.0
    %3776 = vmatmul.mubr.f32.gmra.mrb[0].mxu0 %v3682
    %v3777 = vpop.f32.mrb[0].mxu0
    %v3778 = vadd.f32 %v3704, %v3777
    %v3779 = vpop.f32.mrb[0].mxu0
    %3780 = vdwg.mxu0
    %v3781 = vadd.f32 %v3773, %v3571
    %v3782 = vadd.f32 %v3778, %v3572
    %v3783 = vsel %vm238, %v3781, 0.0
    %3784 = vadd.xlane.f32.xlu0 %v3783
    %v3785 = vpop.xlane.xlu0 %3784
    %v3786 = vsel %vm238, %v3782, 0.0
    %3787 = vadd.xlane.f32.xlu0 %v3786
    %v3788 = vpop.xlane.xlu0 %3787
    %v3789 = vmul.f32 %v3785, %v1732
    %v3790 = vmul.f32 %v3788, %v1732
    %v3791 = vsub.f32 %v3781, %v3789
    %v3792 = vsub.f32 %v3782, %v3790
    %v3793 = vmul.f32 %v3791, %v3791
    %v3794 = vmul.f32 %v3792, %v3792
    %v3795 = vsel %vm238, %v3793, 0.0
    %3796 = vadd.xlane.f32.xlu0 %v3795
    %v3797 = vpop.xlane.xlu0 %3796
    %v3798 = vsel %vm238, %v3794, 0.0
    %3799 = vadd.xlane.f32.xlu0 %v3798
    %v3800 = vpop.xlane.xlu0 %3799
    %v3801 = vmul.f32 %v3797, %v1732
    %v3802 = vmul.f32 %v3800, %v1732
    %v3803 = vadd.f32 %v3801, 1e-12
    %v3804 = vadd.f32 %v3802, 1e-12
    %v3805 = vrsqrt.pop %v3803
    %v3806 = vrsqrt.pop %v3804
    %v3807 = vmul.f32 %v3791, %v3805
    %v3808 = vmul.f32 %v3792, %v3806
    %v3809 = vlaneseq
    %v3810 = vshrl.u32 %v3809, 7
    %v3811 = vsub.s32 5, %v3810
    %v3812 = vrot.slane %v225, %v3811
    %v3813 = vmul.f32 %v3807, %v3812
    %v3814 = vmul.f32 %v3808, %v3812
    %v3815 = vlaneseq
    %v3816 = vshrl.u32 %v3815, 7
    %v3817 = vsub.s32 5, %v3816
    %v3818 = vrot.slane %v226, %v3817
    %v3819 = vadd.f32 %v3813, %v3818
    %v3820 = vadd.f32 %v3814, %v3818
    %s3821 = scalar_lea.vmem %s57, 8
    %v3822 = vld [vmem:[%s3821] sm:$0x3f]
    %s3823 = scalar_lea.vmem %s59, 8
    %v3824 = vld [vmem:[%s3823] sm:$0x3f]
    %s3825 = scalar_lea.vmem %s9, 32
    %v3826 = vld [vmem:[%s3825] sm:$0xff]
    %v3827 = vld [vmem:[%s3825 + $0x8] sm:$0xff]
    %v3828 = vld [vmem:[%s3825 + $0x10] sm:$0xff]
    %v3829 = vld [vmem:[%s3825 + $0x18] sm:$0xff]
    %s3830 = scalar_lea.vmem [#allocation7], 1
    %v3831 = vld [vmem:[%s3830] sm:$0x1]
    %v3833 = vlaneseq
    %v3834 = vshrl.u32 %v3833, 7
    %v3835 = vsub.s32 0, %v3834
    %v3836 = vrot.slane %v3831, %v3835
    %v3839 = vsel %vm238, %v2771, 0
    %v3842 = vsel %vm238, %v2772, 0
    %3844 = vmatprep.subr.mxu0 0.0
    %3845 = vmatpush1.msra.mxu0 %v3826
    %3846 = vmatprep.subr.mxu0 0.0
    %3847 = vmatpush1.msra.mxu0 %v3827
    %3848 = vmatprep.subr.mxu0 0.0
    %3849 = vmatpush1.msra.mxu0 %v3828
    %3850 = vmatprep.subr.mxu0 0.0
    %3851 = vmatpush1.msra.mxu0 %v3829
    %3852 = vmatprep.subr.mxu0 0.0
    %3853 = vmatpush1.msra.mxu0 0.0
    %3854 = vmatprep.subr.mxu0 0.0
    %3855 = vmatpush1.msra.mxu0 0.0
    %3856 = vmatprep.subr.mxu0 0.0
    %3857 = vmatpush1.msra.mxu0 0.0
    %3858 = vmatprep.subr.mxu0 0.0
    %3859 = vmatpush1.msra.mxu0 0.0
    %3860 = vmatprep.subr.mxu0 0.0
    %3861 = vmatpush1.msra.mxu0 0.0
    %3862 = vmatprep.subr.mxu0 0.0
    %3863 = vmatpush1.msra.mxu0 0.0
    %3864 = vmatprep.subr.mxu0 0.0
    %3865 = vmatpush1.msra.mxu0 0.0
    %3866 = vmatprep.subr.mxu0 0.0
    %3867 = vmatpush1.msra.mxu0 0.0
    %3868 = vmatprep.subr.mxu0 0.0
    %3869 = vmatpush1.msra.mxu0 0.0
    %3870 = vmatprep.subr.mxu0 0.0
    %3871 = vmatpush1.msra.mxu0 0.0
    %3872 = vmatprep.subr.mxu0 0.0
    %3873 = vmatpush1.msra.mxu0 0.0
    %3874 = vmatprep.subr.mxu0 0.0
    %3875 = vmatpush1.msra.mxu0 0.0
    %3876 = vmatprep.subr.mxu0 0.0
    %3877 = vmatpush1.msra.mxu0 0.0
    %3878 = vmatprep.subr.mxu0 0.0
    %3879 = vmatpush1.msra.mxu0 0.0
    %3880 = vmatprep.subr.mxu0 0.0
    %3881 = vmatpush1.msra.mxu0 0.0
    %3882 = vmatprep.subr.mxu0 0.0
    %3883 = vmatpush1.msra.mxu0 0.0
    %3884 = vmatprep.subr.mxu0 0.0
    %3885 = vmatpush1.msra.mxu0 0.0
    %3886 = vmatprep.subr.mxu0 0.0
    %3887 = vmatpush1.msra.mxu0 0.0
    %3888 = vmatprep.subr.mxu0 0.0
    %3889 = vmatpush1.msra.mxu0 0.0
    %3890 = vmatprep.subr.mxu0 0.0
    %3891 = vmatpush1.msra.mxu0 0.0
    %3892 = vmatprep.subr.mxu0 0.0
    %3893 = vmatpush1.msra.mxu0 0.0
    %3894 = vmatprep.subr.mxu0 0.0
    %3895 = vmatpush1.msra.mxu0 0.0
    %3896 = vmatprep.subr.mxu0 0.0
    %3897 = vmatpush1.msra.mxu0 0.0
    %3898 = vmatprep.subr.mxu0 0.0
    %3899 = vmatpush1.msra.mxu0 0.0
    %3900 = vmatprep.subr.mxu0 0.0
    %3901 = vmatpush1.msra.mxu0 0.0
    %3902 = vmatprep.subr.mxu0 0.0
    %3903 = vmatpush1.msra.mxu0 0.0
    %3904 = vmatprep.subr.mxu0 0.0
    %3905 = vmatpush1.msra.mxu0 0.0
    %3906 = vmatprep.subr.mxu0 0.0
    %3907 = vmatpush1.msra.mxu0 0.0
    %3908 = vmatprep.mubr.f32.mxu0 0.0
    %3909 = vmatmul.mubr.f32.gmra.mrb[0].mxu0 %v3839
    %v3910 = vpop.f32.mrb[0].mxu0
    %v3911 = vadd.f32 %v3836, %v3910
    %v3912 = vpop.f32.mrb[0].mxu0
    %3913 = vmatprep.mubr.f32.mxu0 0.0
    %3914 = vmatmul.mubr.f32.gmra.mrb[0].mxu0 %v3842
    %v3915 = vpop.f32.mrb[0].mxu0
    %v3916 = vadd.f32 %v3836, %v3915
    %v3917 = vpop.f32.mrb[0].mxu0
    %3918 = vdwg.mxu0
    %s3919 = scalar_lea.vmem %s13, 32
    %v3920 = vld [vmem:[%s3919] sm:$0xff]
    %v3921 = vld [vmem:[%s3919 + $0x8] sm:$0xff]
    %v3922 = vld [vmem:[%s3919 + $0x10] sm:$0xff]
    %v3923 = vld [vmem:[%s3919 + $0x18] sm:$0xff]
    %s3924 = scalar_lea.vmem [#allocation8], 1
    %v3925 = vld [vmem:[%s3924] sm:$0x1]
    %v3927 = vlaneseq
    %v3928 = vshrl.u32 %v3927, 7
    %v3929 = vsub.s32 0, %v3928
    %v3930 = vrot.slane %v3925, %v3929
    %v3933 = vsel %vm238, %v3819, 0
    %v3936 = vsel %vm238, %v3820, 0
    %3938 = vmatprep.subr.mxu0 0.0
    %3939 = vmatpush1.msra.mxu0 %v3920
    %3940 = vmatprep.subr.mxu0 0.0
    %3941 = vmatpush1.msra.mxu0 %v3921
    %3942 = vmatprep.subr.mxu0 0.0
    %3943 = vmatpush1.msra.mxu0 %v3922
    %3944 = vmatprep.subr.mxu0 0.0
    %3945 = vmatpush1.msra.mxu0 %v3923
    %3946 = vmatprep.subr.mxu0 0.0
    %3947 = vmatpush1.msra.mxu0 0.0
    %3948 = vmatprep.subr.mxu0 0.0
    %3949 = vmatpush1.msra.mxu0 0.0
    %3950 = vmatprep.subr.mxu0 0.0
    %3951 = vmatpush1.msra.mxu0 0.0
    %3952 = vmatprep.subr.mxu0 0.0
    %3953 = vmatpush1.msra.mxu0 0.0
    %3954 = vmatprep.subr.mxu0 0.0
    %3955 = vmatpush1.msra.mxu0 0.0
    %3956 = vmatprep.subr.mxu0 0.0
    %3957 = vmatpush1.msra.mxu0 0.0
    %3958 = vmatprep.subr.mxu0 0.0
    %3959 = vmatpush1.msra.mxu0 0.0
    %3960 = vmatprep.subr.mxu0 0.0
    %3961 = vmatpush1.msra.mxu0 0.0
    %3962 = vmatprep.subr.mxu0 0.0
    %3963 = vmatpush1.msra.mxu0 0.0
    %3964 = vmatprep.subr.mxu0 0.0
    %3965 = vmatpush1.msra.mxu0 0.0
    %3966 = vmatprep.subr.mxu0 0.0
    %3967 = vmatpush1.msra.mxu0 0.0
    %3968 = vmatprep.subr.mxu0 0.0
    %3969 = vmatpush1.msra.mxu0 0.0
    %3970 = vmatprep.subr.mxu0 0.0
    %3971 = vmatpush1.msra.mxu0 0.0
    %3972 = vmatprep.subr.mxu0 0.0
    %3973 = vmatpush1.msra.mxu0 0.0
    %3974 = vmatprep.subr.mxu0 0.0
    %3975 = vmatpush1.msra.mxu0 0.0
    %3976 = vmatprep.subr.mxu0 0.0
    %3977 = vmatpush1.msra.mxu0 0.0
    %3978 = vmatprep.subr.mxu0 0.0
    %3979 = vmatpush1.msra.mxu0 0.0
    %3980 = vmatprep.subr.mxu0 0.0
    %3981 = vmatpush1.msra.mxu0 0.0
    %3982 = vmatprep.subr.mxu0 0.0
    %3983 = vmatpush1.msra.mxu0 0.0
    %3984 = vmatprep.subr.mxu0 0.0
    %3985 = vmatpush1.msra.mxu0 0.0
    %3986 = vmatprep.subr.mxu0 0.0
    %3987 = vmatpush1.msra.mxu0 0.0
    %3988 = vmatprep.subr.mxu0 0.0
    %3989 = vmatpush1.msra.mxu0 0.0
    %3990 = vmatprep.subr.mxu0 0.0
    %3991 = vmatpush1.msra.mxu0 0.0
    %3992 = vmatprep.subr.mxu0 0.0
    %3993 = vmatpush1.msra.mxu0 0.0
    %3994 = vmatprep.subr.mxu0 0.0
    %3995 = vmatpush1.msra.mxu0 0.0
    %3996 = vmatprep.subr.mxu0 0.0
    %3997 = vmatpush1.msra.mxu0 0.0
    %3998 = vmatprep.subr.mxu0 0.0
    %3999 = vmatpush1.msra.mxu0 0.0
    %4000 = vmatprep.subr.mxu0 0.0
    %4001 = vmatpush1.msra.mxu0 0.0
    %4002 = vmatprep.mubr.f32.mxu0 0.0
    %4003 = vmatmul.mubr.f32.gmra.mrb[0].mxu0 %v3933
    %v4004 = vpop.f32.mrb[0].mxu0
    %v4005 = vadd.f32 %v3930, %v4004
    %v4006 = vpop.f32.mrb[0].mxu0
    %4007 = vmatprep.mubr.f32.mxu0 0.0
    %4008 = vmatmul.mubr.f32.gmra.mrb[0].mxu0 %v3936
    %v4009 = vpop.f32.mrb[0].mxu0
    %v4010 = vadd.f32 %v3930, %v4009
    %v4011 = vpop.f32.mrb[0].mxu0
    %4012 = vdwg.mxu0
    %s4013 = scalar_lea.vmem %s17, 32
    %v4014 = vld [vmem:[%s4013] sm:$0xff]
    %v4015 = vld [vmem:[%s4013 + $0x8] sm:$0xff]
    %v4016 = vld [vmem:[%s4013 + $0x10] sm:$0xff]
    %v4017 = vld [vmem:[%s4013 + $0x18] sm:$0xff]
    %s4018 = scalar_lea.vmem %s19, 1
    %v4019 = vld [vmem:[%s4018] sm:$0x1]
    %v4020 = vmul.f32 %v4005, %v422
    %v4021 = vmul.f32 %v4005, %v424
    %v4022 = vmul.f32 %v4005, %v426
    %v4023 = vmul.f32 %v4005, %v428
    %v4024 = vmul.f32 %v4005, %v438
    %v4025 = vmul.f32 %v4005, %v440
    %v4026 = vmul.f32 %v4005, %v442
    %v4027 = vmul.f32 %v4005, %v444
    %4032 = vrot.lane.b32.xlu0 %v4020, 96
    %v4033 = vpop.permute.xlu0 %4032
    %4034 = vrot.lane.b32.xlu0 %v4021, 96
    %v4035 = vpop.permute.xlu0 %4034
    %4036 = vrot.lane.b32.xlu0 %v4022, 96
    %v4037 = vpop.permute.xlu0 %4036
    %4038 = vrot.lane.b32.xlu0 %v4023, 96
    %v4039 = vpop.permute.xlu0 %4038
    %v4041 = vsel %vm238, %v3911, 0
    %v4043 = vsel %vm238, %v4033, 0
    %v4045 = vsel %vm238, %v4035, 0
    %v4047 = vsel %vm238, %v4037, 0
    %v4049 = vsel %vm238, %v4039, 0
    %4051 = vmatprep.subr.mxu0 0.0
    %4052 = vmatpush1.xpose.msra.mxu0 %v4043
    %4053 = vmatprep.subr.mxu0 0.0
    %4054 = vmatpush1.xpose.msra.mxu0 %v4045
    %4055 = vmatprep.subr.mxu0 0.0
    %4056 = vmatpush1.xpose.msra.mxu0 %v4047
    %4057 = vmatprep.subr.mxu0 0.0
    %4058 = vmatpush1.xpose.msra.mxu0 %v4049
    %4059 = vmatprep.subr.mxu0 0.0
    %4060 = vmatpush1.xpose.msra.mxu0 0.0
    %4061 = vmatprep.subr.mxu0 0.0
    %4062 = vmatpush1.xpose.msra.mxu0 0.0
    %4063 = vmatprep.subr.mxu0 0.0
    %4064 = vmatpush1.xpose.msra.mxu0 0.0
    %4065 = vmatprep.subr.mxu0 0.0
    %4066 = vmatpush1.xpose.msra.mxu0 0.0
    %4067 = vmatprep.subr.mxu0 0.0
    %4068 = vmatpush1.xpose.msra.mxu0 0.0
    %4069 = vmatprep.subr.mxu0 0.0
    %4070 = vmatpush1.xpose.msra.mxu0 0.0
    %4071 = vmatprep.subr.mxu0 0.0
    %4072 = vmatpush1.xpose.msra.mxu0 0.0
    %4073 = vmatprep.subr.mxu0 0.0
    %4074 = vmatpush1.xpose.msra.mxu0 0.0
    %4075 = vmatprep.subr.mxu0 0.0
    %4076 = vmatpush1.xpose.msra.mxu0 0.0
    %4077 = vmatprep.subr.mxu0 0.0
    %4078 = vmatpush1.xpose.msra.mxu0 0.0
    %4079 = vmatprep.subr.mxu0 0.0
    %4080 = vmatpush1.xpose.msra.mxu0 0.0
    %4081 = vmatprep.subr.mxu0 0.0
    %4082 = vmatpush1.xpose.msra.mxu0 0.0
    %4083 = vmatprep.subr.mxu0 0.0
    %4084 = vmatpush1.xpose.msra.mxu0 0.0
    %4085 = vmatprep.subr.mxu0 0.0
    %4086 = vmatpush1.xpose.msra.mxu0 0.0
    %4087 = vmatprep.subr.mxu0 0.0
    %4088 = vmatpush1.xpose.msra.mxu0 0.0
    %4089 = vmatprep.subr.mxu0 0.0
    %4090 = vmatpush1.xpose.msra.mxu0 0.0
    %4091 = vmatprep.subr.mxu0 0.0
    %4092 = vmatpush1.xpose.msra.mxu0 0.0
    %4093 = vmatprep.subr.mxu0 0.0
    %4094 = vmatpush1.xpose.msra.mxu0 0.0
    %4095 = vmatprep.subr.mxu0 0.0
    %4096 = vmatpush1.xpose.msra.mxu0 0.0
    %4097 = vmatprep.subr.mxu0 0.0
    %4098 = vmatpush1.xpose.msra.mxu0 0.0
    %4099 = vmatprep.subr.mxu0 0.0
    %4100 = vmatpush1.xpose.msra.mxu0 0.0
    %4101 = vmatprep.subr.mxu0 0.0
    %4102 = vmatpush1.xpose.msra.mxu0 0.0
    %4103 = vmatprep.subr.mxu0 0.0
    %4104 = vmatpush1.xpose.msra.mxu0 0.0
    %4105 = vmatprep.subr.mxu0 0.0
    %4106 = vmatpush1.xpose.msra.mxu0 0.0
    %4107 = vmatprep.subr.mxu0 0.0
    %4108 = vmatpush1.xpose.msra.mxu0 0.0
    %4109 = vmatprep.subr.mxu0 0.0
    %4110 = vmatpush1.xpose.msra.mxu0 0.0
    %4111 = vmatprep.subr.mxu0 0.0
    %4112 = vmatpush1.xpose.msra.mxu0 0.0
    %4113 = vmatprep.subr.mxu0 0.0
    %4114 = vmatpush1.xpose.msra.mxu0 0.0
    %4115 = vmatprep.mubr.f32.mxu0 0.0
    %4116 = vmatmul.mubr.f32.gmra.mrb[0].mxu0 %v4041
    %v4117 = vpop.f32.mrb[0].mxu0
    %v4118 = vadd.f32 0.0, %v4117
    %v4119 = vpop.f32.mrb[0].mxu0
    %4120 = vdwg.mxu0
    %v4121 = vsel %vm238, %v4118, -inf
    %4122 = vmax.xlane.f32.xlu0 %v4121
    %v4123 = vpop.xlane.xlu0 %4122
    %v4124 = vsub.f32 %v4118, %v4123
    %v4125 = vmul.f32 %v4124, 1.442695
    %v4126 = vpow.pop %v4125
    %4131 = vrot.lane.b32.xlu0 %v4024, 64
    %v4132 = vpop.permute.xlu0 %4131
    %4133 = vrot.lane.b32.xlu0 %v4025, 64
    %v4134 = vpop.permute.xlu0 %4133
    %4135 = vrot.lane.b32.xlu0 %v4026, 64
    %v4136 = vpop.permute.xlu0 %4135
    %4137 = vrot.lane.b32.xlu0 %v4027, 64
    %v4138 = vpop.permute.xlu0 %4137
    %v4144 = vsel %vm238, %v4126, 0
    %4146 = vmatprep.subr.mxu0 0.0
    %4147 = vmatpush1.msra.mxu0 %v4132
    %4148 = vmatprep.subr.mxu0 0.0
    %4149 = vmatpush1.msra.mxu0 %v4134
    %4150 = vmatprep.subr.mxu0 0.0
    %4151 = vmatpush1.msra.mxu0 %v4136
    %4152 = vmatprep.subr.mxu0 0.0
    %4153 = vmatpush1.msra.mxu0 %v4138
    %4154 = vmatprep.subr.mxu0 0.0
    %4155 = vmatpush1.msra.mxu0 0.0
    %4156 = vmatprep.subr.mxu0 0.0
    %4157 = vmatpush1.msra.mxu0 0.0
    %4158 = vmatprep.subr.mxu0 0.0
    %4159 = vmatpush1.msra.mxu0 0.0
    %4160 = vmatprep.subr.mxu0 0.0
    %4161 = vmatpush1.msra.mxu0 0.0
    %4162 = vmatprep.subr.mxu0 0.0
    %4163 = vmatpush1.msra.mxu0 0.0
    %4164 = vmatprep.subr.mxu0 0.0
    %4165 = vmatpush1.msra.mxu0 0.0
    %4166 = vmatprep.subr.mxu0 0.0
    %4167 = vmatpush1.msra.mxu0 0.0
    %4168 = vmatprep.subr.mxu0 0.0
    %4169 = vmatpush1.msra.mxu0 0.0
    %4170 = vmatprep.subr.mxu0 0.0
    %4171 = vmatpush1.msra.mxu0 0.0
    %4172 = vmatprep.subr.mxu0 0.0
    %4173 = vmatpush1.msra.mxu0 0.0
    %4174 = vmatprep.subr.mxu0 0.0
    %4175 = vmatpush1.msra.mxu0 0.0
    %4176 = vmatprep.subr.mxu0 0.0
    %4177 = vmatpush1.msra.mxu0 0.0
    %4178 = vmatprep.subr.mxu0 0.0
    %4179 = vmatpush1.msra.mxu0 0.0
    %4180 = vmatprep.subr.mxu0 0.0
    %4181 = vmatpush1.msra.mxu0 0.0
    %4182 = vmatprep.subr.mxu0 0.0
    %4183 = vmatpush1.msra.mxu0 0.0
    %4184 = vmatprep.subr.mxu0 0.0
    %4185 = vmatpush1.msra.mxu0 0.0
    %4186 = vmatprep.subr.mxu0 0.0
    %4187 = vmatpush1.msra.mxu0 0.0
    %4188 = vmatprep.subr.mxu0 0.0
    %4189 = vmatpush1.msra.mxu0 0.0
    %4190 = vmatprep.subr.mxu0 0.0
    %4191 = vmatpush1.msra.mxu0 0.0
    %4192 = vmatprep.subr.mxu0 0.0
    %4193 = vmatpush1.msra.mxu0 0.0
    %4194 = vmatprep.subr.mxu0 0.0
    %4195 = vmatpush1.msra.mxu0 0.0
    %4196 = vmatprep.subr.mxu0 0.0
    %4197 = vmatpush1.msra.mxu0 0.0
    %4198 = vmatprep.subr.mxu0 0.0
    %4199 = vmatpush1.msra.mxu0 0.0
    %4200 = vmatprep.subr.mxu0 0.0
    %4201 = vmatpush1.msra.mxu0 0.0
    %4202 = vmatprep.subr.mxu0 0.0
    %4203 = vmatpush1.msra.mxu0 0.0
    %4204 = vmatprep.subr.mxu0 0.0
    %4205 = vmatpush1.msra.mxu0 0.0
    %4206 = vmatprep.subr.mxu0 0.0
    %4207 = vmatpush1.msra.mxu0 0.0
    %4208 = vmatprep.subr.mxu0 0.0
    %4209 = vmatpush1.msra.mxu0 0.0
    %4210 = vmatprep.mubr.f32.mxu0 0.0
    %4211 = vmatmul.mubr.f32.gmra.mrb[0].mxu0 %v4144
    %v4212 = vpop.f32.mrb[0].mxu0
    %v4213 = vadd.f32 0.0, %v4212
    %v4214 = vpop.f32.mrb[0].mxu0
    %4215 = vdwg.mxu0
    %4216 = vmatprep.subr.mxu0 0.0
    %4217 = vmatpush1.msra.mxu0 %v217
    %4218 = vmatprep.subr.mxu0 0.0
    %4219 = vmatpush1.msra.mxu0 %v218
    %4220 = vmatprep.subr.mxu0 0.0
    %4221 = vmatpush1.msra.mxu0 %v219
    %4222 = vmatprep.subr.mxu0 0.0
    %4223 = vmatpush1.msra.mxu0 %v220
    %4224 = vmatprep.subr.mxu0 0.0
    %4225 = vmatpush1.msra.mxu0 0.0
    %4226 = vmatprep.subr.mxu0 0.0
    %4227 = vmatpush1.msra.mxu0 0.0
    %4228 = vmatprep.subr.mxu0 0.0
    %4229 = vmatpush1.msra.mxu0 0.0
    %4230 = vmatprep.subr.mxu0 0.0
    %4231 = vmatpush1.msra.mxu0 0.0
    %4232 = vmatprep.subr.mxu0 0.0
    %4233 = vmatpush1.msra.mxu0 0.0
    %4234 = vmatprep.subr.mxu0 0.0
    %4235 = vmatpush1.msra.mxu0 0.0
    %4236 = vmatprep.subr.mxu0 0.0
    %4237 = vmatpush1.msra.mxu0 0.0
    %4238 = vmatprep.subr.mxu0 0.0
    %4239 = vmatpush1.msra.mxu0 0.0
    %4240 = vmatprep.subr.mxu0 0.0
    %4241 = vmatpush1.msra.mxu0 0.0
    %4242 = vmatprep.subr.mxu0 0.0
    %4243 = vmatpush1.msra.mxu0 0.0
    %4244 = vmatprep.subr.mxu0 0.0
    %4245 = vmatpush1.msra.mxu0 0.0
    %4246 = vmatprep.subr.mxu0 0.0
    %4247 = vmatpush1.msra.mxu0 0.0
    %4248 = vmatprep.subr.mxu0 0.0
    %4249 = vmatpush1.msra.mxu0 0.0
    %4250 = vmatprep.subr.mxu0 0.0
    %4251 = vmatpush1.msra.mxu0 0.0
    %4252 = vmatprep.subr.mxu0 0.0
    %4253 = vmatpush1.msra.mxu0 0.0
    %4254 = vmatprep.subr.mxu0 0.0
    %4255 = vmatpush1.msra.mxu0 0.0
    %4256 = vmatprep.subr.mxu0 0.0
    %4257 = vmatpush1.msra.mxu0 0.0
    %4258 = vmatprep.subr.mxu0 0.0
    %4259 = vmatpush1.msra.mxu0 0.0
    %4260 = vmatprep.subr.mxu0 0.0
    %4261 = vmatpush1.msra.mxu0 0.0
    %4262 = vmatprep.subr.mxu0 0.0
    %4263 = vmatpush1.msra.mxu0 0.0
    %4264 = vmatprep.subr.mxu0 0.0
    %4265 = vmatpush1.msra.mxu0 0.0
    %4266 = vmatprep.subr.mxu0 0.0
    %4267 = vmatpush1.msra.mxu0 0.0
    %4268 = vmatprep.subr.mxu0 0.0
    %4269 = vmatpush1.msra.mxu0 0.0
    %4270 = vmatprep.subr.mxu0 0.0
    %4271 = vmatpush1.msra.mxu0 0.0
    %4272 = vmatprep.subr.mxu0 0.0
    %4273 = vmatpush1.msra.mxu0 0.0
    %4274 = vmatprep.subr.mxu0 0.0
    %4275 = vmatpush1.msra.mxu0 0.0
    %4276 = vmatprep.subr.mxu0 0.0
    %4277 = vmatpush1.msra.mxu0 0.0
    %4278 = vmatprep.subr.mxu0 0.0
    %4279 = vmatpush1.msra.mxu0 0.0
    %4280 = vmatprep.mubr.f32.mxu0 0.0
    %4281 = vmatmul.mubr.f32.gmra.mrb[0].mxu0 %v4144
    %v4282 = vpop.f32.mrb[0].mxu0
    %v4283 = vadd.f32 0.0, %v4282
    %v4284 = vpop.f32.mrb[0].mxu0
    %4285 = vdwg.mxu0
    %v4286 = vrcp.pop %v4283
    %v4287 = vmul.f32 %v4213, %v4286
    %v4288 = vmul.f32 %v4010, %v422
    %v4289 = vmul.f32 %v4010, %v424
    %v4290 = vmul.f32 %v4010, %v426
    %v4291 = vmul.f32 %v4010, %v428
    %v4292 = vmul.f32 %v4010, %v438
    %v4293 = vmul.f32 %v4010, %v440
    %v4294 = vmul.f32 %v4010, %v442
    %v4295 = vmul.f32 %v4010, %v444
    %4300 = vrot.lane.b32.xlu0 %v4288, 96
    %v4301 = vpop.permute.xlu0 %4300
    %4302 = vrot.lane.b32.xlu0 %v4289, 96
    %v4303 = vpop.permute.xlu0 %4302
    %4304 = vrot.lane.b32.xlu0 %v4290, 96
    %v4305 = vpop.permute.xlu0 %4304
    %4306 = vrot.lane.b32.xlu0 %v4291, 96
    %v4307 = vpop.permute.xlu0 %4306
    %v4309 = vsel %vm238, %v3916, 0
    %v4311 = vsel %vm238, %v4301, 0
    %v4313 = vsel %vm238, %v4303, 0
    %v4315 = vsel %vm238, %v4305, 0
    %v4317 = vsel %vm238, %v4307, 0
    %4319 = vmatprep.subr.mxu0 0.0
    %4320 = vmatpush1.xpose.msra.mxu0 %v4311
    %4321 = vmatprep.subr.mxu0 0.0
    %4322 = vmatpush1.xpose.msra.mxu0 %v4313
    %4323 = vmatprep.subr.mxu0 0.0
    %4324 = vmatpush1.xpose.msra.mxu0 %v4315
    %4325 = vmatprep.subr.mxu0 0.0
    %4326 = vmatpush1.xpose.msra.mxu0 %v4317
    %4327 = vmatprep.subr.mxu0 0.0
    %4328 = vmatpush1.xpose.msra.mxu0 0.0
    %4329 = vmatprep.subr.mxu0 0.0
    %4330 = vmatpush1.xpose.msra.mxu0 0.0
    %4331 = vmatprep.subr.mxu0 0.0
    %4332 = vmatpush1.xpose.msra.mxu0 0.0
    %4333 = vmatprep.subr.mxu0 0.0
    %4334 = vmatpush1.xpose.msra.mxu0 0.0
    %4335 = vmatprep.subr.mxu0 0.0
    %4336 = vmatpush1.xpose.msra.mxu0 0.0
    %4337 = vmatprep.subr.mxu0 0.0
    %4338 = vmatpush1.xpose.msra.mxu0 0.0
    %4339 = vmatprep.subr.mxu0 0.0
    %4340 = vmatpush1.xpose.msra.mxu0 0.0
    %4341 = vmatprep.subr.mxu0 0.0
    %4342 = vmatpush1.xpose.msra.mxu0 0.0
    %4343 = vmatprep.subr.mxu0 0.0
    %4344 = vmatpush1.xpose.msra.mxu0 0.0
    %4345 = vmatprep.subr.mxu0 0.0
    %4346 = vmatpush1.xpose.msra.mxu0 0.0
    %4347 = vmatprep.subr.mxu0 0.0
    %4348 = vmatpush1.xpose.msra.mxu0 0.0
    %4349 = vmatprep.subr.mxu0 0.0
    %4350 = vmatpush1.xpose.msra.mxu0 0.0
    %4351 = vmatprep.subr.mxu0 0.0
    %4352 = vmatpush1.xpose.msra.mxu0 0.0
    %4353 = vmatprep.subr.mxu0 0.0
    %4354 = vmatpush1.xpose.msra.mxu0 0.0
    %4355 = vmatprep.subr.mxu0 0.0
    %4356 = vmatpush1.xpose.msra.mxu0 0.0
    %4357 = vmatprep.subr.mxu0 0.0
    %4358 = vmatpush1.xpose.msra.mxu0 0.0
    %4359 = vmatprep.subr.mxu0 0.0
    %4360 = vmatpush1.xpose.msra.mxu0 0.0
    %4361 = vmatprep.subr.mxu0 0.0
    %4362 = vmatpush1.xpose.msra.mxu0 0.0
    %4363 = vmatprep.subr.mxu0 0.0
    %4364 = vmatpush1.xpose.msra.mxu0 0.0
    %4365 = vmatprep.subr.mxu0 0.0
    %4366 = vmatpush1.xpose.msra.mxu0 0.0
    %4367 = vmatprep.subr.mxu0 0.0
    %4368 = vmatpush1.xpose.msra.mxu0 0.0
    %4369 = vmatprep.subr.mxu0 0.0
    %4370 = vmatpush1.xpose.msra.mxu0 0.0
    %4371 = vmatprep.subr.mxu0 0.0
    %4372 = vmatpush1.xpose.msra.mxu0 0.0
    %4373 = vmatprep.subr.mxu0 0.0
    %4374 = vmatpush1.xpose.msra.mxu0 0.0
    %4375 = vmatprep.subr.mxu0 0.0
    %4376 = vmatpush1.xpose.msra.mxu0 0.0
    %4377 = vmatprep.subr.mxu0 0.0
    %4378 = vmatpush1.xpose.msra.mxu0 0.0
    %4379 = vmatprep.subr.mxu0 0.0
    %4380 = vmatpush1.xpose.msra.mxu0 0.0
    %4381 = vmatprep.subr.mxu0 0.0
    %4382 = vmatpush1.xpose.msra.mxu0 0.0
    %4383 = vmatprep.mubr.f32.mxu0 0.0
    %4384 = vmatmul.mubr.f32.gmra.mrb[0].mxu0 %v4309
    %v4385 = vpop.f32.mrb[0].mxu0
    %v4386 = vadd.f32 0.0, %v4385
    %v4387 = vpop.f32.mrb[0].mxu0
    %4388 = vdwg.mxu0
    %v4389 = vsel %vm238, %v4386, -inf
    %4390 = vmax.xlane.f32.xlu0 %v4389
    %v4391 = vpop.xlane.xlu0 %4390
    %v4392 = vsub.f32 %v4386, %v4391
    %v4393 = vmul.f32 %v4392, 1.442695
    %v4394 = vpow.pop %v4393
    %4399 = vrot.lane.b32.xlu0 %v4292, 64
    %v4400 = vpop.permute.xlu0 %4399
    %4401 = vrot.lane.b32.xlu0 %v4293, 64
    %v4402 = vpop.permute.xlu0 %4401
    %4403 = vrot.lane.b32.xlu0 %v4294, 64
    %v4404 = vpop.permute.xlu0 %4403
    %4405 = vrot.lane.b32.xlu0 %v4295, 64
    %v4406 = vpop.permute.xlu0 %4405
    %v4412 = vsel %vm238, %v4394, 0
    %4414 = vmatprep.subr.mxu0 0.0
    %4415 = vmatpush1.msra.mxu0 %v4400
    %4416 = vmatprep.subr.mxu0 0.0
    %4417 = vmatpush1.msra.mxu0 %v4402
    %4418 = vmatprep.subr.mxu0 0.0
    %4419 = vmatpush1.msra.mxu0 %v4404
    %4420 = vmatprep.subr.mxu0 0.0
    %4421 = vmatpush1.msra.mxu0 %v4406
    %4422 = vmatprep.subr.mxu0 0.0
    %4423 = vmatpush1.msra.mxu0 0.0
    %4424 = vmatprep.subr.mxu0 0.0
    %4425 = vmatpush1.msra.mxu0 0.0
    %4426 = vmatprep.subr.mxu0 0.0
    %4427 = vmatpush1.msra.mxu0 0.0
    %4428 = vmatprep.subr.mxu0 0.0
    %4429 = vmatpush1.msra.mxu0 0.0
    %4430 = vmatprep.subr.mxu0 0.0
    %4431 = vmatpush1.msra.mxu0 0.0
    %4432 = vmatprep.subr.mxu0 0.0
    %4433 = vmatpush1.msra.mxu0 0.0
    %4434 = vmatprep.subr.mxu0 0.0
    %4435 = vmatpush1.msra.mxu0 0.0
    %4436 = vmatprep.subr.mxu0 0.0
    %4437 = vmatpush1.msra.mxu0 0.0
    %4438 = vmatprep.subr.mxu0 0.0
    %4439 = vmatpush1.msra.mxu0 0.0
    %4440 = vmatprep.subr.mxu0 0.0
    %4441 = vmatpush1.msra.mxu0 0.0
    %4442 = vmatprep.subr.mxu0 0.0
    %4443 = vmatpush1.msra.mxu0 0.0
    %4444 = vmatprep.subr.mxu0 0.0
    %4445 = vmatpush1.msra.mxu0 0.0
    %4446 = vmatprep.subr.mxu0 0.0
    %4447 = vmatpush1.msra.mxu0 0.0
    %4448 = vmatprep.subr.mxu0 0.0
    %4449 = vmatpush1.msra.mxu0 0.0
    %4450 = vmatprep.subr.mxu0 0.0
    %4451 = vmatpush1.msra.mxu0 0.0
    %4452 = vmatprep.subr.mxu0 0.0
    %4453 = vmatpush1.msra.mxu0 0.0
    %4454 = vmatprep.subr.mxu0 0.0
    %4455 = vmatpush1.msra.mxu0 0.0
    %4456 = vmatprep.subr.mxu0 0.0
    %4457 = vmatpush1.msra.mxu0 0.0
    %4458 = vmatprep.subr.mxu0 0.0
    %4459 = vmatpush1.msra.mxu0 0.0
    %4460 = vmatprep.subr.mxu0 0.0
    %4461 = vmatpush1.msra.mxu0 0.0
    %4462 = vmatprep.subr.mxu0 0.0
    %4463 = vmatpush1.msra.mxu0 0.0
    %4464 = vmatprep.subr.mxu0 0.0
    %4465 = vmatpush1.msra.mxu0 0.0
    %4466 = vmatprep.subr.mxu0 0.0
    %4467 = vmatpush1.msra.mxu0 0.0
    %4468 = vmatprep.subr.mxu0 0.0
    %4469 = vmatpush1.msra.mxu0 0.0
    %4470 = vmatprep.subr.mxu0 0.0
    %4471 = vmatpush1.msra.mxu0 0.0
    %4472 = vmatprep.subr.mxu0 0.0
    %4473 = vmatpush1.msra.mxu0 0.0
    %4474 = vmatprep.subr.mxu0 0.0
    %4475 = vmatpush1.msra.mxu0 0.0
    %4476 = vmatprep.subr.mxu0 0.0
    %4477 = vmatpush1.msra.mxu0 0.0
    %4478 = vmatprep.mubr.f32.mxu0 0.0
    %4479 = vmatmul.mubr.f32.gmra.mrb[0].mxu0 %v4412
    %v4480 = vpop.f32.mrb[0].mxu0
    %v4481 = vadd.f32 0.0, %v4480
    %v4482 = vpop.f32.mrb[0].mxu0
    %4483 = vdwg.mxu0
    %4484 = vmatprep.subr.mxu0 0.0
    %4485 = vmatpush1.msra.mxu0 %v217
    %4486 = vmatprep.subr.mxu0 0.0
    %4487 = vmatpush1.msra.mxu0 %v218
    %4488 = vmatprep.subr.mxu0 0.0
    %4489 = vmatpush1.msra.mxu0 %v219
    %4490 = vmatprep.subr.mxu0 0.0
    %4491 = vmatpush1.msra.mxu0 %v220
    %4492 = vmatprep.subr.mxu0 0.0
    %4493 = vmatpush1.msra.mxu0 0.0
    %4494 = vmatprep.subr.mxu0 0.0
    %4495 = vmatpush1.msra.mxu0 0.0
    %4496 = vmatprep.subr.mxu0 0.0
    %4497 = vmatpush1.msra.mxu0 0.0
    %4498 = vmatprep.subr.mxu0 0.0
    %4499 = vmatpush1.msra.mxu0 0.0
    %4500 = vmatprep.subr.mxu0 0.0
    %4501 = vmatpush1.msra.mxu0 0.0
    %4502 = vmatprep.subr.mxu0 0.0
    %4503 = vmatpush1.msra.mxu0 0.0
    %4504 = vmatprep.subr.mxu0 0.0
    %4505 = vmatpush1.msra.mxu0 0.0
    %4506 = vmatprep.subr.mxu0 0.0
    %4507 = vmatpush1.msra.mxu0 0.0
    %4508 = vmatprep.subr.mxu0 0.0
    %4509 = vmatpush1.msra.mxu0 0.0
    %4510 = vmatprep.subr.mxu0 0.0
    %4511 = vmatpush1.msra.mxu0 0.0
    %4512 = vmatprep.subr.mxu0 0.0
    %4513 = vmatpush1.msra.mxu0 0.0
    %4514 = vmatprep.subr.mxu0 0.0
    %4515 = vmatpush1.msra.mxu0 0.0
    %4516 = vmatprep.subr.mxu0 0.0
    %4517 = vmatpush1.msra.mxu0 0.0
    %4518 = vmatprep.subr.mxu0 0.0
    %4519 = vmatpush1.msra.mxu0 0.0
    %4520 = vmatprep.subr.mxu0 0.0
    %4521 = vmatpush1.msra.mxu0 0.0
    %4522 = vmatprep.subr.mxu0 0.0
    %4523 = vmatpush1.msra.mxu0 0.0
    %4524 = vmatprep.subr.mxu0 0.0
    %4525 = vmatpush1.msra.mxu0 0.0
    %4526 = vmatprep.subr.mxu0 0.0
    %4527 = vmatpush1.msra.mxu0 0.0
    %4528 = vmatprep.subr.mxu0 0.0
    %4529 = vmatpush1.msra.mxu0 0.0
    %4530 = vmatprep.subr.mxu0 0.0
    %4531 = vmatpush1.msra.mxu0 0.0
    %4532 = vmatprep.subr.mxu0 0.0
    %4533 = vmatpush1.msra.mxu0 0.0
    %4534 = vmatprep.subr.mxu0 0.0
    %4535 = vmatpush1.msra.mxu0 0.0
    %4536 = vmatprep.subr.mxu0 0.0
    %4537 = vmatpush1.msra.mxu0 0.0
    %4538 = vmatprep.subr.mxu0 0.0
    %4539 = vmatpush1.msra.mxu0 0.0
    %4540 = vmatprep.subr.mxu0 0.0
    %4541 = vmatpush1.msra.mxu0 0.0
    %4542 = vmatprep.subr.mxu0 0.0
    %4543 = vmatpush1.msra.mxu0 0.0
    %4544 = vmatprep.subr.mxu0 0.0
    %4545 = vmatpush1.msra.mxu0 0.0
    %4546 = vmatprep.subr.mxu0 0.0
    %4547 = vmatpush1.msra.mxu0 0.0
    %4548 = vmatprep.mubr.f32.mxu0 0.0
    %4549 = vmatmul.mubr.f32.gmra.mrb[0].mxu0 %v4412
    %v4550 = vpop.f32.mrb[0].mxu0
    %v4551 = vadd.f32 0.0, %v4550
    %v4552 = vpop.f32.mrb[0].mxu0
    %4553 = vdwg.mxu0
    %v4554 = vrcp.pop %v4551
    %v4555 = vmul.f32 %v4481, %v4554
    %v4557 = vlaneseq
    %v4558 = vshrl.u32 %v4557, 7
    %v4559 = vsub.s32 0, %v4558
    %v4560 = vrot.slane %v4019, %v4559
    %v4563 = vsel %vm238, %v4287, 0
    %v4566 = vsel %vm238, %v4555, 0
    %4568 = vmatprep.subr.mxu0 0.0
    %4569 = vmatpush1.msra.mxu0 %v4014
    %4570 = vmatprep.subr.mxu0 0.0
    %4571 = vmatpush1.msra.mxu0 %v4015
    %4572 = vmatprep.subr.mxu0 0.0
    %4573 = vmatpush1.msra.mxu0 %v4016
    %4574 = vmatprep.subr.mxu0 0.0
    %4575 = vmatpush1.msra.mxu0 %v4017
    %4576 = vmatprep.subr.mxu0 0.0
    %4577 = vmatpush1.msra.mxu0 0.0
    %4578 = vmatprep.subr.mxu0 0.0
    %4579 = vmatpush1.msra.mxu0 0.0
    %4580 = vmatprep.subr.mxu0 0.0
    %4581 = vmatpush1.msra.mxu0 0.0
    %4582 = vmatprep.subr.mxu0 0.0
    %4583 = vmatpush1.msra.mxu0 0.0
    %4584 = vmatprep.subr.mxu0 0.0
    %4585 = vmatpush1.msra.mxu0 0.0
    %4586 = vmatprep.subr.mxu0 0.0
    %4587 = vmatpush1.msra.mxu0 0.0
    %4588 = vmatprep.subr.mxu0 0.0
    %4589 = vmatpush1.msra.mxu0 0.0
    %4590 = vmatprep.subr.mxu0 0.0
    %4591 = vmatpush1.msra.mxu0 0.0
    %4592 = vmatprep.subr.mxu0 0.0
    %4593 = vmatpush1.msra.mxu0 0.0
    %4594 = vmatprep.subr.mxu0 0.0
    %4595 = vmatpush1.msra.mxu0 0.0
    %4596 = vmatprep.subr.mxu0 0.0
    %4597 = vmatpush1.msra.mxu0 0.0
    %4598 = vmatprep.subr.mxu0 0.0
    %4599 = vmatpush1.msra.mxu0 0.0
    %4600 = vmatprep.subr.mxu0 0.0
    %4601 = vmatpush1.msra.mxu0 0.0
    %4602 = vmatprep.subr.mxu0 0.0
    %4603 = vmatpush1.msra.mxu0 0.0
    %4604 = vmatprep.subr.mxu0 0.0
    %4605 = vmatpush1.msra.mxu0 0.0
    %4606 = vmatprep.subr.mxu0 0.0
    %4607 = vmatpush1.msra.mxu0 0.0
    %4608 = vmatprep.subr.mxu0 0.0
    %4609 = vmatpush1.msra.mxu0 0.0
    %4610 = vmatprep.subr.mxu0 0.0
    %4611 = vmatpush1.msra.mxu0 0.0
    %4612 = vmatprep.subr.mxu0 0.0
    %4613 = vmatpush1.msra.mxu0 0.0
    %4614 = vmatprep.subr.mxu0 0.0
    %4615 = vmatpush1.msra.mxu0 0.0
    %4616 = vmatprep.subr.mxu0 0.0
    %4617 = vmatpush1.msra.mxu0 0.0
    %4618 = vmatprep.subr.mxu0 0.0
    %4619 = vmatpush1.msra.mxu0 0.0
    %4620 = vmatprep.subr.mxu0 0.0
    %4621 = vmatpush1.msra.mxu0 0.0
    %4622 = vmatprep.subr.mxu0 0.0
    %4623 = vmatpush1.msra.mxu0 0.0
    %4624 = vmatprep.subr.mxu0 0.0
    %4625 = vmatpush1.msra.mxu0 0.0
    %4626 = vmatprep.subr.mxu0 0.0
    %4627 = vmatpush1.msra.mxu0 0.0
    %4628 = vmatprep.subr.mxu0 0.0
    %4629 = vmatpush1.msra.mxu0 0.0
    %4630 = vmatprep.subr.mxu0 0.0
    %4631 = vmatpush1.msra.mxu0 0.0
    %4632 = vmatprep.mubr.f32.mxu0 0.0
    %4633 = vmatmul.mubr.f32.gmra.mrb[0].mxu0 %v4563
    %v4634 = vpop.f32.mrb[0].mxu0
    %v4635 = vadd.f32 %v4560, %v4634
    %v4636 = vpop.f32.mrb[0].mxu0
    %4637 = vmatprep.mubr.f32.mxu0 0.0
    %4638 = vmatmul.mubr.f32.gmra.mrb[0].mxu0 %v4566
    %v4639 = vpop.f32.mrb[0].mxu0
    %v4640 = vadd.f32 %v4560, %v4639
    %v4641 = vpop.f32.mrb[0].mxu0
    %4642 = vdwg.mxu0
    %s4643 = scalar_lea.vmem %s21, 32
    %v4644 = vld [vmem:[%s4643] sm:$0xff]
    %v4645 = vld [vmem:[%s4643 + $0x8] sm:$0xff]
    %v4646 = vld [vmem:[%s4643 + $0x10] sm:$0xff]
    %v4647 = vld [vmem:[%s4643 + $0x18] sm:$0xff]
    %s4648 = scalar_lea.vmem [#allocation10], 1
    %v4649 = vld [vmem:[%s4648] sm:$0x1]
    %v4650 = vmul.f32 %v3911, %v1078
    %v4651 = vmul.f32 %v3911, %v1080
    %v4652 = vmul.f32 %v3911, %v1082
    %v4653 = vmul.f32 %v3911, %v1084
    %v4654 = vmul.f32 %v3911, %v1094
    %v4655 = vmul.f32 %v3911, %v1096
    %v4656 = vmul.f32 %v3911, %v1098
    %v4657 = vmul.f32 %v3911, %v1100
    %4662 = vrot.lane.b32.xlu0 %v4650, 96
    %v4663 = vpop.permute.xlu0 %4662
    %4664 = vrot.lane.b32.xlu0 %v4651, 96
    %v4665 = vpop.permute.xlu0 %4664
    %4666 = vrot.lane.b32.xlu0 %v4652, 96
    %v4667 = vpop.permute.xlu0 %4666
    %4668 = vrot.lane.b32.xlu0 %v4653, 96
    %v4669 = vpop.permute.xlu0 %4668
    %v4671 = vsel %vm238, %v4005, 0
    %v4673 = vsel %vm238, %v4663, 0
    %v4675 = vsel %vm238, %v4665, 0
    %v4677 = vsel %vm238, %v4667, 0
    %v4679 = vsel %vm238, %v4669, 0
    %4681 = vmatprep.subr.mxu0 0.0
    %4682 = vmatpush1.xpose.msra.mxu0 %v4673
    %4683 = vmatprep.subr.mxu0 0.0
    %4684 = vmatpush1.xpose.msra.mxu0 %v4675
    %4685 = vmatprep.subr.mxu0 0.0
    %4686 = vmatpush1.xpose.msra.mxu0 %v4677
    %4687 = vmatprep.subr.mxu0 0.0
    %4688 = vmatpush1.xpose.msra.mxu0 %v4679
    %4689 = vmatprep.subr.mxu0 0.0
    %4690 = vmatpush1.xpose.msra.mxu0 0.0
    %4691 = vmatprep.subr.mxu0 0.0
    %4692 = vmatpush1.xpose.msra.mxu0 0.0
    %4693 = vmatprep.subr.mxu0 0.0
    %4694 = vmatpush1.xpose.msra.mxu0 0.0
    %4695 = vmatprep.subr.mxu0 0.0
    %4696 = vmatpush1.xpose.msra.mxu0 0.0
    %4697 = vmatprep.subr.mxu0 0.0
    %4698 = vmatpush1.xpose.msra.mxu0 0.0
    %4699 = vmatprep.subr.mxu0 0.0
    %4700 = vmatpush1.xpose.msra.mxu0 0.0
    %4701 = vmatprep.subr.mxu0 0.0
    %4702 = vmatpush1.xpose.msra.mxu0 0.0
    %4703 = vmatprep.subr.mxu0 0.0
    %4704 = vmatpush1.xpose.msra.mxu0 0.0
    %4705 = vmatprep.subr.mxu0 0.0
    %4706 = vmatpush1.xpose.msra.mxu0 0.0
    %4707 = vmatprep.subr.mxu0 0.0
    %4708 = vmatpush1.xpose.msra.mxu0 0.0
    %4709 = vmatprep.subr.mxu0 0.0
    %4710 = vmatpush1.xpose.msra.mxu0 0.0
    %4711 = vmatprep.subr.mxu0 0.0
    %4712 = vmatpush1.xpose.msra.mxu0 0.0
    %4713 = vmatprep.subr.mxu0 0.0
    %4714 = vmatpush1.xpose.msra.mxu0 0.0
    %4715 = vmatprep.subr.mxu0 0.0
    %4716 = vmatpush1.xpose.msra.mxu0 0.0
    %4717 = vmatprep.subr.mxu0 0.0
    %4718 = vmatpush1.xpose.msra.mxu0 0.0
    %4719 = vmatprep.subr.mxu0 0.0
    %4720 = vmatpush1.xpose.msra.mxu0 0.0
    %4721 = vmatprep.subr.mxu0 0.0
    %4722 = vmatpush1.xpose.msra.mxu0 0.0
    %4723 = vmatprep.subr.mxu0 0.0
    %4724 = vmatpush1.xpose.msra.mxu0 0.0
    %4725 = vmatprep.subr.mxu0 0.0
    %4726 = vmatpush1.xpose.msra.mxu0 0.0
    %4727 = vmatprep.subr.mxu0 0.0
    %4728 = vmatpush1.xpose.msra.mxu0 0.0
    %4729 = vmatprep.subr.mxu0 0.0
    %4730 = vmatpush1.xpose.msra.mxu0 0.0
    %4731 = vmatprep.subr.mxu0 0.0
    %4732 = vmatpush1.xpose.msra.mxu0 0.0
    %4733 = vmatprep.subr.mxu0 0.0
    %4734 = vmatpush1.xpose.msra.mxu0 0.0
    %4735 = vmatprep.subr.mxu0 0.0
    %4736 = vmatpush1.xpose.msra.mxu0 0.0
    %4737 = vmatprep.subr.mxu0 0.0
    %4738 = vmatpush1.xpose.msra.mxu0 0.0
    %4739 = vmatprep.subr.mxu0 0.0
    %4740 = vmatpush1.xpose.msra.mxu0 0.0
    %4741 = vmatprep.subr.mxu0 0.0
    %4742 = vmatpush1.xpose.msra.mxu0 0.0
    %4743 = vmatprep.subr.mxu0 0.0
    %4744 = vmatpush1.xpose.msra.mxu0 0.0
    %4745 = vmatprep.mubr.f32.mxu0 0.0
    %4746 = vmatmul.mubr.f32.gmra.mrb[0].mxu0 %v4671
    %v4747 = vpop.f32.mrb[0].mxu0
    %v4748 = vadd.f32 0.0, %v4747
    %v4749 = vpop.f32.mrb[0].mxu0
    %4750 = vdwg.mxu0
    %v4751 = vsel %vm238, %v4748, -inf
    %4752 = vmax.xlane.f32.xlu0 %v4751
    %v4753 = vpop.xlane.xlu0 %4752
    %v4754 = vsub.f32 %v4748, %v4753
    %v4755 = vmul.f32 %v4754, 1.442695
    %v4756 = vpow.pop %v4755
    %4761 = vrot.lane.b32.xlu0 %v4654, 64
    %v4762 = vpop.permute.xlu0 %4761
    %4763 = vrot.lane.b32.xlu0 %v4655, 64
    %v4764 = vpop.permute.xlu0 %4763
    %4765 = vrot.lane.b32.xlu0 %v4656, 64
    %v4766 = vpop.permute.xlu0 %4765
    %4767 = vrot.lane.b32.xlu0 %v4657, 64
    %v4768 = vpop.permute.xlu0 %4767
    %v4774 = vsel %vm238, %v4756, 0
    %4776 = vmatprep.subr.mxu0 0.0
    %4777 = vmatpush1.msra.mxu0 %v4762
    %4778 = vmatprep.subr.mxu0 0.0
    %4779 = vmatpush1.msra.mxu0 %v4764
    %4780 = vmatprep.subr.mxu0 0.0
    %4781 = vmatpush1.msra.mxu0 %v4766
    %4782 = vmatprep.subr.mxu0 0.0
    %4783 = vmatpush1.msra.mxu0 %v4768
    %4784 = vmatprep.subr.mxu0 0.0
    %4785 = vmatpush1.msra.mxu0 0.0
    %4786 = vmatprep.subr.mxu0 0.0
    %4787 = vmatpush1.msra.mxu0 0.0
    %4788 = vmatprep.subr.mxu0 0.0
    %4789 = vmatpush1.msra.mxu0 0.0
    %4790 = vmatprep.subr.mxu0 0.0
    %4791 = vmatpush1.msra.mxu0 0.0
    %4792 = vmatprep.subr.mxu0 0.0
    %4793 = vmatpush1.msra.mxu0 0.0
    %4794 = vmatprep.subr.mxu0 0.0
    %4795 = vmatpush1.msra.mxu0 0.0
    %4796 = vmatprep.subr.mxu0 0.0
    %4797 = vmatpush1.msra.mxu0 0.0
    %4798 = vmatprep.subr.mxu0 0.0
    %4799 = vmatpush1.msra.mxu0 0.0
    %4800 = vmatprep.subr.mxu0 0.0
    %4801 = vmatpush1.msra.mxu0 0.0
    %4802 = vmatprep.subr.mxu0 0.0
    %4803 = vmatpush1.msra.mxu0 0.0
    %4804 = vmatprep.subr.mxu0 0.0
    %4805 = vmatpush1.msra.mxu0 0.0
    %4806 = vmatprep.subr.mxu0 0.0
    %4807 = vmatpush1.msra.mxu0 0.0
    %4808 = vmatprep.subr.mxu0 0.0
    %4809 = vmatpush1.msra.mxu0 0.0
    %4810 = vmatprep.subr.mxu0 0.0
    %4811 = vmatpush1.msra.mxu0 0.0
    %4812 = vmatprep.subr.mxu0 0.0
    %4813 = vmatpush1.msra.mxu0 0.0
    %4814 = vmatprep.subr.mxu0 0.0
    %4815 = vmatpush1.msra.mxu0 0.0
    %4816 = vmatprep.subr.mxu0 0.0
    %4817 = vmatpush1.msra.mxu0 0.0
    %4818 = vmatprep.subr.mxu0 0.0
    %4819 = vmatpush1.msra.mxu0 0.0
    %4820 = vmatprep.subr.mxu0 0.0
    %4821 = vmatpush1.msra.mxu0 0.0
    %4822 = vmatprep.subr.mxu0 0.0
    %4823 = vmatpush1.msra.mxu0 0.0
    %4824 = vmatprep.subr.mxu0 0.0
    %4825 = vmatpush1.msra.mxu0 0.0
    %4826 = vmatprep.subr.mxu0 0.0
    %4827 = vmatpush1.msra.mxu0 0.0
    %4828 = vmatprep.subr.mxu0 0.0
    %4829 = vmatpush1.msra.mxu0 0.0
    %4830 = vmatprep.subr.mxu0 0.0
    %4831 = vmatpush1.msra.mxu0 0.0
    %4832 = vmatprep.subr.mxu0 0.0
    %4833 = vmatpush1.msra.mxu0 0.0
    %4834 = vmatprep.subr.mxu0 0.0
    %4835 = vmatpush1.msra.mxu0 0.0
    %4836 = vmatprep.subr.mxu0 0.0
    %4837 = vmatpush1.msra.mxu0 0.0
    %4838 = vmatprep.subr.mxu0 0.0
    %4839 = vmatpush1.msra.mxu0 0.0
    %4840 = vmatprep.mubr.f32.mxu0 0.0
    %4841 = vmatmul.mubr.f32.gmra.mrb[0].mxu0 %v4774
    %v4842 = vpop.f32.mrb[0].mxu0
    %v4843 = vadd.f32 0.0, %v4842
    %v4844 = vpop.f32.mrb[0].mxu0
    %4845 = vdwg.mxu0
    %4846 = vmatprep.subr.mxu0 0.0
    %4847 = vmatpush1.msra.mxu0 %v213
    %4848 = vmatprep.subr.mxu0 0.0
    %4849 = vmatpush1.msra.mxu0 %v214
    %4850 = vmatprep.subr.mxu0 0.0
    %4851 = vmatpush1.msra.mxu0 %v215
    %4852 = vmatprep.subr.mxu0 0.0
    %4853 = vmatpush1.msra.mxu0 %v216
    %4854 = vmatprep.subr.mxu0 0.0
    %4855 = vmatpush1.msra.mxu0 0.0
    %4856 = vmatprep.subr.mxu0 0.0
    %4857 = vmatpush1.msra.mxu0 0.0
    %4858 = vmatprep.subr.mxu0 0.0
    %4859 = vmatpush1.msra.mxu0 0.0
    %4860 = vmatprep.subr.mxu0 0.0
    %4861 = vmatpush1.msra.mxu0 0.0
    %4862 = vmatprep.subr.mxu0 0.0
    %4863 = vmatpush1.msra.mxu0 0.0
    %4864 = vmatprep.subr.mxu0 0.0
    %4865 = vmatpush1.msra.mxu0 0.0
    %4866 = vmatprep.subr.mxu0 0.0
    %4867 = vmatpush1.msra.mxu0 0.0
    %4868 = vmatprep.subr.mxu0 0.0
    %4869 = vmatpush1.msra.mxu0 0.0
    %4870 = vmatprep.subr.mxu0 0.0
    %4871 = vmatpush1.msra.mxu0 0.0
    %4872 = vmatprep.subr.mxu0 0.0
    %4873 = vmatpush1.msra.mxu0 0.0
    %4874 = vmatprep.subr.mxu0 0.0
    %4875 = vmatpush1.msra.mxu0 0.0
    %4876 = vmatprep.subr.mxu0 0.0
    %4877 = vmatpush1.msra.mxu0 0.0
    %4878 = vmatprep.subr.mxu0 0.0
    %4879 = vmatpush1.msra.mxu0 0.0
    %4880 = vmatprep.subr.mxu0 0.0
    %4881 = vmatpush1.msra.mxu0 0.0
    %4882 = vmatprep.subr.mxu0 0.0
    %4883 = vmatpush1.msra.mxu0 0.0
    %4884 = vmatprep.subr.mxu0 0.0
    %4885 = vmatpush1.msra.mxu0 0.0
    %4886 = vmatprep.subr.mxu0 0.0
    %4887 = vmatpush1.msra.mxu0 0.0
    %4888 = vmatprep.subr.mxu0 0.0
    %4889 = vmatpush1.msra.mxu0 0.0
    %4890 = vmatprep.subr.mxu0 0.0
    %4891 = vmatpush1.msra.mxu0 0.0
    %4892 = vmatprep.subr.mxu0 0.0
    %4893 = vmatpush1.msra.mxu0 0.0
    %4894 = vmatprep.subr.mxu0 0.0
    %4895 = vmatpush1.msra.mxu0 0.0
    %4896 = vmatprep.subr.mxu0 0.0
    %4897 = vmatpush1.msra.mxu0 0.0
    %4898 = vmatprep.subr.mxu0 0.0
    %4899 = vmatpush1.msra.mxu0 0.0
    %4900 = vmatprep.subr.mxu0 0.0
    %4901 = vmatpush1.msra.mxu0 0.0
    %4902 = vmatprep.subr.mxu0 0.0
    %4903 = vmatpush1.msra.mxu0 0.0
    %4904 = vmatprep.subr.mxu0 0.0
    %4905 = vmatpush1.msra.mxu0 0.0
    %4906 = vmatprep.subr.mxu0 0.0
    %4907 = vmatpush1.msra.mxu0 0.0
    %4908 = vmatprep.subr.mxu0 0.0
    %4909 = vmatpush1.msra.mxu0 0.0
    %4910 = vmatprep.mubr.f32.mxu0 0.0
    %4911 = vmatmul.mubr.f32.gmra.mrb[0].mxu0 %v4774
    %v4912 = vpop.f32.mrb[0].mxu0
    %v4913 = vadd.f32 0.0, %v4912
    %v4914 = vpop.f32.mrb[0].mxu0
    %4915 = vdwg.mxu0
    %v4916 = vrcp.pop %v4913
    %v4917 = vmul.f32 %v4843, %v4916
    %v4918 = vmul.f32 %v3916, %v1078
    %v4919 = vmul.f32 %v3916, %v1080
    %v4920 = vmul.f32 %v3916, %v1082
    %v4921 = vmul.f32 %v3916, %v1084
    %v4922 = vmul.f32 %v3916, %v1094
    %v4923 = vmul.f32 %v3916, %v1096
    %v4924 = vmul.f32 %v3916, %v1098
    %v4925 = vmul.f32 %v3916, %v1100
    %4930 = vrot.lane.b32.xlu0 %v4918, 96
    %v4931 = vpop.permute.xlu0 %4930
    %4932 = vrot.lane.b32.xlu0 %v4919, 96
    %v4933 = vpop.permute.xlu0 %4932
    %4934 = vrot.lane.b32.xlu0 %v4920, 96
    %v4935 = vpop.permute.xlu0 %4934
    %4936 = vrot.lane.b32.xlu0 %v4921, 96
    %v4937 = vpop.permute.xlu0 %4936
    %v4939 = vsel %vm238, %v4010, 0
    %v4941 = vsel %vm238, %v4931, 0
    %v4943 = vsel %vm238, %v4933, 0
    %v4945 = vsel %vm238, %v4935, 0
    %v4947 = vsel %vm238, %v4937, 0
    %4949 = vmatprep.subr.mxu0 0.0
    %4950 = vmatpush1.xpose.msra.mxu0 %v4941
    %4951 = vmatprep.subr.mxu0 0.0
    %4952 = vmatpush1.xpose.msra.mxu0 %v4943
    %4953 = vmatprep.subr.mxu0 0.0
    %4954 = vmatpush1.xpose.msra.mxu0 %v4945
    %4955 = vmatprep.subr.mxu0 0.0
    %4956 = vmatpush1.xpose.msra.mxu0 %v4947
    %4957 = vmatprep.subr.mxu0 0.0
    %4958 = vmatpush1.xpose.msra.mxu0 0.0
    %4959 = vmatprep.subr.mxu0 0.0
    %4960 = vmatpush1.xpose.msra.mxu0 0.0
    %4961 = vmatprep.subr.mxu0 0.0
    %4962 = vmatpush1.xpose.msra.mxu0 0.0
    %4963 = vmatprep.subr.mxu0 0.0
    %4964 = vmatpush1.xpose.msra.mxu0 0.0
    %4965 = vmatprep.subr.mxu0 0.0
    %4966 = vmatpush1.xpose.msra.mxu0 0.0
    %4967 = vmatprep.subr.mxu0 0.0
    %4968 = vmatpush1.xpose.msra.mxu0 0.0
    %4969 = vmatprep.subr.mxu0 0.0
    %4970 = vmatpush1.xpose.msra.mxu0 0.0
    %4971 = vmatprep.subr.mxu0 0.0
    %4972 = vmatpush1.xpose.msra.mxu0 0.0
    %4973 = vmatprep.subr.mxu0 0.0
    %4974 = vmatpush1.xpose.msra.mxu0 0.0
    %4975 = vmatprep.subr.mxu0 0.0
    %4976 = vmatpush1.xpose.msra.mxu0 0.0
    %4977 = vmatprep.subr.mxu0 0.0
    %4978 = vmatpush1.xpose.msra.mxu0 0.0
    %4979 = vmatprep.subr.mxu0 0.0
    %4980 = vmatpush1.xpose.msra.mxu0 0.0
    %4981 = vmatprep.subr.mxu0 0.0
    %4982 = vmatpush1.xpose.msra.mxu0 0.0
    %4983 = vmatprep.subr.mxu0 0.0
    %4984 = vmatpush1.xpose.msra.mxu0 0.0
    %4985 = vmatprep.subr.mxu0 0.0
    %4986 = vmatpush1.xpose.msra.mxu0 0.0
    %4987 = vmatprep.subr.mxu0 0.0
    %4988 = vmatpush1.xpose.msra.mxu0 0.0
    %4989 = vmatprep.subr.mxu0 0.0
    %4990 = vmatpush1.xpose.msra.mxu0 0.0
    %4991 = vmatprep.subr.mxu0 0.0
    %4992 = vmatpush1.xpose.msra.mxu0 0.0
    %4993 = vmatprep.subr.mxu0 0.0
    %4994 = vmatpush1.xpose.msra.mxu0 0.0
    %4995 = vmatprep.subr.mxu0 0.0
    %4996 = vmatpush1.xpose.msra.mxu0 0.0
    %4997 = vmatprep.subr.mxu0 0.0
    %4998 = vmatpush1.xpose.msra.mxu0 0.0
    %4999 = vmatprep.subr.mxu0 0.0
    %5000 = vmatpush1.xpose.msra.mxu0 0.0
    %5001 = vmatprep.subr.mxu0 0.0
    %5002 = vmatpush1.xpose.msra.mxu0 0.0
    %5003 = vmatprep.subr.mxu0 0.0
    %5004 = vmatpush1.xpose.msra.mxu0 0.0
    %5005 = vmatprep.subr.mxu0 0.0
    %5006 = vmatpush1.xpose.msra.mxu0 0.0
    %5007 = vmatprep.subr.mxu0 0.0
    %5008 = vmatpush1.xpose.msra.mxu0 0.0
    %5009 = vmatprep.subr.mxu0 0.0
    %5010 = vmatpush1.xpose.msra.mxu0 0.0
    %5011 = vmatprep.subr.mxu0 0.0
    %5012 = vmatpush1.xpose.msra.mxu0 0.0
    %5013 = vmatprep.mubr.f32.mxu0 0.0
    %5014 = vmatmul.mubr.f32.gmra.mrb[0].mxu0 %v4939
    %v5015 = vpop.f32.mrb[0].mxu0
    %v5016 = vadd.f32 0.0, %v5015
    %v5017 = vpop.f32.mrb[0].mxu0
    %5018 = vdwg.mxu0
    %v5019 = vsel %vm238, %v5016, -inf
    %5020 = vmax.xlane.f32.xlu0 %v5019
    %v5021 = vpop.xlane.xlu0 %5020
    %v5022 = vsub.f32 %v5016, %v5021
    %v5023 = vmul.f32 %v5022, 1.442695
    %v5024 = vpow.pop %v5023
    %5029 = vrot.lane.b32.xlu0 %v4922, 64
    %v5030 = vpop.permute.xlu0 %5029
    %5031 = vrot.lane.b32.xlu0 %v4923, 64
    %v5032 = vpop.permute.xlu0 %5031
    %5033 = vrot.lane.b32.xlu0 %v4924, 64
    %v5034 = vpop.permute.xlu0 %5033
    %5035 = vrot.lane.b32.xlu0 %v4925, 64
    %v5036 = vpop.permute.xlu0 %5035
    %v5042 = vsel %vm238, %v5024, 0
    %5044 = vmatprep.subr.mxu0 0.0
    %5045 = vmatpush1.msra.mxu0 %v5030
    %5046 = vmatprep.subr.mxu0 0.0
    %5047 = vmatpush1.msra.mxu0 %v5032
    %5048 = vmatprep.subr.mxu0 0.0
    %5049 = vmatpush1.msra.mxu0 %v5034
    %5050 = vmatprep.subr.mxu0 0.0
    %5051 = vmatpush1.msra.mxu0 %v5036
    %5052 = vmatprep.subr.mxu0 0.0
    %5053 = vmatpush1.msra.mxu0 0.0
    %5054 = vmatprep.subr.mxu0 0.0
    %5055 = vmatpush1.msra.mxu0 0.0
    %5056 = vmatprep.subr.mxu0 0.0
    %5057 = vmatpush1.msra.mxu0 0.0
    %5058 = vmatprep.subr.mxu0 0.0
    %5059 = vmatpush1.msra.mxu0 0.0
    %5060 = vmatprep.subr.mxu0 0.0
    %5061 = vmatpush1.msra.mxu0 0.0
    %5062 = vmatprep.subr.mxu0 0.0
    %5063 = vmatpush1.msra.mxu0 0.0
    %5064 = vmatprep.subr.mxu0 0.0
    %5065 = vmatpush1.msra.mxu0 0.0
    %5066 = vmatprep.subr.mxu0 0.0
    %5067 = vmatpush1.msra.mxu0 0.0
    %5068 = vmatprep.subr.mxu0 0.0
    %5069 = vmatpush1.msra.mxu0 0.0
    %5070 = vmatprep.subr.mxu0 0.0
    %5071 = vmatpush1.msra.mxu0 0.0
    %5072 = vmatprep.subr.mxu0 0.0
    %5073 = vmatpush1.msra.mxu0 0.0
    %5074 = vmatprep.subr.mxu0 0.0
    %5075 = vmatpush1.msra.mxu0 0.0
    %5076 = vmatprep.subr.mxu0 0.0
    %5077 = vmatpush1.msra.mxu0 0.0
    %5078 = vmatprep.subr.mxu0 0.0
    %5079 = vmatpush1.msra.mxu0 0.0
    %5080 = vmatprep.subr.mxu0 0.0
    %5081 = vmatpush1.msra.mxu0 0.0
    %5082 = vmatprep.subr.mxu0 0.0
    %5083 = vmatpush1.msra.mxu0 0.0
    %5084 = vmatprep.subr.mxu0 0.0
    %5085 = vmatpush1.msra.mxu0 0.0
    %5086 = vmatprep.subr.mxu0 0.0
    %5087 = vmatpush1.msra.mxu0 0.0
    %5088 = vmatprep.subr.mxu0 0.0
    %5089 = vmatpush1.msra.mxu0 0.0
    %5090 = vmatprep.subr.mxu0 0.0
    %5091 = vmatpush1.msra.mxu0 0.0
    %5092 = vmatprep.subr.mxu0 0.0
    %5093 = vmatpush1.msra.mxu0 0.0
    %5094 = vmatprep.subr.mxu0 0.0
    %5095 = vmatpush1.msra.mxu0 0.0
    %5096 = vmatprep.subr.mxu0 0.0
    %5097 = vmatpush1.msra.mxu0 0.0
    %5098 = vmatprep.subr.mxu0 0.0
    %5099 = vmatpush1.msra.mxu0 0.0
    %5100 = vmatprep.subr.mxu0 0.0
    %5101 = vmatpush1.msra.mxu0 0.0
    %5102 = vmatprep.subr.mxu0 0.0
    %5103 = vmatpush1.msra.mxu0 0.0
    %5104 = vmatprep.subr.mxu0 0.0
    %5105 = vmatpush1.msra.mxu0 0.0
    %5106 = vmatprep.subr.mxu0 0.0
    %5107 = vmatpush1.msra.mxu0 0.0
    %5108 = vmatprep.mubr.f32.mxu0 0.0
    %5109 = vmatmul.mubr.f32.gmra.mrb[0].mxu0 %v5042
    %v5110 = vpop.f32.mrb[0].mxu0
    %v5111 = vadd.f32 0.0, %v5110
    %v5112 = vpop.f32.mrb[0].mxu0
    %5113 = vdwg.mxu0
    %5114 = vmatprep.subr.mxu0 0.0
    %5115 = vmatpush1.msra.mxu0 %v213
    %5116 = vmatprep.subr.mxu0 0.0
    %5117 = vmatpush1.msra.mxu0 %v214
    %5118 = vmatprep.subr.mxu0 0.0
    %5119 = vmatpush1.msra.mxu0 %v215
    %5120 = vmatprep.subr.mxu0 0.0
    %5121 = vmatpush1.msra.mxu0 %v216
    %5122 = vmatprep.subr.mxu0 0.0
    %5123 = vmatpush1.msra.mxu0 0.0
    %5124 = vmatprep.subr.mxu0 0.0
    %5125 = vmatpush1.msra.mxu0 0.0
    %5126 = vmatprep.subr.mxu0 0.0
    %5127 = vmatpush1.msra.mxu0 0.0
    %5128 = vmatprep.subr.mxu0 0.0
    %5129 = vmatpush1.msra.mxu0 0.0
    %5130 = vmatprep.subr.mxu0 0.0
    %5131 = vmatpush1.msra.mxu0 0.0
    %5132 = vmatprep.subr.mxu0 0.0
    %5133 = vmatpush1.msra.mxu0 0.0
    %5134 = vmatprep.subr.mxu0 0.0
    %5135 = vmatpush1.msra.mxu0 0.0
    %5136 = vmatprep.subr.mxu0 0.0
    %5137 = vmatpush1.msra.mxu0 0.0
    %5138 = vmatprep.subr.mxu0 0.0
    %5139 = vmatpush1.msra.mxu0 0.0
    %5140 = vmatprep.subr.mxu0 0.0
    %5141 = vmatpush1.msra.mxu0 0.0
    %5142 = vmatprep.subr.mxu0 0.0
    %5143 = vmatpush1.msra.mxu0 0.0
    %5144 = vmatprep.subr.mxu0 0.0
    %5145 = vmatpush1.msra.mxu0 0.0
    %5146 = vmatprep.subr.mxu0 0.0
    %5147 = vmatpush1.msra.mxu0 0.0
    %5148 = vmatprep.subr.mxu0 0.0
    %5149 = vmatpush1.msra.mxu0 0.0
    %5150 = vmatprep.subr.mxu0 0.0
    %5151 = vmatpush1.msra.mxu0 0.0
    %5152 = vmatprep.subr.mxu0 0.0
    %5153 = vmatpush1.msra.mxu0 0.0
    %5154 = vmatprep.subr.mxu0 0.0
    %5155 = vmatpush1.msra.mxu0 0.0
    %5156 = vmatprep.subr.mxu0 0.0
    %5157 = vmatpush1.msra.mxu0 0.0
    %5158 = vmatprep.subr.mxu0 0.0
    %5159 = vmatpush1.msra.mxu0 0.0
    %5160 = vmatprep.subr.mxu0 0.0
    %5161 = vmatpush1.msra.mxu0 0.0
    %5162 = vmatprep.subr.mxu0 0.0
    %5163 = vmatpush1.msra.mxu0 0.0
    %5164 = vmatprep.subr.mxu0 0.0
    %5165 = vmatpush1.msra.mxu0 0.0
    %5166 = vmatprep.subr.mxu0 0.0
    %5167 = vmatpush1.msra.mxu0 0.0
    %5168 = vmatprep.subr.mxu0 0.0
    %5169 = vmatpush1.msra.mxu0 0.0
    %5170 = vmatprep.subr.mxu0 0.0
    %5171 = vmatpush1.msra.mxu0 0.0
    %5172 = vmatprep.subr.mxu0 0.0
    %5173 = vmatpush1.msra.mxu0 0.0
    %5174 = vmatprep.subr.mxu0 0.0
    %5175 = vmatpush1.msra.mxu0 0.0
    %5176 = vmatprep.subr.mxu0 0.0
    %5177 = vmatpush1.msra.mxu0 0.0
    %5178 = vmatprep.mubr.f32.mxu0 0.0
    %5179 = vmatmul.mubr.f32.gmra.mrb[0].mxu0 %v5042
    %v5180 = vpop.f32.mrb[0].mxu0
    %v5181 = vadd.f32 0.0, %v5180
    %v5182 = vpop.f32.mrb[0].mxu0
    %5183 = vdwg.mxu0
    %v5184 = vrcp.pop %v5181
    %v5185 = vmul.f32 %v5111, %v5184
    %v5187 = vlaneseq
    %v5188 = vshrl.u32 %v5187, 7
    %v5189 = vsub.s32 0, %v5188
    %v5190 = vrot.slane %v4649, %v5189
    %v5193 = vsel %vm238, %v4917, 0
    %v5196 = vsel %vm238, %v5185, 0
    %5198 = vmatprep.subr.mxu0 0.0
    %5199 = vmatpush1.msra.mxu0 %v4644
    %5200 = vmatprep.subr.mxu0 0.0
    %5201 = vmatpush1.msra.mxu0 %v4645
    %5202 = vmatprep.subr.mxu0 0.0
    %5203 = vmatpush1.msra.mxu0 %v4646
    %5204 = vmatprep.subr.mxu0 0.0
    %5205 = vmatpush1.msra.mxu0 %v4647
    %5206 = vmatprep.subr.mxu0 0.0
    %5207 = vmatpush1.msra.mxu0 0.0
    %5208 = vmatprep.subr.mxu0 0.0
    %5209 = vmatpush1.msra.mxu0 0.0
    %5210 = vmatprep.subr.mxu0 0.0
    %5211 = vmatpush1.msra.mxu0 0.0
    %5212 = vmatprep.subr.mxu0 0.0
    %5213 = vmatpush1.msra.mxu0 0.0
    %5214 = vmatprep.subr.mxu0 0.0
    %5215 = vmatpush1.msra.mxu0 0.0
    %5216 = vmatprep.subr.mxu0 0.0
    %5217 = vmatpush1.msra.mxu0 0.0
    %5218 = vmatprep.subr.mxu0 0.0
    %5219 = vmatpush1.msra.mxu0 0.0
    %5220 = vmatprep.subr.mxu0 0.0
    %5221 = vmatpush1.msra.mxu0 0.0
    %5222 = vmatprep.subr.mxu0 0.0
    %5223 = vmatpush1.msra.mxu0 0.0
    %5224 = vmatprep.subr.mxu0 0.0
    %5225 = vmatpush1.msra.mxu0 0.0
    %5226 = vmatprep.subr.mxu0 0.0
    %5227 = vmatpush1.msra.mxu0 0.0
    %5228 = vmatprep.subr.mxu0 0.0
    %5229 = vmatpush1.msra.mxu0 0.0
    %5230 = vmatprep.subr.mxu0 0.0
    %5231 = vmatpush1.msra.mxu0 0.0
    %5232 = vmatprep.subr.mxu0 0.0
    %5233 = vmatpush1.msra.mxu0 0.0
    %5234 = vmatprep.subr.mxu0 0.0
    %5235 = vmatpush1.msra.mxu0 0.0
    %5236 = vmatprep.subr.mxu0 0.0
    %5237 = vmatpush1.msra.mxu0 0.0
    %5238 = vmatprep.subr.mxu0 0.0
    %5239 = vmatpush1.msra.mxu0 0.0
    %5240 = vmatprep.subr.mxu0 0.0
    %5241 = vmatpush1.msra.mxu0 0.0
    %5242 = vmatprep.subr.mxu0 0.0
    %5243 = vmatpush1.msra.mxu0 0.0
    %5244 = vmatprep.subr.mxu0 0.0
    %5245 = vmatpush1.msra.mxu0 0.0
    %5246 = vmatprep.subr.mxu0 0.0
    %5247 = vmatpush1.msra.mxu0 0.0
    %5248 = vmatprep.subr.mxu0 0.0
    %5249 = vmatpush1.msra.mxu0 0.0
    %5250 = vmatprep.subr.mxu0 0.0
    %5251 = vmatpush1.msra.mxu0 0.0
    %5252 = vmatprep.subr.mxu0 0.0
    %5253 = vmatpush1.msra.mxu0 0.0
    %5254 = vmatprep.subr.mxu0 0.0
    %5255 = vmatpush1.msra.mxu0 0.0
    %5256 = vmatprep.subr.mxu0 0.0
    %5257 = vmatpush1.msra.mxu0 0.0
    %5258 = vmatprep.subr.mxu0 0.0
    %5259 = vmatpush1.msra.mxu0 0.0
    %5260 = vmatprep.subr.mxu0 0.0
    %5261 = vmatpush1.msra.mxu0 0.0
    %5262 = vmatprep.mubr.f32.mxu0 0.0
    %5263 = vmatmul.mubr.f32.gmra.mrb[0].mxu0 %v5193
    %v5264 = vpop.f32.mrb[0].mxu0
    %v5265 = vadd.f32 %v5190, %v5264
    %v5266 = vpop.f32.mrb[0].mxu0
    %5267 = vmatprep.mubr.f32.mxu0 0.0
    %5268 = vmatmul.mubr.f32.gmra.mrb[0].mxu0 %v5196
    %v5269 = vpop.f32.mrb[0].mxu0
    %v5270 = vadd.f32 %v5190, %v5269
    %v5271 = vpop.f32.mrb[0].mxu0
    %5272 = vdwg.mxu0
    %v5273 = vadd.f32 %v4635, %v2771
    %v5274 = vadd.f32 %v4640, %v2772
    %v5275 = vsel %vm238, %v5273, 0.0
    %5276 = vadd.xlane.f32.xlu0 %v5275
    %v5277 = vpop.xlane.xlu0 %5276
    %v5278 = vsel %vm238, %v5274, 0.0
    %5279 = vadd.xlane.f32.xlu0 %v5278
    %v5280 = vpop.xlane.xlu0 %5279
    %v5281 = vmul.f32 %v5277, %v1732
    %v5282 = vmul.f32 %v5280, %v1732
    %v5283 = vsub.f32 %v5273, %v5281
    %v5284 = vsub.f32 %v5274, %v5282
    %v5285 = vmul.f32 %v5283, %v5283
    %v5286 = vmul.f32 %v5284, %v5284
    %v5287 = vsel %vm238, %v5285, 0.0
    %5288 = vadd.xlane.f32.xlu0 %v5287
    %v5289 = vpop.xlane.xlu0 %5288
    %v5290 = vsel %vm238, %v5286, 0.0
    %5291 = vadd.xlane.f32.xlu0 %v5290
    %v5292 = vpop.xlane.xlu0 %5291
    %v5293 = vmul.f32 %v5289, %v1732
    %v5294 = vmul.f32 %v5292, %v1732
    %v5295 = vadd.f32 %v5293, 1e-12
    %v5296 = vadd.f32 %v5294, 1e-12
    %v5297 = vrsqrt.pop %v5295
    %v5298 = vrsqrt.pop %v5296
    %v5299 = vmul.f32 %v5283, %v5297
    %v5300 = vmul.f32 %v5284, %v5298
    %v5301 = vlaneseq
    %v5302 = vshrl.u32 %v5301, 7
    %v5303 = vsub.s32 0, %v5302
    %v5304 = vrot.slane %v3822, %v5303
    %v5305 = vmul.f32 %v5299, %v5304
    %v5306 = vmul.f32 %v5300, %v5304
    %v5307 = vlaneseq
    %v5308 = vshrl.u32 %v5307, 7
    %v5309 = vsub.s32 0, %v5308
    %v5310 = vrot.slane %v3824, %v5309
    %v5311 = vadd.f32 %v5305, %v5310
    %v5312 = vadd.f32 %v5306, %v5310
    %s5313 = scalar_lea.vmem %s25, 32
    %v5314 = vld [vmem:[%s5313] sm:$0xff]
    %v5315 = vld [vmem:[%s5313 + $0x8] sm:$0xff]
    %v5316 = vld [vmem:[%s5313 + $0x10] sm:$0xff]
    %v5317 = vld [vmem:[%s5313 + $0x18] sm:$0xff]
    %s5318 = scalar_lea.vmem [#allocation11], 1
    %v5319 = vld [vmem:[%s5318] sm:$0x1]
    %v5321 = vlaneseq
    %v5322 = vshrl.u32 %v5321, 7
    %v5323 = vsub.s32 0, %v5322
    %v5324 = vrot.slane %v5319, %v5323
    %v5327 = vsel %vm238, %v5311, 0
    %v5330 = vsel %vm238, %v5312, 0
    %5332 = vmatprep.subr.mxu0 0.0
    %5333 = vmatpush1.msra.mxu0 %v5314
    %5334 = vmatprep.subr.mxu0 0.0
    %5335 = vmatpush1.msra.mxu0 %v5315
    %5336 = vmatprep.subr.mxu0 0.0
    %5337 = vmatpush1.msra.mxu0 %v5316
    %5338 = vmatprep.subr.mxu0 0.0
    %5339 = vmatpush1.msra.mxu0 %v5317
    %5340 = vmatprep.subr.mxu0 0.0
    %5341 = vmatpush1.msra.mxu0 0.0
    %5342 = vmatprep.subr.mxu0 0.0
    %5343 = vmatpush1.msra.mxu0 0.0
    %5344 = vmatprep.subr.mxu0 0.0
    %5345 = vmatpush1.msra.mxu0 0.0
    %5346 = vmatprep.subr.mxu0 0.0
    %5347 = vmatpush1.msra.mxu0 0.0
    %5348 = vmatprep.subr.mxu0 0.0
    %5349 = vmatpush1.msra.mxu0 0.0
    %5350 = vmatprep.subr.mxu0 0.0
    %5351 = vmatpush1.msra.mxu0 0.0
    %5352 = vmatprep.subr.mxu0 0.0
    %5353 = vmatpush1.msra.mxu0 0.0
    %5354 = vmatprep.subr.mxu0 0.0
    %5355 = vmatpush1.msra.mxu0 0.0
    %5356 = vmatprep.subr.mxu0 0.0
    %5357 = vmatpush1.msra.mxu0 0.0
    %5358 = vmatprep.subr.mxu0 0.0
    %5359 = vmatpush1.msra.mxu0 0.0
    %5360 = vmatprep.subr.mxu0 0.0
    %5361 = vmatpush1.msra.mxu0 0.0
    %5362 = vmatprep.subr.mxu0 0.0
    %5363 = vmatpush1.msra.mxu0 0.0
    %5364 = vmatprep.subr.mxu0 0.0
    %5365 = vmatpush1.msra.mxu0 0.0
    %5366 = vmatprep.subr.mxu0 0.0
    %5367 = vmatpush1.msra.mxu0 0.0
    %5368 = vmatprep.subr.mxu0 0.0
    %5369 = vmatpush1.msra.mxu0 0.0
    %5370 = vmatprep.subr.mxu0 0.0
    %5371 = vmatpush1.msra.mxu0 0.0
    %5372 = vmatprep.subr.mxu0 0.0
    %5373 = vmatpush1.msra.mxu0 0.0
    %5374 = vmatprep.subr.mxu0 0.0
    %5375 = vmatpush1.msra.mxu0 0.0
    %5376 = vmatprep.subr.mxu0 0.0
    %5377 = vmatpush1.msra.mxu0 0.0
    %5378 = vmatprep.subr.mxu0 0.0
    %5379 = vmatpush1.msra.mxu0 0.0
    %5380 = vmatprep.subr.mxu0 0.0
    %5381 = vmatpush1.msra.mxu0 0.0
    %5382 = vmatprep.subr.mxu0 0.0
    %5383 = vmatpush1.msra.mxu0 0.0
    %5384 = vmatprep.subr.mxu0 0.0
    %5385 = vmatpush1.msra.mxu0 0.0
    %5386 = vmatprep.subr.mxu0 0.0
    %5387 = vmatpush1.msra.mxu0 0.0
    %5388 = vmatprep.subr.mxu0 0.0
    %5389 = vmatpush1.msra.mxu0 0.0
    %5390 = vmatprep.subr.mxu0 0.0
    %5391 = vmatpush1.msra.mxu0 0.0
    %5392 = vmatprep.subr.mxu0 0.0
    %5393 = vmatpush1.msra.mxu0 0.0
    %5394 = vmatprep.subr.mxu0 0.0
    %5395 = vmatpush1.msra.mxu0 0.0
    %5396 = vmatprep.mubr.f32.mxu0 0.0
    %5397 = vmatmul.mubr.f32.gmra.mrb[0].mxu0 %v5327
    %v5398 = vpop.f32.mrb[0].mxu0
    %v5399 = vadd.f32 %v5324, %v5398
    %v5400 = vpop.f32.mrb[0].mxu0
    %5401 = vmatprep.mubr.f32.mxu0 0.0
    %5402 = vmatmul.mubr.f32.gmra.mrb[0].mxu0 %v5330
    %v5403 = vpop.f32.mrb[0].mxu0
    %v5404 = vadd.f32 %v5324, %v5403
    %v5405 = vpop.f32.mrb[0].mxu0
    %5406 = vdwg.mxu0
    %s5407 = scalar_lea.vmem %s29, 32
    %v5408 = vld [vmem:[%s5407] sm:$0xff]
    %v5409 = vld [vmem:[%s5407 + $0x8] sm:$0xff]
    %v5410 = vld [vmem:[%s5407 + $0x10] sm:$0xff]
    %v5411 = vld [vmem:[%s5407 + $0x18] sm:$0xff]
    %s5412 = scalar_lea.vmem %s31, 1
    %v5413 = vld [vmem:[%s5412] sm:$0x1]
    %v5414 = vmul.f32 %v5399, %v1078
    %v5415 = vmul.f32 %v5399, %v1080
    %v5416 = vmul.f32 %v5399, %v1082
    %v5417 = vmul.f32 %v5399, %v1084
    %v5418 = vmul.f32 %v5399, %v1094
    %v5419 = vmul.f32 %v5399, %v1096
    %v5420 = vmul.f32 %v5399, %v1098
    %v5421 = vmul.f32 %v5399, %v1100
    %5426 = vrot.lane.b32.xlu0 %v5414, 96
    %v5427 = vpop.permute.xlu0 %5426
    %5428 = vrot.lane.b32.xlu0 %v5415, 96
    %v5429 = vpop.permute.xlu0 %5428
    %5430 = vrot.lane.b32.xlu0 %v5416, 96
    %v5431 = vpop.permute.xlu0 %5430
    %5432 = vrot.lane.b32.xlu0 %v5417, 96
    %v5433 = vpop.permute.xlu0 %5432
    %v5435 = vsel %vm238, %v5399, 0
    %v5437 = vsel %vm238, %v5427, 0
    %v5439 = vsel %vm238, %v5429, 0
    %v5441 = vsel %vm238, %v5431, 0
    %v5443 = vsel %vm238, %v5433, 0
    %5445 = vmatprep.subr.mxu0 0.0
    %5446 = vmatpush1.xpose.msra.mxu0 %v5437
    %5447 = vmatprep.subr.mxu0 0.0
    %5448 = vmatpush1.xpose.msra.mxu0 %v5439
    %5449 = vmatprep.subr.mxu0 0.0
    %5450 = vmatpush1.xpose.msra.mxu0 %v5441
    %5451 = vmatprep.subr.mxu0 0.0
    %5452 = vmatpush1.xpose.msra.mxu0 %v5443
    %5453 = vmatprep.subr.mxu0 0.0
    %5454 = vmatpush1.xpose.msra.mxu0 0.0
    %5455 = vmatprep.subr.mxu0 0.0
    %5456 = vmatpush1.xpose.msra.mxu0 0.0
    %5457 = vmatprep.subr.mxu0 0.0
    %5458 = vmatpush1.xpose.msra.mxu0 0.0
    %5459 = vmatprep.subr.mxu0 0.0
    %5460 = vmatpush1.xpose.msra.mxu0 0.0
    %5461 = vmatprep.subr.mxu0 0.0
    %5462 = vmatpush1.xpose.msra.mxu0 0.0
    %5463 = vmatprep.subr.mxu0 0.0
    %5464 = vmatpush1.xpose.msra.mxu0 0.0
    %5465 = vmatprep.subr.mxu0 0.0
    %5466 = vmatpush1.xpose.msra.mxu0 0.0
    %5467 = vmatprep.subr.mxu0 0.0
    %5468 = vmatpush1.xpose.msra.mxu0 0.0
    %5469 = vmatprep.subr.mxu0 0.0
    %5470 = vmatpush1.xpose.msra.mxu0 0.0
    %5471 = vmatprep.subr.mxu0 0.0
    %5472 = vmatpush1.xpose.msra.mxu0 0.0
    %5473 = vmatprep.subr.mxu0 0.0
    %5474 = vmatpush1.xpose.msra.mxu0 0.0
    %5475 = vmatprep.subr.mxu0 0.0
    %5476 = vmatpush1.xpose.msra.mxu0 0.0
    %5477 = vmatprep.subr.mxu0 0.0
    %5478 = vmatpush1.xpose.msra.mxu0 0.0
    %5479 = vmatprep.subr.mxu0 0.0
    %5480 = vmatpush1.xpose.msra.mxu0 0.0
    %5481 = vmatprep.subr.mxu0 0.0
    %5482 = vmatpush1.xpose.msra.mxu0 0.0
    %5483 = vmatprep.subr.mxu0 0.0
    %5484 = vmatpush1.xpose.msra.mxu0 0.0
    %5485 = vmatprep.subr.mxu0 0.0
    %5486 = vmatpush1.xpose.msra.mxu0 0.0
    %5487 = vmatprep.subr.mxu0 0.0
    %5488 = vmatpush1.xpose.msra.mxu0 0.0
    %5489 = vmatprep.subr.mxu0 0.0
    %5490 = vmatpush1.xpose.msra.mxu0 0.0
    %5491 = vmatprep.subr.mxu0 0.0
    %5492 = vmatpush1.xpose.msra.mxu0 0.0
    %5493 = vmatprep.subr.mxu0 0.0
    %5494 = vmatpush1.xpose.msra.mxu0 0.0
    %5495 = vmatprep.subr.mxu0 0.0
    %5496 = vmatpush1.xpose.msra.mxu0 0.0
    %5497 = vmatprep.subr.mxu0 0.0
    %5498 = vmatpush1.xpose.msra.mxu0 0.0
    %5499 = vmatprep.subr.mxu0 0.0
    %5500 = vmatpush1.xpose.msra.mxu0 0.0
    %5501 = vmatprep.subr.mxu0 0.0
    %5502 = vmatpush1.xpose.msra.mxu0 0.0
    %5503 = vmatprep.subr.mxu0 0.0
    %5504 = vmatpush1.xpose.msra.mxu0 0.0
    %5505 = vmatprep.subr.mxu0 0.0
    %5506 = vmatpush1.xpose.msra.mxu0 0.0
    %5507 = vmatprep.subr.mxu0 0.0
    %5508 = vmatpush1.xpose.msra.mxu0 0.0
    %5509 = vmatprep.mubr.f32.mxu0 0.0
    %5510 = vmatmul.mubr.f32.gmra.mrb[0].mxu0 %v5435
    %v5511 = vpop.f32.mrb[0].mxu0
    %v5512 = vadd.f32 0.0, %v5511
    %v5513 = vpop.f32.mrb[0].mxu0
    %5514 = vdwg.mxu0
    %v5515 = vsel %vm238, %v5512, -inf
    %5516 = vmax.xlane.f32.xlu0 %v5515
    %v5517 = vpop.xlane.xlu0 %5516
    %v5518 = vsub.f32 %v5512, %v5517
    %v5519 = vmul.f32 %v5518, 1.442695
    %v5520 = vpow.pop %v5519
    %5525 = vrot.lane.b32.xlu0 %v5418, 64
    %v5526 = vpop.permute.xlu0 %5525
    %5527 = vrot.lane.b32.xlu0 %v5419, 64
    %v5528 = vpop.permute.xlu0 %5527
    %5529 = vrot.lane.b32.xlu0 %v5420, 64
    %v5530 = vpop.permute.xlu0 %5529
    %5531 = vrot.lane.b32.xlu0 %v5421, 64
    %v5532 = vpop.permute.xlu0 %5531
    %v5538 = vsel %vm238, %v5520, 0
    %5540 = vmatprep.subr.mxu0 0.0
    %5541 = vmatpush1.msra.mxu0 %v5526
    %5542 = vmatprep.subr.mxu0 0.0
    %5543 = vmatpush1.msra.mxu0 %v5528
    %5544 = vmatprep.subr.mxu0 0.0
    %5545 = vmatpush1.msra.mxu0 %v5530
    %5546 = vmatprep.subr.mxu0 0.0
    %5547 = vmatpush1.msra.mxu0 %v5532
    %5548 = vmatprep.subr.mxu0 0.0
    %5549 = vmatpush1.msra.mxu0 0.0
    %5550 = vmatprep.subr.mxu0 0.0
    %5551 = vmatpush1.msra.mxu0 0.0
    %5552 = vmatprep.subr.mxu0 0.0
    %5553 = vmatpush1.msra.mxu0 0.0
    %5554 = vmatprep.subr.mxu0 0.0
    %5555 = vmatpush1.msra.mxu0 0.0
    %5556 = vmatprep.subr.mxu0 0.0
    %5557 = vmatpush1.msra.mxu0 0.0
    %5558 = vmatprep.subr.mxu0 0.0
    %5559 = vmatpush1.msra.mxu0 0.0
    %5560 = vmatprep.subr.mxu0 0.0
    %5561 = vmatpush1.msra.mxu0 0.0
    %5562 = vmatprep.subr.mxu0 0.0
    %5563 = vmatpush1.msra.mxu0 0.0
    %5564 = vmatprep.subr.mxu0 0.0
    %5565 = vmatpush1.msra.mxu0 0.0
    %5566 = vmatprep.subr.mxu0 0.0
    %5567 = vmatpush1.msra.mxu0 0.0
    %5568 = vmatprep.subr.mxu0 0.0
    %5569 = vmatpush1.msra.mxu0 0.0
    %5570 = vmatprep.subr.mxu0 0.0
    %5571 = vmatpush1.msra.mxu0 0.0
    %5572 = vmatprep.subr.mxu0 0.0
    %5573 = vmatpush1.msra.mxu0 0.0
    %5574 = vmatprep.subr.mxu0 0.0
    %5575 = vmatpush1.msra.mxu0 0.0
    %5576 = vmatprep.subr.mxu0 0.0
    %5577 = vmatpush1.msra.mxu0 0.0
    %5578 = vmatprep.subr.mxu0 0.0
    %5579 = vmatpush1.msra.mxu0 0.0
    %5580 = vmatprep.subr.mxu0 0.0
    %5581 = vmatpush1.msra.mxu0 0.0
    %5582 = vmatprep.subr.mxu0 0.0
    %5583 = vmatpush1.msra.mxu0 0.0
    %5584 = vmatprep.subr.mxu0 0.0
    %5585 = vmatpush1.msra.mxu0 0.0
    %5586 = vmatprep.subr.mxu0 0.0
    %5587 = vmatpush1.msra.mxu0 0.0
    %5588 = vmatprep.subr.mxu0 0.0
    %5589 = vmatpush1.msra.mxu0 0.0
    %5590 = vmatprep.subr.mxu0 0.0
    %5591 = vmatpush1.msra.mxu0 0.0
    %5592 = vmatprep.subr.mxu0 0.0
    %5593 = vmatpush1.msra.mxu0 0.0
    %5594 = vmatprep.subr.mxu0 0.0
    %5595 = vmatpush1.msra.mxu0 0.0
    %5596 = vmatprep.subr.mxu0 0.0
    %5597 = vmatpush1.msra.mxu0 0.0
    %5598 = vmatprep.subr.mxu0 0.0
    %5599 = vmatpush1.msra.mxu0 0.0
    %5600 = vmatprep.subr.mxu0 0.0
    %5601 = vmatpush1.msra.mxu0 0.0
    %5602 = vmatprep.subr.mxu0 0.0
    %5603 = vmatpush1.msra.mxu0 0.0
    %5604 = vmatprep.mubr.f32.mxu0 0.0
    %5605 = vmatmul.mubr.f32.gmra.mrb[0].mxu0 %v5538
    %v5606 = vpop.f32.mrb[0].mxu0
    %v5607 = vadd.f32 0.0, %v5606
    %v5608 = vpop.f32.mrb[0].mxu0
    %5609 = vdwg.mxu0
    %5610 = vmatprep.subr.mxu0 0.0
    %5611 = vmatpush1.msra.mxu0 %v213
    %5612 = vmatprep.subr.mxu0 0.0
    %5613 = vmatpush1.msra.mxu0 %v214
    %5614 = vmatprep.subr.mxu0 0.0
    %5615 = vmatpush1.msra.mxu0 %v215
    %5616 = vmatprep.subr.mxu0 0.0
    %5617 = vmatpush1.msra.mxu0 %v216
    %5618 = vmatprep.subr.mxu0 0.0
    %5619 = vmatpush1.msra.mxu0 0.0
    %5620 = vmatprep.subr.mxu0 0.0
    %5621 = vmatpush1.msra.mxu0 0.0
    %5622 = vmatprep.subr.mxu0 0.0
    %5623 = vmatpush1.msra.mxu0 0.0
    %5624 = vmatprep.subr.mxu0 0.0
    %5625 = vmatpush1.msra.mxu0 0.0
    %5626 = vmatprep.subr.mxu0 0.0
    %5627 = vmatpush1.msra.mxu0 0.0
    %5628 = vmatprep.subr.mxu0 0.0
    %5629 = vmatpush1.msra.mxu0 0.0
    %5630 = vmatprep.subr.mxu0 0.0
    %5631 = vmatpush1.msra.mxu0 0.0
    %5632 = vmatprep.subr.mxu0 0.0
    %5633 = vmatpush1.msra.mxu0 0.0
    %5634 = vmatprep.subr.mxu0 0.0
    %5635 = vmatpush1.msra.mxu0 0.0
    %5636 = vmatprep.subr.mxu0 0.0
    %5637 = vmatpush1.msra.mxu0 0.0
    %5638 = vmatprep.subr.mxu0 0.0
    %5639 = vmatpush1.msra.mxu0 0.0
    %5640 = vmatprep.subr.mxu0 0.0
    %5641 = vmatpush1.msra.mxu0 0.0
    %5642 = vmatprep.subr.mxu0 0.0
    %5643 = vmatpush1.msra.mxu0 0.0
    %5644 = vmatprep.subr.mxu0 0.0
    %5645 = vmatpush1.msra.mxu0 0.0
    %5646 = vmatprep.subr.mxu0 0.0
    %5647 = vmatpush1.msra.mxu0 0.0
    %5648 = vmatprep.subr.mxu0 0.0
    %5649 = vmatpush1.msra.mxu0 0.0
    %5650 = vmatprep.subr.mxu0 0.0
    %5651 = vmatpush1.msra.mxu0 0.0
    %5652 = vmatprep.subr.mxu0 0.0
    %5653 = vmatpush1.msra.mxu0 0.0
    %5654 = vmatprep.subr.mxu0 0.0
    %5655 = vmatpush1.msra.mxu0 0.0
    %5656 = vmatprep.subr.mxu0 0.0
    %5657 = vmatpush1.msra.mxu0 0.0
    %5658 = vmatprep.subr.mxu0 0.0
    %5659 = vmatpush1.msra.mxu0 0.0
    %5660 = vmatprep.subr.mxu0 0.0
    %5661 = vmatpush1.msra.mxu0 0.0
    %5662 = vmatprep.subr.mxu0 0.0
    %5663 = vmatpush1.msra.mxu0 0.0
    %5664 = vmatprep.subr.mxu0 0.0
    %5665 = vmatpush1.msra.mxu0 0.0
    %5666 = vmatprep.subr.mxu0 0.0
    %5667 = vmatpush1.msra.mxu0 0.0
    %5668 = vmatprep.subr.mxu0 0.0
    %5669 = vmatpush1.msra.mxu0 0.0
    %5670 = vmatprep.subr.mxu0 0.0
    %5671 = vmatpush1.msra.mxu0 0.0
    %5672 = vmatprep.subr.mxu0 0.0
    %5673 = vmatpush1.msra.mxu0 0.0
    %5674 = vmatprep.mubr.f32.mxu0 0.0
    %5675 = vmatmul.mubr.f32.gmra.mrb[0].mxu0 %v5538
    %v5676 = vpop.f32.mrb[0].mxu0
    %v5677 = vadd.f32 0.0, %v5676
    %v5678 = vpop.f32.mrb[0].mxu0
    %5679 = vdwg.mxu0
    %v5680 = vrcp.pop %v5677
    %v5681 = vmul.f32 %v5607, %v5680
    %v5682 = vmul.f32 %v5404, %v1078
    %v5683 = vmul.f32 %v5404, %v1080
    %v5684 = vmul.f32 %v5404, %v1082
    %v5685 = vmul.f32 %v5404, %v1084
    %v5686 = vmul.f32 %v5404, %v1094
    %v5687 = vmul.f32 %v5404, %v1096
    %v5688 = vmul.f32 %v5404, %v1098
    %v5689 = vmul.f32 %v5404, %v1100
    %5694 = vrot.lane.b32.xlu0 %v5682, 96
    %v5695 = vpop.permute.xlu0 %5694
    %5696 = vrot.lane.b32.xlu0 %v5683, 96
    %v5697 = vpop.permute.xlu0 %5696
    %5698 = vrot.lane.b32.xlu0 %v5684, 96
    %v5699 = vpop.permute.xlu0 %5698
    %5700 = vrot.lane.b32.xlu0 %v5685, 96
    %v5701 = vpop.permute.xlu0 %5700
    %v5703 = vsel %vm238, %v5404, 0
    %v5705 = vsel %vm238, %v5695, 0
    %v5707 = vsel %vm238, %v5697, 0
    %v5709 = vsel %vm238, %v5699, 0
    %v5711 = vsel %vm238, %v5701, 0
    %5713 = vmatprep.subr.mxu0 0.0
    %5714 = vmatpush1.xpose.msra.mxu0 %v5705
    %5715 = vmatprep.subr.mxu0 0.0
    %5716 = vmatpush1.xpose.msra.mxu0 %v5707
    %5717 = vmatprep.subr.mxu0 0.0
    %5718 = vmatpush1.xpose.msra.mxu0 %v5709
    %5719 = vmatprep.subr.mxu0 0.0
    %5720 = vmatpush1.xpose.msra.mxu0 %v5711
    %5721 = vmatprep.subr.mxu0 0.0
    %5722 = vmatpush1.xpose.msra.mxu0 0.0
    %5723 = vmatprep.subr.mxu0 0.0
    %5724 = vmatpush1.xpose.msra.mxu0 0.0
    %5725 = vmatprep.subr.mxu0 0.0
    %5726 = vmatpush1.xpose.msra.mxu0 0.0
    %5727 = vmatprep.subr.mxu0 0.0
    %5728 = vmatpush1.xpose.msra.mxu0 0.0
    %5729 = vmatprep.subr.mxu0 0.0
    %5730 = vmatpush1.xpose.msra.mxu0 0.0
    %5731 = vmatprep.subr.mxu0 0.0
    %5732 = vmatpush1.xpose.msra.mxu0 0.0
    %5733 = vmatprep.subr.mxu0 0.0
    %5734 = vmatpush1.xpose.msra.mxu0 0.0
    %5735 = vmatprep.subr.mxu0 0.0
    %5736 = vmatpush1.xpose.msra.mxu0 0.0
    %5737 = vmatprep.subr.mxu0 0.0
    %5738 = vmatpush1.xpose.msra.mxu0 0.0
    %5739 = vmatprep.subr.mxu0 0.0
    %5740 = vmatpush1.xpose.msra.mxu0 0.0
    %5741 = vmatprep.subr.mxu0 0.0
    %5742 = vmatpush1.xpose.msra.mxu0 0.0
    %5743 = vmatprep.subr.mxu0 0.0
    %5744 = vmatpush1.xpose.msra.mxu0 0.0
    %5745 = vmatprep.subr.mxu0 0.0
    %5746 = vmatpush1.xpose.msra.mxu0 0.0
    %5747 = vmatprep.subr.mxu0 0.0
    %5748 = vmatpush1.xpose.msra.mxu0 0.0
    %5749 = vmatprep.subr.mxu0 0.0
    %5750 = vmatpush1.xpose.msra.mxu0 0.0
    %5751 = vmatprep.subr.mxu0 0.0
    %5752 = vmatpush1.xpose.msra.mxu0 0.0
    %5753 = vmatprep.subr.mxu0 0.0
    %5754 = vmatpush1.xpose.msra.mxu0 0.0
    %5755 = vmatprep.subr.mxu0 0.0
    %5756 = vmatpush1.xpose.msra.mxu0 0.0
    %5757 = vmatprep.subr.mxu0 0.0
    %5758 = vmatpush1.xpose.msra.mxu0 0.0
    %5759 = vmatprep.subr.mxu0 0.0
    %5760 = vmatpush1.xpose.msra.mxu0 0.0
    %5761 = vmatprep.subr.mxu0 0.0
    %5762 = vmatpush1.xpose.msra.mxu0 0.0
    %5763 = vmatprep.subr.mxu0 0.0
    %5764 = vmatpush1.xpose.msra.mxu0 0.0
    %5765 = vmatprep.subr.mxu0 0.0
    %5766 = vmatpush1.xpose.msra.mxu0 0.0
    %5767 = vmatprep.subr.mxu0 0.0
    %5768 = vmatpush1.xpose.msra.mxu0 0.0
    %5769 = vmatprep.subr.mxu0 0.0
    %5770 = vmatpush1.xpose.msra.mxu0 0.0
    %5771 = vmatprep.subr.mxu0 0.0
    %5772 = vmatpush1.xpose.msra.mxu0 0.0
    %5773 = vmatprep.subr.mxu0 0.0
    %5774 = vmatpush1.xpose.msra.mxu0 0.0
    %5775 = vmatprep.subr.mxu0 0.0
    %5776 = vmatpush1.xpose.msra.mxu0 0.0
    %5777 = vmatprep.mubr.f32.mxu0 0.0
    %5778 = vmatmul.mubr.f32.gmra.mrb[0].mxu0 %v5703
    %v5779 = vpop.f32.mrb[0].mxu0
    %v5780 = vadd.f32 0.0, %v5779
    %v5781 = vpop.f32.mrb[0].mxu0
    %5782 = vdwg.mxu0
    %v5783 = vsel %vm238, %v5780, -inf
    %5784 = vmax.xlane.f32.xlu0 %v5783
    %v5785 = vpop.xlane.xlu0 %5784
    %v5786 = vsub.f32 %v5780, %v5785
    %v5787 = vmul.f32 %v5786, 1.442695
    %v5788 = vpow.pop %v5787
    %5793 = vrot.lane.b32.xlu0 %v5686, 64
    %v5794 = vpop.permute.xlu0 %5793
    %5795 = vrot.lane.b32.xlu0 %v5687, 64
    %v5796 = vpop.permute.xlu0 %5795
    %5797 = vrot.lane.b32.xlu0 %v5688, 64
    %v5798 = vpop.permute.xlu0 %5797
    %5799 = vrot.lane.b32.xlu0 %v5689, 64
    %v5800 = vpop.permute.xlu0 %5799
    %v5806 = vsel %vm238, %v5788, 0
    %5808 = vmatprep.subr.mxu0 0.0
    %5809 = vmatpush1.msra.mxu0 %v5794
    %5810 = vmatprep.subr.mxu0 0.0
    %5811 = vmatpush1.msra.mxu0 %v5796
    %5812 = vmatprep.subr.mxu0 0.0
    %5813 = vmatpush1.msra.mxu0 %v5798
    %5814 = vmatprep.subr.mxu0 0.0
    %5815 = vmatpush1.msra.mxu0 %v5800
    %5816 = vmatprep.subr.mxu0 0.0
    %5817 = vmatpush1.msra.mxu0 0.0
    %5818 = vmatprep.subr.mxu0 0.0
    %5819 = vmatpush1.msra.mxu0 0.0
    %5820 = vmatprep.subr.mxu0 0.0
    %5821 = vmatpush1.msra.mxu0 0.0
    %5822 = vmatprep.subr.mxu0 0.0
    %5823 = vmatpush1.msra.mxu0 0.0
    %5824 = vmatprep.subr.mxu0 0.0
    %5825 = vmatpush1.msra.mxu0 0.0
    %5826 = vmatprep.subr.mxu0 0.0
    %5827 = vmatpush1.msra.mxu0 0.0
    %5828 = vmatprep.subr.mxu0 0.0
    %5829 = vmatpush1.msra.mxu0 0.0
    %5830 = vmatprep.subr.mxu0 0.0
    %5831 = vmatpush1.msra.mxu0 0.0
    %5832 = vmatprep.subr.mxu0 0.0
    %5833 = vmatpush1.msra.mxu0 0.0
    %5834 = vmatprep.subr.mxu0 0.0
    %5835 = vmatpush1.msra.mxu0 0.0
    %5836 = vmatprep.subr.mxu0 0.0
    %5837 = vmatpush1.msra.mxu0 0.0
    %5838 = vmatprep.subr.mxu0 0.0
    %5839 = vmatpush1.msra.mxu0 0.0
    %5840 = vmatprep.subr.mxu0 0.0
    %5841 = vmatpush1.msra.mxu0 0.0
    %5842 = vmatprep.subr.mxu0 0.0
    %5843 = vmatpush1.msra.mxu0 0.0
    %5844 = vmatprep.subr.mxu0 0.0
    %5845 = vmatpush1.msra.mxu0 0.0
    %5846 = vmatprep.subr.mxu0 0.0
    %5847 = vmatpush1.msra.mxu0 0.0
    %5848 = vmatprep.subr.mxu0 0.0
    %5849 = vmatpush1.msra.mxu0 0.0
    %5850 = vmatprep.subr.mxu0 0.0
    %5851 = vmatpush1.msra.mxu0 0.0
    %5852 = vmatprep.subr.mxu0 0.0
    %5853 = vmatpush1.msra.mxu0 0.0
    %5854 = vmatprep.subr.mxu0 0.0
    %5855 = vmatpush1.msra.mxu0 0.0
    %5856 = vmatprep.subr.mxu0 0.0
    %5857 = vmatpush1.msra.mxu0 0.0
    %5858 = vmatprep.subr.mxu0 0.0
    %5859 = vmatpush1.msra.mxu0 0.0
    %5860 = vmatprep.subr.mxu0 0.0
    %5861 = vmatpush1.msra.mxu0 0.0
    %5862 = vmatprep.subr.mxu0 0.0
    %5863 = vmatpush1.msra.mxu0 0.0
    %5864 = vmatprep.subr.mxu0 0.0
    %5865 = vmatpush1.msra.mxu0 0.0
    %5866 = vmatprep.subr.mxu0 0.0
    %5867 = vmatpush1.msra.mxu0 0.0
    %5868 = vmatprep.subr.mxu0 0.0
    %5869 = vmatpush1.msra.mxu0 0.0
    %5870 = vmatprep.subr.mxu0 0.0
    %5871 = vmatpush1.msra.mxu0 0.0
    %5872 = vmatprep.mubr.f32.mxu0 0.0
    %5873 = vmatmul.mubr.f32.gmra.mrb[0].mxu0 %v5806
    %v5874 = vpop.f32.mrb[0].mxu0
    %v5875 = vadd.f32 0.0, %v5874
    %v5876 = vpop.f32.mrb[0].mxu0
    %5877 = vdwg.mxu0
    %5878 = vmatprep.subr.mxu0 0.0
    %5879 = vmatpush1.msra.mxu0 %v213
    %5880 = vmatprep.subr.mxu0 0.0
    %5881 = vmatpush1.msra.mxu0 %v214
    %5882 = vmatprep.subr.mxu0 0.0
    %5883 = vmatpush1.msra.mxu0 %v215
    %5884 = vmatprep.subr.mxu0 0.0
    %5885 = vmatpush1.msra.mxu0 %v216
    %5886 = vmatprep.subr.mxu0 0.0
    %5887 = vmatpush1.msra.mxu0 0.0
    %5888 = vmatprep.subr.mxu0 0.0
    %5889 = vmatpush1.msra.mxu0 0.0
    %5890 = vmatprep.subr.mxu0 0.0
    %5891 = vmatpush1.msra.mxu0 0.0
    %5892 = vmatprep.subr.mxu0 0.0
    %5893 = vmatpush1.msra.mxu0 0.0
    %5894 = vmatprep.subr.mxu0 0.0
    %5895 = vmatpush1.msra.mxu0 0.0
    %5896 = vmatprep.subr.mxu0 0.0
    %5897 = vmatpush1.msra.mxu0 0.0
    %5898 = vmatprep.subr.mxu0 0.0
    %5899 = vmatpush1.msra.mxu0 0.0
    %5900 = vmatprep.subr.mxu0 0.0
    %5901 = vmatpush1.msra.mxu0 0.0
    %5902 = vmatprep.subr.mxu0 0.0
    %5903 = vmatpush1.msra.mxu0 0.0
    %5904 = vmatprep.subr.mxu0 0.0
    %5905 = vmatpush1.msra.mxu0 0.0
    %5906 = vmatprep.subr.mxu0 0.0
    %5907 = vmatpush1.msra.mxu0 0.0
    %5908 = vmatprep.subr.mxu0 0.0
    %5909 = vmatpush1.msra.mxu0 0.0
    %5910 = vmatprep.subr.mxu0 0.0
    %5911 = vmatpush1.msra.mxu0 0.0
    %5912 = vmatprep.subr.mxu0 0.0
    %5913 = vmatpush1.msra.mxu0 0.0
    %5914 = vmatprep.subr.mxu0 0.0
    %5915 = vmatpush1.msra.mxu0 0.0
    %5916 = vmatprep.subr.mxu0 0.0
    %5917 = vmatpush1.msra.mxu0 0.0
    %5918 = vmatprep.subr.mxu0 0.0
    %5919 = vmatpush1.msra.mxu0 0.0
    %5920 = vmatprep.subr.mxu0 0.0
    %5921 = vmatpush1.msra.mxu0 0.0
    %5922 = vmatprep.subr.mxu0 0.0
    %5923 = vmatpush1.msra.mxu0 0.0
    %5924 = vmatprep.subr.mxu0 0.0
    %5925 = vmatpush1.msra.mxu0 0.0
    %5926 = vmatprep.subr.mxu0 0.0
    %5927 = vmatpush1.msra.mxu0 0.0
    %5928 = vmatprep.subr.mxu0 0.0
    %5929 = vmatpush1.msra.mxu0 0.0
    %5930 = vmatprep.subr.mxu0 0.0
    %5931 = vmatpush1.msra.mxu0 0.0
    %5932 = vmatprep.subr.mxu0 0.0
    %5933 = vmatpush1.msra.mxu0 0.0
    %5934 = vmatprep.subr.mxu0 0.0
    %5935 = vmatpush1.msra.mxu0 0.0
    %5936 = vmatprep.subr.mxu0 0.0
    %5937 = vmatpush1.msra.mxu0 0.0
    %5938 = vmatprep.subr.mxu0 0.0
    %5939 = vmatpush1.msra.mxu0 0.0
    %5940 = vmatprep.subr.mxu0 0.0
    %5941 = vmatpush1.msra.mxu0 0.0
    %5942 = vmatprep.mubr.f32.mxu0 0.0
    %5943 = vmatmul.mubr.f32.gmra.mrb[0].mxu0 %v5806
    %v5944 = vpop.f32.mrb[0].mxu0
    %v5945 = vadd.f32 0.0, %v5944
    %v5946 = vpop.f32.mrb[0].mxu0
    %5947 = vdwg.mxu0
    %v5948 = vrcp.pop %v5945
    %v5949 = vmul.f32 %v5875, %v5948
    %v5951 = vlaneseq
    %v5952 = vshrl.u32 %v5951, 7
    %v5953 = vsub.s32 0, %v5952
    %v5954 = vrot.slane %v5413, %v5953
    %v5957 = vsel %vm238, %v5681, 0
    %v5960 = vsel %vm238, %v5949, 0
    %5962 = vmatprep.subr.mxu0 0.0
    %5963 = vmatpush1.msra.mxu0 %v5408
    %5964 = vmatprep.subr.mxu0 0.0
    %5965 = vmatpush1.msra.mxu0 %v5409
    %5966 = vmatprep.subr.mxu0 0.0
    %5967 = vmatpush1.msra.mxu0 %v5410
    %5968 = vmatprep.subr.mxu0 0.0
    %5969 = vmatpush1.msra.mxu0 %v5411
    %5970 = vmatprep.subr.mxu0 0.0
    %5971 = vmatpush1.msra.mxu0 0.0
    %5972 = vmatprep.subr.mxu0 0.0
    %5973 = vmatpush1.msra.mxu0 0.0
    %5974 = vmatprep.subr.mxu0 0.0
    %5975 = vmatpush1.msra.mxu0 0.0
    %5976 = vmatprep.subr.mxu0 0.0
    %5977 = vmatpush1.msra.mxu0 0.0
    %5978 = vmatprep.subr.mxu0 0.0
    %5979 = vmatpush1.msra.mxu0 0.0
    %5980 = vmatprep.subr.mxu0 0.0
    %5981 = vmatpush1.msra.mxu0 0.0
    %5982 = vmatprep.subr.mxu0 0.0
    %5983 = vmatpush1.msra.mxu0 0.0
    %5984 = vmatprep.subr.mxu0 0.0
    %5985 = vmatpush1.msra.mxu0 0.0
    %5986 = vmatprep.subr.mxu0 0.0
    %5987 = vmatpush1.msra.mxu0 0.0
    %5988 = vmatprep.subr.mxu0 0.0
    %5989 = vmatpush1.msra.mxu0 0.0
    %5990 = vmatprep.subr.mxu0 0.0
    %5991 = vmatpush1.msra.mxu0 0.0
    %5992 = vmatprep.subr.mxu0 0.0
    %5993 = vmatpush1.msra.mxu0 0.0
    %5994 = vmatprep.subr.mxu0 0.0
    %5995 = vmatpush1.msra.mxu0 0.0
    %5996 = vmatprep.subr.mxu0 0.0
    %5997 = vmatpush1.msra.mxu0 0.0
    %5998 = vmatprep.subr.mxu0 0.0
    %5999 = vmatpush1.msra.mxu0 0.0
    %6000 = vmatprep.subr.mxu0 0.0
    %6001 = vmatpush1.msra.mxu0 0.0
    %6002 = vmatprep.subr.mxu0 0.0
    %6003 = vmatpush1.msra.mxu0 0.0
    %6004 = vmatprep.subr.mxu0 0.0
    %6005 = vmatpush1.msra.mxu0 0.0
    %6006 = vmatprep.subr.mxu0 0.0
    %6007 = vmatpush1.msra.mxu0 0.0
    %6008 = vmatprep.subr.mxu0 0.0
    %6009 = vmatpush1.msra.mxu0 0.0
    %6010 = vmatprep.subr.mxu0 0.0
    %6011 = vmatpush1.msra.mxu0 0.0
    %6012 = vmatprep.subr.mxu0 0.0
    %6013 = vmatpush1.msra.mxu0 0.0
    %6014 = vmatprep.subr.mxu0 0.0
    %6015 = vmatpush1.msra.mxu0 0.0
    %6016 = vmatprep.subr.mxu0 0.0
    %6017 = vmatpush1.msra.mxu0 0.0
    %6018 = vmatprep.subr.mxu0 0.0
    %6019 = vmatpush1.msra.mxu0 0.0
    %6020 = vmatprep.subr.mxu0 0.0
    %6021 = vmatpush1.msra.mxu0 0.0
    %6022 = vmatprep.subr.mxu0 0.0
    %6023 = vmatpush1.msra.mxu0 0.0
    %6024 = vmatprep.subr.mxu0 0.0
    %6025 = vmatpush1.msra.mxu0 0.0
    %6026 = vmatprep.mubr.f32.mxu0 0.0
    %6027 = vmatmul.mubr.f32.gmra.mrb[0].mxu0 %v5957
    %v6028 = vpop.f32.mrb[0].mxu0
    %v6029 = vadd.f32 %v5954, %v6028
    %v6030 = vpop.f32.mrb[0].mxu0
    %6031 = vmatprep.mubr.f32.mxu0 0.0
    %6032 = vmatmul.mubr.f32.gmra.mrb[0].mxu0 %v5960
    %v6033 = vpop.f32.mrb[0].mxu0
    %v6034 = vadd.f32 %v5954, %v6033
    %v6035 = vpop.f32.mrb[0].mxu0
    %6036 = vdwg.mxu0
    %v6037 = vadd.f32 %v6029, %v5311
    %v6038 = vadd.f32 %v6034, %v5312
    %v6039 = vsel %vm238, %v6037, 0.0
    %6040 = vadd.xlane.f32.xlu0 %v6039
    %v6041 = vpop.xlane.xlu0 %6040
    %v6042 = vsel %vm238, %v6038, 0.0
    %6043 = vadd.xlane.f32.xlu0 %v6042
    %v6044 = vpop.xlane.xlu0 %6043
    %v6045 = vmul.f32 %v6041, %v1732
    %v6046 = vmul.f32 %v6044, %v1732
    %v6047 = vsub.f32 %v6037, %v6045
    %v6048 = vsub.f32 %v6038, %v6046
    %v6049 = vmul.f32 %v6047, %v6047
    %v6050 = vmul.f32 %v6048, %v6048
    %v6051 = vsel %vm238, %v6049, 0.0
    %6052 = vadd.xlane.f32.xlu0 %v6051
    %v6053 = vpop.xlane.xlu0 %6052
    %v6054 = vsel %vm238, %v6050, 0.0
    %6055 = vadd.xlane.f32.xlu0 %v6054
    %v6056 = vpop.xlane.xlu0 %6055
    %v6057 = vmul.f32 %v6053, %v1732
    %v6058 = vmul.f32 %v6056, %v1732
    %v6059 = vadd.f32 %v6057, 1e-12
    %v6060 = vadd.f32 %v6058, 1e-12
    %v6061 = vrsqrt.pop %v6059
    %v6062 = vrsqrt.pop %v6060
    %v6063 = vmul.f32 %v6047, %v6061
    %v6064 = vmul.f32 %v6048, %v6062
    %v6065 = vlaneseq
    %v6066 = vshrl.u32 %v6065, 7
    %v6067 = vsub.s32 1, %v6066
    %v6068 = vrot.slane %v3822, %v6067
    %v6069 = vmul.f32 %v6063, %v6068
    %v6070 = vmul.f32 %v6064, %v6068
    %v6071 = vlaneseq
    %v6072 = vshrl.u32 %v6071, 7
    %v6073 = vsub.s32 1, %v6072
    %v6074 = vrot.slane %v3824, %v6073
    %v6075 = vadd.f32 %v6069, %v6074
    %v6076 = vadd.f32 %v6070, %v6074
    %s6077 = scalar_lea.vmem %s41, 32
    %v6078 = vld [vmem:[%s6077] sm:$0xff]
    %v6079 = vld [vmem:[%s6077 + $0x8] sm:$0xff]
    %v6080 = vld [vmem:[%s6077 + $0x10] sm:$0xff]
    %v6081 = vld [vmem:[%s6077 + $0x18] sm:$0xff]
    %s6082 = scalar_lea.vmem %s43, 1
    %v6083 = vld [vmem:[%s6082] sm:$0x1]
    %v6085 = vlaneseq
    %v6086 = vshrl.u32 %v6085, 7
    %v6087 = vsub.s32 0, %v6086
    %v6088 = vrot.slane %v6083, %v6087
    %v6091 = vsel %vm238, %v6075, 0
    %v6094 = vsel %vm238, %v6076, 0
    %6096 = vmatprep.subr.mxu0 0.0
    %6097 = vmatpush1.msra.mxu0 %v6078
    %6098 = vmatprep.subr.mxu0 0.0
    %6099 = vmatpush1.msra.mxu0 %v6079
    %6100 = vmatprep.subr.mxu0 0.0
    %6101 = vmatpush1.msra.mxu0 %v6080
    %6102 = vmatprep.subr.mxu0 0.0
    %6103 = vmatpush1.msra.mxu0 %v6081
    %6104 = vmatprep.subr.mxu0 0.0
    %6105 = vmatpush1.msra.mxu0 0.0
    %6106 = vmatprep.subr.mxu0 0.0
    %6107 = vmatpush1.msra.mxu0 0.0
    %6108 = vmatprep.subr.mxu0 0.0
    %6109 = vmatpush1.msra.mxu0 0.0
    %6110 = vmatprep.subr.mxu0 0.0
    %6111 = vmatpush1.msra.mxu0 0.0
    %6112 = vmatprep.subr.mxu0 0.0
    %6113 = vmatpush1.msra.mxu0 0.0
    %6114 = vmatprep.subr.mxu0 0.0
    %6115 = vmatpush1.msra.mxu0 0.0
    %6116 = vmatprep.subr.mxu0 0.0
    %6117 = vmatpush1.msra.mxu0 0.0
    %6118 = vmatprep.subr.mxu0 0.0
    %6119 = vmatpush1.msra.mxu0 0.0
    %6120 = vmatprep.subr.mxu0 0.0
    %6121 = vmatpush1.msra.mxu0 0.0
    %6122 = vmatprep.subr.mxu0 0.0
    %6123 = vmatpush1.msra.mxu0 0.0
    %6124 = vmatprep.subr.mxu0 0.0
    %6125 = vmatpush1.msra.mxu0 0.0
    %6126 = vmatprep.subr.mxu0 0.0
    %6127 = vmatpush1.msra.mxu0 0.0
    %6128 = vmatprep.subr.mxu0 0.0
    %6129 = vmatpush1.msra.mxu0 0.0
    %6130 = vmatprep.subr.mxu0 0.0
    %6131 = vmatpush1.msra.mxu0 0.0
    %6132 = vmatprep.subr.mxu0 0.0
    %6133 = vmatpush1.msra.mxu0 0.0
    %6134 = vmatprep.subr.mxu0 0.0
    %6135 = vmatpush1.msra.mxu0 0.0
    %6136 = vmatprep.subr.mxu0 0.0
    %6137 = vmatpush1.msra.mxu0 0.0
    %6138 = vmatprep.subr.mxu0 0.0
    %6139 = vmatpush1.msra.mxu0 0.0
    %6140 = vmatprep.subr.mxu0 0.0
    %6141 = vmatpush1.msra.mxu0 0.0
    %6142 = vmatprep.subr.mxu0 0.0
    %6143 = vmatpush1.msra.mxu0 0.0
    %6144 = vmatprep.subr.mxu0 0.0
    %6145 = vmatpush1.msra.mxu0 0.0
    %6146 = vmatprep.subr.mxu0 0.0
    %6147 = vmatpush1.msra.mxu0 0.0
    %6148 = vmatprep.subr.mxu0 0.0
    %6149 = vmatpush1.msra.mxu0 0.0
    %6150 = vmatprep.subr.mxu0 0.0
    %6151 = vmatpush1.msra.mxu0 0.0
    %6152 = vmatprep.subr.mxu0 0.0
    %6153 = vmatpush1.msra.mxu0 0.0
    %6154 = vmatprep.subr.mxu0 0.0
    %6155 = vmatpush1.msra.mxu0 0.0
    %6156 = vmatprep.subr.mxu0 0.0
    %6157 = vmatpush1.msra.mxu0 0.0
    %6158 = vmatprep.subr.mxu0 0.0
    %6159 = vmatpush1.msra.mxu0 0.0
    %6160 = vmatprep.mubr.f32.mxu0 0.0
    %6161 = vmatmul.mubr.f32.gmra.mrb[0].mxu0 %v6091
    %v6162 = vpop.f32.mrb[0].mxu0
    %v6163 = vadd.f32 %v6088, %v6162
    %v6164 = vpop.f32.mrb[0].mxu0
    %6165 = vmatprep.mubr.f32.mxu0 0.0
    %6166 = vmatmul.mubr.f32.gmra.mrb[0].mxu0 %v6094
    %v6167 = vpop.f32.mrb[0].mxu0
    %v6168 = vadd.f32 %v6088, %v6167
    %v6169 = vpop.f32.mrb[0].mxu0
    %6170 = vdwg.mxu0
    %v6171 = vmul.f32 %v6163, %v6163
    %v6172 = vmul.f32 %v6168, %v6168
    %v6173 = vmul.f32 %v6163, %v6171
    %v6174 = vmul.f32 %v6168, %v6172
    %v6175 = vmul.f32 %v6173, 0.044715
    %v6176 = vmul.f32 %v6174, 0.044715
    %v6177 = vadd.f32 %v6163, %v6175
    %v6178 = vadd.f32 %v6168, %v6176
    %v6179 = vmul.f32 %v6177, 0.7978846
    %v6180 = vmul.f32 %v6178, 0.7978846
    %v6181 = vtanh.pop %v6179
    %v6182 = vtanh.pop %v6180
    %v6183 = vadd.f32 %v6181, 1.0
    %v6184 = vadd.f32 %v6182, 1.0
    %v6185 = vmul.f32 %v6183, 0.5
    %v6186 = vmul.f32 %v6184, 0.5
    %v6187 = vmul.f32 %v6163, %v6185
    %v6188 = vmul.f32 %v6168, %v6186
    %s6189 = scalar_lea.vmem %s45, 128
    %v6190 = vld [vmem:[%s6189] sm:$0xff]
    %v6191 = vld [vmem:[%s6189 + $0x8] sm:$0xff]
    %v6192 = vld [vmem:[%s6189 + $0x10] sm:$0xff]
    %v6193 = vld [vmem:[%s6189 + $0x18] sm:$0xff]
    %v6194 = vld [vmem:[%s6189 + $0x20] sm:$0xff]
    %v6195 = vld [vmem:[%s6189 + $0x28] sm:$0xff]
    %v6196 = vld [vmem:[%s6189 + $0x30] sm:$0xff]
    %v6197 = vld [vmem:[%s6189 + $0x38] sm:$0xff]
    %v6198 = vld [vmem:[%s6189 + $0x40] sm:$0xff]
    %v6199 = vld [vmem:[%s6189 + $0x48] sm:$0xff]
    %v6200 = vld [vmem:[%s6189 + $0x50] sm:$0xff]
    %v6201 = vld [vmem:[%s6189 + $0x58] sm:$0xff]
    %v6202 = vld [vmem:[%s6189 + $0x60] sm:$0xff]
    %v6203 = vld [vmem:[%s6189 + $0x68] sm:$0xff]
    %v6204 = vld [vmem:[%s6189 + $0x70] sm:$0xff]
    %v6205 = vld [vmem:[%s6189 + $0x78] sm:$0xff]
    %s6206 = scalar_lea.vmem %s47, 1
    %v6207 = vld [vmem:[%s6206] sm:$0x1]
    %v6209 = vlaneseq
    %v6210 = vshrl.u32 %v6209, 7
    %v6211 = vsub.s32 0, %v6210
    %v6212 = vrot.slane %v6207, %v6211
    %6214 = vmatprep.subr.mxu0 0.0
    %6215 = vmatpush1.msra.mxu0 %v6190
    %6216 = vmatprep.subr.mxu0 0.0
    %6217 = vmatpush1.msra.mxu0 %v6191
    %6218 = vmatprep.subr.mxu0 0.0
    %6219 = vmatpush1.msra.mxu0 %v6192
    %6220 = vmatprep.subr.mxu0 0.0
    %6221 = vmatpush1.msra.mxu0 %v6193
    %6222 = vmatprep.subr.mxu0 0.0
    %6223 = vmatpush1.msra.mxu0 %v6194
    %6224 = vmatprep.subr.mxu0 0.0
    %6225 = vmatpush1.msra.mxu0 %v6195
    %6226 = vmatprep.subr.mxu0 0.0
    %6227 = vmatpush1.msra.mxu0 %v6196
    %6228 = vmatprep.subr.mxu0 0.0
    %6229 = vmatpush1.msra.mxu0 %v6197
    %6230 = vmatprep.subr.mxu0 0.0
    %6231 = vmatpush1.msra.mxu0 %v6198
    %6232 = vmatprep.subr.mxu0 0.0
    %6233 = vmatpush1.msra.mxu0 %v6199
    %6234 = vmatprep.subr.mxu0 0.0
    %6235 = vmatpush1.msra.mxu0 %v6200
    %6236 = vmatprep.subr.mxu0 0.0
    %6237 = vmatpush1.msra.mxu0 %v6201
    %6238 = vmatprep.subr.mxu0 0.0
    %6239 = vmatpush1.msra.mxu0 %v6202
    %6240 = vmatprep.subr.mxu0 0.0
    %6241 = vmatpush1.msra.mxu0 %v6203
    %6242 = vmatprep.subr.mxu0 0.0
    %6243 = vmatpush1.msra.mxu0 %v6204
    %6244 = vmatprep.subr.mxu0 0.0
    %6245 = vmatpush1.msra.mxu0 %v6205
    %6246 = vmatprep.subr.mxu0 0.0
    %6247 = vmatpush1.msra.mxu0 0.0
    %6248 = vmatprep.subr.mxu0 0.0
    %6249 = vmatpush1.msra.mxu0 0.0
    %6250 = vmatprep.subr.mxu0 0.0
    %6251 = vmatpush1.msra.mxu0 0.0
    %6252 = vmatprep.subr.mxu0 0.0
    %6253 = vmatpush1.msra.mxu0 0.0
    %6254 = vmatprep.subr.mxu0 0.0
    %6255 = vmatpush1.msra.mxu0 0.0
    %6256 = vmatprep.subr.mxu0 0.0
    %6257 = vmatpush1.msra.mxu0 0.0
    %6258 = vmatprep.subr.mxu0 0.0
    %6259 = vmatpush1.msra.mxu0 0.0
    %6260 = vmatprep.subr.mxu0 0.0
    %6261 = vmatpush1.msra.mxu0 0.0
    %6262 = vmatprep.subr.mxu0 0.0
    %6263 = vmatpush1.msra.mxu0 0.0
    %6264 = vmatprep.subr.mxu0 0.0
    %6265 = vmatpush1.msra.mxu0 0.0
    %6266 = vmatprep.subr.mxu0 0.0
    %6267 = vmatpush1.msra.mxu0 0.0
    %6268 = vmatprep.subr.mxu0 0.0
    %6269 = vmatpush1.msra.mxu0 0.0
    %6270 = vmatprep.subr.mxu0 0.0
    %6271 = vmatpush1.msra.mxu0 0.0
    %6272 = vmatprep.subr.mxu0 0.0
    %6273 = vmatpush1.msra.mxu0 0.0
    %6274 = vmatprep.subr.mxu0 0.0
    %6275 = vmatpush1.msra.mxu0 0.0
    %6276 = vmatprep.subr.mxu0 0.0
    %6277 = vmatpush1.msra.mxu0 0.0
    %6278 = vmatprep.mubr.f32.mxu0 0.0
    %6279 = vmatmul.mubr.f32.gmra.mrb[0].mxu0 %v6187
    %v6280 = vpop.f32.mrb[0].mxu0
    %v6281 = vadd.f32 %v6212, %v6280
    %v6282 = vpop.f32.mrb[0].mxu0
    %6283 = vmatprep.mubr.f32.mxu0 0.0
    %6284 = vmatmul.mubr.f32.gmra.mrb[0].mxu0 %v6188
    %v6285 = vpop.f32.mrb[0].mxu0
    %v6286 = vadd.f32 %v6212, %v6285
    %v6287 = vpop.f32.mrb[0].mxu0
    %6288 = vdwg.mxu0
    %v6289 = vadd.f32 %v6281, %v6075
    %v6290 = vadd.f32 %v6286, %v6076
    %v6291 = vsel %vm238, %v6289, 0.0
    %6292 = vadd.xlane.f32.xlu0 %v6291
    %v6293 = vpop.xlane.xlu0 %6292
    %v6294 = vsel %vm238, %v6290, 0.0
    %6295 = vadd.xlane.f32.xlu0 %v6294
    %v6296 = vpop.xlane.xlu0 %6295
    %v6297 = vmul.f32 %v6293, %v1732
    %v6298 = vmul.f32 %v6296, %v1732
    %v6299 = vsub.f32 %v6289, %v6297
    %v6300 = vsub.f32 %v6290, %v6298
    %v6301 = vmul.f32 %v6299, %v6299
    %v6302 = vmul.f32 %v6300, %v6300
    %v6303 = vsel %vm238, %v6301, 0.0
    %6304 = vadd.xlane.f32.xlu0 %v6303
    %v6305 = vpop.xlane.xlu0 %6304
    %v6306 = vsel %vm238, %v6302, 0.0
    %6307 = vadd.xlane.f32.xlu0 %v6306
    %v6308 = vpop.xlane.xlu0 %6307
    %v6309 = vmul.f32 %v6305, %v1732
    %v6310 = vmul.f32 %v6308, %v1732
    %v6311 = vadd.f32 %v6309, 1e-12
    %v6312 = vadd.f32 %v6310, 1e-12
    %v6313 = vrsqrt.pop %v6311
    %v6314 = vrsqrt.pop %v6312
    %v6315 = vmul.f32 %v6299, %v6313
    %v6316 = vmul.f32 %v6300, %v6314
    %v6317 = vlaneseq
    %v6318 = vshrl.u32 %v6317, 7
    %v6319 = vsub.s32 2, %v6318
    %v6320 = vrot.slane %v3822, %v6319
    %v6321 = vmul.f32 %v6315, %v6320
    %v6322 = vmul.f32 %v6316, %v6320
    %v6323 = vlaneseq
    %v6324 = vshrl.u32 %v6323, 7
    %v6325 = vsub.s32 2, %v6324
    %v6326 = vrot.slane %v3824, %v6325
    %v6327 = vadd.f32 %v6321, %v6326
    %v6328 = vadd.f32 %v6322, %v6326
    %v6329 = vadd.f32 %v5265, %v3819
    %v6330 = vadd.f32 %v5270, %v3820
    %v6331 = vsel %vm238, %v6329, 0.0
    %6332 = vadd.xlane.f32.xlu0 %v6331
    %v6333 = vpop.xlane.xlu0 %6332
    %v6334 = vsel %vm238, %v6330, 0.0
    %6335 = vadd.xlane.f32.xlu0 %v6334
    %v6336 = vpop.xlane.xlu0 %6335
    %v6337 = vmul.f32 %v6333, %v1732
    %v6338 = vmul.f32 %v6336, %v1732
    %v6339 = vsub.f32 %v6329, %v6337
    %v6340 = vsub.f32 %v6330, %v6338
    %v6341 = vmul.f32 %v6339, %v6339
    %v6342 = vmul.f32 %v6340, %v6340
    %v6343 = vsel %vm238, %v6341, 0.0
    %6344 = vadd.xlane.f32.xlu0 %v6343
    %v6345 = vpop.xlane.xlu0 %6344
    %v6346 = vsel %vm238, %v6342, 0.0
    %6347 = vadd.xlane.f32.xlu0 %v6346
    %v6348 = vpop.xlane.xlu0 %6347
    %v6349 = vmul.f32 %v6345, %v1732
    %v6350 = vmul.f32 %v6348, %v1732
    %v6351 = vadd.f32 %v6349, 1e-12
    %v6352 = vadd.f32 %v6350, 1e-12
    %v6353 = vrsqrt.pop %v6351
    %v6354 = vrsqrt.pop %v6352
    %v6355 = vmul.f32 %v6339, %v6353
    %v6356 = vmul.f32 %v6340, %v6354
    %v6357 = vlaneseq
    %v6358 = vshrl.u32 %v6357, 7
    %v6359 = vsub.s32 3, %v6358
    %v6360 = vrot.slane %v3822, %v6359
    %v6361 = vmul.f32 %v6355, %v6360
    %v6362 = vmul.f32 %v6356, %v6360
    %v6363 = vlaneseq
    %v6364 = vshrl.u32 %v6363, 7
    %v6365 = vsub.s32 3, %v6364
    %v6366 = vrot.slane %v3824, %v6365
    %v6367 = vadd.f32 %v6361, %v6366
    %v6368 = vadd.f32 %v6362, %v6366
    %s6369 = scalar_lea.vmem %s33, 32
    %v6370 = vld [vmem:[%s6369] sm:$0xff]
    %v6371 = vld [vmem:[%s6369 + $0x8] sm:$0xff]
    %v6372 = vld [vmem:[%s6369 + $0x10] sm:$0xff]
    %v6373 = vld [vmem:[%s6369 + $0x18] sm:$0xff]
    %s6374 = scalar_lea.vmem %s35, 1
    %v6375 = vld [vmem:[%s6374] sm:$0x1]
    %v6377 = vlaneseq
    %v6378 = vshrl.u32 %v6377, 7
    %v6379 = vsub.s32 0, %v6378
    %v6380 = vrot.slane %v6375, %v6379
    %v6383 = vsel %vm238, %v6367, 0
    %v6386 = vsel %vm238, %v6368, 0
    %6388 = vmatprep.subr.mxu0 0.0
    %6389 = vmatpush1.msra.mxu0 %v6370
    %6390 = vmatprep.subr.mxu0 0.0
    %6391 = vmatpush1.msra.mxu0 %v6371
    %6392 = vmatprep.subr.mxu0 0.0
    %6393 = vmatpush1.msra.mxu0 %v6372
    %6394 = vmatprep.subr.mxu0 0.0
    %6395 = vmatpush1.msra.mxu0 %v6373
    %6396 = vmatprep.subr.mxu0 0.0
    %6397 = vmatpush1.msra.mxu0 0.0
    %6398 = vmatprep.subr.mxu0 0.0
    %6399 = vmatpush1.msra.mxu0 0.0
    %6400 = vmatprep.subr.mxu0 0.0
    %6401 = vmatpush1.msra.mxu0 0.0
    %6402 = vmatprep.subr.mxu0 0.0
    %6403 = vmatpush1.msra.mxu0 0.0
    %6404 = vmatprep.subr.mxu0 0.0
    %6405 = vmatpush1.msra.mxu0 0.0
    %6406 = vmatprep.subr.mxu0 0.0
    %6407 = vmatpush1.msra.mxu0 0.0
    %6408 = vmatprep.subr.mxu0 0.0
    %6409 = vmatpush1.msra.mxu0 0.0
    %6410 = vmatprep.subr.mxu0 0.0
    %6411 = vmatpush1.msra.mxu0 0.0
    %6412 = vmatprep.subr.mxu0 0.0
    %6413 = vmatpush1.msra.mxu0 0.0
    %6414 = vmatprep.subr.mxu0 0.0
    %6415 = vmatpush1.msra.mxu0 0.0
    %6416 = vmatprep.subr.mxu0 0.0
    %6417 = vmatpush1.msra.mxu0 0.0
    %6418 = vmatprep.subr.mxu0 0.0
    %6419 = vmatpush1.msra.mxu0 0.0
    %6420 = vmatprep.subr.mxu0 0.0
    %6421 = vmatpush1.msra.mxu0 0.0
    %6422 = vmatprep.subr.mxu0 0.0
    %6423 = vmatpush1.msra.mxu0 0.0
    %6424 = vmatprep.subr.mxu0 0.0
    %6425 = vmatpush1.msra.mxu0 0.0
    %6426 = vmatprep.subr.mxu0 0.0
    %6427 = vmatpush1.msra.mxu0 0.0
    %6428 = vmatprep.subr.mxu0 0.0
    %6429 = vmatpush1.msra.mxu0 0.0
    %6430 = vmatprep.subr.mxu0 0.0
    %6431 = vmatpush1.msra.mxu0 0.0
    %6432 = vmatprep.subr.mxu0 0.0
    %6433 = vmatpush1.msra.mxu0 0.0
    %6434 = vmatprep.subr.mxu0 0.0
    %6435 = vmatpush1.msra.mxu0 0.0
    %6436 = vmatprep.subr.mxu0 0.0
    %6437 = vmatpush1.msra.mxu0 0.0
    %6438 = vmatprep.subr.mxu0 0.0
    %6439 = vmatpush1.msra.mxu0 0.0
    %6440 = vmatprep.subr.mxu0 0.0
    %6441 = vmatpush1.msra.mxu0 0.0
    %6442 = vmatprep.subr.mxu0 0.0
    %6443 = vmatpush1.msra.mxu0 0.0
    %6444 = vmatprep.subr.mxu0 0.0
    %6445 = vmatpush1.msra.mxu0 0.0
    %6446 = vmatprep.subr.mxu0 0.0
    %6447 = vmatpush1.msra.mxu0 0.0
    %6448 = vmatprep.subr.mxu0 0.0
    %6449 = vmatpush1.msra.mxu0 0.0
    %6450 = vmatprep.subr.mxu0 0.0
    %6451 = vmatpush1.msra.mxu0 0.0
    %6452 = vmatprep.mubr.f32.mxu0 0.0
    %6453 = vmatmul.mubr.f32.gmra.mrb[0].mxu0 %v6383
    %v6454 = vpop.f32.mrb[0].mxu0
    %v6455 = vadd.f32 %v6380, %v6454
    %v6456 = vpop.f32.mrb[0].mxu0
    %6457 = vmatprep.mubr.f32.mxu0 0.0
    %6458 = vmatmul.mubr.f32.gmra.mrb[0].mxu0 %v6386
    %v6459 = vpop.f32.mrb[0].mxu0
    %v6460 = vadd.f32 %v6380, %v6459
    %v6461 = vpop.f32.mrb[0].mxu0
    %6462 = vdwg.mxu0
    %s6463 = scalar_lea.vmem %s37, 32
    %v6464 = vld [vmem:[%s6463] sm:$0xff]
    %v6465 = vld [vmem:[%s6463 + $0x8] sm:$0xff]
    %v6466 = vld [vmem:[%s6463 + $0x10] sm:$0xff]
    %v6467 = vld [vmem:[%s6463 + $0x18] sm:$0xff]
    %s6468 = scalar_lea.vmem %s39, 1
    %v6469 = vld [vmem:[%s6468] sm:$0x1]
    %v6470 = vmul.f32 %v6455, %v422
    %v6471 = vmul.f32 %v6455, %v424
    %v6472 = vmul.f32 %v6455, %v426
    %v6473 = vmul.f32 %v6455, %v428
    %v6474 = vmul.f32 %v6455, %v438
    %v6475 = vmul.f32 %v6455, %v440
    %v6476 = vmul.f32 %v6455, %v442
    %v6477 = vmul.f32 %v6455, %v444
    %6482 = vrot.lane.b32.xlu0 %v6470, 96
    %v6483 = vpop.permute.xlu0 %6482
    %6484 = vrot.lane.b32.xlu0 %v6471, 96
    %v6485 = vpop.permute.xlu0 %6484
    %6486 = vrot.lane.b32.xlu0 %v6472, 96
    %v6487 = vpop.permute.xlu0 %6486
    %6488 = vrot.lane.b32.xlu0 %v6473, 96
    %v6489 = vpop.permute.xlu0 %6488
    %v6491 = vsel %vm238, %v6455, 0
    %v6493 = vsel %vm238, %v6483, 0
    %v6495 = vsel %vm238, %v6485, 0
    %v6497 = vsel %vm238, %v6487, 0
    %v6499 = vsel %vm238, %v6489, 0
    %6501 = vmatprep.subr.mxu0 0.0
    %6502 = vmatpush1.xpose.msra.mxu0 %v6493
    %6503 = vmatprep.subr.mxu0 0.0
    %6504 = vmatpush1.xpose.msra.mxu0 %v6495
    %6505 = vmatprep.subr.mxu0 0.0
    %6506 = vmatpush1.xpose.msra.mxu0 %v6497
    %6507 = vmatprep.subr.mxu0 0.0
    %6508 = vmatpush1.xpose.msra.mxu0 %v6499
    %6509 = vmatprep.subr.mxu0 0.0
    %6510 = vmatpush1.xpose.msra.mxu0 0.0
    %6511 = vmatprep.subr.mxu0 0.0
    %6512 = vmatpush1.xpose.msra.mxu0 0.0
    %6513 = vmatprep.subr.mxu0 0.0
    %6514 = vmatpush1.xpose.msra.mxu0 0.0
    %6515 = vmatprep.subr.mxu0 0.0
    %6516 = vmatpush1.xpose.msra.mxu0 0.0
    %6517 = vmatprep.subr.mxu0 0.0
    %6518 = vmatpush1.xpose.msra.mxu0 0.0
    %6519 = vmatprep.subr.mxu0 0.0
    %6520 = vmatpush1.xpose.msra.mxu0 0.0
    %6521 = vmatprep.subr.mxu0 0.0
    %6522 = vmatpush1.xpose.msra.mxu0 0.0
    %6523 = vmatprep.subr.mxu0 0.0
    %6524 = vmatpush1.xpose.msra.mxu0 0.0
    %6525 = vmatprep.subr.mxu0 0.0
    %6526 = vmatpush1.xpose.msra.mxu0 0.0
    %6527 = vmatprep.subr.mxu0 0.0
    %6528 = vmatpush1.xpose.msra.mxu0 0.0
    %6529 = vmatprep.subr.mxu0 0.0
    %6530 = vmatpush1.xpose.msra.mxu0 0.0
    %6531 = vmatprep.subr.mxu0 0.0
    %6532 = vmatpush1.xpose.msra.mxu0 0.0
    %6533 = vmatprep.subr.mxu0 0.0
    %6534 = vmatpush1.xpose.msra.mxu0 0.0
    %6535 = vmatprep.subr.mxu0 0.0
    %6536 = vmatpush1.xpose.msra.mxu0 0.0
    %6537 = vmatprep.subr.mxu0 0.0
    %6538 = vmatpush1.xpose.msra.mxu0 0.0
    %6539 = vmatprep.subr.mxu0 0.0
    %6540 = vmatpush1.xpose.msra.mxu0 0.0
    %6541 = vmatprep.subr.mxu0 0.0
    %6542 = vmatpush1.xpose.msra.mxu0 0.0
    %6543 = vmatprep.subr.mxu0 0.0
    %6544 = vmatpush1.xpose.msra.mxu0 0.0
    %6545 = vmatprep.subr.mxu0 0.0
    %6546 = vmatpush1.xpose.msra.mxu0 0.0
    %6547 = vmatprep.subr.mxu0 0.0
    %6548 = vmatpush1.xpose.msra.mxu0 0.0
    %6549 = vmatprep.subr.mxu0 0.0
    %6550 = vmatpush1.xpose.msra.mxu0 0.0
    %6551 = vmatprep.subr.mxu0 0.0
    %6552 = vmatpush1.xpose.msra.mxu0 0.0
    %6553 = vmatprep.subr.mxu0 0.0
    %6554 = vmatpush1.xpose.msra.mxu0 0.0
    %6555 = vmatprep.subr.mxu0 0.0
    %6556 = vmatpush1.xpose.msra.mxu0 0.0
    %6557 = vmatprep.subr.mxu0 0.0
    %6558 = vmatpush1.xpose.msra.mxu0 0.0
    %6559 = vmatprep.subr.mxu0 0.0
    %6560 = vmatpush1.xpose.msra.mxu0 0.0
    %6561 = vmatprep.subr.mxu0 0.0
    %6562 = vmatpush1.xpose.msra.mxu0 0.0
    %6563 = vmatprep.subr.mxu0 0.0
    %6564 = vmatpush1.xpose.msra.mxu0 0.0
    %6565 = vmatprep.mubr.f32.mxu0 0.0
    %6566 = vmatmul.mubr.f32.gmra.mrb[0].mxu0 %v6491
    %v6567 = vpop.f32.mrb[0].mxu0
    %v6568 = vadd.f32 0.0, %v6567
    %v6569 = vpop.f32.mrb[0].mxu0
    %6570 = vdwg.mxu0
    %v6571 = vsel %vm238, %v6568, -inf
    %6572 = vmax.xlane.f32.xlu0 %v6571
    %v6573 = vpop.xlane.xlu0 %6572
    %v6574 = vsub.f32 %v6568, %v6573
    %v6575 = vmul.f32 %v6574, 1.442695
    %v6576 = vpow.pop %v6575
    %6581 = vrot.lane.b32.xlu0 %v6474, 64
    %v6582 = vpop.permute.xlu0 %6581
    %6583 = vrot.lane.b32.xlu0 %v6475, 64
    %v6584 = vpop.permute.xlu0 %6583
    %6585 = vrot.lane.b32.xlu0 %v6476, 64
    %v6586 = vpop.permute.xlu0 %6585
    %6587 = vrot.lane.b32.xlu0 %v6477, 64
    %v6588 = vpop.permute.xlu0 %6587
    %v6594 = vsel %vm238, %v6576, 0
    %6596 = vmatprep.subr.mxu0 0.0
    %6597 = vmatpush1.msra.mxu0 %v6582
    %6598 = vmatprep.subr.mxu0 0.0
    %6599 = vmatpush1.msra.mxu0 %v6584
    %6600 = vmatprep.subr.mxu0 0.0
    %6601 = vmatpush1.msra.mxu0 %v6586
    %6602 = vmatprep.subr.mxu0 0.0
    %6603 = vmatpush1.msra.mxu0 %v6588
    %6604 = vmatprep.subr.mxu0 0.0
    %6605 = vmatpush1.msra.mxu0 0.0
    %6606 = vmatprep.subr.mxu0 0.0
    %6607 = vmatpush1.msra.mxu0 0.0
    %6608 = vmatprep.subr.mxu0 0.0
    %6609 = vmatpush1.msra.mxu0 0.0
    %6610 = vmatprep.subr.mxu0 0.0
    %6611 = vmatpush1.msra.mxu0 0.0
    %6612 = vmatprep.subr.mxu0 0.0
    %6613 = vmatpush1.msra.mxu0 0.0
    %6614 = vmatprep.subr.mxu0 0.0
    %6615 = vmatpush1.msra.mxu0 0.0
    %6616 = vmatprep.subr.mxu0 0.0
    %6617 = vmatpush1.msra.mxu0 0.0
    %6618 = vmatprep.subr.mxu0 0.0
    %6619 = vmatpush1.msra.mxu0 0.0
    %6620 = vmatprep.subr.mxu0 0.0
    %6621 = vmatpush1.msra.mxu0 0.0
    %6622 = vmatprep.subr.mxu0 0.0
    %6623 = vmatpush1.msra.mxu0 0.0
    %6624 = vmatprep.subr.mxu0 0.0
    %6625 = vmatpush1.msra.mxu0 0.0
    %6626 = vmatprep.subr.mxu0 0.0
    %6627 = vmatpush1.msra.mxu0 0.0
    %6628 = vmatprep.subr.mxu0 0.0
    %6629 = vmatpush1.msra.mxu0 0.0
    %6630 = vmatprep.subr.mxu0 0.0
    %6631 = vmatpush1.msra.mxu0 0.0
    %6632 = vmatprep.subr.mxu0 0.0
    %6633 = vmatpush1.msra.mxu0 0.0
    %6634 = vmatprep.subr.mxu0 0.0
    %6635 = vmatpush1.msra.mxu0 0.0
    %6636 = vmatprep.subr.mxu0 0.0
    %6637 = vmatpush1.msra.mxu0 0.0
    %6638 = vmatprep.subr.mxu0 0.0
    %6639 = vmatpush1.msra.mxu0 0.0
    %6640 = vmatprep.subr.mxu0 0.0
    %6641 = vmatpush1.msra.mxu0 0.0
    %6642 = vmatprep.subr.mxu0 0.0
    %6643 = vmatpush1.msra.mxu0 0.0
    %6644 = vmatprep.subr.mxu0 0.0
    %6645 = vmatpush1.msra.mxu0 0.0
    %6646 = vmatprep.subr.mxu0 0.0
    %6647 = vmatpush1.msra.mxu0 0.0
    %6648 = vmatprep.subr.mxu0 0.0
    %6649 = vmatpush1.msra.mxu0 0.0
    %6650 = vmatprep.subr.mxu0 0.0
    %6651 = vmatpush1.msra.mxu0 0.0
    %6652 = vmatprep.subr.mxu0 0.0
    %6653 = vmatpush1.msra.mxu0 0.0
    %6654 = vmatprep.subr.mxu0 0.0
    %6655 = vmatpush1.msra.mxu0 0.0
    %6656 = vmatprep.subr.mxu0 0.0
    %6657 = vmatpush1.msra.mxu0 0.0
    %6658 = vmatprep.subr.mxu0 0.0
    %6659 = vmatpush1.msra.mxu0 0.0
    %6660 = vmatprep.mubr.f32.mxu0 0.0
    %6661 = vmatmul.mubr.f32.gmra.mrb[0].mxu0 %v6594
    %v6662 = vpop.f32.mrb[0].mxu0
    %v6663 = vadd.f32 0.0, %v6662
    %v6664 = vpop.f32.mrb[0].mxu0
    %6665 = vdwg.mxu0
    %6666 = vmatprep.subr.mxu0 0.0
    %6667 = vmatpush1.msra.mxu0 %v217
    %6668 = vmatprep.subr.mxu0 0.0
    %6669 = vmatpush1.msra.mxu0 %v218
    %6670 = vmatprep.subr.mxu0 0.0
    %6671 = vmatpush1.msra.mxu0 %v219
    %6672 = vmatprep.subr.mxu0 0.0
    %6673 = vmatpush1.msra.mxu0 %v220
    %6674 = vmatprep.subr.mxu0 0.0
    %6675 = vmatpush1.msra.mxu0 0.0
    %6676 = vmatprep.subr.mxu0 0.0
    %6677 = vmatpush1.msra.mxu0 0.0
    %6678 = vmatprep.subr.mxu0 0.0
    %6679 = vmatpush1.msra.mxu0 0.0
    %6680 = vmatprep.subr.mxu0 0.0
    %6681 = vmatpush1.msra.mxu0 0.0
    %6682 = vmatprep.subr.mxu0 0.0
    %6683 = vmatpush1.msra.mxu0 0.0
    %6684 = vmatprep.subr.mxu0 0.0
    %6685 = vmatpush1.msra.mxu0 0.0
    %6686 = vmatprep.subr.mxu0 0.0
    %6687 = vmatpush1.msra.mxu0 0.0
    %6688 = vmatprep.subr.mxu0 0.0
    %6689 = vmatpush1.msra.mxu0 0.0
    %6690 = vmatprep.subr.mxu0 0.0
    %6691 = vmatpush1.msra.mxu0 0.0
    %6692 = vmatprep.subr.mxu0 0.0
    %6693 = vmatpush1.msra.mxu0 0.0
    %6694 = vmatprep.subr.mxu0 0.0
    %6695 = vmatpush1.msra.mxu0 0.0
    %6696 = vmatprep.subr.mxu0 0.0
    %6697 = vmatpush1.msra.mxu0 0.0
    %6698 = vmatprep.subr.mxu0 0.0
    %6699 = vmatpush1.msra.mxu0 0.0
    %6700 = vmatprep.subr.mxu0 0.0
    %6701 = vmatpush1.msra.mxu0 0.0
    %6702 = vmatprep.subr.mxu0 0.0
    %6703 = vmatpush1.msra.mxu0 0.0
    %6704 = vmatprep.subr.mxu0 0.0
    %6705 = vmatpush1.msra.mxu0 0.0
    %6706 = vmatprep.subr.mxu0 0.0
    %6707 = vmatpush1.msra.mxu0 0.0
    %6708 = vmatprep.subr.mxu0 0.0
    %6709 = vmatpush1.msra.mxu0 0.0
    %6710 = vmatprep.subr.mxu0 0.0
    %6711 = vmatpush1.msra.mxu0 0.0
    %6712 = vmatprep.subr.mxu0 0.0
    %6713 = vmatpush1.msra.mxu0 0.0
    %6714 = vmatprep.subr.mxu0 0.0
    %6715 = vmatpush1.msra.mxu0 0.0
    %6716 = vmatprep.subr.mxu0 0.0
    %6717 = vmatpush1.msra.mxu0 0.0
    %6718 = vmatprep.subr.mxu0 0.0
    %6719 = vmatpush1.msra.mxu0 0.0
    %6720 = vmatprep.subr.mxu0 0.0
    %6721 = vmatpush1.msra.mxu0 0.0
    %6722 = vmatprep.subr.mxu0 0.0
    %6723 = vmatpush1.msra.mxu0 0.0
    %6724 = vmatprep.subr.mxu0 0.0
    %6725 = vmatpush1.msra.mxu0 0.0
    %6726 = vmatprep.subr.mxu0 0.0
    %6727 = vmatpush1.msra.mxu0 0.0
    %6728 = vmatprep.subr.mxu0 0.0
    %6729 = vmatpush1.msra.mxu0 0.0
    %6730 = vmatprep.mubr.f32.mxu0 0.0
    %6731 = vmatmul.mubr.f32.gmra.mrb[0].mxu0 %v6594
    %v6732 = vpop.f32.mrb[0].mxu0
    %v6733 = vadd.f32 0.0, %v6732
    %v6734 = vpop.f32.mrb[0].mxu0
    %6735 = vdwg.mxu0
    %v6736 = vrcp.pop %v6733
    %v6737 = vmul.f32 %v6663, %v6736
    %v6738 = vmul.f32 %v6460, %v422
    %v6739 = vmul.f32 %v6460, %v424
    %v6740 = vmul.f32 %v6460, %v426
    %v6741 = vmul.f32 %v6460, %v428
    %v6742 = vmul.f32 %v6460, %v438
    %v6743 = vmul.f32 %v6460, %v440
    %v6744 = vmul.f32 %v6460, %v442
    %v6745 = vmul.f32 %v6460, %v444
    %6750 = vrot.lane.b32.xlu0 %v6738, 96
    %v6751 = vpop.permute.xlu0 %6750
    %6752 = vrot.lane.b32.xlu0 %v6739, 96
    %v6753 = vpop.permute.xlu0 %6752
    %6754 = vrot.lane.b32.xlu0 %v6740, 96
    %v6755 = vpop.permute.xlu0 %6754
    %6756 = vrot.lane.b32.xlu0 %v6741, 96
    %v6757 = vpop.permute.xlu0 %6756
    %v6759 = vsel %vm238, %v6460, 0
    %v6761 = vsel %vm238, %v6751, 0
    %v6763 = vsel %vm238, %v6753, 0
    %v6765 = vsel %vm238, %v6755, 0
    %v6767 = vsel %vm238, %v6757, 0
    %6769 = vmatprep.subr.mxu0 0.0
    %6770 = vmatpush1.xpose.msra.mxu0 %v6761
    %6771 = vmatprep.subr.mxu0 0.0
    %6772 = vmatpush1.xpose.msra.mxu0 %v6763
    %6773 = vmatprep.subr.mxu0 0.0
    %6774 = vmatpush1.xpose.msra.mxu0 %v6765
    %6775 = vmatprep.subr.mxu0 0.0
    %6776 = vmatpush1.xpose.msra.mxu0 %v6767
    %6777 = vmatprep.subr.mxu0 0.0
    %6778 = vmatpush1.xpose.msra.mxu0 0.0
    %6779 = vmatprep.subr.mxu0 0.0
    %6780 = vmatpush1.xpose.msra.mxu0 0.0
    %6781 = vmatprep.subr.mxu0 0.0
    %6782 = vmatpush1.xpose.msra.mxu0 0.0
    %6783 = vmatprep.subr.mxu0 0.0
    %6784 = vmatpush1.xpose.msra.mxu0 0.0
    %6785 = vmatprep.subr.mxu0 0.0
    %6786 = vmatpush1.xpose.msra.mxu0 0.0
    %6787 = vmatprep.subr.mxu0 0.0
    %6788 = vmatpush1.xpose.msra.mxu0 0.0
    %6789 = vmatprep.subr.mxu0 0.0
    %6790 = vmatpush1.xpose.msra.mxu0 0.0
    %6791 = vmatprep.subr.mxu0 0.0
    %6792 = vmatpush1.xpose.msra.mxu0 0.0
    %6793 = vmatprep.subr.mxu0 0.0
    %6794 = vmatpush1.xpose.msra.mxu0 0.0
    %6795 = vmatprep.subr.mxu0 0.0
    %6796 = vmatpush1.xpose.msra.mxu0 0.0
    %6797 = vmatprep.subr.mxu0 0.0
    %6798 = vmatpush1.xpose.msra.mxu0 0.0
    %6799 = vmatprep.subr.mxu0 0.0
    %6800 = vmatpush1.xpose.msra.mxu0 0.0
    %6801 = vmatprep.subr.mxu0 0.0
    %6802 = vmatpush1.xpose.msra.mxu0 0.0
    %6803 = vmatprep.subr.mxu0 0.0
    %6804 = vmatpush1.xpose.msra.mxu0 0.0
    %6805 = vmatprep.subr.mxu0 0.0
    %6806 = vmatpush1.xpose.msra.mxu0 0.0
    %6807 = vmatprep.subr.mxu0 0.0
    %6808 = vmatpush1.xpose.msra.mxu0 0.0
    %6809 = vmatprep.subr.mxu0 0.0
    %6810 = vmatpush1.xpose.msra.mxu0 0.0
    %6811 = vmatprep.subr.mxu0 0.0
    %6812 = vmatpush1.xpose.msra.mxu0 0.0
    %6813 = vmatprep.subr.mxu0 0.0
    %6814 = vmatpush1.xpose.msra.mxu0 0.0
    %6815 = vmatprep.subr.mxu0 0.0
    %6816 = vmatpush1.xpose.msra.mxu0 0.0
    %6817 = vmatprep.subr.mxu0 0.0
    %6818 = vmatpush1.xpose.msra.mxu0 0.0
    %6819 = vmatprep.subr.mxu0 0.0
    %6820 = vmatpush1.xpose.msra.mxu0 0.0
    %6821 = vmatprep.subr.mxu0 0.0
    %6822 = vmatpush1.xpose.msra.mxu0 0.0
    %6823 = vmatprep.subr.mxu0 0.0
    %6824 = vmatpush1.xpose.msra.mxu0 0.0
    %6825 = vmatprep.subr.mxu0 0.0
    %6826 = vmatpush1.xpose.msra.mxu0 0.0
    %6827 = vmatprep.subr.mxu0 0.0
    %6828 = vmatpush1.xpose.msra.mxu0 0.0
    %6829 = vmatprep.subr.mxu0 0.0
    %6830 = vmatpush1.xpose.msra.mxu0 0.0
    %6831 = vmatprep.subr.mxu0 0.0
    %6832 = vmatpush1.xpose.msra.mxu0 0.0
    %6833 = vmatprep.mubr.f32.mxu0 0.0
    %6834 = vmatmul.mubr.f32.gmra.mrb[0].mxu0 %v6759
    %v6835 = vpop.f32.mrb[0].mxu0
    %v6836 = vadd.f32 0.0, %v6835
    %v6837 = vpop.f32.mrb[0].mxu0
    %6838 = vdwg.mxu0
    %v6839 = vsel %vm238, %v6836, -inf
    %6840 = vmax.xlane.f32.xlu0 %v6839
    %v6841 = vpop.xlane.xlu0 %6840
    %v6842 = vsub.f32 %v6836, %v6841
    %v6843 = vmul.f32 %v6842, 1.442695
    %v6844 = vpow.pop %v6843
    %6849 = vrot.lane.b32.xlu0 %v6742, 64
    %v6850 = vpop.permute.xlu0 %6849
    %6851 = vrot.lane.b32.xlu0 %v6743, 64
    %v6852 = vpop.permute.xlu0 %6851
    %6853 = vrot.lane.b32.xlu0 %v6744, 64
    %v6854 = vpop.permute.xlu0 %6853
    %6855 = vrot.lane.b32.xlu0 %v6745, 64
    %v6856 = vpop.permute.xlu0 %6855
    %v6862 = vsel %vm238, %v6844, 0
    %6864 = vmatprep.subr.mxu0 0.0
    %6865 = vmatpush1.msra.mxu0 %v6850
    %6866 = vmatprep.subr.mxu0 0.0
    %6867 = vmatpush1.msra.mxu0 %v6852
    %6868 = vmatprep.subr.mxu0 0.0
    %6869 = vmatpush1.msra.mxu0 %v6854
    %6870 = vmatprep.subr.mxu0 0.0
    %6871 = vmatpush1.msra.mxu0 %v6856
    %6872 = vmatprep.subr.mxu0 0.0
    %6873 = vmatpush1.msra.mxu0 0.0
    %6874 = vmatprep.subr.mxu0 0.0
    %6875 = vmatpush1.msra.mxu0 0.0
    %6876 = vmatprep.subr.mxu0 0.0
    %6877 = vmatpush1.msra.mxu0 0.0
    %6878 = vmatprep.subr.mxu0 0.0
    %6879 = vmatpush1.msra.mxu0 0.0
    %6880 = vmatprep.subr.mxu0 0.0
    %6881 = vmatpush1.msra.mxu0 0.0
    %6882 = vmatprep.subr.mxu0 0.0
    %6883 = vmatpush1.msra.mxu0 0.0
    %6884 = vmatprep.subr.mxu0 0.0
    %6885 = vmatpush1.msra.mxu0 0.0
    %6886 = vmatprep.subr.mxu0 0.0
    %6887 = vmatpush1.msra.mxu0 0.0
    %6888 = vmatprep.subr.mxu0 0.0
    %6889 = vmatpush1.msra.mxu0 0.0
    %6890 = vmatprep.subr.mxu0 0.0
    %6891 = vmatpush1.msra.mxu0 0.0
    %6892 = vmatprep.subr.mxu0 0.0
    %6893 = vmatpush1.msra.mxu0 0.0
    %6894 = vmatprep.subr.mxu0 0.0
    %6895 = vmatpush1.msra.mxu0 0.0
    %6896 = vmatprep.subr.mxu0 0.0
    %6897 = vmatpush1.msra.mxu0 0.0
    %6898 = vmatprep.subr.mxu0 0.0
    %6899 = vmatpush1.msra.mxu0 0.0
    %6900 = vmatprep.subr.mxu0 0.0
    %6901 = vmatpush1.msra.mxu0 0.0
    %6902 = vmatprep.subr.mxu0 0.0
    %6903 = vmatpush1.msra.mxu0 0.0
    %6904 = vmatprep.subr.mxu0 0.0
    %6905 = vmatpush1.msra.mxu0 0.0
    %6906 = vmatprep.subr.mxu0 0.0
    %6907 = vmatpush1.msra.mxu0 0.0
    %6908 = vmatprep.subr.mxu0 0.0
    %6909 = vmatpush1.msra.mxu0 0.0
    %6910 = vmatprep.subr.mxu0 0.0
    %6911 = vmatpush1.msra.mxu0 0.0
    %6912 = vmatprep.subr.mxu0 0.0
    %6913 = vmatpush1.msra.mxu0 0.0
    %6914 = vmatprep.subr.mxu0 0.0
    %6915 = vmatpush1.msra.mxu0 0.0
    %6916 = vmatprep.subr.mxu0 0.0
    %6917 = vmatpush1.msra.mxu0 0.0
    %6918 = vmatprep.subr.mxu0 0.0
    %6919 = vmatpush1.msra.mxu0 0.0
    %6920 = vmatprep.subr.mxu0 0.0
    %6921 = vmatpush1.msra.mxu0 0.0
    %6922 = vmatprep.subr.mxu0 0.0
    %6923 = vmatpush1.msra.mxu0 0.0
    %6924 = vmatprep.subr.mxu0 0.0
    %6925 = vmatpush1.msra.mxu0 0.0
    %6926 = vmatprep.subr.mxu0 0.0
    %6927 = vmatpush1.msra.mxu0 0.0
    %6928 = vmatprep.mubr.f32.mxu0 0.0
    %6929 = vmatmul.mubr.f32.gmra.mrb[0].mxu0 %v6862
    %v6930 = vpop.f32.mrb[0].mxu0
    %v6931 = vadd.f32 0.0, %v6930
    %v6932 = vpop.f32.mrb[0].mxu0
    %6933 = vdwg.mxu0
    %6934 = vmatprep.subr.mxu0 0.0
    %6935 = vmatpush1.msra.mxu0 %v217
    %6936 = vmatprep.subr.mxu0 0.0
    %6937 = vmatpush1.msra.mxu0 %v218
    %6938 = vmatprep.subr.mxu0 0.0
    %6939 = vmatpush1.msra.mxu0 %v219
    %6940 = vmatprep.subr.mxu0 0.0
    %6941 = vmatpush1.msra.mxu0 %v220
    %6942 = vmatprep.subr.mxu0 0.0
    %6943 = vmatpush1.msra.mxu0 0.0
    %6944 = vmatprep.subr.mxu0 0.0
    %6945 = vmatpush1.msra.mxu0 0.0
    %6946 = vmatprep.subr.mxu0 0.0
    %6947 = vmatpush1.msra.mxu0 0.0
    %6948 = vmatprep.subr.mxu0 0.0
    %6949 = vmatpush1.msra.mxu0 0.0
    %6950 = vmatprep.subr.mxu0 0.0
    %6951 = vmatpush1.msra.mxu0 0.0
    %6952 = vmatprep.subr.mxu0 0.0
    %6953 = vmatpush1.msra.mxu0 0.0
    %6954 = vmatprep.subr.mxu0 0.0
    %6955 = vmatpush1.msra.mxu0 0.0
    %6956 = vmatprep.subr.mxu0 0.0
    %6957 = vmatpush1.msra.mxu0 0.0
    %6958 = vmatprep.subr.mxu0 0.0
    %6959 = vmatpush1.msra.mxu0 0.0
    %6960 = vmatprep.subr.mxu0 0.0
    %6961 = vmatpush1.msra.mxu0 0.0
    %6962 = vmatprep.subr.mxu0 0.0
    %6963 = vmatpush1.msra.mxu0 0.0
    %6964 = vmatprep.subr.mxu0 0.0
    %6965 = vmatpush1.msra.mxu0 0.0
    %6966 = vmatprep.subr.mxu0 0.0
    %6967 = vmatpush1.msra.mxu0 0.0
    %6968 = vmatprep.subr.mxu0 0.0
    %6969 = vmatpush1.msra.mxu0 0.0
    %6970 = vmatprep.subr.mxu0 0.0
    %6971 = vmatpush1.msra.mxu0 0.0
    %6972 = vmatprep.subr.mxu0 0.0
    %6973 = vmatpush1.msra.mxu0 0.0
    %6974 = vmatprep.subr.mxu0 0.0
    %6975 = vmatpush1.msra.mxu0 0.0
    %6976 = vmatprep.subr.mxu0 0.0
    %6977 = vmatpush1.msra.mxu0 0.0
    %6978 = vmatprep.subr.mxu0 0.0
    %6979 = vmatpush1.msra.mxu0 0.0
    %6980 = vmatprep.subr.mxu0 0.0
    %6981 = vmatpush1.msra.mxu0 0.0
    %6982 = vmatprep.subr.mxu0 0.0
    %6983 = vmatpush1.msra.mxu0 0.0
    %6984 = vmatprep.subr.mxu0 0.0
    %6985 = vmatpush1.msra.mxu0 0.0
    %6986 = vmatprep.subr.mxu0 0.0
    %6987 = vmatpush1.msra.mxu0 0.0
    %6988 = vmatprep.subr.mxu0 0.0
    %6989 = vmatpush1.msra.mxu0 0.0
    %6990 = vmatprep.subr.mxu0 0.0
    %6991 = vmatpush1.msra.mxu0 0.0
    %6992 = vmatprep.subr.mxu0 0.0
    %6993 = vmatpush1.msra.mxu0 0.0
    %6994 = vmatprep.subr.mxu0 0.0
    %6995 = vmatpush1.msra.mxu0 0.0
    %6996 = vmatprep.subr.mxu0 0.0
    %6997 = vmatpush1.msra.mxu0 0.0
    %6998 = vmatprep.mubr.f32.mxu0 0.0
    %6999 = vmatmul.mubr.f32.gmra.mrb[0].mxu0 %v6862
    %v7000 = vpop.f32.mrb[0].mxu0
    %v7001 = vadd.f32 0.0, %v7000
    %v7002 = vpop.f32.mrb[0].mxu0
    %7003 = vdwg.mxu0
    %v7004 = vrcp.pop %v7001
    %v7005 = vmul.f32 %v6931, %v7004
    %v7007 = vlaneseq
    %v7008 = vshrl.u32 %v7007, 7
    %v7009 = vsub.s32 0, %v7008
    %v7010 = vrot.slane %v6469, %v7009
    %v7013 = vsel %vm238, %v6737, 0
    %v7016 = vsel %vm238, %v7005, 0
    %7018 = vmatprep.subr.mxu0 0.0
    %7019 = vmatpush1.msra.mxu0 %v6464
    %7020 = vmatprep.subr.mxu0 0.0
    %7021 = vmatpush1.msra.mxu0 %v6465
    %7022 = vmatprep.subr.mxu0 0.0
    %7023 = vmatpush1.msra.mxu0 %v6466
    %7024 = vmatprep.subr.mxu0 0.0
    %7025 = vmatpush1.msra.mxu0 %v6467
    %7026 = vmatprep.subr.mxu0 0.0
    %7027 = vmatpush1.msra.mxu0 0.0
    %7028 = vmatprep.subr.mxu0 0.0
    %7029 = vmatpush1.msra.mxu0 0.0
    %7030 = vmatprep.subr.mxu0 0.0
    %7031 = vmatpush1.msra.mxu0 0.0
    %7032 = vmatprep.subr.mxu0 0.0
    %7033 = vmatpush1.msra.mxu0 0.0
    %7034 = vmatprep.subr.mxu0 0.0
    %7035 = vmatpush1.msra.mxu0 0.0
    %7036 = vmatprep.subr.mxu0 0.0
    %7037 = vmatpush1.msra.mxu0 0.0
    %7038 = vmatprep.subr.mxu0 0.0
    %7039 = vmatpush1.msra.mxu0 0.0
    %7040 = vmatprep.subr.mxu0 0.0
    %7041 = vmatpush1.msra.mxu0 0.0
    %7042 = vmatprep.subr.mxu0 0.0
    %7043 = vmatpush1.msra.mxu0 0.0
    %7044 = vmatprep.subr.mxu0 0.0
    %7045 = vmatpush1.msra.mxu0 0.0
    %7046 = vmatprep.subr.mxu0 0.0
    %7047 = vmatpush1.msra.mxu0 0.0
    %7048 = vmatprep.subr.mxu0 0.0
    %7049 = vmatpush1.msra.mxu0 0.0
    %7050 = vmatprep.subr.mxu0 0.0
    %7051 = vmatpush1.msra.mxu0 0.0
    %7052 = vmatprep.subr.mxu0 0.0
    %7053 = vmatpush1.msra.mxu0 0.0
    %7054 = vmatprep.subr.mxu0 0.0
    %7055 = vmatpush1.msra.mxu0 0.0
    %7056 = vmatprep.subr.mxu0 0.0
    %7057 = vmatpush1.msra.mxu0 0.0
    %7058 = vmatprep.subr.mxu0 0.0
    %7059 = vmatpush1.msra.mxu0 0.0
    %7060 = vmatprep.subr.mxu0 0.0
    %7061 = vmatpush1.msra.mxu0 0.0
    %7062 = vmatprep.subr.mxu0 0.0
    %7063 = vmatpush1.msra.mxu0 0.0
    %7064 = vmatprep.subr.mxu0 0.0
    %7065 = vmatpush1.msra.mxu0 0.0
    %7066 = vmatprep.subr.mxu0 0.0
    %7067 = vmatpush1.msra.mxu0 0.0
    %7068 = vmatprep.subr.mxu0 0.0
    %7069 = vmatpush1.msra.mxu0 0.0
    %7070 = vmatprep.subr.mxu0 0.0
    %7071 = vmatpush1.msra.mxu0 0.0
    %7072 = vmatprep.subr.mxu0 0.0
    %7073 = vmatpush1.msra.mxu0 0.0
    %7074 = vmatprep.subr.mxu0 0.0
    %7075 = vmatpush1.msra.mxu0 0.0
    %7076 = vmatprep.subr.mxu0 0.0
    %7077 = vmatpush1.msra.mxu0 0.0
    %7078 = vmatprep.subr.mxu0 0.0
    %7079 = vmatpush1.msra.mxu0 0.0
    %7080 = vmatprep.subr.mxu0 0.0
    %7081 = vmatpush1.msra.mxu0 0.0
    %7082 = vmatprep.mubr.f32.mxu0 0.0
    %7083 = vmatmul.mubr.f32.gmra.mrb[0].mxu0 %v7013
    %v7084 = vpop.f32.mrb[0].mxu0
    %v7085 = vadd.f32 %v7010, %v7084
    %v7086 = vpop.f32.mrb[0].mxu0
    %7087 = vmatprep.mubr.f32.mxu0 0.0
    %7088 = vmatmul.mubr.f32.gmra.mrb[0].mxu0 %v7016
    %v7089 = vpop.f32.mrb[0].mxu0
    %v7090 = vadd.f32 %v7010, %v7089
    %v7091 = vpop.f32.mrb[0].mxu0
    %7092 = vdwg.mxu0
    %v7093 = vadd.f32 %v7085, %v6367
    %v7094 = vadd.f32 %v7090, %v6368
    %v7095 = vsel %vm238, %v7093, 0.0
    %7096 = vadd.xlane.f32.xlu0 %v7095
    %v7097 = vpop.xlane.xlu0 %7096
    %v7098 = vsel %vm238, %v7094, 0.0
    %7099 = vadd.xlane.f32.xlu0 %v7098
    %v7100 = vpop.xlane.xlu0 %7099
    %v7101 = vmul.f32 %v7097, %v1732
    %v7102 = vmul.f32 %v7100, %v1732
    %v7103 = vsub.f32 %v7093, %v7101
    %v7104 = vsub.f32 %v7094, %v7102
    %v7105 = vmul.f32 %v7103, %v7103
    %v7106 = vmul.f32 %v7104, %v7104
    %v7107 = vsel %vm238, %v7105, 0.0
    %7108 = vadd.xlane.f32.xlu0 %v7107
    %v7109 = vpop.xlane.xlu0 %7108
    %v7110 = vsel %vm238, %v7106, 0.0
    %7111 = vadd.xlane.f32.xlu0 %v7110
    %v7112 = vpop.xlane.xlu0 %7111
    %v7113 = vmul.f32 %v7109, %v1732
    %v7114 = vmul.f32 %v7112, %v1732
    %v7115 = vadd.f32 %v7113, 1e-12
    %v7116 = vadd.f32 %v7114, 1e-12
    %v7117 = vrsqrt.pop %v7115
    %v7118 = vrsqrt.pop %v7116
    %v7119 = vmul.f32 %v7103, %v7117
    %v7120 = vmul.f32 %v7104, %v7118
    %v7121 = vlaneseq
    %v7122 = vshrl.u32 %v7121, 7
    %v7123 = vsub.s32 4, %v7122
    %v7124 = vrot.slane %v3822, %v7123
    %v7125 = vmul.f32 %v7119, %v7124
    %v7126 = vmul.f32 %v7120, %v7124
    %v7127 = vlaneseq
    %v7128 = vshrl.u32 %v7127, 7
    %v7129 = vsub.s32 4, %v7128
    %v7130 = vrot.slane %v3824, %v7129
    %v7131 = vadd.f32 %v7125, %v7130
    %v7132 = vadd.f32 %v7126, %v7130
    %s7133 = scalar_lea.vmem %s49, 32
    %v7134 = vld [vmem:[%s7133] sm:$0xff]
    %v7135 = vld [vmem:[%s7133 + $0x8] sm:$0xff]
    %v7136 = vld [vmem:[%s7133 + $0x10] sm:$0xff]
    %v7137 = vld [vmem:[%s7133 + $0x18] sm:$0xff]
    %s7138 = scalar_lea.vmem %s51, 1
    %v7139 = vld [vmem:[%s7138] sm:$0x1]
    %v7141 = vlaneseq
    %v7142 = vshrl.u32 %v7141, 7
    %v7143 = vsub.s32 0, %v7142
    %v7144 = vrot.slane %v7139, %v7143
    %v7147 = vsel %vm238, %v7131, 0
    %v7150 = vsel %vm238, %v7132, 0
    %7152 = vmatprep.subr.mxu0 0.0
    %7153 = vmatpush1.msra.mxu0 %v7134
    %7154 = vmatprep.subr.mxu0 0.0
    %7155 = vmatpush1.msra.mxu0 %v7135
    %7156 = vmatprep.subr.mxu0 0.0
    %7157 = vmatpush1.msra.mxu0 %v7136
    %7158 = vmatprep.subr.mxu0 0.0
    %7159 = vmatpush1.msra.mxu0 %v7137
    %7160 = vmatprep.subr.mxu0 0.0
    %7161 = vmatpush1.msra.mxu0 0.0
    %7162 = vmatprep.subr.mxu0 0.0
    %7163 = vmatpush1.msra.mxu0 0.0
    %7164 = vmatprep.subr.mxu0 0.0
    %7165 = vmatpush1.msra.mxu0 0.0
    %7166 = vmatprep.subr.mxu0 0.0
    %7167 = vmatpush1.msra.mxu0 0.0
    %7168 = vmatprep.subr.mxu0 0.0
    %7169 = vmatpush1.msra.mxu0 0.0
    %7170 = vmatprep.subr.mxu0 0.0
    %7171 = vmatpush1.msra.mxu0 0.0
    %7172 = vmatprep.subr.mxu0 0.0
    %7173 = vmatpush1.msra.mxu0 0.0
    %7174 = vmatprep.subr.mxu0 0.0
    %7175 = vmatpush1.msra.mxu0 0.0
    %7176 = vmatprep.subr.mxu0 0.0
    %7177 = vmatpush1.msra.mxu0 0.0
    %7178 = vmatprep.subr.mxu0 0.0
    %7179 = vmatpush1.msra.mxu0 0.0
    %7180 = vmatprep.subr.mxu0 0.0
    %7181 = vmatpush1.msra.mxu0 0.0
    %7182 = vmatprep.subr.mxu0 0.0
    %7183 = vmatpush1.msra.mxu0 0.0
    %7184 = vmatprep.subr.mxu0 0.0
    %7185 = vmatpush1.msra.mxu0 0.0
    %7186 = vmatprep.subr.mxu0 0.0
    %7187 = vmatpush1.msra.mxu0 0.0
    %7188 = vmatprep.subr.mxu0 0.0
    %7189 = vmatpush1.msra.mxu0 0.0
    %7190 = vmatprep.subr.mxu0 0.0
    %7191 = vmatpush1.msra.mxu0 0.0
    %7192 = vmatprep.subr.mxu0 0.0
    %7193 = vmatpush1.msra.mxu0 0.0
    %7194 = vmatprep.subr.mxu0 0.0
    %7195 = vmatpush1.msra.mxu0 0.0
    %7196 = vmatprep.subr.mxu0 0.0
    %7197 = vmatpush1.msra.mxu0 0.0
    %7198 = vmatprep.subr.mxu0 0.0
    %7199 = vmatpush1.msra.mxu0 0.0
    %7200 = vmatprep.subr.mxu0 0.0
    %7201 = vmatpush1.msra.mxu0 0.0
    %7202 = vmatprep.subr.mxu0 0.0
    %7203 = vmatpush1.msra.mxu0 0.0
    %7204 = vmatprep.subr.mxu0 0.0
    %7205 = vmatpush1.msra.mxu0 0.0
    %7206 = vmatprep.subr.mxu0 0.0
    %7207 = vmatpush1.msra.mxu0 0.0
    %7208 = vmatprep.subr.mxu0 0.0
    %7209 = vmatpush1.msra.mxu0 0.0
    %7210 = vmatprep.subr.mxu0 0.0
    %7211 = vmatpush1.msra.mxu0 0.0
    %7212 = vmatprep.subr.mxu0 0.0
    %7213 = vmatpush1.msra.mxu0 0.0
    %7214 = vmatprep.subr.mxu0 0.0
    %7215 = vmatpush1.msra.mxu0 0.0
    %7216 = vmatprep.mubr.f32.mxu0 0.0
    %7217 = vmatmul.mubr.f32.gmra.mrb[0].mxu0 %v7147
    %v7218 = vpop.f32.mrb[0].mxu0
    %v7219 = vadd.f32 %v7144, %v7218
    %v7220 = vpop.f32.mrb[0].mxu0
    %7221 = vmatprep.mubr.f32.mxu0 0.0
    %7222 = vmatmul.mubr.f32.gmra.mrb[0].mxu0 %v7150
    %v7223 = vpop.f32.mrb[0].mxu0
    %v7224 = vadd.f32 %v7144, %v7223
    %v7225 = vpop.f32.mrb[0].mxu0
    %7226 = vdwg.mxu0
    %v7227 = vmul.f32 %v7219, %v7219
    %v7228 = vmul.f32 %v7224, %v7224
    %v7229 = vmul.f32 %v7219, %v7227
    %v7230 = vmul.f32 %v7224, %v7228
    %v7231 = vmul.f32 %v7229, 0.044715
    %v7232 = vmul.f32 %v7230, 0.044715
    %v7233 = vadd.f32 %v7219, %v7231
    %v7234 = vadd.f32 %v7224, %v7232
    %v7235 = vmul.f32 %v7233, 0.7978846
    %v7236 = vmul.f32 %v7234, 0.7978846
    %v7237 = vtanh.pop %v7235
    %v7238 = vtanh.pop %v7236
    %v7239 = vadd.f32 %v7237, 1.0
    %v7240 = vadd.f32 %v7238, 1.0
    %v7241 = vmul.f32 %v7239, 0.5
    %v7242 = vmul.f32 %v7240, 0.5
    %v7243 = vmul.f32 %v7219, %v7241
    %v7244 = vmul.f32 %v7224, %v7242
    %s7245 = scalar_lea.vmem %s53, 128
    %v7246 = vld [vmem:[%s7245] sm:$0xff]
    %v7247 = vld [vmem:[%s7245 + $0x8] sm:$0xff]
    %v7248 = vld [vmem:[%s7245 + $0x10] sm:$0xff]
    %v7249 = vld [vmem:[%s7245 + $0x18] sm:$0xff]
    %v7250 = vld [vmem:[%s7245 + $0x20] sm:$0xff]
    %v7251 = vld [vmem:[%s7245 + $0x28] sm:$0xff]
    %v7252 = vld [vmem:[%s7245 + $0x30] sm:$0xff]
    %v7253 = vld [vmem:[%s7245 + $0x38] sm:$0xff]
    %v7254 = vld [vmem:[%s7245 + $0x40] sm:$0xff]
    %v7255 = vld [vmem:[%s7245 + $0x48] sm:$0xff]
    %v7256 = vld [vmem:[%s7245 + $0x50] sm:$0xff]
    %v7257 = vld [vmem:[%s7245 + $0x58] sm:$0xff]
    %v7258 = vld [vmem:[%s7245 + $0x60] sm:$0xff]
    %v7259 = vld [vmem:[%s7245 + $0x68] sm:$0xff]
    %v7260 = vld [vmem:[%s7245 + $0x70] sm:$0xff]
    %v7261 = vld [vmem:[%s7245 + $0x78] sm:$0xff]
    %s7262 = scalar_lea.vmem %s55, 1
    %v7263 = vld [vmem:[%s7262] sm:$0x1]
    %v7265 = vlaneseq
    %v7266 = vshrl.u32 %v7265, 7
    %v7267 = vsub.s32 0, %v7266
    %v7268 = vrot.slane %v7263, %v7267
    %7270 = vmatprep.subr.mxu0 0.0
    %7271 = vmatpush1.msra.mxu0 %v7246
    %7272 = vmatprep.subr.mxu0 0.0
    %7273 = vmatpush1.msra.mxu0 %v7247
    %7274 = vmatprep.subr.mxu0 0.0
    %7275 = vmatpush1.msra.mxu0 %v7248
    %7276 = vmatprep.subr.mxu0 0.0
    %7277 = vmatpush1.msra.mxu0 %v7249
    %7278 = vmatprep.subr.mxu0 0.0
    %7279 = vmatpush1.msra.mxu0 %v7250
    %7280 = vmatprep.subr.mxu0 0.0
    %7281 = vmatpush1.msra.mxu0 %v7251
    %7282 = vmatprep.subr.mxu0 0.0
    %7283 = vmatpush1.msra.mxu0 %v7252
    %7284 = vmatprep.subr.mxu0 0.0
    %7285 = vmatpush1.msra.mxu0 %v7253
    %7286 = vmatprep.subr.mxu0 0.0
    %7287 = vmatpush1.msra.mxu0 %v7254
    %7288 = vmatprep.subr.mxu0 0.0
    %7289 = vmatpush1.msra.mxu0 %v7255
    %7290 = vmatprep.subr.mxu0 0.0
    %7291 = vmatpush1.msra.mxu0 %v7256
    %7292 = vmatprep.subr.mxu0 0.0
    %7293 = vmatpush1.msra.mxu0 %v7257
    %7294 = vmatprep.subr.mxu0 0.0
    %7295 = vmatpush1.msra.mxu0 %v7258
    %7296 = vmatprep.subr.mxu0 0.0
    %7297 = vmatpush1.msra.mxu0 %v7259
    %7298 = vmatprep.subr.mxu0 0.0
    %7299 = vmatpush1.msra.mxu0 %v7260
    %7300 = vmatprep.subr.mxu0 0.0
    %7301 = vmatpush1.msra.mxu0 %v7261
    %7302 = vmatprep.subr.mxu0 0.0
    %7303 = vmatpush1.msra.mxu0 0.0
    %7304 = vmatprep.subr.mxu0 0.0
    %7305 = vmatpush1.msra.mxu0 0.0
    %7306 = vmatprep.subr.mxu0 0.0
    %7307 = vmatpush1.msra.mxu0 0.0
    %7308 = vmatprep.subr.mxu0 0.0
    %7309 = vmatpush1.msra.mxu0 0.0
    %7310 = vmatprep.subr.mxu0 0.0
    %7311 = vmatpush1.msra.mxu0 0.0
    %7312 = vmatprep.subr.mxu0 0.0
    %7313 = vmatpush1.msra.mxu0 0.0
    %7314 = vmatprep.subr.mxu0 0.0
    %7315 = vmatpush1.msra.mxu0 0.0
    %7316 = vmatprep.subr.mxu0 0.0
    %7317 = vmatpush1.msra.mxu0 0.0
    %7318 = vmatprep.subr.mxu0 0.0
    %7319 = vmatpush1.msra.mxu0 0.0
    %7320 = vmatprep.subr.mxu0 0.0
    %7321 = vmatpush1.msra.mxu0 0.0
    %7322 = vmatprep.subr.mxu0 0.0
    %7323 = vmatpush1.msra.mxu0 0.0
    %7324 = vmatprep.subr.mxu0 0.0
    %7325 = vmatpush1.msra.mxu0 0.0
    %7326 = vmatprep.subr.mxu0 0.0
    %7327 = vmatpush1.msra.mxu0 0.0
    %7328 = vmatprep.subr.mxu0 0.0
    %7329 = vmatpush1.msra.mxu0 0.0
    %7330 = vmatprep.subr.mxu0 0.0
    %7331 = vmatpush1.msra.mxu0 0.0
    %7332 = vmatprep.subr.mxu0 0.0
    %7333 = vmatpush1.msra.mxu0 0.0
    %7334 = vmatprep.mubr.f32.mxu0 0.0
    %7335 = vmatmul.mubr.f32.gmra.mrb[0].mxu0 %v7243
    %v7336 = vpop.f32.mrb[0].mxu0
    %v7337 = vadd.f32 %v7268, %v7336
    %v7338 = vpop.f32.mrb[0].mxu0
    %7339 = vmatprep.mubr.f32.mxu0 0.0
    %7340 = vmatmul.mubr.f32.gmra.mrb[0].mxu0 %v7244
    %v7341 = vpop.f32.mrb[0].mxu0
    %v7342 = vadd.f32 %v7268, %v7341
    %v7343 = vpop.f32.mrb[0].mxu0
    %7344 = vdwg.mxu0
    %v7345 = vadd.f32 %v7337, %v7131
    %v7346 = vadd.f32 %v7342, %v7132
    %v7347 = vsel %vm238, %v7345, 0.0
    %7348 = vadd.xlane.f32.xlu0 %v7347
    %v7349 = vpop.xlane.xlu0 %7348
    %v7350 = vsel %vm238, %v7346, 0.0
    %7351 = vadd.xlane.f32.xlu0 %v7350
    %v7352 = vpop.xlane.xlu0 %7351
    %v7353 = vmul.f32 %v7349, %v1732
    %v7354 = vmul.f32 %v7352, %v1732
    %v7355 = vsub.f32 %v7345, %v7353
    %v7356 = vsub.f32 %v7346, %v7354
    %v7357 = vmul.f32 %v7355, %v7355
    %v7358 = vmul.f32 %v7356, %v7356
    %v7359 = vsel %vm238, %v7357, 0.0
    %7360 = vadd.xlane.f32.xlu0 %v7359
    %v7361 = vpop.xlane.xlu0 %7360
    %v7362 = vsel %vm238, %v7358, 0.0
    %7363 = vadd.xlane.f32.xlu0 %v7362
    %v7364 = vpop.xlane.xlu0 %7363
    %v7365 = vmul.f32 %v7361, %v1732
    %v7366 = vmul.f32 %v7364, %v1732
    %v7367 = vadd.f32 %v7365, 1e-12
    %v7368 = vadd.f32 %v7366, 1e-12
    %v7369 = vrsqrt.pop %v7367
    %v7370 = vrsqrt.pop %v7368
    %v7371 = vmul.f32 %v7355, %v7369
    %v7372 = vmul.f32 %v7356, %v7370
    %v7373 = vlaneseq
    %v7374 = vshrl.u32 %v7373, 7
    %v7375 = vsub.s32 5, %v7374
    %v7376 = vrot.slane %v3822, %v7375
    %v7377 = vmul.f32 %v7371, %v7376
    %v7378 = vmul.f32 %v7372, %v7376
    %v7379 = vlaneseq
    %v7380 = vshrl.u32 %v7379, 7
    %v7381 = vsub.s32 5, %v7380
    %v7382 = vrot.slane %v3824, %v7381
    %v7383 = vadd.f32 %v7377, %v7382
    %v7384 = vadd.f32 %v7378, %v7382
    %7385 = vst.msk [vmem:[#allocation13] sm:$0xff] %vm238, %v6327
    %7386 = vst.msk [vmem:[#allocation13 + $0x8] sm:$0xff] %vm238, %v6328
    %7387 = vst.msk [vmem:[#allocation14] sm:$0xff] %vm238, %v7383
    %7388 = vst.msk [vmem:[#allocation14 + $0x8] sm:$0xff] %vm238, %v7384
    // Predicated region
    $region146: #{_lambda_.1} parent=1 // pred_check
      _
    $region147: #{_lambda_.1} parent=1 // pred_check_branch
      %7390 = sbr.rel (0) target = $region149
    $region148: #{_lambda_.1} parent=1 // pred_region
      %s7392 = ssub.s32 256, 256
      %7393 = vsyncadd [#allocation4], %s7392
      %s7394 = sshll.u32 [#allocation13], 4
      %s7395 = int_to_ptr.vmem [resolvable:$true] %s7394
      %7400 = dma.vmem_to_hbm [thread:$0]  %s7395, 256, %s61, [#allocation4], 128, 128, 8
    $region149: #{_lambda_.1} parent=1 // pred_fallthru
      _
    // Predicated region
    $region150: #{_lambda_.1} parent=1 // pred_check
      _
    $region151: #{_lambda_.1} parent=1 // pred_check_branch
      %7402 = sbr.rel (0) target = $region153
    $region152: #{_lambda_.1} parent=1 // pred_region
      %s7404 = ssub.s32 256, 256
      %7405 = vsyncadd [#allocation15], %s7404
      %s7406 = sshll.u32 [#allocation14], 4
      %s7407 = int_to_ptr.vmem [resolvable:$true] %s7406
      %7412 = dma.vmem_to_hbm [thread:$0]  %s7407, 256, %s63, [#allocation15], 128, 128, 8
    $region153: #{_lambda_.1} parent=1 // pred_fallthru
      _
    // Predicated region
    $region154: #{_lambda_.1} parent=1 // pred_check
      _
    $region155: #{_lambda_.1} parent=1 // pred_check_branch
      %7414 = sbr.rel (0) target = $region157
    $region156: #{_lambda_.1} parent=1 // pred_region
      %7415 = dma.done [#allocation4], 256
    $region157: #{_lambda_.1} parent=1 // pred_fallthru
      _
    // Predicated region
    $region158: #{_lambda_.1} parent=1 // pred_check
      _
    $region159: #{_lambda_.1} parent=1 // pred_check_branch
      %7417 = sbr.rel (0) target = $region161
    $region160: #{_lambda_.1} parent=1 // pred_region
      %7418 = dma.done [#allocation15], 256
    $region161: #{_lambda_.1} parent=1 // pred_fallthru
      _
    %7419 = vsyncpa [#allocation3], 1
    %7420 = vsyncpa [#allocation6], 1
    %7421 = vsyncpa [#allocation9], 1
    %7422 = vsyncpa [#allocation12], 1
    %7423 = vsyncpa [#allocation4], 1
    %7424 = vsyncpa [#allocation15], 1

</llo_original>
